<compile_context>
chip_gen: v7x
topology: tpu7x:2x2x1
jax: 0.10.0
libtpu: 0.0.40
codegen_flags: <defaults>
</compile_context>

<pallas_src>
import functools
import math

import jax
import jax.numpy as jnp
from jax.experimental import pallas as pl
from jax.experimental.pallas import tpu as pltpu

# --- module constants (bayesian_torch resnet_hvariational) -------------------
PRIOR_MU = 0.0
PRIOR_SIGMA = 1.0
POSTERIOR_MU_INIT = 0.0
POSTERIOR_RHO_INIT = -3.0
BN_EPS = 1e-5
LANES = 128                      # lane-dense channel padding
MXU_DTYPE = jnp.bfloat16         # bf16 MXU operands on all generations (v5e MXU eats bf16 natively)

# rho whose softplus equals PRIOR_SIGMA: padded parameter entries (mu=0, eps=0, rho=neutral)
# sample to exactly 0 weight and contribute exactly 0 KL (valid because PRIOR_MU == 0).
RHO_KL_NEUTRAL = math.log(math.expm1(PRIOR_SIGMA))


@functools.lru_cache(maxsize=None)
def _vmem_limit_bytes():
    """Generation-aware scoped-VMEM budget (v5e/v6e: 128 MiB physical, v7x: 64 MiB)."""
    try:
        cap = int(pltpu.get_tpu_info().vmem_capacity_bytes)
    except Exception:
        cap = 64 * 1024 * 1024
    return int(max(32 * 1024 * 1024, min(cap * 3 // 4, 96 * 1024 * 1024)))


def _pick_batch_tile(n, per_image_bytes):
    """Images per grid step: as big as the VMEM budget allows, but keep >= 2 grid steps so both
    v7x TensorCores stay busy, and require the tile to divide the batch exactly."""
    budget = _vmem_limit_bytes() // 6            # double-buffered ins+outs plus scratch headroom
    b = max(1, min(n // 2 if n >= 2 else 1, budget // max(int(per_image_bytes), 1)))
    b = min(b, n)
    while n % b:
        b -= 1
    return b


def _softplus(x):
    # numerically stable softplus (safe for large positive rho during training)
    return jnp.where(x > 20.0, x, jnp.log1p(jnp.exp(jnp.minimum(x, 20.0))))


# ----------------------- weight sampling + KL (once) -------------------------

def _sample_one(mu_ref, rho_ref, eps_ref, w_ref):
    mu = mu_ref[...]                                       # (K, cpad) f32
    sigma = _softplus(rho_ref[...])
    w_ref[...] = (mu + sigma * eps_ref[...]).astype(w_ref.dtype)
    # mean-field KL(q || N(PRIOR_MU, PRIOR_SIGMA)); padded rows/lanes contribute exactly 0
    kl = (math.log(PRIOR_SIGMA) - jnp.log(sigma)
          + (sigma * sigma + (mu - PRIOR_MU) ** 2) * (0.5 / (PRIOR_SIGMA ** 2))
          - 0.5)
    return jnp.sum(kl, axis=0, keepdims=True)              # (1, cpad) lane partials


def _sample_kernel(mu1, rho1, eps1, mu2, rho2, eps2, w1_ref, w2_ref, kl_ref):
    kl_ref[...] = (_sample_one(mu1, rho1, eps1, w1_ref)
                   + _sample_one(mu2, rho2, eps2, w2_ref))


def sample_weights(params):
    """One tiny pallas_call: sample both weight tensors (bf16) + combined KL lane partials."""
    mu1, mu2 = params["mu1"], params["mu2"]
    cpad = mu1.shape[-1]
    full = lambda shape: pl.BlockSpec(shape, lambda i: (0, 0))
    return pl.pallas_call(
        _sample_kernel,
        grid=(1,),
        in_specs=[full(mu1.shape), full(mu1.shape), full(mu1.shape),
                  full(mu2.shape), full(mu2.shape), full(mu2.shape)],
        out_specs=(full((mu1.shape[0], cpad)),
                   full((mu2.shape[0], cpad)),
                   full((1, cpad))),
        out_shape=(jax.ShapeDtypeStruct((mu1.shape[0], cpad), MXU_DTYPE),
                   jax.ShapeDtypeStruct((mu2.shape[0], cpad), MXU_DTYPE),
                   jax.ShapeDtypeStruct((1, cpad), jnp.float32)),
        compiler_params=pltpu.CompilerParams(
            dimension_semantics=("arbitrary",),
            vmem_limit_bytes=_vmem_limit_bytes()),
    )(params["mu1"], params["rho1"], params["eps1"],
      params["mu2"], params["rho2"], params["eps2"])


# ------------------------- conv1: im2col + single MXU matmul -----------------

def _conv1_kernel(x_ref, w_ref, y_ref, st_ref, *, stride, hout, wout, ksize, bsz):
    cin = x_ref.shape[-1]
    cpad = y_ref.shape[-1]
    m = hout * wout
    wmat = w_ref[...]                                            # (k*k*cin, cpad) bf16
    parts = []
    for b in range(bsz):
        taps = []
        for kh in range(ksize):
            ah, ph = divmod(kh, stride)
            for kw in range(ksize):
                aw, pw = divmod(kw, stride)
                taps.append(x_ref[b, ph * stride + pw,
                                  ah:ah + hout, aw:aw + wout, :])    # (hout, wout, cin)
        parts.append(jnp.concatenate(taps, axis=-1).reshape(m, ksize * ksize * cin))
    lhs = (parts[0] if bsz == 1 else jnp.concatenate(parts, axis=0)).astype(wmat.dtype)
    acc = jnp.dot(lhs, wmat, preferred_element_type=jnp.float32)     # (bsz*m, cpad) f32
    y_ref[...] = acc.reshape(bsz, hout, wout, cpad).astype(y_ref.dtype)
    # one combined (2, cpad) partial-stats store (sum / sum-of-squares) per grid step
    st_ref[0] = jnp.concatenate(
        [jnp.sum(acc, axis=0, keepdims=True),
         jnp.sum(acc * acc, axis=0, keepdims=True)], axis=0)


def bayes_conv1(x_nhwc, wk, *, stride):
    n, h, w, cin = x_nhwc.shape
    k, pad = 3, 1
    hout = (h + 2 * pad - k) // stride + 1
    wout = (w + 2 * pad - k) // stride + 1
    hp, wp = h + 2 * pad, w + 2 * pad
    assert hp % stride == 0 and wp % stride == 0
    hs, ws = hp // stride, wp // stride
    cpad = wk.shape[-1]

    # zero spatial pad + split into stride phases (metadata-only for stride 1):
    # x5[n, ph*stride+pw, a, b, :] == x_pad[n, stride*a+ph, stride*b+pw, :]
    xp = jnp.pad(x_nhwc, ((0, 0), (pad, pad), (pad, pad), (0, 0)))
    x5 = xp.reshape(n, hs, stride, ws, stride, cin).transpose(0, 2, 4, 1, 3, 5)
    x5 = x5.reshape(n, stride * stride, hs, ws, cin)

    bsz = _pick_batch_tile(
        n, hs * ws * stride * stride * cin * 4 + hout * wout * cpad * 2)
    steps = n // bsz
    kernel = functools.partial(_conv1_kernel, stride=stride, hout=hout, wout=wout,
                               ksize=k, bsz=bsz)
    y, st = pl.pallas_call(
        kernel,
        grid=(steps,),
        in_specs=[pl.BlockSpec((bsz, stride * stride, hs, ws, cin),
                               lambda i: (i, 0, 0, 0, 0)),
                  pl.BlockSpec(wk.shape, lambda i: (0, 0))],        # resident weight block
        out_specs=(pl.BlockSpec((bsz, hout, wout, cpad), lambda i: (i, 0, 0, 0)),
                   pl.BlockSpec((1, 2, cpad), lambda i: (i, 0, 0))),
        out_shape=(jax.ShapeDtypeStruct((n, hout, wout, cpad), MXU_DTYPE),
                   jax.ShapeDtypeStruct((steps, 2, cpad), jnp.float32)),
        compiler_params=pltpu.CompilerParams(
            dimension_semantics=("parallel",),
            vmem_limit_bytes=_vmem_limit_bytes()),
    )(x5, wk)
    return y, st


# --------------- conv2 with BN1+ReLU fused into its input path ---------------

def _conv2_kernel(y1_ref, bn_ref, w_ref, y_ref, st_ref, pad_ref, *, hh, ww, bsz):
    cpad = y_ref.shape[-1]
    m = hh * ww
    scale = bn_ref[0:1, :].reshape(1, 1, 1, cpad)
    shift = bn_ref[1:2, :].reshape(1, 1, 1, cpad)
    # fused BN1 (batch stats folded on host, affine included) + ReLU on conv1's bf16 output
    act = jnp.maximum(y1_ref[...].astype(jnp.float32) * scale + shift, 0.0)
    # zero-padded activation in a VMEM scratch; input stays lane-dense (no 128 -> planes slice)
    pad_ref[...] = jnp.zeros(pad_ref.shape, pad_ref.dtype)
    pad_ref[:, 1:hh + 1, 1:ww + 1, :] = act.astype(pad_ref.dtype)
    wmat = w_ref[...]                                            # (9*cpad, cpad) bf16
    parts = []
    for b in range(bsz):
        taps = []
        for kh in range(3):
            for kw in range(3):
                taps.append(pad_ref[b, kh:kh + hh, kw:kw + ww, :])   # (hh, ww, cpad)
        parts.append(jnp.concatenate(taps, axis=-1).reshape(m, 9 * cpad))
    lhs = parts[0] if bsz == 1 else jnp.concatenate(parts, axis=0)
    acc = jnp.dot(lhs, wmat, preferred_element_type=jnp.float32)     # (bsz*m, cpad) f32
    y_ref[...] = acc.reshape(bsz, hh, ww, cpad).astype(y_ref.dtype)
    st_ref[0] = jnp.concatenate(
        [jnp.sum(acc, axis=0, keepdims=True),
         jnp.sum(acc * acc, axis=0, keepdims=True)], axis=0)


def bayes_conv2(y1, bn1, wk):
    n, hh, ww, cpad = y1.shape
    bsz = _pick_batch_tile(
        n, hh * ww * cpad * (2 + 2) + (hh + 2) * (ww + 2) * cpad * 2)
    steps = n // bsz
    kernel = functools.partial(_conv2_kernel, hh=hh, ww=ww, bsz=bsz)
    y, st = pl.pallas_call(
        kernel,
        grid=(steps,),
        in_specs=[pl.BlockSpec((bsz, hh, ww, cpad), lambda i: (i, 0, 0, 0)),
                  pl.BlockSpec((2, cpad), lambda i: (0, 0)),
                  pl.BlockSpec(wk.shape, lambda i: (0, 0))],
        out_specs=(pl.BlockSpec((bsz, hh, ww, cpad), lambda i: (i, 0, 0, 0)),
                   pl.BlockSpec((1, 2, cpad), lambda i: (i, 0, 0))),
        out_shape=(jax.ShapeDtypeStruct((n, hh, ww, cpad), MXU_DTYPE),
                   jax.ShapeDtypeStruct((steps, 2, cpad), jnp.float32)),
        scratch_shapes=[pltpu.VMEM((bsz, hh + 2, ww + 2, cpad), MXU_DTYPE)],
        compiler_params=pltpu.CompilerParams(
            dimension_semantics=("parallel",),
            vmem_limit_bytes=_vmem_limit_bytes()),
    )(y1, bn1, wk)
    return y, st


# -------------------- BN fold (tiny XLA) + BN2/add/ReLU kernel ---------------

def bn_fold(stats, count, gamma, beta):
    """Fold training-mode batch statistics + affine into (scale, shift), shape (2, cpad)."""
    cpad = stats.shape[-1]
    s = jnp.sum(stats, axis=0)                         # (2, cpad)
    mean = s[0] / count
    var = jnp.maximum(s[1] / count - mean * mean, 0.0)  # biased var (PyTorch BN training mode)
    inv_std = jax.lax.rsqrt(var + BN_EPS)
    g = jnp.pad(gamma.astype(jnp.float32), (0, cpad - gamma.shape[0]))
    b = jnp.pad(beta.astype(jnp.float32), (0, cpad - beta.shape[0]))
    scale = g * inv_std
    shift = b - mean * scale
    return jnp.stack([scale, shift], axis=0)


def _bn2_add_relu_kernel(y_ref, bn_ref, sc_ref, o_ref):
    cpad = y_ref.shape[-1]
    scale = bn_ref[0:1, :].reshape(1, 1, 1, cpad)
    shift = bn_ref[1:2, :].reshape(1, 1, 1, cpad)
    o_ref[...] = jnp.maximum(
        y_ref[...].astype(jnp.float32) * scale + shift + sc_ref[...].astype(jnp.float32),
        0.0)


def bn2_add_relu(y2, bn2, sc):
    n, hh, ww, cpad = y2.shape
    bsz = _pick_batch_tile(n, hh * ww * cpad * (2 + 4 + 4))
    steps = n // bsz
    return pl.pallas_call(
        _bn2_add_relu_kernel,
        grid=(steps,),
        in_specs=[pl.BlockSpec((bsz, hh, ww, cpad), lambda i: (i, 0, 0, 0)),
                  pl.BlockSpec((2, cpad), lambda i: (0, 0)),
                  pl.BlockSpec((bsz, hh, ww, cpad), lambda i: (i, 0, 0, 0))],
        out_specs=pl.BlockSpec((bsz, hh, ww, cpad), lambda i: (i, 0, 0, 0)),
        out_shape=jax.ShapeDtypeStruct((n, hh, ww, cpad), jnp.float32),
        compiler_params=pltpu.CompilerParams(
            dimension_semantics=("parallel",),
            vmem_limit_bytes=_vmem_limit_bytes()),
    )(y2, bn2, sc)


# ------------------------------ parameter prep -------------------------------

def _prep_conv_param(a, *, pad_cin, fill=0.0):
    """(Cout, Cin, k, k) -> (k*k*Cin_pad, Cout_pad): im2col weight rows (tap-major, cin-minor),
    lane-padded output channels.  Padded entries use `fill`."""
    cout, cin, k, _ = a.shape
    cpad = -(-cout // LANES) * LANES
    cin_p = -(-cin // LANES) * LANES if pad_cin else cin
    a = jnp.transpose(a, (2, 3, 1, 0))                              # (k, k, cin, cout)
    a = jnp.pad(a, ((0, 0), (0, 0), (0, cin_p - cin), (0, cpad - cout)),
                constant_values=fill)
    return a.reshape(k * k * cin_p, cpad).astype(jnp.float32)


def prepare_params(raw, planes):
    """Pre-transpose / pad the variational parameters once, outside the jit.  conv2's input
    channels are lane-padded so its input is conv1's lane-dense output (no relayout between the
    convs).  Padded entries: mu=0, eps=0, rho=RHO_KL_NEUTRAL -> weight 0 and KL contribution 0."""
    out = {}
    for tag, pad_cin in (("1", False), ("2", True)):
        out["mu" + tag] = _prep_conv_param(raw["mu" + tag], pad_cin=pad_cin, fill=0.0)
        out["rho" + tag] = _prep_conv_param(raw["rho" + tag], pad_cin=pad_cin,
                                            fill=RHO_KL_NEUTRAL)
        out["eps" + tag] = _prep_conv_param(raw["eps" + tag], pad_cin=pad_cin, fill=0.0)
    # fresh SyncBatchNorm affine (gamma=1, beta=0); learned values can be substituted here.
    for tag in ("1", "2"):
        out["gamma" + tag] = jnp.ones((planes,), jnp.float32)
        out["beta" + tag] = jnp.zeros((planes,), jnp.float32)
    return out


# ------------------------------ block forward --------------------------------

def basic_block_forward(x_nchw, params, *, stride, planes):
    x = jnp.transpose(x_nchw, (0, 2, 3, 1))               # NHWC, channels on lanes
    n, h, w, in_planes = x.shape

    # 1) sample W1/W2 + KL lane partials (once)
    wk1, wk2, kl_lanes = sample_weights(params)
    kl_sum = jnp.sum(kl_lanes)

    # 2) conv1 + BN1 partial stats; fold BN1 (training-mode batch stats + affine) on host
    y1, st1 = bayes_conv1(x, wk1, stride=stride)
    _, h1, w1, cpad = y1.shape
    bn1 = bn_fold(st1, n * h1 * w1, params["gamma1"], params["beta1"])

    # 3) conv2 with BN1+ReLU fused into its input path; BN2 partial stats
    y2, st2 = bayes_conv2(y1, bn1, wk2)
    bn2 = bn_fold(st2, n * h1 * w1, params["gamma2"], params["beta2"])

    # 4) option-'A' shortcut exactly as in the PyTorch module, then BN2 + add + ReLU
    if stride != 1 or in_planes != planes:
        pc = planes // 4
        sc = jnp.pad(x[:, ::2, ::2, :], ((0, 0), (0, 0), (0, 0), (pc, pc)))
    else:
        sc = x
    sc = jnp.pad(sc, ((0, 0), (0, 0), (0, 0), (0, cpad - sc.shape[-1])))

    out = bn2_add_relu(y2, bn2, sc)
    out = jnp.transpose(out[..., :planes], (0, 3, 1, 2))   # drop padded lanes, back to NCHW
    return out, kl_sum


# --------------------------------- main ---------------------------------------

if __name__ == "__main__":
    in_planes, planes, stride = 4, 8, 2
    N, H, W = 2, 16, 16

    key = jax.random.PRNGKey(0)
    ks = jax.random.split(key, 7)
    x = jax.random.normal(ks[0], (N, in_planes, H, W), jnp.float32)

    # bayesian_torch init: mu ~ N(0, 0.1), rho ~ N(-3, 0.1); eps is the reparameterization draw.
    raw = {
        "mu1": POSTERIOR_MU_INIT + 0.1 * jax.random.normal(ks[1], (planes, in_planes, 3, 3)),
        "rho1": POSTERIOR_RHO_INIT + 0.1 * jax.random.normal(ks[2], (planes, in_planes, 3, 3)),
        "eps1": jax.random.normal(ks[3], (planes, in_planes, 3, 3)),
        "mu2": POSTERIOR_MU_INIT + 0.1 * jax.random.normal(ks[4], (planes, planes, 3, 3)),
        "rho2": POSTERIOR_RHO_INIT + 0.1 * jax.random.normal(ks[5], (planes, planes, 3, 3)),
        "eps2": jax.random.normal(ks[6], (planes, planes, 3, 3)),
    }
    params = prepare_params(raw, planes)    # pre-transpose + pad once, outside the jit

    fwd = jax.jit(functools.partial(basic_block_forward, stride=stride, planes=planes))
    out, kl_sum = fwd(x, params)
    jax.block_until_ready((out, kl_sum))

    assert out.shape == (N, planes, H // stride, W // stride), out.shape
    assert kl_sum.shape == ()
    assert bool(jnp.all(jnp.isfinite(out))) and bool(jnp.isfinite(kl_sum))
    print("KERNEL_OK")
</pallas_src>

<mosaic_0001>
module attributes {stable_mosaic.version = 11 : i64} {
  func.func @_sample_kernel(%arg0: i32, %arg1: memref<36x128xf32, #tpu.memory_space<vmem>>, %arg2: memref<36x128xf32, #tpu.memory_space<vmem>>, %arg3: memref<36x128xf32, #tpu.memory_space<vmem>>, %arg4: memref<1152x128xf32, #tpu.memory_space<vmem>>, %arg5: memref<1152x128xf32, #tpu.memory_space<vmem>>, %arg6: memref<1152x128xf32, #tpu.memory_space<vmem>>, %arg7: memref<36x128xbf16, #tpu.memory_space<vmem>>, %arg8: memref<1152x128xbf16, #tpu.memory_space<vmem>>, %arg9: memref<1x128xf32, #tpu.memory_space<vmem>>) attributes {dimension_semantics = [#tpu.dimension_semantics<arbitrary>], iteration_bounds = array<i64: 1>, scalar_prefetch = 0 : i64, scratch_operands = 0 : i64, tpu.core_type = #tpu.core_type<tc>, window_params = [{pipeline_mode = #tpu.pipeline_mode<synchronous>, transform_indices = @transform_0, window_bounds = array<i64: 36, 128>}, {pipeline_mode = #tpu.pipeline_mode<synchronous>, transform_indices = @transform_1, window_bounds = array<i64: 36, 128>}, {pipeline_mode = #tpu.pipeline_mode<synchronous>, transform_indices = @transform_2, window_bounds = array<i64: 36, 128>}, {pipeline_mode = #tpu.pipeline_mode<synchronous>, transform_indices = @transform_3, window_bounds = array<i64: 1152, 128>}, {pipeline_mode = #tpu.pipeline_mode<synchronous>, transform_indices = @transform_4, window_bounds = array<i64: 1152, 128>}, {pipeline_mode = #tpu.pipeline_mode<synchronous>, transform_indices = @transform_5, window_bounds = array<i64: 1152, 128>}, {pipeline_mode = #tpu.pipeline_mode<synchronous>, transform_indices = @transform_6, window_bounds = array<i64: 36, 128>}, {pipeline_mode = #tpu.pipeline_mode<synchronous>, transform_indices = @transform_7, window_bounds = array<i64: 1152, 128>}, {pipeline_mode = #tpu.pipeline_mode<synchronous>, transform_indices = @transform_8, window_bounds = array<i64: 1, 128>}]} {
    %c0 = arith.constant 0 : index
    %c0_0 = arith.constant 0 : index
    %0 = vector.load %arg1[%c0, %c0_0] : memref<36x128xf32, #tpu.memory_space<vmem>>, vector<36x128xf32>
    %c0_1 = arith.constant 0 : index
    %c0_2 = arith.constant 0 : index
    %1 = vector.load %arg2[%c0_1, %c0_2] : memref<36x128xf32, #tpu.memory_space<vmem>>, vector<36x128xf32>
    %cst = arith.constant 2.000000e+01 : f32
    %2 = vector.broadcast %cst : f32 to vector<36x128xf32>
    %3 = arith.cmpf ogt, %1, %2 : vector<36x128xf32>
    %cst_3 = arith.constant 2.000000e+01 : f32
    %4 = vector.broadcast %cst_3 : f32 to vector<36x128xf32>
    %5 = arith.minimumf %1, %4 : vector<36x128xf32>
    %6 = math.exp %5 : vector<36x128xf32>
    %7 = math.log1p %6 : vector<36x128xf32>
    %8 = arith.select %3, %1, %7 : vector<36x128xi1>, vector<36x128xf32>
    %c0_4 = arith.constant 0 : index
    %c0_5 = arith.constant 0 : index
    %9 = vector.load %arg3[%c0_4, %c0_5] : memref<36x128xf32, #tpu.memory_space<vmem>>, vector<36x128xf32>
    %10 = arith.mulf %8, %9 : vector<36x128xf32>
    %11 = arith.addf %0, %10 : vector<36x128xf32>
    %12 = arith.truncf %11 : vector<36x128xf32> to vector<36x128xbf16>
    %c0_6 = arith.constant 0 : index
    %c0_7 = arith.constant 0 : index
    %13 = vector.load %arg7[%c0_6, %c0_7] : memref<36x128xbf16, #tpu.memory_space<vmem>>, vector<36x128xbf16>
    tpu.vector_store %arg7[%c0_6, %c0_7], %12 {strides = array<i32>} : memref<36x128xbf16, #tpu.memory_space<vmem>>, vector<36x128xbf16>,
    %14 = math.log %8 : vector<36x128xf32>
    %cst_8 = arith.constant 0.000000e+00 : f32
    %15 = vector.broadcast %cst_8 : f32 to vector<36x128xf32>
    %16 = arith.subf %15, %14 : vector<36x128xf32>
    %17 = arith.mulf %8, %8 : vector<36x128xf32>
    %cst_9 = arith.constant 0.000000e+00 : f32
    %18 = vector.broadcast %cst_9 : f32 to vector<36x128xf32>
    %19 = arith.subf %0, %18 : vector<36x128xf32>
    %20 = arith.mulf %19, %19 : vector<36x128xf32>
    %21 = arith.addf %17, %20 : vector<36x128xf32>
    %cst_10 = arith.constant 5.000000e-01 : f32
    %22 = vector.broadcast %cst_10 : f32 to vector<36x128xf32>
    %23 = arith.mulf %21, %22 : vector<36x128xf32>
    %24 = arith.addf %16, %23 : vector<36x128xf32>
    %cst_11 = arith.constant 5.000000e-01 : f32
    %25 = vector.broadcast %cst_11 : f32 to vector<36x128xf32>
    %26 = arith.subf %24, %25 : vector<36x128xf32>
    %cst_12 = arith.constant dense<0.000000e+00> : vector<128xf32>
    %27 = vector.multi_reduction <add>, %26, %cst_12 [0] : vector<36x128xf32> to vector<128xf32>
    %28 = vector.shape_cast %27 : vector<128xf32> to vector<1x128xf32>
    %c0_13 = arith.constant 0 : index
    %c0_14 = arith.constant 0 : index
    %29 = vector.load %arg4[%c0_13, %c0_14] : memref<1152x128xf32, #tpu.memory_space<vmem>>, vector<1152x128xf32>
    %c0_15 = arith.constant 0 : index
    %c0_16 = arith.constant 0 : index
    %30 = vector.load %arg5[%c0_15, %c0_16] : memref<1152x128xf32, #tpu.memory_space<vmem>>, vector<1152x128xf32>
    %cst_17 = arith.constant 2.000000e+01 : f32
    %31 = vector.broadcast %cst_17 : f32 to vector<1152x128xf32>
    %32 = arith.cmpf ogt, %30, %31 : vector<1152x128xf32>
    %cst_18 = arith.constant 2.000000e+01 : f32
    %33 = vector.broadcast %cst_18 : f32 to vector<1152x128xf32>
    %34 = arith.minimumf %30, %33 : vector<1152x128xf32>
    %35 = math.exp %34 : vector<1152x128xf32>
    %36 = math.log1p %35 : vector<1152x128xf32>
    %37 = arith.select %32, %30, %36 : vector<1152x128xi1>, vector<1152x128xf32>
    %c0_19 = arith.constant 0 : index
    %c0_20 = arith.constant 0 : index
    %38 = vector.load %arg6[%c0_19, %c0_20] : memref<1152x128xf32, #tpu.memory_space<vmem>>, vector<1152x128xf32>
    %39 = arith.mulf %37, %38 : vector<1152x128xf32>
    %40 = arith.addf %29, %39 : vector<1152x128xf32>
    %41 = arith.truncf %40 : vector<1152x128xf32> to vector<1152x128xbf16>
    %c0_21 = arith.constant 0 : index
    %c0_22 = arith.constant 0 : index
    %42 = vector.load %arg8[%c0_21, %c0_22] : memref<1152x128xbf16, #tpu.memory_space<vmem>>, vector<1152x128xbf16>
    tpu.vector_store %arg8[%c0_21, %c0_22], %41 {strides = array<i32>} : memref<1152x128xbf16, #tpu.memory_space<vmem>>, vector<1152x128xbf16>,
    %43 = math.log %37 : vector<1152x128xf32>
    %cst_23 = arith.constant 0.000000e+00 : f32
    %44 = vector.broadcast %cst_23 : f32 to vector<1152x128xf32>
    %45 = arith.subf %44, %43 : vector<1152x128xf32>
    %46 = arith.mulf %37, %37 : vector<1152x128xf32>
    %cst_24 = arith.constant 0.000000e+00 : f32
    %47 = vector.broadcast %cst_24 : f32 to vector<1152x128xf32>
    %48 = arith.subf %29, %47 : vector<1152x128xf32>
    %49 = arith.mulf %48, %48 : vector<1152x128xf32>
    %50 = arith.addf %46, %49 : vector<1152x128xf32>
    %cst_25 = arith.constant 5.000000e-01 : f32
    %51 = vector.broadcast %cst_25 : f32 to vector<1152x128xf32>
    %52 = arith.mulf %50, %51 : vector<1152x128xf32>
    %53 = arith.addf %45, %52 : vector<1152x128xf32>
    %cst_26 = arith.constant 5.000000e-01 : f32
    %54 = vector.broadcast %cst_26 : f32 to vector<1152x128xf32>
    %55 = arith.subf %53, %54 : vector<1152x128xf32>
    %cst_27 = arith.constant dense<0.000000e+00> : vector<128xf32>
    %56 = vector.multi_reduction <add>, %55, %cst_27 [0] : vector<1152x128xf32> to vector<128xf32>
    %57 = vector.shape_cast %56 : vector<128xf32> to vector<1x128xf32>
    %58 = arith.addf %28, %57 : vector<1x128xf32>
    %c0_28 = arith.constant 0 : index
    %c0_29 = arith.constant 0 : index
    %59 = vector.load %arg9[%c0_28, %c0_29] : memref<1x128xf32, #tpu.memory_space<vmem>>, vector<1x128xf32>
    tpu.vector_store %arg9[%c0_28, %c0_29], %58 {strides = array<i32>} : memref<1x128xf32, #tpu.memory_space<vmem>>, vector<1x128xf32>,
    return
  }
  func.func @transform_0(%arg0: i32) -> (i32, i32) {
    %c0_i32 = arith.constant 0 : i32
    %c0_i32_0 = arith.constant 0 : i32
    %c0_i32_1 = arith.constant 0 : i32
    return %c0_i32, %c0_i32_0 : i32, i32
  }
  func.func @transform_1(%arg0: i32) -> (i32, i32) {
    %c0_i32 = arith.constant 0 : i32
    %c0_i32_0 = arith.constant 0 : i32
    %c0_i32_1 = arith.constant 0 : i32
    return %c0_i32, %c0_i32_0 : i32, i32
  }
  func.func @transform_2(%arg0: i32) -> (i32, i32) {
    %c0_i32 = arith.constant 0 : i32
    %c0_i32_0 = arith.constant 0 : i32
    %c0_i32_1 = arith.constant 0 : i32
    return %c0_i32, %c0_i32_0 : i32, i32
  }
  func.func @transform_3(%arg0: i32) -> (i32, i32) {
    %c0_i32 = arith.constant 0 : i32
    %c0_i32_0 = arith.constant 0 : i32
    %c0_i32_1 = arith.constant 0 : i32
    return %c0_i32, %c0_i32_0 : i32, i32
  }
  func.func @transform_4(%arg0: i32) -> (i32, i32) {
    %c0_i32 = arith.constant 0 : i32
    %c0_i32_0 = arith.constant 0 : i32
    %c0_i32_1 = arith.constant 0 : i32
    return %c0_i32, %c0_i32_0 : i32, i32
  }
  func.func @transform_5(%arg0: i32) -> (i32, i32) {
    %c0_i32 = arith.constant 0 : i32
    %c0_i32_0 = arith.constant 0 : i32
    %c0_i32_1 = arith.constant 0 : i32
    return %c0_i32, %c0_i32_0 : i32, i32
  }
  func.func @transform_6(%arg0: i32) -> (i32, i32) {
    %c0_i32 = arith.constant 0 : i32
    %c0_i32_0 = arith.constant 0 : i32
    %c0_i32_1 = arith.constant 0 : i32
    return %c0_i32, %c0_i32_0 : i32, i32
  }
  func.func @transform_7(%arg0: i32) -> (i32, i32) {
    %c0_i32 = arith.constant 0 : i32
    %c0_i32_0 = arith.constant 0 : i32
    %c0_i32_1 = arith.constant 0 : i32
    return %c0_i32, %c0_i32_0 : i32, i32
  }
  func.func @transform_8(%arg0: i32) -> (i32, i32) {
    %c0_i32 = arith.constant 0 : i32
    %c0_i32_0 = arith.constant 0 : i32
    %c0_i32_1 = arith.constant 0 : i32
    return %c0_i32, %c0_i32_0 : i32, i32
  }
}

module attributes {stable_mosaic.version = 11 : i64} {
  func.func @_conv1_kernel(%arg0: i32, %arg1: memref<1x4x9x9x4xf32, #tpu.memory_space<vmem>>, %arg2: memref<36x128xbf16, #tpu.memory_space<vmem>>, %arg3: memref<1x8x8x128xbf16, #tpu.memory_space<vmem>>, %arg4: memref<1x2x128xf32, #tpu.memory_space<vmem>>) attributes {dimension_semantics = [#tpu.dimension_semantics<parallel>], iteration_bounds = array<i64: 2>, scalar_prefetch = 0 : i64, scratch_operands = 0 : i64, tpu.core_type = #tpu.core_type<tc>, window_params = [{transform_indices = @transform_0, window_bounds = array<i64: 1, 4, 9, 9, 4>}, {pipeline_mode = #tpu.pipeline_mode<synchronous>, transform_indices = @transform_1, window_bounds = array<i64: 36, 128>}, {transform_indices = @transform_2, window_bounds = array<i64: 1, 8, 8, 128>}, {transform_indices = @transform_3, window_bounds = array<i64: 1, 2, 128>}]} {
    %c0 = arith.constant 0 : index
    %c0_0 = arith.constant 0 : index
    %0 = vector.load %arg2[%c0, %c0_0] : memref<36x128xbf16, #tpu.memory_space<vmem>>, vector<36x128xbf16>
    %c0_1 = arith.constant 0 : index
    %c0_2 = arith.constant 0 : index
    %c0_3 = arith.constant 0 : index
    %c0_4 = arith.constant 0 : index
    %c0_5 = arith.constant 0 : index
    %1 = vector.load %arg1[%c0_1, %c0_2, %c0_3, %c0_4, %c0_5] : memref<1x4x9x9x4xf32, #tpu.memory_space<vmem>>, vector<1x1x8x8x4xf32>
    %2 = vector.shape_cast %1 : vector<1x1x8x8x4xf32> to vector<8x8x4xf32>
    %c0_6 = arith.constant 0 : index
    %c1 = arith.constant 1 : index
    %c0_7 = arith.constant 0 : index
    %c0_8 = arith.constant 0 : index
    %c0_9 = arith.constant 0 : index
    %3 = vector.load %arg1[%c0_6, %c1, %c0_7, %c0_8, %c0_9] : memref<1x4x9x9x4xf32, #tpu.memory_space<vmem>>, vector<1x1x8x8x4xf32>
    %4 = vector.shape_cast %3 : vector<1x1x8x8x4xf32> to vector<8x8x4xf32>
    %c0_10 = arith.constant 0 : index
    %c0_11 = arith.constant 0 : index
    %c0_12 = arith.constant 0 : index
    %c1_13 = arith.constant 1 : index
    %c0_14 = arith.constant 0 : index
    %5 = vector.load %arg1[%c0_10, %c0_11, %c0_12, %c1_13, %c0_14] : memref<1x4x9x9x4xf32, #tpu.memory_space<vmem>>, vector<1x1x8x8x4xf32>
    %6 = vector.shape_cast %5 : vector<1x1x8x8x4xf32> to vector<8x8x4xf32>
    %c0_15 = arith.constant 0 : index
    %c2 = arith.constant 2 : index
    %c0_16 = arith.constant 0 : index
    %c0_17 = arith.constant 0 : index
    %c0_18 = arith.constant 0 : index
    %7 = vector.load %arg1[%c0_15, %c2, %c0_16, %c0_17, %c0_18] : memref<1x4x9x9x4xf32, #tpu.memory_space<vmem>>, vector<1x1x8x8x4xf32>
    %8 = vector.shape_cast %7 : vector<1x1x8x8x4xf32> to vector<8x8x4xf32>
    %c0_19 = arith.constant 0 : index
    %c3 = arith.constant 3 : index
    %c0_20 = arith.constant 0 : index
    %c0_21 = arith.constant 0 : index
    %c0_22 = arith.constant 0 : index
    %9 = vector.load %arg1[%c0_19, %c3, %c0_20, %c0_21, %c0_22] : memref<1x4x9x9x4xf32, #tpu.memory_space<vmem>>, vector<1x1x8x8x4xf32>
    %10 = vector.shape_cast %9 : vector<1x1x8x8x4xf32> to vector<8x8x4xf32>
    %c0_23 = arith.constant 0 : index
    %c2_24 = arith.constant 2 : index
    %c0_25 = arith.constant 0 : index
    %c1_26 = arith.constant 1 : index
    %c0_27 = arith.constant 0 : index
    %11 = vector.load %arg1[%c0_23, %c2_24, %c0_25, %c1_26, %c0_27] : memref<1x4x9x9x4xf32, #tpu.memory_space<vmem>>, vector<1x1x8x8x4xf32>
    %12 = vector.shape_cast %11 : vector<1x1x8x8x4xf32> to vector<8x8x4xf32>
    %c0_28 = arith.constant 0 : index
    %c0_29 = arith.constant 0 : index
    %c1_30 = arith.constant 1 : index
    %c0_31 = arith.constant 0 : index
    %c0_32 = arith.constant 0 : index
    %13 = vector.load %arg1[%c0_28, %c0_29, %c1_30, %c0_31, %c0_32] : memref<1x4x9x9x4xf32, #tpu.memory_space<vmem>>, vector<1x1x8x8x4xf32>
    %14 = vector.shape_cast %13 : vector<1x1x8x8x4xf32> to vector<8x8x4xf32>
    %c0_33 = arith.constant 0 : index
    %c1_34 = arith.constant 1 : index
    %c1_35 = arith.constant 1 : index
    %c0_36 = arith.constant 0 : index
    %c0_37 = arith.constant 0 : index
    %15 = vector.load %arg1[%c0_33, %c1_34, %c1_35, %c0_36, %c0_37] : memref<1x4x9x9x4xf32, #tpu.memory_space<vmem>>, vector<1x1x8x8x4xf32>
    %16 = vector.shape_cast %15 : vector<1x1x8x8x4xf32> to vector<8x8x4xf32>
    %c0_38 = arith.constant 0 : index
    %c0_39 = arith.constant 0 : index
    %c1_40 = arith.constant 1 : index
    %c1_41 = arith.constant 1 : index
    %c0_42 = arith.constant 0 : index
    %17 = vector.load %arg1[%c0_38, %c0_39, %c1_40, %c1_41, %c0_42] : memref<1x4x9x9x4xf32, #tpu.memory_space<vmem>>, vector<1x1x8x8x4xf32>
    %18 = vector.shape_cast %17 : vector<1x1x8x8x4xf32> to vector<8x8x4xf32>
    %19 = tpu.concatenate %2, %4, %6, %8, %10, %12, %14, %16, %18 in 2 : vector<8x8x4xf32>, vector<8x8x4xf32>, vector<8x8x4xf32>, vector<8x8x4xf32>, vector<8x8x4xf32>, vector<8x8x4xf32>, vector<8x8x4xf32>, vector<8x8x4xf32>, vector<8x8x4xf32> -> vector<8x8x36xf32>
    %20 = vector.shape_cast %19 : vector<8x8x36xf32> to vector<64x36xf32>
    %21 = arith.truncf %20 : vector<64x36xf32> to vector<64x36xbf16>
    %cst = arith.constant dense<0.000000e+00> : vector<64x128xf32>
    %22 = tpu.matmul %21, %0, %cst {dimension_numbers = #tpu.dot_dimension_numbers<[1], [0], [0], [1], [0, 0, 1, 1], [], []>} : vector<64x36xbf16>, vector<36x128xbf16>, vector<64x128xf32> -> vector<64x128xf32>
    %23 = vector.shape_cast %22 : vector<64x128xf32> to vector<1x8x8x128xf32>
    %24 = arith.truncf %23 : vector<1x8x8x128xf32> to vector<1x8x8x128xbf16>
    %c0_43 = arith.constant 0 : index
    %c0_44 = arith.constant 0 : index
    %c0_45 = arith.constant 0 : index
    %c0_46 = arith.constant 0 : index
    %25 = vector.load %arg3[%c0_43, %c0_44, %c0_45, %c0_46] : memref<1x8x8x128xbf16, #tpu.memory_space<vmem>>, vector<1x8x8x128xbf16>
    tpu.vector_store %arg3[%c0_43, %c0_44, %c0_45, %c0_46], %24 {strides = array<i32>} : memref<1x8x8x128xbf16, #tpu.memory_space<vmem>>, vector<1x8x8x128xbf16>,
    %cst_47 = arith.constant dense<0.000000e+00> : vector<128xf32>
    %26 = vector.multi_reduction <add>, %22, %cst_47 [0] : vector<64x128xf32> to vector<128xf32>
    %27 = vector.shape_cast %26 : vector<128xf32> to vector<1x128xf32>
    %28 = arith.mulf %22, %22 : vector<64x128xf32>
    %cst_48 = arith.constant dense<0.000000e+00> : vector<128xf32>
    %29 = vector.multi_reduction <add>, %28, %cst_48 [0] : vector<64x128xf32> to vector<128xf32>
    %30 = vector.shape_cast %29 : vector<128xf32> to vector<1x128xf32>
    %31 = tpu.concatenate %27, %30 in 0 : vector<1x128xf32>, vector<1x128xf32> -> vector<2x128xf32>
    %c0_49 = arith.constant 0 : index
    %c0_50 = arith.constant 0 : index
    %c0_51 = arith.constant 0 : index
    %32 = vector.load %arg4[%c0_49, %c0_50, %c0_51] : memref<1x2x128xf32, #tpu.memory_space<vmem>>, vector<1x2x128xf32>
    %33 = vector.shape_cast %32 : vector<1x2x128xf32> to vector<2x128xf32>
    %34 = vector.shape_cast %31 : vector<2x128xf32> to vector<1x2x128xf32>
    tpu.vector_store %arg4[%c0_49, %c0_50, %c0_51], %34 {strides = array<i32>} : memref<1x2x128xf32, #tpu.memory_space<vmem>>, vector<1x2x128xf32>,
    return
  }
  func.func @transform_0(%arg0: i32) -> (i32, i32, i32, i32, i32) {
    %c0_i32 = arith.constant 0 : i32
    %c0_i32_0 = arith.constant 0 : i32
    %c0_i32_1 = arith.constant 0 : i32
    %c0_i32_2 = arith.constant 0 : i32
    %c0_i32_3 = arith.constant 0 : i32
    return %arg0, %c0_i32, %c0_i32_0, %c0_i32_1, %c0_i32_2 : i32, i32, i32, i32, i32
  }
  func.func @transform_1(%arg0: i32) -> (i32, i32) {
    %c0_i32 = arith.constant 0 : i32
    %c0_i32_0 = arith.constant 0 : i32
    %c0_i32_1 = arith.constant 0 : i32
    return %c0_i32, %c0_i32_0 : i32, i32
  }
  func.func @transform_2(%arg0: i32) -> (i32, i32, i32, i32) {
    %c0_i32 = arith.constant 0 : i32
    %c0_i32_0 = arith.constant 0 : i32
    %c0_i32_1 = arith.constant 0 : i32
    %c0_i32_2 = arith.constant 0 : i32
    return %arg0, %c0_i32, %c0_i32_0, %c0_i32_1 : i32, i32, i32, i32
  }
  func.func @transform_3(%arg0: i32) -> (i32, i32, i32) {
    %c0_i32 = arith.constant 0 : i32
    %c0_i32_0 = arith.constant 0 : i32
    %c0_i32_1 = arith.constant 0 : i32
    return %arg0, %c0_i32, %c0_i32_0 : i32, i32, i32
  }
}

module attributes {stable_mosaic.version = 11 : i64} {
  func.func @_conv2_kernel(%arg0: i32, %arg1: memref<1x8x8x128xbf16, #tpu.memory_space<vmem>>, %arg2: memref<2x128xf32, #tpu.memory_space<vmem>>, %arg3: memref<1152x128xbf16, #tpu.memory_space<vmem>>, %arg4: memref<1x8x8x128xbf16, #tpu.memory_space<vmem>>, %arg5: memref<1x2x128xf32, #tpu.memory_space<vmem>>, %arg6: memref<1x10x10x128xbf16, #tpu.memory_space<vmem>>) attributes {dimension_semantics = [#tpu.dimension_semantics<parallel>], iteration_bounds = array<i64: 2>, scalar_prefetch = 0 : i64, scratch_operands = 1 : i64, tpu.core_type = #tpu.core_type<tc>, window_params = [{transform_indices = @transform_0, window_bounds = array<i64: 1, 8, 8, 128>}, {pipeline_mode = #tpu.pipeline_mode<synchronous>, transform_indices = @transform_1, window_bounds = array<i64: 2, 128>}, {pipeline_mode = #tpu.pipeline_mode<synchronous>, transform_indices = @transform_2, window_bounds = array<i64: 1152, 128>}, {transform_indices = @transform_3, window_bounds = array<i64: 1, 8, 8, 128>}, {transform_indices = @transform_4, window_bounds = array<i64: 1, 2, 128>}]} {
    %c0 = arith.constant 0 : index
    %c0_0 = arith.constant 0 : index
    %0 = vector.load %arg2[%c0, %c0_0] : memref<2x128xf32, #tpu.memory_space<vmem>>, vector<1x128xf32>
    %1 = vector.shape_cast %0 : vector<1x128xf32> to vector<1x1x1x128xf32>
    %c1 = arith.constant 1 : index
    %c0_1 = arith.constant 0 : index
    %2 = vector.load %arg2[%c1, %c0_1] : memref<2x128xf32, #tpu.memory_space<vmem>>, vector<1x128xf32>
    %3 = vector.shape_cast %2 : vector<1x128xf32> to vector<1x1x1x128xf32>
    %c0_2 = arith.constant 0 : index
    %c0_3 = arith.constant 0 : index
    %c0_4 = arith.constant 0 : index
    %c0_5 = arith.constant 0 : index
    %4 = vector.load %arg1[%c0_2, %c0_3, %c0_4, %c0_5] : memref<1x8x8x128xbf16, #tpu.memory_space<vmem>>, vector<1x8x8x128xbf16>
    %5 = arith.extf %4 : vector<1x8x8x128xbf16> to vector<1x8x8x128xf32>
    %6 = vector.broadcast %1 : vector<1x1x1x128xf32> to vector<1x8x8x128xf32>
    %7 = arith.mulf %5, %6 : vector<1x8x8x128xf32>
    %8 = vector.broadcast %3 : vector<1x1x1x128xf32> to vector<1x8x8x128xf32>
    %9 = arith.addf %7, %8 : vector<1x8x8x128xf32>
    %cst = arith.constant 0.000000e+00 : f32
    %10 = vector.broadcast %cst : f32 to vector<1x8x8x128xf32>
    %11 = arith.maximumf %9, %10 : vector<1x8x8x128xf32>
    %cst_6 = arith.constant 0.000000e+00 : bf16
    %12 = vector.broadcast %cst_6 : bf16 to vector<1x10x10x128xbf16>
    %c0_7 = arith.constant 0 : index
    %c0_8 = arith.constant 0 : index
    %c0_9 = arith.constant 0 : index
    %c0_10 = arith.constant 0 : index
    %13 = vector.load %arg6[%c0_7, %c0_8, %c0_9, %c0_10] : memref<1x10x10x128xbf16, #tpu.memory_space<vmem>>, vector<1x10x10x128xbf16>
    tpu.vector_store %arg6[%c0_7, %c0_8, %c0_9, %c0_10], %12 {strides = array<i32>} : memref<1x10x10x128xbf16, #tpu.memory_space<vmem>>, vector<1x10x10x128xbf16>,
    %14 = arith.truncf %11 : vector<1x8x8x128xf32> to vector<1x8x8x128xbf16>
    %c0_11 = arith.constant 0 : index
    %c1_12 = arith.constant 1 : index
    %c1_13 = arith.constant 1 : index
    %c0_14 = arith.constant 0 : index
    %15 = vector.load %arg6[%c0_11, %c1_12, %c1_13, %c0_14] : memref<1x10x10x128xbf16, #tpu.memory_space<vmem>>, vector<1x8x8x128xbf16>
    tpu.vector_store %arg6[%c0_11, %c1_12, %c1_13, %c0_14], %14 {strides = array<i32>} : memref<1x10x10x128xbf16, #tpu.memory_space<vmem>>, vector<1x8x8x128xbf16>,
    %c0_15 = arith.constant 0 : index
    %c0_16 = arith.constant 0 : index
    %16 = vector.load %arg3[%c0_15, %c0_16] : memref<1152x128xbf16, #tpu.memory_space<vmem>>, vector<1152x128xbf16>
    %c0_17 = arith.constant 0 : index
    %c0_18 = arith.constant 0 : index
    %c0_19 = arith.constant 0 : index
    %c0_20 = arith.constant 0 : index
    %17 = vector.load %arg6[%c0_17, %c0_18, %c0_19, %c0_20] : memref<1x10x10x128xbf16, #tpu.memory_space<vmem>>, vector<1x8x8x128xbf16>
    %18 = vector.shape_cast %17 : vector<1x8x8x128xbf16> to vector<8x8x128xbf16>
    %c0_21 = arith.constant 0 : index
    %c0_22 = arith.constant 0 : index
    %c1_23 = arith.constant 1 : index
    %c0_24 = arith.constant 0 : index
    %19 = vector.load %arg6[%c0_21, %c0_22, %c1_23, %c0_24] : memref<1x10x10x128xbf16, #tpu.memory_space<vmem>>, vector<1x8x8x128xbf16>
    %20 = vector.shape_cast %19 : vector<1x8x8x128xbf16> to vector<8x8x128xbf16>
    %c0_25 = arith.constant 0 : index
    %c0_26 = arith.constant 0 : index
    %c2 = arith.constant 2 : index
    %c0_27 = arith.constant 0 : index
    %21 = vector.load %arg6[%c0_25, %c0_26, %c2, %c0_27] : memref<1x10x10x128xbf16, #tpu.memory_space<vmem>>, vector<1x8x8x128xbf16>
    %22 = vector.shape_cast %21 : vector<1x8x8x128xbf16> to vector<8x8x128xbf16>
    %c0_28 = arith.constant 0 : index
    %c1_29 = arith.constant 1 : index
    %c0_30 = arith.constant 0 : index
    %c0_31 = arith.constant 0 : index
    %23 = vector.load %arg6[%c0_28, %c1_29, %c0_30, %c0_31] : memref<1x10x10x128xbf16, #tpu.memory_space<vmem>>, vector<1x8x8x128xbf16>
    %24 = vector.shape_cast %23 : vector<1x8x8x128xbf16> to vector<8x8x128xbf16>
    %c0_32 = arith.constant 0 : index
    %c1_33 = arith.constant 1 : index
    %c1_34 = arith.constant 1 : index
    %c0_35 = arith.constant 0 : index
    %25 = vector.load %arg6[%c0_32, %c1_33, %c1_34, %c0_35] : memref<1x10x10x128xbf16, #tpu.memory_space<vmem>>, vector<1x8x8x128xbf16>
    %26 = vector.shape_cast %25 : vector<1x8x8x128xbf16> to vector<8x8x128xbf16>
    %c0_36 = arith.constant 0 : index
    %c1_37 = arith.constant 1 : index
    %c2_38 = arith.constant 2 : index
    %c0_39 = arith.constant 0 : index
    %27 = vector.load %arg6[%c0_36, %c1_37, %c2_38, %c0_39] : memref<1x10x10x128xbf16, #tpu.memory_space<vmem>>, vector<1x8x8x128xbf16>
    %28 = vector.shape_cast %27 : vector<1x8x8x128xbf16> to vector<8x8x128xbf16>
    %c0_40 = arith.constant 0 : index
    %c2_41 = arith.constant 2 : index
    %c0_42 = arith.constant 0 : index
    %c0_43 = arith.constant 0 : index
    %29 = vector.load %arg6[%c0_40, %c2_41, %c0_42, %c0_43] : memref<1x10x10x128xbf16, #tpu.memory_space<vmem>>, vector<1x8x8x128xbf16>
    %30 = vector.shape_cast %29 : vector<1x8x8x128xbf16> to vector<8x8x128xbf16>
    %c0_44 = arith.constant 0 : index
    %c2_45 = arith.constant 2 : index
    %c1_46 = arith.constant 1 : index
    %c0_47 = arith.constant 0 : index
    %31 = vector.load %arg6[%c0_44, %c2_45, %c1_46, %c0_47] : memref<1x10x10x128xbf16, #tpu.memory_space<vmem>>, vector<1x8x8x128xbf16>
    %32 = vector.shape_cast %31 : vector<1x8x8x128xbf16> to vector<8x8x128xbf16>
    %c0_48 = arith.constant 0 : index
    %c2_49 = arith.constant 2 : index
    %c2_50 = arith.constant 2 : index
    %c0_51 = arith.constant 0 : index
    %33 = vector.load %arg6[%c0_48, %c2_49, %c2_50, %c0_51] : memref<1x10x10x128xbf16, #tpu.memory_space<vmem>>, vector<1x8x8x128xbf16>
    %34 = vector.shape_cast %33 : vector<1x8x8x128xbf16> to vector<8x8x128xbf16>
    %35 = tpu.concatenate %18, %20, %22, %24, %26, %28, %30, %32, %34 in 2 : vector<8x8x128xbf16>, vector<8x8x128xbf16>, vector<8x8x128xbf16>, vector<8x8x128xbf16>, vector<8x8x128xbf16>, vector<8x8x128xbf16>, vector<8x8x128xbf16>, vector<8x8x128xbf16>, vector<8x8x128xbf16> -> vector<8x8x1152xbf16>
    %36 = vector.shape_cast %35 : vector<8x8x1152xbf16> to vector<64x1152xbf16>
    %cst_52 = arith.constant dense<0.000000e+00> : vector<64x128xf32>
    %37 = tpu.matmul %36, %16, %cst_52 {dimension_numbers = #tpu.dot_dimension_numbers<[1], [0], [0], [1], [0, 0, 1, 1], [], []>} : vector<64x1152xbf16>, vector<1152x128xbf16>, vector<64x128xf32> -> vector<64x128xf32>
    %38 = vector.shape_cast %37 : vector<64x128xf32> to vector<1x8x8x128xf32>
    %39 = arith.truncf %38 : vector<1x8x8x128xf32> to vector<1x8x8x128xbf16>
    %c0_53 = arith.constant 0 : index
    %c0_54 = arith.constant 0 : index
    %c0_55 = arith.constant 0 : index
    %c0_56 = arith.constant 0 : index
    %40 = vector.load %arg4[%c0_53, %c0_54, %c0_55, %c0_56] : memref<1x8x8x128xbf16, #tpu.memory_space<vmem>>, vector<1x8x8x128xbf16>
    tpu.vector_store %arg4[%c0_53, %c0_54, %c0_55, %c0_56], %39 {strides = array<i32>} : memref<1x8x8x128xbf16, #tpu.memory_space<vmem>>, vector<1x8x8x128xbf16>,
    %cst_57 = arith.constant dense<0.000000e+00> : vector<128xf32>
    %41 = vector.multi_reduction <add>, %37, %cst_57 [0] : vector<64x128xf32> to vector<128xf32>
    %42 = vector.shape_cast %41 : vector<128xf32> to vector<1x128xf32>
    %43 = arith.mulf %37, %37 : vector<64x128xf32>
    %cst_58 = arith.constant dense<0.000000e+00> : vector<128xf32>
    %44 = vector.multi_reduction <add>, %43, %cst_58 [0] : vector<64x128xf32> to vector<128xf32>
    %45 = vector.shape_cast %44 : vector<128xf32> to vector<1x128xf32>
    %46 = tpu.concatenate %42, %45 in 0 : vector<1x128xf32>, vector<1x128xf32> -> vector<2x128xf32>
    %c0_59 = arith.constant 0 : index
    %c0_60 = arith.constant 0 : index
    %c0_61 = arith.constant 0 : index
    %47 = vector.load %arg5[%c0_59, %c0_60, %c0_61] : memref<1x2x128xf32, #tpu.memory_space<vmem>>, vector<1x2x128xf32>
    %48 = vector.shape_cast %47 : vector<1x2x128xf32> to vector<2x128xf32>
    %49 = vector.shape_cast %46 : vector<2x128xf32> to vector<1x2x128xf32>
    tpu.vector_store %arg5[%c0_59, %c0_60, %c0_61], %49 {strides = array<i32>} : memref<1x2x128xf32, #tpu.memory_space<vmem>>, vector<1x2x128xf32>,
    return
  }
  func.func @transform_0(%arg0: i32) -> (i32, i32, i32, i32) {
    %c0_i32 = arith.constant 0 : i32
    %c0_i32_0 = arith.constant 0 : i32
    %c0_i32_1 = arith.constant 0 : i32
    %c0_i32_2 = arith.constant 0 : i32
    return %arg0, %c0_i32, %c0_i32_0, %c0_i32_1 : i32, i32, i32, i32
  }
  func.func @transform_1(%arg0: i32) -> (i32, i32) {
    %c0_i32 = arith.constant 0 : i32
    %c0_i32_0 = arith.constant 0 : i32
    %c0_i32_1 = arith.constant 0 : i32
    return %c0_i32, %c0_i32_0 : i32, i32
  }
  func.func @transform_2(%arg0: i32) -> (i32, i32) {
    %c0_i32 = arith.constant 0 : i32
    %c0_i32_0 = arith.constant 0 : i32
    %c0_i32_1 = arith.constant 0 : i32
    return %c0_i32, %c0_i32_0 : i32, i32
  }
  func.func @transform_3(%arg0: i32) -> (i32, i32, i32, i32) {
    %c0_i32 = arith.constant 0 : i32
    %c0_i32_0 = arith.constant 0 : i32
    %c0_i32_1 = arith.constant 0 : i32
    %c0_i32_2 = arith.constant 0 : i32
    return %arg0, %c0_i32, %c0_i32_0, %c0_i32_1 : i32, i32, i32, i32
  }
  func.func @transform_4(%arg0: i32) -> (i32, i32, i32) {
    %c0_i32 = arith.constant 0 : i32
    %c0_i32_0 = arith.constant 0 : i32
    %c0_i32_1 = arith.constant 0 : i32
    return %arg0, %c0_i32, %c0_i32_0 : i32, i32, i32
  }
}

module attributes {stable_mosaic.version = 11 : i64} {
  func.func @_bn2_add_relu_kernel(%arg0: i32, %arg1: memref<1x8x8x128xbf16, #tpu.memory_space<vmem>>, %arg2: memref<2x128xf32, #tpu.memory_space<vmem>>, %arg3: memref<1x8x8x128xf32, #tpu.memory_space<vmem>>, %arg4: memref<1x8x8x128xf32, #tpu.memory_space<vmem>>) attributes {dimension_semantics = [#tpu.dimension_semantics<parallel>], iteration_bounds = array<i64: 2>, scalar_prefetch = 0 : i64, scratch_operands = 0 : i64, tpu.core_type = #tpu.core_type<tc>, window_params = [{transform_indices = @transform_0, window_bounds = array<i64: 1, 8, 8, 128>}, {pipeline_mode = #tpu.pipeline_mode<synchronous>, transform_indices = @transform_1, window_bounds = array<i64: 2, 128>}, {transform_indices = @transform_2, window_bounds = array<i64: 1, 8, 8, 128>}, {transform_indices = @transform_3, window_bounds = array<i64: 1, 8, 8, 128>}]} {
    %c0 = arith.constant 0 : index
    %c0_0 = arith.constant 0 : index
    %0 = vector.load %arg2[%c0, %c0_0] : memref<2x128xf32, #tpu.memory_space<vmem>>, vector<1x128xf32>
    %1 = vector.shape_cast %0 : vector<1x128xf32> to vector<1x1x1x128xf32>
    %c1 = arith.constant 1 : index
    %c0_1 = arith.constant 0 : index
    %2 = vector.load %arg2[%c1, %c0_1] : memref<2x128xf32, #tpu.memory_space<vmem>>, vector<1x128xf32>
    %3 = vector.shape_cast %2 : vector<1x128xf32> to vector<1x1x1x128xf32>
    %c0_2 = arith.constant 0 : index
    %c0_3 = arith.constant 0 : index
    %c0_4 = arith.constant 0 : index
    %c0_5 = arith.constant 0 : index
    %4 = vector.load %arg1[%c0_2, %c0_3, %c0_4, %c0_5] : memref<1x8x8x128xbf16, #tpu.memory_space<vmem>>, vector<1x8x8x128xbf16>
    %5 = arith.extf %4 : vector<1x8x8x128xbf16> to vector<1x8x8x128xf32>
    %6 = vector.broadcast %1 : vector<1x1x1x128xf32> to vector<1x8x8x128xf32>
    %7 = arith.mulf %5, %6 : vector<1x8x8x128xf32>
    %8 = vector.broadcast %3 : vector<1x1x1x128xf32> to vector<1x8x8x128xf32>
    %9 = arith.addf %7, %8 : vector<1x8x8x128xf32>
    %c0_6 = arith.constant 0 : index
    %c0_7 = arith.constant 0 : index
    %c0_8 = arith.constant 0 : index
    %c0_9 = arith.constant 0 : index
    %10 = vector.load %arg3[%c0_6, %c0_7, %c0_8, %c0_9] : memref<1x8x8x128xf32, #tpu.memory_space<vmem>>, vector<1x8x8x128xf32>
    %11 = arith.addf %9, %10 : vector<1x8x8x128xf32>
    %cst = arith.constant 0.000000e+00 : f32
    %12 = vector.broadcast %cst : f32 to vector<1x8x8x128xf32>
    %13 = arith.maximumf %11, %12 : vector<1x8x8x128xf32>
    %c0_10 = arith.constant 0 : index
    %c0_11 = arith.constant 0 : index
    %c0_12 = arith.constant 0 : index
    %c0_13 = arith.constant 0 : index
    %14 = vector.load %arg4[%c0_10, %c0_11, %c0_12, %c0_13] : memref<1x8x8x128xf32, #tpu.memory_space<vmem>>, vector<1x8x8x128xf32>
    tpu.vector_store %arg4[%c0_10, %c0_11, %c0_12, %c0_13], %13 {strides = array<i32>} : memref<1x8x8x128xf32, #tpu.memory_space<vmem>>, vector<1x8x8x128xf32>,
    return
  }
  func.func @transform_0(%arg0: i32) -> (i32, i32, i32, i32) {
    %c0_i32 = arith.constant 0 : i32
    %c0_i32_0 = arith.constant 0 : i32
    %c0_i32_1 = arith.constant 0 : i32
    %c0_i32_2 = arith.constant 0 : i32
    return %arg0, %c0_i32, %c0_i32_0, %c0_i32_1 : i32, i32, i32, i32
  }
  func.func @transform_1(%arg0: i32) -> (i32, i32) {
    %c0_i32 = arith.constant 0 : i32
    %c0_i32_0 = arith.constant 0 : i32
    %c0_i32_1 = arith.constant 0 : i32
    return %c0_i32, %c0_i32_0 : i32, i32
  }
  func.func @transform_2(%arg0: i32) -> (i32, i32, i32, i32) {
    %c0_i32 = arith.constant 0 : i32
    %c0_i32_0 = arith.constant 0 : i32
    %c0_i32_1 = arith.constant 0 : i32
    %c0_i32_2 = arith.constant 0 : i32
    return %arg0, %c0_i32, %c0_i32_0, %c0_i32_1 : i32, i32, i32, i32
  }
  func.func @transform_3(%arg0: i32) -> (i32, i32, i32, i32) {
    %c0_i32 = arith.constant 0 : i32
    %c0_i32_0 = arith.constant 0 : i32
    %c0_i32_1 = arith.constant 0 : i32
    %c0_i32_2 = arith.constant 0 : i32
    return %arg0, %c0_i32, %c0_i32_0, %c0_i32_1 : i32, i32, i32, i32
  }
}

</mosaic_0001>

<llo_original>
// kernel: basic_block_forward.5
$region0: #{basic_block_forward.5}
  #allocation0 [shape = 'u32[]', space=smem, size = 0x4, offset = 0x4, fixed_abs, tag = 'smem constant byte address 0x4 - core index']
  #allocation1 [shape = 'u32[144,128]{1,0:T(1,128)}', space=vmem, size = 0x12000, scoped, tag = 'internal scratch']
  %s0 = inlined_call_operand.vmem [shape: f32[2,4,9,9,4], index: 0, kind: input, shape index: {}]
  %s1 = inlined_call_operand.vmem [shape: bf16[36,128], index: 1, kind: input, shape index: {}]
  %s2 = inlined_call_operand.vmem [shape: bf16[2,8,8,128], index: 2, kind: output, shape index: {0}]
  %s3 = inlined_call_operand.vmem [shape: f32[2,2,128], index: 3, kind: output, shape index: {1}]
  %4 = xla_tuple %s2, %s3
  %s5 = sld [smem:[#allocation0]]
  $region49: #{basic_block_forward.5} parent=0
    _
  %s7 = ssub.s32 1, %s5
  %s8 = scalar_select 0, %s7, %s5
  loop: start=0, step=1, limit=4
  $region2: #{basic_block_forward.5} parent=0 // loop_pre_header
    _
  $region3: #{basic_block_forward.5} parent=0 // loop_header
    %s10 = sphi 0, %s14
    %p11 = scmp.ge.s32.totalorder %s10, 4
    %s20 = sphi 0, %s22
    %s23 = sphi 0, %s20
    %s24 = sphi 0, %s23
    %s40 = sphi 0, %s24
    %s44 = sphi 0, %s44
    %s46 = sphi 0, %s44
    %s47 = sphi 0, %s46
    %s61 = sphi 0, %s47
    %s67 = sphi 0, %s69
    %s70 = sphi 0, %s67
    %s71 = sphi 0, %s70
    %s87 = sphi 0, %s71
    %s93 = sphi 0, %s95
    %s96 = sphi 0, %s93
    %s97 = sphi 0, %s96
    %s113 = sphi 0, %s97
  $region4: #{basic_block_forward.5} parent=0 // loop_header_branch
    %13 = sbr.rel (%p11) target = $region8
  $region5: #{basic_block_forward.5} parent=0 // loop_body
    %s15 = ssub.s32 %s10, 1
    %s16 = ssub.s32 %s10, 2
    %s17 = sadd.s32 %s10, 1
    %s18 = ssub.s32 %s10, %s17
    %p19 = scmp.eq.s32.totalorder %s18, 0
    %s21 = sadd.s32 %s20, 1
    %s22 = scalar_select %p19, %s20, %s21
    %p25 = pneg %p19
    %p26 = scmp.eq.s32.totalorder %s10, 1
    %p27 = por %p25, %p26
    %p28 = scmp.ne.s32.totalorder %s20, %s23
    %p29 = scmp.eq.s32.totalorder %s10, 0
    %p30 = por %p28, %p29
    %p31 = scmp.ne.s32.totalorder %s20, %s23
    %p32 = scmp.eq.s32.totalorder %s15, 1
    %p33 = por %p31, %p32
    %p34 = scmp.ne.s32.totalorder %s23, %s24
    %p35 = scmp.eq.s32.totalorder %s15, 0
    %p36 = por %p34, %p35
    %p37 = scmp.ne.s32.totalorder %s23, %s24
    %p38 = scmp.eq.s32.totalorder %s16, 1
    %p39 = por %p37, %p38
    %p41 = scmp.ne.s32.totalorder %s24, %s40
    %p42 = scmp.eq.s32.totalorder %s16, 0
    %p43 = por %p41, %p42
    %s45 = sadd.s32 %s44, 1
    %p48 = scmp.eq.s32.totalorder %s10, 1
    %p49 = scmp.ne.s32.totalorder %s44, %s46
    %p50 = scmp.eq.s32.totalorder %s10, 0
    %p51 = por %p49, %p50
    %p52 = scmp.ne.s32.totalorder %s44, %s46
    %p53 = scmp.eq.s32.totalorder %s15, 1
    %p54 = por %p52, %p53
    %p55 = scmp.ne.s32.totalorder %s46, %s47
    %p56 = scmp.eq.s32.totalorder %s15, 0
    %p57 = por %p55, %p56
    %p58 = scmp.ne.s32.totalorder %s46, %s47
    %p59 = scmp.eq.s32.totalorder %s16, 1
    %p60 = por %p58, %p59
    %p62 = scmp.ne.s32.totalorder %s47, %s61
    %p63 = scmp.eq.s32.totalorder %s16, 0
    %p64 = por %p62, %p63
    %s65 = ssub.s32 %s10, %s17
    %p66 = scmp.eq.s32.totalorder %s65, 0
    %s68 = sadd.s32 %s67, 1
    %s69 = scalar_select %p66, %s67, %s68
    %p72 = pneg %p66
    %p73 = scmp.eq.s32.totalorder %s10, 1
    %p74 = por %p72, %p73
    %p75 = scmp.ne.s32.totalorder %s67, %s70
    %p76 = scmp.eq.s32.totalorder %s10, 0
    %p77 = por %p75, %p76
    %p78 = scmp.ne.s32.totalorder %s67, %s70
    %p79 = scmp.eq.s32.totalorder %s15, 1
    %p80 = por %p78, %p79
    %p81 = scmp.ne.s32.totalorder %s70, %s71
    %p82 = scmp.eq.s32.totalorder %s15, 0
    %p83 = por %p81, %p82
    %p84 = scmp.ne.s32.totalorder %s70, %s71
    %p85 = scmp.eq.s32.totalorder %s16, 1
    %p86 = por %p84, %p85
    %p88 = scmp.ne.s32.totalorder %s71, %s87
    %p89 = scmp.eq.s32.totalorder %s16, 0
    %p90 = por %p88, %p89
    %s91 = ssub.s32 %s10, %s17
    %p92 = scmp.eq.s32.totalorder %s91, 0
    %s94 = sadd.s32 %s93, 1
    %s95 = scalar_select %p92, %s93, %s94
    %p98 = pneg %p92
    %p99 = scmp.eq.s32.totalorder %s10, 1
    %p100 = por %p98, %p99
    %p101 = scmp.ne.s32.totalorder %s93, %s96
    %p102 = scmp.eq.s32.totalorder %s10, 0
    %p103 = por %p101, %p102
    %p104 = scmp.ne.s32.totalorder %s93, %s96
    %p105 = scmp.eq.s32.totalorder %s15, 1
    %p106 = por %p104, %p105
    %p107 = scmp.ne.s32.totalorder %s96, %s97
    %p108 = scmp.eq.s32.totalorder %s15, 0
    %p109 = por %p107, %p108
    %p110 = scmp.ne.s32.totalorder %s96, %s97
    %p111 = scmp.eq.s32.totalorder %s16, 1
    %p112 = por %p110, %p111
    %p114 = scmp.ne.s32.totalorder %s97, %s113
    %p115 = scmp.eq.s32.totalorder %s16, 0
    %p116 = por %p114, %p115
    %p117 = scmp.le.s32.totalorder 1, %s10
    %p118 = scmp.lt.s32.totalorder %s10, 3
    %p119 = pnand %p117, %p118
    %p120 = pneg %p119
    // Predicated region
    $region9: #{basic_block_forward.5} parent=5 // pred_check
      _
    $region10: #{basic_block_forward.5} parent=5 // pred_check_branch
      %122 = sbr.rel (%p119) target = $region12
    $region11: #{basic_block_forward.5} parent=5 // pred_region
      %s123 = ssub.s32 %s10, 1
      // Predicated region
      $region13: #{basic_block_forward.5} parent=11 // pred_check
        %p124 = pneg %p57
      $region14: #{basic_block_forward.5} parent=11 // pred_check_branch
        %126 = sbr.rel (%p124) target = $region16
      $region15: #{basic_block_forward.5} parent=11 // pred_region
        _
      $region16: #{basic_block_forward.5} parent=11 // pred_fallthru
        _
    $region12: #{basic_block_forward.5} parent=5 // pred_fallthru
      _
    %p127 = scmp.lt.s32.totalorder %s10, 2
    // Predicated region
    $region17: #{basic_block_forward.5} parent=5 // pred_check
      %p128 = pneg %p127
    $region18: #{basic_block_forward.5} parent=5 // pred_check_branch
      %130 = sbr.rel (%p128) target = $region20
    $region19: #{basic_block_forward.5} parent=5 // pred_region
      // Predicated region
      $region21: #{basic_block_forward.5} parent=19 // pred_check
        %p131 = pneg %p30
      $region22: #{basic_block_forward.5} parent=19 // pred_check_branch
        %133 = sbr.rel (%p131) target = $region24
      $region23: #{basic_block_forward.5} parent=19 // pred_region
        %p134 = scmp.lt.s32.totalorder %s10, 1
        %s135 = scalar_select %p134, %s10, 1
        %s136 = smul.addr %s135, 72
        %s137 = smul.addr %s136, 8
        %s138 = scalar_lea.vmem %s0, %s137
      $region24: #{basic_block_forward.5} parent=19 // pred_fallthru
        _
    $region20: #{basic_block_forward.5} parent=5 // pred_fallthru
      _
    %p139 = scmp.le.s32.totalorder 1, %s10
    %p140 = scmp.lt.s32.totalorder %s10, 3
    %p141 = pnand %p139, %p140
    %p142 = pneg %p141
    // Predicated region
    $region25: #{basic_block_forward.5} parent=5 // pred_check
      _
    $region26: #{basic_block_forward.5} parent=5 // pred_check_branch
      %144 = sbr.rel (%p141) target = $region28
    $region27: #{basic_block_forward.5} parent=5 // pred_region
      %s145 = ssub.s32 %s10, 1
      %p146 = scmp.lt.s32.totalorder %s15, 1
      %s147 = scalar_select %p146, %s15, 1
      %s148 = smul.addr %s147, 72
      %s149 = smul.addr %s148, 8
      %s150 = scalar_lea.vmem %s0, %s149
      %p151 = pneg %p36
      %p152 = pneg %p33
      %p153 = pneg %p57
      %p154 = pneg %p54
      %p155 = pneg %p83
      %p156 = pneg %p80
      %p157 = scmp.lt.s32.totalorder %s15, 1
      %s158 = scalar_select %p157, %s15, 1
      %s159 = smul.addr %s158, 8
      %s160 = smul.addr %s159, 4
      %s161 = scalar_lea.vmem %s2, %s160
      %p162 = pneg %p109
      %p163 = pneg %p106
      %p164 = scmp.lt.s32.totalorder %s15, 1
      %s165 = scalar_select %p164, %s15, 1
      %s166 = smul.addr %s165, 2
      %s167 = scalar_lea.vmem %s3, %s166
      %p168 = scmp.lt.s32.totalorder %s15, 1
      %s169 = scalar_select %p168, %s15, 1
      %s170 = smul.addr %s169, 72
      %s171 = smul.addr %s170, 8
      %s172 = scalar_lea.vmem %s0, %s171
      %p173 = scmp.lt.s32.totalorder %s15, 1
      %s174 = scalar_select %p173, %s15, 1
      %s175 = smul.addr %s174, 8
      %s176 = smul.addr %s175, 4
      %s177 = scalar_lea.vmem %s2, %s176
      %p178 = scmp.lt.s32.totalorder %s15, 1
      %s179 = scalar_select %p178, %s15, 1
      %s180 = smul.addr %s179, 2
      %s181 = scalar_lea.vmem %s3, %s180
      %v183 = vld [vmem:[%s1] sm:$0xf]
      %v184 = vld [vmem:[%s1 + $0x4] sm:$0xf]
      %v185 = vld [vmem:[%s1 + $0x8] sm:$0xf]
      %v186 = vld [vmem:[%s1 + $0xc] sm:$0xf]
      %v187 = vld [vmem:[%s1 + $0x10] sm:$0x3]
      %v188 = vld [vmem:[%s172] sm:$0xff]
      %v189 = vld [vmem:[%s172 + $0x10] sm:$0xff]
      %v190 = vld [vmem:[%s172 + $0x20] sm:$0xff]
      %v191 = vld [vmem:[%s172 + $0x30] sm:$0xff]
      %v192 = vld [vmem:[%s172 + $0x40] sm:$0xff]
      %v193 = vld [vmem:[%s172 + $0x50] sm:$0xff]
      %v194 = vld [vmem:[%s172 + $0x60] sm:$0xff]
      %v195 = vld [vmem:[%s172 + $0x70] sm:$0xff]
      %s196 = scalar_lea.vmem %s172, 144
      %v197 = vld [vmem:[%s196] sm:$0xff]
      %v198 = vld [vmem:[%s196 + $0x10] sm:$0xff]
      %v199 = vld [vmem:[%s196 + $0x20] sm:$0xff]
      %v200 = vld [vmem:[%s196 + $0x30] sm:$0xff]
      %v201 = vld [vmem:[%s196 + $0x40] sm:$0xff]
      %v202 = vld [vmem:[%s196 + $0x50] sm:$0xff]
      %v203 = vld [vmem:[%s196 + $0x60] sm:$0xff]
      %v204 = vld [vmem:[%s196 + $0x70] sm:$0xff]
      %v205 = vld [vmem:[%s172 + $0x1] sm:$0xff]
      %v206 = vld [vmem:[%s172 + $0x11] sm:$0xff]
      %v207 = vld [vmem:[%s172 + $0x21] sm:$0xff]
      %v208 = vld [vmem:[%s172 + $0x31] sm:$0xff]
      %v209 = vld [vmem:[%s172 + $0x41] sm:$0xff]
      %v210 = vld [vmem:[%s172 + $0x51] sm:$0xff]
      %v211 = vld [vmem:[%s172 + $0x61] sm:$0xff]
      %v212 = vld [vmem:[%s172 + $0x71] sm:$0xff]
      %s213 = scalar_lea.vmem %s172, 288
      %v214 = vld [vmem:[%s213] sm:$0xff]
      %v215 = vld [vmem:[%s213 + $0x10] sm:$0xff]
      %v216 = vld [vmem:[%s213 + $0x20] sm:$0xff]
      %v217 = vld [vmem:[%s213 + $0x30] sm:$0xff]
      %v218 = vld [vmem:[%s213 + $0x40] sm:$0xff]
      %v219 = vld [vmem:[%s213 + $0x50] sm:$0xff]
      %v220 = vld [vmem:[%s213 + $0x60] sm:$0xff]
      %v221 = vld [vmem:[%s213 + $0x70] sm:$0xff]
      %s222 = scalar_lea.vmem %s172, 432
      %v223 = vld [vmem:[%s222] sm:$0xff]
      %v224 = vld [vmem:[%s222 + $0x10] sm:$0xff]
      %v225 = vld [vmem:[%s222 + $0x20] sm:$0xff]
      %v226 = vld [vmem:[%s222 + $0x30] sm:$0xff]
      %v227 = vld [vmem:[%s222 + $0x40] sm:$0xff]
      %v228 = vld [vmem:[%s222 + $0x50] sm:$0xff]
      %v229 = vld [vmem:[%s222 + $0x60] sm:$0xff]
      %v230 = vld [vmem:[%s222 + $0x70] sm:$0xff]
      %v231 = vld [vmem:[%s213 + $0x1] sm:$0xff]
      %v232 = vld [vmem:[%s213 + $0x11] sm:$0xff]
      %v233 = vld [vmem:[%s213 + $0x21] sm:$0xff]
      %v234 = vld [vmem:[%s213 + $0x31] sm:$0xff]
      %v235 = vld [vmem:[%s213 + $0x41] sm:$0xff]
      %v236 = vld [vmem:[%s213 + $0x51] sm:$0xff]
      %v237 = vld [vmem:[%s213 + $0x61] sm:$0xff]
      %v238 = vld [vmem:[%s213 + $0x71] sm:$0xff]
      %s239 = scalar_lea.vmem %s172, 16
      %v240 = vld [vmem:[%s239] sm:$0xff]
      %v241 = vld [vmem:[%s239 + $0x10] sm:$0xff]
      %v242 = vld [vmem:[%s239 + $0x20] sm:$0xff]
      %v243 = vld [vmem:[%s239 + $0x30] sm:$0xff]
      %v244 = vld [vmem:[%s239 + $0x40] sm:$0xff]
      %v245 = vld [vmem:[%s239 + $0x50] sm:$0xff]
      %v246 = vld [vmem:[%s239 + $0x60] sm:$0xff]
      %v247 = vld [vmem:[%s239 + $0x70] sm:$0xff]
      %s248 = scalar_lea.vmem %s172, 160
      %v249 = vld [vmem:[%s248] sm:$0xff]
      %v250 = vld [vmem:[%s248 + $0x10] sm:$0xff]
      %v251 = vld [vmem:[%s248 + $0x20] sm:$0xff]
      %v252 = vld [vmem:[%s248 + $0x30] sm:$0xff]
      %v253 = vld [vmem:[%s248 + $0x40] sm:$0xff]
      %v254 = vld [vmem:[%s248 + $0x50] sm:$0xff]
      %v255 = vld [vmem:[%s248 + $0x60] sm:$0xff]
      %v256 = vld [vmem:[%s248 + $0x70] sm:$0xff]
      %v257 = vld [vmem:[%s239 + $0x1] sm:$0xff]
      %v258 = vld [vmem:[%s239 + $0x11] sm:$0xff]
      %v259 = vld [vmem:[%s239 + $0x21] sm:$0xff]
      %v260 = vld [vmem:[%s239 + $0x31] sm:$0xff]
      %v261 = vld [vmem:[%s239 + $0x41] sm:$0xff]
      %v262 = vld [vmem:[%s239 + $0x51] sm:$0xff]
      %v263 = vld [vmem:[%s239 + $0x61] sm:$0xff]
      %v264 = vld [vmem:[%s239 + $0x71] sm:$0xff]
      %273 = vrot.lane.b32.xlu0 %v197, 4
      %v274 = vpop.permute.xlu0 %273
      %275 = vrot.lane.b32.xlu0 %v198, 4
      %v276 = vpop.permute.xlu0 %275
      %277 = vrot.lane.b32.xlu0 %v199, 4
      %v278 = vpop.permute.xlu0 %277
      %279 = vrot.lane.b32.xlu0 %v200, 4
      %v280 = vpop.permute.xlu0 %279
      %281 = vrot.lane.b32.xlu0 %v201, 4
      %v282 = vpop.permute.xlu0 %281
      %283 = vrot.lane.b32.xlu0 %v202, 4
      %v284 = vpop.permute.xlu0 %283
      %285 = vrot.lane.b32.xlu0 %v203, 4
      %v286 = vpop.permute.xlu0 %285
      %287 = vrot.lane.b32.xlu0 %v204, 4
      %v288 = vpop.permute.xlu0 %287
      %305 = vrot.lane.b32.xlu0 %v205, 8
      %v306 = vpop.permute.xlu0 %305
      %307 = vrot.lane.b32.xlu0 %v206, 8
      %v308 = vpop.permute.xlu0 %307
      %309 = vrot.lane.b32.xlu0 %v207, 8
      %v310 = vpop.permute.xlu0 %309
      %311 = vrot.lane.b32.xlu0 %v208, 8
      %v312 = vpop.permute.xlu0 %311
      %313 = vrot.lane.b32.xlu0 %v209, 8
      %v314 = vpop.permute.xlu0 %313
      %315 = vrot.lane.b32.xlu0 %v210, 8
      %v316 = vpop.permute.xlu0 %315
      %317 = vrot.lane.b32.xlu0 %v211, 8
      %v318 = vpop.permute.xlu0 %317
      %319 = vrot.lane.b32.xlu0 %v212, 8
      %v320 = vpop.permute.xlu0 %319
      %337 = vrot.lane.b32.xlu0 %v214, 12
      %v338 = vpop.permute.xlu0 %337
      %339 = vrot.lane.b32.xlu0 %v215, 12
      %v340 = vpop.permute.xlu0 %339
      %341 = vrot.lane.b32.xlu0 %v216, 12
      %v342 = vpop.permute.xlu0 %341
      %343 = vrot.lane.b32.xlu0 %v217, 12
      %v344 = vpop.permute.xlu0 %343
      %345 = vrot.lane.b32.xlu0 %v218, 12
      %v346 = vpop.permute.xlu0 %345
      %347 = vrot.lane.b32.xlu0 %v219, 12
      %v348 = vpop.permute.xlu0 %347
      %349 = vrot.lane.b32.xlu0 %v220, 12
      %v350 = vpop.permute.xlu0 %349
      %351 = vrot.lane.b32.xlu0 %v221, 12
      %v352 = vpop.permute.xlu0 %351
      %369 = vrot.lane.b32.xlu0 %v223, 16
      %v370 = vpop.permute.xlu0 %369
      %371 = vrot.lane.b32.xlu0 %v224, 16
      %v372 = vpop.permute.xlu0 %371
      %373 = vrot.lane.b32.xlu0 %v225, 16
      %v374 = vpop.permute.xlu0 %373
      %375 = vrot.lane.b32.xlu0 %v226, 16
      %v376 = vpop.permute.xlu0 %375
      %377 = vrot.lane.b32.xlu0 %v227, 16
      %v378 = vpop.permute.xlu0 %377
      %379 = vrot.lane.b32.xlu0 %v228, 16
      %v380 = vpop.permute.xlu0 %379
      %381 = vrot.lane.b32.xlu0 %v229, 16
      %v382 = vpop.permute.xlu0 %381
      %383 = vrot.lane.b32.xlu0 %v230, 16
      %v384 = vpop.permute.xlu0 %383
      %401 = vrot.lane.b32.xlu0 %v231, 20
      %v402 = vpop.permute.xlu0 %401
      %403 = vrot.lane.b32.xlu0 %v232, 20
      %v404 = vpop.permute.xlu0 %403
      %405 = vrot.lane.b32.xlu0 %v233, 20
      %v406 = vpop.permute.xlu0 %405
      %407 = vrot.lane.b32.xlu0 %v234, 20
      %v408 = vpop.permute.xlu0 %407
      %409 = vrot.lane.b32.xlu0 %v235, 20
      %v410 = vpop.permute.xlu0 %409
      %411 = vrot.lane.b32.xlu0 %v236, 20
      %v412 = vpop.permute.xlu0 %411
      %413 = vrot.lane.b32.xlu0 %v237, 20
      %v414 = vpop.permute.xlu0 %413
      %415 = vrot.lane.b32.xlu0 %v238, 20
      %v416 = vpop.permute.xlu0 %415
      %433 = vrot.lane.b32.xlu0 %v240, 24
      %v434 = vpop.permute.xlu0 %433
      %435 = vrot.lane.b32.xlu0 %v241, 24
      %v436 = vpop.permute.xlu0 %435
      %437 = vrot.lane.b32.xlu0 %v242, 24
      %v438 = vpop.permute.xlu0 %437
      %439 = vrot.lane.b32.xlu0 %v243, 24
      %v440 = vpop.permute.xlu0 %439
      %441 = vrot.lane.b32.xlu0 %v244, 24
      %v442 = vpop.permute.xlu0 %441
      %443 = vrot.lane.b32.xlu0 %v245, 24
      %v444 = vpop.permute.xlu0 %443
      %445 = vrot.lane.b32.xlu0 %v246, 24
      %v446 = vpop.permute.xlu0 %445
      %447 = vrot.lane.b32.xlu0 %v247, 24
      %v448 = vpop.permute.xlu0 %447
      %465 = vrot.lane.b32.xlu0 %v249, 28
      %v466 = vpop.permute.xlu0 %465
      %467 = vrot.lane.b32.xlu0 %v250, 28
      %v468 = vpop.permute.xlu0 %467
      %469 = vrot.lane.b32.xlu0 %v251, 28
      %v470 = vpop.permute.xlu0 %469
      %471 = vrot.lane.b32.xlu0 %v252, 28
      %v472 = vpop.permute.xlu0 %471
      %473 = vrot.lane.b32.xlu0 %v253, 28
      %v474 = vpop.permute.xlu0 %473
      %475 = vrot.lane.b32.xlu0 %v254, 28
      %v476 = vpop.permute.xlu0 %475
      %477 = vrot.lane.b32.xlu0 %v255, 28
      %v478 = vpop.permute.xlu0 %477
      %479 = vrot.lane.b32.xlu0 %v256, 28
      %v480 = vpop.permute.xlu0 %479
      %497 = vrot.lane.b32.xlu0 %v257, 32
      %v498 = vpop.permute.xlu0 %497
      %499 = vrot.lane.b32.xlu0 %v258, 32
      %v500 = vpop.permute.xlu0 %499
      %501 = vrot.lane.b32.xlu0 %v259, 32
      %v502 = vpop.permute.xlu0 %501
      %503 = vrot.lane.b32.xlu0 %v260, 32
      %v504 = vpop.permute.xlu0 %503
      %505 = vrot.lane.b32.xlu0 %v261, 32
      %v506 = vpop.permute.xlu0 %505
      %507 = vrot.lane.b32.xlu0 %v262, 32
      %v508 = vpop.permute.xlu0 %507
      %509 = vrot.lane.b32.xlu0 %v263, 32
      %v510 = vpop.permute.xlu0 %509
      %511 = vrot.lane.b32.xlu0 %v264, 32
      %v512 = vpop.permute.xlu0 %511
      %vm521 = vcmask 31744
      %v522 = vsel %vm521, %v188, %v274
      %v523 = vsel %vm521, %v189, %v276
      %v524 = vsel %vm521, %v190, %v278
      %v525 = vsel %vm521, %v191, %v280
      %v526 = vsel %vm521, %v192, %v282
      %v527 = vsel %vm521, %v193, %v284
      %v528 = vsel %vm521, %v194, %v286
      %v529 = vsel %vm521, %v195, %v288
      %vm530 = vcmask 64512
      %v531 = vsel %vm530, %v522, %v306
      %v532 = vsel %vm530, %v523, %v308
      %v533 = vsel %vm530, %v524, %v310
      %v534 = vsel %vm530, %v525, %v312
      %v535 = vsel %vm530, %v526, %v314
      %v536 = vsel %vm530, %v527, %v316
      %v537 = vsel %vm530, %v528, %v318
      %v538 = vsel %vm530, %v529, %v320
      %vm539 = vcmask 97280
      %v540 = vsel %vm539, %v531, %v338
      %v541 = vsel %vm539, %v532, %v340
      %v542 = vsel %vm539, %v533, %v342
      %v543 = vsel %vm539, %v534, %v344
      %v544 = vsel %vm539, %v535, %v346
      %v545 = vsel %vm539, %v536, %v348
      %v546 = vsel %vm539, %v537, %v350
      %v547 = vsel %vm539, %v538, %v352
      %vm548 = vcmask 130048
      %v549 = vsel %vm548, %v540, %v370
      %v550 = vsel %vm548, %v541, %v372
      %v551 = vsel %vm548, %v542, %v374
      %v552 = vsel %vm548, %v543, %v376
      %v553 = vsel %vm548, %v544, %v378
      %v554 = vsel %vm548, %v545, %v380
      %v555 = vsel %vm548, %v546, %v382
      %v556 = vsel %vm548, %v547, %v384
      %vm557 = vcmask 162816
      %v558 = vsel %vm557, %v549, %v402
      %v559 = vsel %vm557, %v550, %v404
      %v560 = vsel %vm557, %v551, %v406
      %v561 = vsel %vm557, %v552, %v408
      %v562 = vsel %vm557, %v553, %v410
      %v563 = vsel %vm557, %v554, %v412
      %v564 = vsel %vm557, %v555, %v414
      %v565 = vsel %vm557, %v556, %v416
      %vm566 = vcmask 195584
      %v567 = vsel %vm566, %v558, %v434
      %v568 = vsel %vm566, %v559, %v436
      %v569 = vsel %vm566, %v560, %v438
      %v570 = vsel %vm566, %v561, %v440
      %v571 = vsel %vm566, %v562, %v442
      %v572 = vsel %vm566, %v563, %v444
      %v573 = vsel %vm566, %v564, %v446
      %v574 = vsel %vm566, %v565, %v448
      %vm575 = vcmask 228352
      %v576 = vsel %vm575, %v567, %v466
      %v577 = vsel %vm575, %v568, %v468
      %v578 = vsel %vm575, %v569, %v470
      %v579 = vsel %vm575, %v570, %v472
      %v580 = vsel %vm575, %v571, %v474
      %v581 = vsel %vm575, %v572, %v476
      %v582 = vsel %vm575, %v573, %v478
      %v583 = vsel %vm575, %v574, %v480
      %vm584 = vcmask 261120
      %v585 = vsel %vm584, %v576, %v498
      %v586 = vsel %vm584, %v577, %v500
      %v587 = vsel %vm584, %v578, %v502
      %v588 = vsel %vm584, %v579, %v504
      %v589 = vsel %vm584, %v580, %v506
      %v590 = vsel %vm584, %v581, %v508
      %v591 = vsel %vm584, %v582, %v510
      %v592 = vsel %vm584, %v583, %v512
      %v593 = vpack.c.bf16 %v586, %v585
      %v594 = vpack.c.bf16 %v588, %v587
      %v595 = vpack.c.bf16 %v590, %v589
      %v596 = vpack.c.bf16 %v592, %v591
      %v602 = vunpack.c.l.b16 %v183
      %v603 = vunpack.c.l.b16 %v184
      %v604 = vunpack.c.l.b16 %v185
      %v605 = vunpack.c.l.b16 %v186
      %v606 = vunpack.c.l.b16 %v187
      %v607 = vpack.c.b16 %v603, %v602
      %v608 = vpack.c.b16 %v605, %v604
      %v609 = vpack.c.b16 %v606, %v606
      %vm612 = vcmask 293888
      %v614 = vsel %vm612, %v593, 0
      %v617 = vsel %vm612, %v594, 0
      %v620 = vsel %vm612, %v595, 0
      %v623 = vsel %vm612, %v596, 0
      %vm625 = vcmask 1041408
      %v627 = vsel %vm625, %v609, 0
      %629 = vmatprep.subr.bf16.mxu0 0
      %630 = vmatpush1.bf16.msra.mxu0 %v607
      %631 = vmatprep.subr.bf16.mxu0 0
      %632 = vmatpush1.bf16.msra.mxu0 %v608
      %633 = vmatprep.subr.bf16.mxu0 0
      %634 = vmatpush1.bf16.msra.mxu0 %v627
      %635 = vmatprep.subr.bf16.mxu0 0
      %636 = vmatpush1.bf16.msra.mxu0 0
      %637 = vmatprep.subr.bf16.mxu0 0
      %638 = vmatpush1.bf16.msra.mxu0 0
      %639 = vmatprep.subr.bf16.mxu0 0
      %640 = vmatpush1.bf16.msra.mxu0 0
      %641 = vmatprep.subr.bf16.mxu0 0
      %642 = vmatpush1.bf16.msra.mxu0 0
      %643 = vmatprep.subr.bf16.mxu0 0
      %644 = vmatpush1.bf16.msra.mxu0 0
      %645 = vmatprep.subr.bf16.mxu0 0
      %646 = vmatpush1.bf16.msra.mxu0 0
      %647 = vmatprep.subr.bf16.mxu0 0
      %648 = vmatpush1.bf16.msra.mxu0 0
      %649 = vmatprep.subr.bf16.mxu0 0
      %650 = vmatpush1.bf16.msra.mxu0 0
      %651 = vmatprep.subr.bf16.mxu0 0
      %652 = vmatpush1.bf16.msra.mxu0 0
      %653 = vmatprep.subr.bf16.mxu0 0
      %654 = vmatpush1.bf16.msra.mxu0 0
      %655 = vmatprep.subr.bf16.mxu0 0
      %656 = vmatpush1.bf16.msra.mxu0 0
      %657 = vmatprep.subr.bf16.mxu0 0
      %658 = vmatpush1.bf16.msra.mxu0 0
      %659 = vmatprep.subr.bf16.mxu0 0
      %660 = vmatpush1.bf16.msra.mxu0 0
      %661 = vmatprep.mubr.bf16.mxu0 0
      %662 = vmatmul.mubr.bf16.gmra.mrb[0].mxu0 %v614
      %v663 = vpop.f32.mrb[0].mxu0
      %v664 = vadd.f32 0.0, %v663
      %v665 = vpop.f32.mrb[0].mxu0
      %v666 = vpop.f32.mrb[0].mxu0
      %v667 = vadd.f32 0.0, %v666
      %v668 = vpop.f32.mrb[0].mxu0
      %669 = vmatprep.mubr.bf16.mxu0 0
      %670 = vmatmul.mubr.bf16.gmra.mrb[0].mxu0 %v617
      %v671 = vpop.f32.mrb[0].mxu0
      %v672 = vadd.f32 0.0, %v671
      %v673 = vpop.f32.mrb[0].mxu0
      %v674 = vpop.f32.mrb[0].mxu0
      %v675 = vadd.f32 0.0, %v674
      %v676 = vpop.f32.mrb[0].mxu0
      %677 = vmatprep.mubr.bf16.mxu0 0
      %678 = vmatmul.mubr.bf16.gmra.mrb[0].mxu0 %v620
      %v679 = vpop.f32.mrb[0].mxu0
      %v680 = vadd.f32 0.0, %v679
      %v681 = vpop.f32.mrb[0].mxu0
      %v682 = vpop.f32.mrb[0].mxu0
      %v683 = vadd.f32 0.0, %v682
      %v684 = vpop.f32.mrb[0].mxu0
      %685 = vmatprep.mubr.bf16.mxu0 0
      %686 = vmatmul.mubr.bf16.gmra.mrb[0].mxu0 %v623
      %v687 = vpop.f32.mrb[0].mxu0
      %v688 = vadd.f32 0.0, %v687
      %v689 = vpop.f32.mrb[0].mxu0
      %v690 = vpop.f32.mrb[0].mxu0
      %v691 = vadd.f32 0.0, %v690
      %v692 = vpop.f32.mrb[0].mxu0
      %693 = vdwg.mxu0
      %v694 = vpack.c.bf16 %v664, %v664
      %v695 = vpack.c.bf16 %v667, %v667
      %v696 = vpack.c.bf16 %v672, %v672
      %v697 = vpack.c.bf16 %v675, %v675
      %v698 = vpack.c.bf16 %v680, %v680
      %v699 = vpack.c.bf16 %v683, %v683
      %v700 = vpack.c.bf16 %v688, %v688
      %v701 = vpack.c.bf16 %v691, %v691
      %702 = vst [vmem:[%s177] sm:$0xf] %v694
      %703 = vst [vmem:[%s177 + $0x4] sm:$0xf] %v695
      %704 = vst [vmem:[%s177 + $0x8] sm:$0xf] %v696
      %705 = vst [vmem:[%s177 + $0xc] sm:$0xf] %v697
      %706 = vst [vmem:[%s177 + $0x10] sm:$0xf] %v698
      %707 = vst [vmem:[%s177 + $0x14] sm:$0xf] %v699
      %708 = vst [vmem:[%s177 + $0x18] sm:$0xf] %v700
      %709 = vst [vmem:[%s177 + $0x1c] sm:$0xf] %v701
      %v710 = vadd.f32 %v664, %v667
      %v711 = vadd.f32 %v710, %v672
      %v712 = vadd.f32 %v711, %v675
      %v713 = vadd.f32 %v712, %v680
      %v714 = vadd.f32 %v713, %v683
      %v715 = vadd.f32 %v714, %v688
      %v716 = vadd.f32 %v715, %v691
      %v717 = vrot.slane %v716, 4
      %v718 = vadd.f32 %v716, %v717
      %v719 = vrot.slane %v718, 2
      %v720 = vadd.f32 %v718, %v719
      %v721 = vrot.slane %v720, 1
      %v722 = vadd.f32 %v720, %v721
      %v723 = vmul.f32 %v664, %v664
      %v724 = vmul.f32 %v667, %v667
      %v725 = vmul.f32 %v672, %v672
      %v726 = vmul.f32 %v675, %v675
      %v727 = vmul.f32 %v680, %v680
      %v728 = vmul.f32 %v683, %v683
      %v729 = vmul.f32 %v688, %v688
      %v730 = vmul.f32 %v691, %v691
      %v731 = vadd.f32 %v723, %v724
      %v732 = vadd.f32 %v731, %v725
      %v733 = vadd.f32 %v732, %v726
      %v734 = vadd.f32 %v733, %v727
      %v735 = vadd.f32 %v734, %v728
      %v736 = vadd.f32 %v735, %v729
      %v737 = vadd.f32 %v736, %v730
      %v738 = vrot.slane %v737, 4
      %v739 = vadd.f32 %v737, %v738
      %v740 = vrot.slane %v739, 2
      %v741 = vadd.f32 %v739, %v740
      %v742 = vrot.slane %v741, 1
      %v743 = vadd.f32 %v741, %v742
      %vm744 = vcmask 1040384
      %v745 = vsel %vm744, %v722, %v743
      %746 = vst [vmem:[%s181] sm:$0x3] %v745
      %p747 = scmp.lt.s32.totalorder %s15, 1
      %s748 = scalar_select %p747, %s15, 1
      %s749 = smul.addr %s748, 8
      %s750 = smul.addr %s749, 4
      %s751 = scalar_lea.vmem %s2, %s750
      %p752 = scmp.lt.s32.totalorder %s15, 1
      %s753 = scalar_select %p752, %s15, 1
      %s754 = smul.addr %s753, 2
      %s755 = scalar_lea.vmem %s3, %s754
      // Predicated region
      $region29: #{basic_block_forward.5} parent=27 // pred_check
        %p756 = pneg %p80
      $region30: #{basic_block_forward.5} parent=27 // pred_check_branch
        %758 = sbr.rel (%p756) target = $region32
      $region31: #{basic_block_forward.5} parent=27 // pred_region
        _
      $region32: #{basic_block_forward.5} parent=27 // pred_fallthru
        _
      // Predicated region
      $region33: #{basic_block_forward.5} parent=27 // pred_check
        %p759 = pneg %p106
      $region34: #{basic_block_forward.5} parent=27 // pred_check_branch
        %761 = sbr.rel (%p759) target = $region36
      $region35: #{basic_block_forward.5} parent=27 // pred_region
        _
      $region36: #{basic_block_forward.5} parent=27 // pred_fallthru
        _
    $region28: #{basic_block_forward.5} parent=5 // pred_fallthru
      _
    %p762 = scmp.le.s32.totalorder 2, %s10
    // Predicated region
    $region37: #{basic_block_forward.5} parent=5 // pred_check
      %p763 = pneg %p762
    $region38: #{basic_block_forward.5} parent=5 // pred_check_branch
      %765 = sbr.rel (%p763) target = $region40
    $region39: #{basic_block_forward.5} parent=5 // pred_region
      %s766 = ssub.s32 %s10, 2
      // Predicated region
      $region41: #{basic_block_forward.5} parent=39 // pred_check
        %p767 = pneg %p86
      $region42: #{basic_block_forward.5} parent=39 // pred_check_branch
        %769 = sbr.rel (%p767) target = $region44
      $region43: #{basic_block_forward.5} parent=39 // pred_region
        %p770 = scmp.lt.s32.totalorder %s16, 1
        %s771 = scalar_select %p770, %s16, 1
        %s772 = smul.addr %s771, 8
        %s773 = smul.addr %s772, 4
        %s774 = scalar_lea.vmem %s2, %s773
      $region44: #{basic_block_forward.5} parent=39 // pred_fallthru
        _
      // Predicated region
      $region45: #{basic_block_forward.5} parent=39 // pred_check
        %p775 = pneg %p112
      $region46: #{basic_block_forward.5} parent=39 // pred_check_branch
        %777 = sbr.rel (%p775) target = $region48
      $region47: #{basic_block_forward.5} parent=39 // pred_region
        %p778 = scmp.lt.s32.totalorder %s16, 1
        %s779 = scalar_select %p778, %s16, 1
        %s780 = smul.addr %s779, 2
        %s781 = scalar_lea.vmem %s3, %s780
      $region48: #{basic_block_forward.5} parent=39 // pred_fallthru
        _
    $region40: #{basic_block_forward.5} parent=5 // pred_fallthru
      _
  $region6: #{basic_block_forward.5} parent=0 // loop_footer
    %s14 = sadd.s32 1, %s10
  $region7: #{basic_block_forward.5} parent=0 // loop_footer_branch
    %9 = sbr.rel target = $region3
  $region8: #{basic_block_forward.5} parent=0 // loop_exit
    _

// kernel: basic_block_forward.7
$region0: #{basic_block_forward.7}
  #allocation0 [shape = 'u32[]', space=smem, size = 0x4, offset = 0x4, fixed_abs, tag = 'smem constant byte address 0x4 - core index']
  #allocation1 [shape = 'u32[144,128]{1,0:T(1,128)}', space=vmem, size = 0x12000, scoped, tag = 'internal scratch']
  %s0 = inlined_call_operand.vmem [shape: bf16[2,8,8,128], index: 0, kind: input, shape index: {}]
  %s1 = inlined_call_operand.vmem [shape: f32[2,128], index: 1, kind: input, shape index: {}]
  %s2 = inlined_call_operand.vmem [shape: f32[2,8,8,128], index: 2, kind: input, shape index: {}]
  %s3 = inlined_call_operand.vmem [shape: f32[2,8,8,128], index: 3, kind: output, shape index: {}]
  %s4 = sld [smem:[#allocation0]]
  $region45: #{basic_block_forward.7} parent=0
    _
  %s6 = ssub.s32 1, %s4
  %s7 = scalar_select 0, %s6, %s4
  loop: start=0, step=1, limit=4
  $region2: #{basic_block_forward.7} parent=0 // loop_pre_header
    _
  $region3: #{basic_block_forward.7} parent=0 // loop_header
    %s9 = sphi 0, %s13
    %p10 = scmp.ge.s32.totalorder %s9, 4
    %s19 = sphi 0, %s21
    %s22 = sphi 0, %s19
    %s23 = sphi 0, %s22
    %s39 = sphi 0, %s23
    %s43 = sphi 0, %s43
    %s45 = sphi 0, %s43
    %s46 = sphi 0, %s45
    %s60 = sphi 0, %s46
    %s66 = sphi 0, %s68
    %s69 = sphi 0, %s66
    %s70 = sphi 0, %s69
    %s86 = sphi 0, %s70
    %s92 = sphi 0, %s94
    %s95 = sphi 0, %s92
    %s96 = sphi 0, %s95
    %s112 = sphi 0, %s96
  $region4: #{basic_block_forward.7} parent=0 // loop_header_branch
    %12 = sbr.rel (%p10) target = $region8
  $region5: #{basic_block_forward.7} parent=0 // loop_body
    %s14 = ssub.s32 %s9, 1
    %s15 = ssub.s32 %s9, 2
    %s16 = sadd.s32 %s9, 1
    %s17 = ssub.s32 %s9, %s16
    %p18 = scmp.eq.s32.totalorder %s17, 0
    %s20 = sadd.s32 %s19, 1
    %s21 = scalar_select %p18, %s19, %s20
    %p24 = pneg %p18
    %p25 = scmp.eq.s32.totalorder %s9, 1
    %p26 = por %p24, %p25
    %p27 = scmp.ne.s32.totalorder %s19, %s22
    %p28 = scmp.eq.s32.totalorder %s9, 0
    %p29 = por %p27, %p28
    %p30 = scmp.ne.s32.totalorder %s19, %s22
    %p31 = scmp.eq.s32.totalorder %s14, 1
    %p32 = por %p30, %p31
    %p33 = scmp.ne.s32.totalorder %s22, %s23
    %p34 = scmp.eq.s32.totalorder %s14, 0
    %p35 = por %p33, %p34
    %p36 = scmp.ne.s32.totalorder %s22, %s23
    %p37 = scmp.eq.s32.totalorder %s15, 1
    %p38 = por %p36, %p37
    %p40 = scmp.ne.s32.totalorder %s23, %s39
    %p41 = scmp.eq.s32.totalorder %s15, 0
    %p42 = por %p40, %p41
    %s44 = sadd.s32 %s43, 1
    %p47 = scmp.eq.s32.totalorder %s9, 1
    %p48 = scmp.ne.s32.totalorder %s43, %s45
    %p49 = scmp.eq.s32.totalorder %s9, 0
    %p50 = por %p48, %p49
    %p51 = scmp.ne.s32.totalorder %s43, %s45
    %p52 = scmp.eq.s32.totalorder %s14, 1
    %p53 = por %p51, %p52
    %p54 = scmp.ne.s32.totalorder %s45, %s46
    %p55 = scmp.eq.s32.totalorder %s14, 0
    %p56 = por %p54, %p55
    %p57 = scmp.ne.s32.totalorder %s45, %s46
    %p58 = scmp.eq.s32.totalorder %s15, 1
    %p59 = por %p57, %p58
    %p61 = scmp.ne.s32.totalorder %s46, %s60
    %p62 = scmp.eq.s32.totalorder %s15, 0
    %p63 = por %p61, %p62
    %s64 = ssub.s32 %s9, %s16
    %p65 = scmp.eq.s32.totalorder %s64, 0
    %s67 = sadd.s32 %s66, 1
    %s68 = scalar_select %p65, %s66, %s67
    %p71 = pneg %p65
    %p72 = scmp.eq.s32.totalorder %s9, 1
    %p73 = por %p71, %p72
    %p74 = scmp.ne.s32.totalorder %s66, %s69
    %p75 = scmp.eq.s32.totalorder %s9, 0
    %p76 = por %p74, %p75
    %p77 = scmp.ne.s32.totalorder %s66, %s69
    %p78 = scmp.eq.s32.totalorder %s14, 1
    %p79 = por %p77, %p78
    %p80 = scmp.ne.s32.totalorder %s69, %s70
    %p81 = scmp.eq.s32.totalorder %s14, 0
    %p82 = por %p80, %p81
    %p83 = scmp.ne.s32.totalorder %s69, %s70
    %p84 = scmp.eq.s32.totalorder %s15, 1
    %p85 = por %p83, %p84
    %p87 = scmp.ne.s32.totalorder %s70, %s86
    %p88 = scmp.eq.s32.totalorder %s15, 0
    %p89 = por %p87, %p88
    %s90 = ssub.s32 %s9, %s16
    %p91 = scmp.eq.s32.totalorder %s90, 0
    %s93 = sadd.s32 %s92, 1
    %s94 = scalar_select %p91, %s92, %s93
    %p97 = pneg %p91
    %p98 = scmp.eq.s32.totalorder %s9, 1
    %p99 = por %p97, %p98
    %p100 = scmp.ne.s32.totalorder %s92, %s95
    %p101 = scmp.eq.s32.totalorder %s9, 0
    %p102 = por %p100, %p101
    %p103 = scmp.ne.s32.totalorder %s92, %s95
    %p104 = scmp.eq.s32.totalorder %s14, 1
    %p105 = por %p103, %p104
    %p106 = scmp.ne.s32.totalorder %s95, %s96
    %p107 = scmp.eq.s32.totalorder %s14, 0
    %p108 = por %p106, %p107
    %p109 = scmp.ne.s32.totalorder %s95, %s96
    %p110 = scmp.eq.s32.totalorder %s15, 1
    %p111 = por %p109, %p110
    %p113 = scmp.ne.s32.totalorder %s96, %s112
    %p114 = scmp.eq.s32.totalorder %s15, 0
    %p115 = por %p113, %p114
    %p116 = scmp.le.s32.totalorder 1, %s9
    %p117 = scmp.lt.s32.totalorder %s9, 3
    %p118 = pnand %p116, %p117
    %p119 = pneg %p118
    // Predicated region
    $region9: #{basic_block_forward.7} parent=5 // pred_check
      _
    $region10: #{basic_block_forward.7} parent=5 // pred_check_branch
      %121 = sbr.rel (%p118) target = $region12
    $region11: #{basic_block_forward.7} parent=5 // pred_region
      %s122 = ssub.s32 %s9, 1
      // Predicated region
      $region13: #{basic_block_forward.7} parent=11 // pred_check
        %p123 = pneg %p56
      $region14: #{basic_block_forward.7} parent=11 // pred_check_branch
        %125 = sbr.rel (%p123) target = $region16
      $region15: #{basic_block_forward.7} parent=11 // pred_region
        _
      $region16: #{basic_block_forward.7} parent=11 // pred_fallthru
        _
    $region12: #{basic_block_forward.7} parent=5 // pred_fallthru
      _
    %p126 = scmp.lt.s32.totalorder %s9, 2
    // Predicated region
    $region17: #{basic_block_forward.7} parent=5 // pred_check
      %p127 = pneg %p126
    $region18: #{basic_block_forward.7} parent=5 // pred_check_branch
      %129 = sbr.rel (%p127) target = $region20
    $region19: #{basic_block_forward.7} parent=5 // pred_region
      // Predicated region
      $region21: #{basic_block_forward.7} parent=19 // pred_check
        %p130 = pneg %p29
      $region22: #{basic_block_forward.7} parent=19 // pred_check_branch
        %132 = sbr.rel (%p130) target = $region24
      $region23: #{basic_block_forward.7} parent=19 // pred_region
        %p133 = scmp.lt.s32.totalorder %s9, 1
        %s134 = scalar_select %p133, %s9, 1
        %s135 = smul.addr %s134, 8
        %s136 = smul.addr %s135, 4
        %s137 = scalar_lea.vmem %s0, %s136
      $region24: #{basic_block_forward.7} parent=19 // pred_fallthru
        _
      // Predicated region
      $region25: #{basic_block_forward.7} parent=19 // pred_check
        %p138 = pneg %p76
      $region26: #{basic_block_forward.7} parent=19 // pred_check_branch
        %140 = sbr.rel (%p138) target = $region28
      $region27: #{basic_block_forward.7} parent=19 // pred_region
        %p141 = scmp.lt.s32.totalorder %s9, 1
        %s142 = scalar_select %p141, %s9, 1
        %s143 = smul.addr %s142, 8
        %s144 = smul.addr %s143, 8
        %s145 = scalar_lea.vmem %s2, %s144
      $region28: #{basic_block_forward.7} parent=19 // pred_fallthru
        _
    $region20: #{basic_block_forward.7} parent=5 // pred_fallthru
      _
    %p146 = scmp.le.s32.totalorder 1, %s9
    %p147 = scmp.lt.s32.totalorder %s9, 3
    %p148 = pnand %p146, %p147
    %p149 = pneg %p148
    // Predicated region
    $region29: #{basic_block_forward.7} parent=5 // pred_check
      _
    $region30: #{basic_block_forward.7} parent=5 // pred_check_branch
      %151 = sbr.rel (%p148) target = $region32
    $region31: #{basic_block_forward.7} parent=5 // pred_region
      %s152 = ssub.s32 %s9, 1
      %p153 = scmp.lt.s32.totalorder %s14, 1
      %s154 = scalar_select %p153, %s14, 1
      %s155 = smul.addr %s154, 8
      %s156 = smul.addr %s155, 4
      %s157 = scalar_lea.vmem %s0, %s156
      %p158 = pneg %p35
      %p159 = pneg %p32
      %p160 = pneg %p56
      %p161 = pneg %p53
      %p162 = scmp.lt.s32.totalorder %s14, 1
      %s163 = scalar_select %p162, %s14, 1
      %s164 = smul.addr %s163, 8
      %s165 = smul.addr %s164, 8
      %s166 = scalar_lea.vmem %s2, %s165
      %p167 = pneg %p82
      %p168 = pneg %p79
      %p169 = pneg %p108
      %p170 = pneg %p105
      %p171 = scmp.lt.s32.totalorder %s14, 1
      %s172 = scalar_select %p171, %s14, 1
      %s173 = smul.addr %s172, 8
      %s174 = smul.addr %s173, 8
      %s175 = scalar_lea.vmem %s3, %s174
      %p176 = scmp.lt.s32.totalorder %s14, 1
      %s177 = scalar_select %p176, %s14, 1
      %s178 = smul.addr %s177, 8
      %s179 = smul.addr %s178, 4
      %s180 = scalar_lea.vmem %s0, %s179
      %p181 = scmp.lt.s32.totalorder %s14, 1
      %s182 = scalar_select %p181, %s14, 1
      %s183 = smul.addr %s182, 8
      %s184 = smul.addr %s183, 8
      %s185 = scalar_lea.vmem %s2, %s184
      %p186 = scmp.lt.s32.totalorder %s14, 1
      %s187 = scalar_select %p186, %s14, 1
      %s188 = smul.addr %s187, 8
      %s189 = smul.addr %s188, 8
      %s190 = scalar_lea.vmem %s3, %s189
      %v191 = vld [vmem:[%s1] sm:$0x1]
      %v192 = vld [vmem:[%s1 + $0x1] sm:$0x1]
      %v193 = vld [vmem:[%s180] sm:$0xf]
      %v194 = vld [vmem:[%s180 + $0x4] sm:$0xf]
      %v195 = vld [vmem:[%s180 + $0x8] sm:$0xf]
      %v196 = vld [vmem:[%s180 + $0xc] sm:$0xf]
      %v197 = vld [vmem:[%s180 + $0x10] sm:$0xf]
      %v198 = vld [vmem:[%s180 + $0x14] sm:$0xf]
      %v199 = vld [vmem:[%s180 + $0x18] sm:$0xf]
      %v200 = vld [vmem:[%s180 + $0x1c] sm:$0xf]
      %v201 = vunpack.c.l.bf16 %v193
      %v202 = vunpack.c.l.bf16 %v194
      %v203 = vunpack.c.l.bf16 %v195
      %v204 = vunpack.c.l.bf16 %v196
      %v205 = vunpack.c.l.bf16 %v197
      %v206 = vunpack.c.l.bf16 %v198
      %v207 = vunpack.c.l.bf16 %v199
      %v208 = vunpack.c.l.bf16 %v200
      %v209 = vlaneseq
      %v210 = vshrl.u32 %v209, 7
      %v211 = vsub.s32 0, %v210
      %v212 = vrot.slane %v191, %v211
      %v213 = vmul.f32 %v201, %v212
      %v214 = vmul.f32 %v202, %v212
      %v215 = vmul.f32 %v203, %v212
      %v216 = vmul.f32 %v204, %v212
      %v217 = vmul.f32 %v205, %v212
      %v218 = vmul.f32 %v206, %v212
      %v219 = vmul.f32 %v207, %v212
      %v220 = vmul.f32 %v208, %v212
      %v221 = vlaneseq
      %v222 = vshrl.u32 %v221, 7
      %v223 = vsub.s32 0, %v222
      %v224 = vrot.slane %v192, %v223
      %v225 = vadd.f32 %v213, %v224
      %v226 = vadd.f32 %v214, %v224
      %v227 = vadd.f32 %v215, %v224
      %v228 = vadd.f32 %v216, %v224
      %v229 = vadd.f32 %v217, %v224
      %v230 = vadd.f32 %v218, %v224
      %v231 = vadd.f32 %v219, %v224
      %v232 = vadd.f32 %v220, %v224
      %v233 = vld [vmem:[%s185] sm:$0xff]
      %v234 = vld [vmem:[%s185 + $0x8] sm:$0xff]
      %v235 = vld [vmem:[%s185 + $0x10] sm:$0xff]
      %v236 = vld [vmem:[%s185 + $0x18] sm:$0xff]
      %v237 = vld [vmem:[%s185 + $0x20] sm:$0xff]
      %v238 = vld [vmem:[%s185 + $0x28] sm:$0xff]
      %v239 = vld [vmem:[%s185 + $0x30] sm:$0xff]
      %v240 = vld [vmem:[%s185 + $0x38] sm:$0xff]
      %v241 = vadd.f32 %v225, %v233
      %v242 = vadd.f32 %v226, %v234
      %v243 = vadd.f32 %v227, %v235
      %v244 = vadd.f32 %v228, %v236
      %v245 = vadd.f32 %v229, %v237
      %v246 = vadd.f32 %v230, %v238
      %v247 = vadd.f32 %v231, %v239
      %v248 = vadd.f32 %v232, %v240
      %v249 = vmax.f32 %v241, 0.0
      %v250 = vmax.f32 %v242, 0.0
      %v251 = vmax.f32 %v243, 0.0
      %v252 = vmax.f32 %v244, 0.0
      %v253 = vmax.f32 %v245, 0.0
      %v254 = vmax.f32 %v246, 0.0
      %v255 = vmax.f32 %v247, 0.0
      %v256 = vmax.f32 %v248, 0.0
      %257 = vst [vmem:[%s190] sm:$0xff] %v249
      %258 = vst [vmem:[%s190 + $0x8] sm:$0xff] %v250
      %259 = vst [vmem:[%s190 + $0x10] sm:$0xff] %v251
      %260 = vst [vmem:[%s190 + $0x18] sm:$0xff] %v252
      %261 = vst [vmem:[%s190 + $0x20] sm:$0xff] %v253
      %262 = vst [vmem:[%s190 + $0x28] sm:$0xff] %v254
      %263 = vst [vmem:[%s190 + $0x30] sm:$0xff] %v255
      %264 = vst [vmem:[%s190 + $0x38] sm:$0xff] %v256
      %p265 = scmp.lt.s32.totalorder %s14, 1
      %s266 = scalar_select %p265, %s14, 1
      %s267 = smul.addr %s266, 8
      %s268 = smul.addr %s267, 8
      %s269 = scalar_lea.vmem %s3, %s268
      // Predicated region
      $region33: #{basic_block_forward.7} parent=31 // pred_check
        %p270 = pneg %p105
      $region34: #{basic_block_forward.7} parent=31 // pred_check_branch
        %272 = sbr.rel (%p270) target = $region36
      $region35: #{basic_block_forward.7} parent=31 // pred_region
        _
      $region36: #{basic_block_forward.7} parent=31 // pred_fallthru
        _
    $region32: #{basic_block_forward.7} parent=5 // pred_fallthru
      _
    %p273 = scmp.le.s32.totalorder 2, %s9
    // Predicated region
    $region37: #{basic_block_forward.7} parent=5 // pred_check
      %p274 = pneg %p273
    $region38: #{basic_block_forward.7} parent=5 // pred_check_branch
      %276 = sbr.rel (%p274) target = $region40
    $region39: #{basic_block_forward.7} parent=5 // pred_region
      %s277 = ssub.s32 %s9, 2
      // Predicated region
      $region41: #{basic_block_forward.7} parent=39 // pred_check
        %p278 = pneg %p111
      $region42: #{basic_block_forward.7} parent=39 // pred_check_branch
        %280 = sbr.rel (%p278) target = $region44
      $region43: #{basic_block_forward.7} parent=39 // pred_region
        %p281 = scmp.lt.s32.totalorder %s15, 1
        %s282 = scalar_select %p281, %s15, 1
        %s283 = smul.addr %s282, 8
        %s284 = smul.addr %s283, 8
        %s285 = scalar_lea.vmem %s3, %s284
      $region44: #{basic_block_forward.7} parent=39 // pred_fallthru
        _
    $region40: #{basic_block_forward.7} parent=5 // pred_fallthru
      _
  $region6: #{basic_block_forward.7} parent=0 // loop_footer
    %s13 = sadd.s32 1, %s9
  $region7: #{basic_block_forward.7} parent=0 // loop_footer_branch
    %8 = sbr.rel target = $region3
  $region8: #{basic_block_forward.7} parent=0 // loop_exit
    _

// kernel: basic_block_forward.6
$region0: #{basic_block_forward.6}
  #allocation0 [shape = 'u32[]', space=smem, size = 0x4, offset = 0x4, fixed_abs, tag = 'smem constant byte address 0x4 - core index']
  #allocation1 [shape = 'u32[144,128]{1,0:T(1,128)}', space=vmem, size = 0x12000, scoped, tag = 'internal scratch']
  #allocation2 [shape = 'bf16[1,10,10,128]{3,2,1,0:T(8,128)(2,1)}', space=vmem, size = 0xa000, scoped, tag = 'scratch operand']
  %s0 = inlined_call_operand.vmem [shape: bf16[2,8,8,128], index: 0, kind: input, shape index: {}]
  %s1 = inlined_call_operand.vmem [shape: f32[2,128], index: 1, kind: input, shape index: {}]
  %s2 = inlined_call_operand.vmem [shape: bf16[1152,128], index: 2, kind: input, shape index: {}]
  %s3 = inlined_call_operand.vmem [shape: bf16[2,8,8,128], index: 3, kind: output, shape index: {0}]
  %s4 = inlined_call_operand.vmem [shape: f32[2,2,128], index: 4, kind: output, shape index: {1}]
  %5 = xla_tuple %s3, %s4
  %s6 = sld [smem:[#allocation0]]
  $region53: #{basic_block_forward.6} parent=0
    _
  %s8 = ssub.s32 1, %s6
  %s9 = scalar_select 0, %s8, %s6
  loop: start=0, step=1, limit=4
  $region2: #{basic_block_forward.6} parent=0 // loop_pre_header
    _
  $region3: #{basic_block_forward.6} parent=0 // loop_header
    %s11 = sphi 0, %s15
    %p12 = scmp.ge.s32.totalorder %s11, 4
    %s21 = sphi 0, %s23
    %s24 = sphi 0, %s21
    %s25 = sphi 0, %s24
    %s41 = sphi 0, %s25
    %s45 = sphi 0, %s45
    %s47 = sphi 0, %s45
    %s48 = sphi 0, %s47
    %s62 = sphi 0, %s48
    %s66 = sphi 0, %s66
    %s68 = sphi 0, %s66
    %s69 = sphi 0, %s68
    %s83 = sphi 0, %s69
    %s89 = sphi 0, %s91
    %s92 = sphi 0, %s89
    %s93 = sphi 0, %s92
    %s109 = sphi 0, %s93
    %s115 = sphi 0, %s117
    %s118 = sphi 0, %s115
    %s119 = sphi 0, %s118
    %s135 = sphi 0, %s119
  $region4: #{basic_block_forward.6} parent=0 // loop_header_branch
    %14 = sbr.rel (%p12) target = $region8
  $region5: #{basic_block_forward.6} parent=0 // loop_body
    %s16 = ssub.s32 %s11, 1
    %s17 = ssub.s32 %s11, 2
    %s18 = sadd.s32 %s11, 1
    %s19 = ssub.s32 %s11, %s18
    %p20 = scmp.eq.s32.totalorder %s19, 0
    %s22 = sadd.s32 %s21, 1
    %s23 = scalar_select %p20, %s21, %s22
    %p26 = pneg %p20
    %p27 = scmp.eq.s32.totalorder %s11, 1
    %p28 = por %p26, %p27
    %p29 = scmp.ne.s32.totalorder %s21, %s24
    %p30 = scmp.eq.s32.totalorder %s11, 0
    %p31 = por %p29, %p30
    %p32 = scmp.ne.s32.totalorder %s21, %s24
    %p33 = scmp.eq.s32.totalorder %s16, 1
    %p34 = por %p32, %p33
    %p35 = scmp.ne.s32.totalorder %s24, %s25
    %p36 = scmp.eq.s32.totalorder %s16, 0
    %p37 = por %p35, %p36
    %p38 = scmp.ne.s32.totalorder %s24, %s25
    %p39 = scmp.eq.s32.totalorder %s17, 1
    %p40 = por %p38, %p39
    %p42 = scmp.ne.s32.totalorder %s25, %s41
    %p43 = scmp.eq.s32.totalorder %s17, 0
    %p44 = por %p42, %p43
    %s46 = sadd.s32 %s45, 1
    %p49 = scmp.eq.s32.totalorder %s11, 1
    %p50 = scmp.ne.s32.totalorder %s45, %s47
    %p51 = scmp.eq.s32.totalorder %s11, 0
    %p52 = por %p50, %p51
    %p53 = scmp.ne.s32.totalorder %s45, %s47
    %p54 = scmp.eq.s32.totalorder %s16, 1
    %p55 = por %p53, %p54
    %p56 = scmp.ne.s32.totalorder %s47, %s48
    %p57 = scmp.eq.s32.totalorder %s16, 0
    %p58 = por %p56, %p57
    %p59 = scmp.ne.s32.totalorder %s47, %s48
    %p60 = scmp.eq.s32.totalorder %s17, 1
    %p61 = por %p59, %p60
    %p63 = scmp.ne.s32.totalorder %s48, %s62
    %p64 = scmp.eq.s32.totalorder %s17, 0
    %p65 = por %p63, %p64
    %s67 = sadd.s32 %s66, 1
    %p70 = scmp.eq.s32.totalorder %s11, 1
    %p71 = scmp.ne.s32.totalorder %s66, %s68
    %p72 = scmp.eq.s32.totalorder %s11, 0
    %p73 = por %p71, %p72
    %p74 = scmp.ne.s32.totalorder %s66, %s68
    %p75 = scmp.eq.s32.totalorder %s16, 1
    %p76 = por %p74, %p75
    %p77 = scmp.ne.s32.totalorder %s68, %s69
    %p78 = scmp.eq.s32.totalorder %s16, 0
    %p79 = por %p77, %p78
    %p80 = scmp.ne.s32.totalorder %s68, %s69
    %p81 = scmp.eq.s32.totalorder %s17, 1
    %p82 = por %p80, %p81
    %p84 = scmp.ne.s32.totalorder %s69, %s83
    %p85 = scmp.eq.s32.totalorder %s17, 0
    %p86 = por %p84, %p85
    %s87 = ssub.s32 %s11, %s18
    %p88 = scmp.eq.s32.totalorder %s87, 0
    %s90 = sadd.s32 %s89, 1
    %s91 = scalar_select %p88, %s89, %s90
    %p94 = pneg %p88
    %p95 = scmp.eq.s32.totalorder %s11, 1
    %p96 = por %p94, %p95
    %p97 = scmp.ne.s32.totalorder %s89, %s92
    %p98 = scmp.eq.s32.totalorder %s11, 0
    %p99 = por %p97, %p98
    %p100 = scmp.ne.s32.totalorder %s89, %s92
    %p101 = scmp.eq.s32.totalorder %s16, 1
    %p102 = por %p100, %p101
    %p103 = scmp.ne.s32.totalorder %s92, %s93
    %p104 = scmp.eq.s32.totalorder %s16, 0
    %p105 = por %p103, %p104
    %p106 = scmp.ne.s32.totalorder %s92, %s93
    %p107 = scmp.eq.s32.totalorder %s17, 1
    %p108 = por %p106, %p107
    %p110 = scmp.ne.s32.totalorder %s93, %s109
    %p111 = scmp.eq.s32.totalorder %s17, 0
    %p112 = por %p110, %p111
    %s113 = ssub.s32 %s11, %s18
    %p114 = scmp.eq.s32.totalorder %s113, 0
    %s116 = sadd.s32 %s115, 1
    %s117 = scalar_select %p114, %s115, %s116
    %p120 = pneg %p114
    %p121 = scmp.eq.s32.totalorder %s11, 1
    %p122 = por %p120, %p121
    %p123 = scmp.ne.s32.totalorder %s115, %s118
    %p124 = scmp.eq.s32.totalorder %s11, 0
    %p125 = por %p123, %p124
    %p126 = scmp.ne.s32.totalorder %s115, %s118
    %p127 = scmp.eq.s32.totalorder %s16, 1
    %p128 = por %p126, %p127
    %p129 = scmp.ne.s32.totalorder %s118, %s119
    %p130 = scmp.eq.s32.totalorder %s16, 0
    %p131 = por %p129, %p130
    %p132 = scmp.ne.s32.totalorder %s118, %s119
    %p133 = scmp.eq.s32.totalorder %s17, 1
    %p134 = por %p132, %p133
    %p136 = scmp.ne.s32.totalorder %s119, %s135
    %p137 = scmp.eq.s32.totalorder %s17, 0
    %p138 = por %p136, %p137
    %p139 = scmp.le.s32.totalorder 1, %s11
    %p140 = scmp.lt.s32.totalorder %s11, 3
    %p141 = pnand %p139, %p140
    %p142 = pneg %p141
    // Predicated region
    $region9: #{basic_block_forward.6} parent=5 // pred_check
      _
    $region10: #{basic_block_forward.6} parent=5 // pred_check_branch
      %144 = sbr.rel (%p141) target = $region12
    $region11: #{basic_block_forward.6} parent=5 // pred_region
      %s145 = ssub.s32 %s11, 1
      // Predicated region
      $region13: #{basic_block_forward.6} parent=11 // pred_check
        %p146 = pneg %p58
      $region14: #{basic_block_forward.6} parent=11 // pred_check_branch
        %148 = sbr.rel (%p146) target = $region16
      $region15: #{basic_block_forward.6} parent=11 // pred_region
        _
      $region16: #{basic_block_forward.6} parent=11 // pred_fallthru
        _
      // Predicated region
      $region17: #{basic_block_forward.6} parent=11 // pred_check
        %p149 = pneg %p79
      $region18: #{basic_block_forward.6} parent=11 // pred_check_branch
        %151 = sbr.rel (%p149) target = $region20
      $region19: #{basic_block_forward.6} parent=11 // pred_region
        _
      $region20: #{basic_block_forward.6} parent=11 // pred_fallthru
        _
    $region12: #{basic_block_forward.6} parent=5 // pred_fallthru
      _
    %p152 = scmp.lt.s32.totalorder %s11, 2
    // Predicated region
    $region21: #{basic_block_forward.6} parent=5 // pred_check
      %p153 = pneg %p152
    $region22: #{basic_block_forward.6} parent=5 // pred_check_branch
      %155 = sbr.rel (%p153) target = $region24
    $region23: #{basic_block_forward.6} parent=5 // pred_region
      // Predicated region
      $region25: #{basic_block_forward.6} parent=23 // pred_check
        %p156 = pneg %p31
      $region26: #{basic_block_forward.6} parent=23 // pred_check_branch
        %158 = sbr.rel (%p156) target = $region28
      $region27: #{basic_block_forward.6} parent=23 // pred_region
        %p159 = scmp.lt.s32.totalorder %s11, 1
        %s160 = scalar_select %p159, %s11, 1
        %s161 = smul.addr %s160, 8
        %s162 = smul.addr %s161, 4
        %s163 = scalar_lea.vmem %s0, %s162
      $region28: #{basic_block_forward.6} parent=23 // pred_fallthru
        _
    $region24: #{basic_block_forward.6} parent=5 // pred_fallthru
      _
    %p164 = scmp.le.s32.totalorder 1, %s11
    %p165 = scmp.lt.s32.totalorder %s11, 3
    %p166 = pnand %p164, %p165
    %p167 = pneg %p166
    // Predicated region
    $region29: #{basic_block_forward.6} parent=5 // pred_check
      _
    $region30: #{basic_block_forward.6} parent=5 // pred_check_branch
      %169 = sbr.rel (%p166) target = $region32
    $region31: #{basic_block_forward.6} parent=5 // pred_region
      %s170 = ssub.s32 %s11, 1
      %p171 = scmp.lt.s32.totalorder %s16, 1
      %s172 = scalar_select %p171, %s16, 1
      %s173 = smul.addr %s172, 8
      %s174 = smul.addr %s173, 4
      %s175 = scalar_lea.vmem %s0, %s174
      %p176 = pneg %p37
      %p177 = pneg %p34
      %p178 = pneg %p58
      %p179 = pneg %p55
      %p180 = pneg %p79
      %p181 = pneg %p76
      %p182 = pneg %p105
      %p183 = pneg %p102
      %p184 = scmp.lt.s32.totalorder %s16, 1
      %s185 = scalar_select %p184, %s16, 1
      %s186 = smul.addr %s185, 8
      %s187 = smul.addr %s186, 4
      %s188 = scalar_lea.vmem %s3, %s187
      %p189 = pneg %p131
      %p190 = pneg %p128
      %p191 = scmp.lt.s32.totalorder %s16, 1
      %s192 = scalar_select %p191, %s16, 1
      %s193 = smul.addr %s192, 2
      %s194 = scalar_lea.vmem %s4, %s193
      %p195 = scmp.lt.s32.totalorder %s16, 1
      %s196 = scalar_select %p195, %s16, 1
      %s197 = smul.addr %s196, 8
      %s198 = smul.addr %s197, 4
      %s199 = scalar_lea.vmem %s0, %s198
      %p200 = scmp.lt.s32.totalorder %s16, 1
      %s201 = scalar_select %p200, %s16, 1
      %s202 = smul.addr %s201, 8
      %s203 = smul.addr %s202, 4
      %s204 = scalar_lea.vmem %s3, %s203
      %p205 = scmp.lt.s32.totalorder %s16, 1
      %s206 = scalar_select %p205, %s16, 1
      %s207 = smul.addr %s206, 2
      %s208 = scalar_lea.vmem %s4, %s207
      %v210 = vld [vmem:[%s1] sm:$0x1]
      %v211 = vld [vmem:[%s1 + $0x1] sm:$0x1]
      %v212 = vld [vmem:[%s199] sm:$0xf]
      %v213 = vld [vmem:[%s199 + $0x4] sm:$0xf]
      %v214 = vld [vmem:[%s199 + $0x8] sm:$0xf]
      %v215 = vld [vmem:[%s199 + $0xc] sm:$0xf]
      %v216 = vld [vmem:[%s199 + $0x10] sm:$0xf]
      %v217 = vld [vmem:[%s199 + $0x14] sm:$0xf]
      %v218 = vld [vmem:[%s199 + $0x18] sm:$0xf]
      %v219 = vld [vmem:[%s199 + $0x1c] sm:$0xf]
      %v220 = vunpack.c.l.bf16 %v212
      %v221 = vunpack.c.l.bf16 %v213
      %v222 = vunpack.c.l.bf16 %v214
      %v223 = vunpack.c.l.bf16 %v215
      %v224 = vunpack.c.l.bf16 %v216
      %v225 = vunpack.c.l.bf16 %v217
      %v226 = vunpack.c.l.bf16 %v218
      %v227 = vunpack.c.l.bf16 %v219
      %v228 = vlaneseq
      %v229 = vshrl.u32 %v228, 7
      %v230 = vsub.s32 0, %v229
      %v231 = vrot.slane %v210, %v230
      %v232 = vmul.f32 %v220, %v231
      %v233 = vmul.f32 %v221, %v231
      %v234 = vmul.f32 %v222, %v231
      %v235 = vmul.f32 %v223, %v231
      %v236 = vmul.f32 %v224, %v231
      %v237 = vmul.f32 %v225, %v231
      %v238 = vmul.f32 %v226, %v231
      %v239 = vmul.f32 %v227, %v231
      %v240 = vlaneseq
      %v241 = vshrl.u32 %v240, 7
      %v242 = vsub.s32 0, %v241
      %v243 = vrot.slane %v211, %v242
      %v244 = vadd.f32 %v232, %v243
      %v245 = vadd.f32 %v233, %v243
      %v246 = vadd.f32 %v234, %v243
      %v247 = vadd.f32 %v235, %v243
      %v248 = vadd.f32 %v236, %v243
      %v249 = vadd.f32 %v237, %v243
      %v250 = vadd.f32 %v238, %v243
      %v251 = vadd.f32 %v239, %v243
      %v252 = vmax.f32 %v244, 0.0
      %v253 = vmax.f32 %v245, 0.0
      %v254 = vmax.f32 %v246, 0.0
      %v255 = vmax.f32 %v247, 0.0
      %v256 = vmax.f32 %v248, 0.0
      %v257 = vmax.f32 %v249, 0.0
      %v258 = vmax.f32 %v250, 0.0
      %v259 = vmax.f32 %v251, 0.0
      %260 = vst [vmem:[#allocation2] sm:$0xf] 0
      %261 = vst [vmem:[#allocation2 + $0x4] sm:$0x1] 0
      %262 = vst [vmem:[#allocation2 + $0x8] sm:$0xf] 0
      %263 = vst [vmem:[#allocation2 + $0xc] sm:$0x1] 0
      %264 = vst [vmem:[#allocation2 + $0x10] sm:$0xf] 0
      %265 = vst [vmem:[#allocation2 + $0x14] sm:$0x1] 0
      %266 = vst [vmem:[#allocation2 + $0x18] sm:$0xf] 0
      %267 = vst [vmem:[#allocation2 + $0x1c] sm:$0x1] 0
      %268 = vst [vmem:[#allocation2 + $0x20] sm:$0xf] 0
      %269 = vst [vmem:[#allocation2 + $0x24] sm:$0x1] 0
      %270 = vst [vmem:[#allocation2 + $0x28] sm:$0xf] 0
      %271 = vst [vmem:[#allocation2 + $0x2c] sm:$0x1] 0
      %272 = vst [vmem:[#allocation2 + $0x30] sm:$0xf] 0
      %273 = vst [vmem:[#allocation2 + $0x34] sm:$0x1] 0
      %274 = vst [vmem:[#allocation2 + $0x38] sm:$0xf] 0
      %275 = vst [vmem:[#allocation2 + $0x3c] sm:$0x1] 0
      %276 = vst [vmem:[#allocation2 + $0x40] sm:$0xf] 0
      %277 = vst [vmem:[#allocation2 + $0x44] sm:$0x1] 0
      %278 = vst [vmem:[#allocation2 + $0x48] sm:$0xf] 0
      %279 = vst [vmem:[#allocation2 + $0x4c] sm:$0x1] 0
      %v280 = vpack.c.bf16 %v252, %v252
      %v281 = vpack.c.bf16 %v253, %v253
      %v282 = vpack.c.bf16 %v254, %v254
      %v283 = vpack.c.bf16 %v255, %v255
      %v284 = vpack.c.bf16 %v256, %v256
      %v285 = vpack.c.bf16 %v257, %v257
      %v286 = vpack.c.bf16 %v258, %v258
      %v287 = vpack.c.bf16 %v259, %v259
      %v296 = vunpack.c.l.b16 %v280
      %v297 = vunpack.c.l.b16 %v281
      %v298 = vunpack.c.l.b16 %v282
      %v299 = vunpack.c.l.b16 %v283
      %v300 = vunpack.c.l.b16 %v284
      %v301 = vunpack.c.l.b16 %v285
      %v302 = vunpack.c.l.b16 %v286
      %v303 = vunpack.c.l.b16 %v287
      %v304 = vpack.c.b16 %v296, %v296
      %v305 = vpack.c.b16 %v297, %v297
      %v306 = vpack.c.b16 %v298, %v298
      %v307 = vpack.c.b16 %v299, %v299
      %v308 = vpack.c.b16 %v300, %v300
      %v309 = vpack.c.b16 %v301, %v301
      %v310 = vpack.c.b16 %v302, %v302
      %v311 = vpack.c.b16 %v303, %v303
      %v313 = vshrl.u32 %v304, 16
      %v315 = vrot.slane %v313, 7
      %v316 = vshll.u32 %v304, 16
      %v318 = vor.u32 %v315, %v316
      %v319 = vrot.slane %v315, 4
      %v321 = vshrl.u32 %v305, 16
      %v323 = vrot.slane %v321, 7
      %v324 = vshll.u32 %v305, 16
      %v326 = vor.u32 %v323, %v324
      %v327 = vrot.slane %v323, 4
      %v329 = vshrl.u32 %v306, 16
      %v331 = vrot.slane %v329, 7
      %v332 = vshll.u32 %v306, 16
      %v334 = vor.u32 %v331, %v332
      %v335 = vrot.slane %v331, 4
      %v337 = vshrl.u32 %v307, 16
      %v339 = vrot.slane %v337, 7
      %v340 = vshll.u32 %v307, 16
      %v342 = vor.u32 %v339, %v340
      %v343 = vrot.slane %v339, 4
      %v345 = vshrl.u32 %v308, 16
      %v347 = vrot.slane %v345, 7
      %v348 = vshll.u32 %v308, 16
      %v350 = vor.u32 %v347, %v348
      %v351 = vrot.slane %v347, 4
      %v353 = vshrl.u32 %v309, 16
      %v355 = vrot.slane %v353, 7
      %v356 = vshll.u32 %v309, 16
      %v358 = vor.u32 %v355, %v356
      %v359 = vrot.slane %v355, 4
      %v361 = vshrl.u32 %v310, 16
      %v363 = vrot.slane %v361, 7
      %v364 = vshll.u32 %v310, 16
      %v366 = vor.u32 %v363, %v364
      %v367 = vrot.slane %v363, 4
      %v369 = vshrl.u32 %v311, 16
      %v371 = vrot.slane %v369, 7
      %v372 = vshll.u32 %v311, 16
      %v374 = vor.u32 %v371, %v372
      %v375 = vrot.slane %v371, 4
      %s392 = scalar_lea.vmem [#allocation2], 8
      %vm393 = vcmask 1043456
      %vm394 = vsmask.f32 7938
      %vm395 = vmand %vm393, %vm394
      %v396 = vld [vmem:[%s392] sm:$0xf]
      %v397 = vsel %vm395, %v318, %v396
      %398 = vst [vmem:[%s392] sm:$0xf] %v397
      %vm399 = vcmask 1040384
      %vm400 = vsmask.f32 256
      %vm401 = vmand %vm399, %vm400
      %v402 = vld [vmem:[%s392 + $0x4] sm:$0x1]
      %v403 = vsel %vm401, %v319, %v402
      %404 = vst [vmem:[%s392 + $0x4] sm:$0x1] %v403
      %v405 = vld [vmem:[%s392 + $0x8] sm:$0xf]
      %v406 = vsel %vm395, %v326, %v405
      %407 = vst [vmem:[%s392 + $0x8] sm:$0xf] %v406
      %v408 = vld [vmem:[%s392 + $0xc] sm:$0x1]
      %v409 = vsel %vm401, %v327, %v408
      %410 = vst [vmem:[%s392 + $0xc] sm:$0x1] %v409
      %v411 = vld [vmem:[%s392 + $0x10] sm:$0xf]
      %v412 = vsel %vm395, %v334, %v411
      %413 = vst [vmem:[%s392 + $0x10] sm:$0xf] %v412
      %v414 = vld [vmem:[%s392 + $0x14] sm:$0x1]
      %v415 = vsel %vm401, %v335, %v414
      %416 = vst [vmem:[%s392 + $0x14] sm:$0x1] %v415
      %v417 = vld [vmem:[%s392 + $0x18] sm:$0xf]
      %v418 = vsel %vm395, %v342, %v417
      %419 = vst [vmem:[%s392 + $0x18] sm:$0xf] %v418
      %v420 = vld [vmem:[%s392 + $0x1c] sm:$0x1]
      %v421 = vsel %vm401, %v343, %v420
      %422 = vst [vmem:[%s392 + $0x1c] sm:$0x1] %v421
      %v423 = vld [vmem:[%s392 + $0x20] sm:$0xf]
      %v424 = vsel %vm395, %v350, %v423
      %425 = vst [vmem:[%s392 + $0x20] sm:$0xf] %v424
      %v426 = vld [vmem:[%s392 + $0x24] sm:$0x1]
      %v427 = vsel %vm401, %v351, %v426
      %428 = vst [vmem:[%s392 + $0x24] sm:$0x1] %v427
      %v429 = vld [vmem:[%s392 + $0x28] sm:$0xf]
      %v430 = vsel %vm395, %v358, %v429
      %431 = vst [vmem:[%s392 + $0x28] sm:$0xf] %v430
      %v432 = vld [vmem:[%s392 + $0x2c] sm:$0x1]
      %v433 = vsel %vm401, %v359, %v432
      %434 = vst [vmem:[%s392 + $0x2c] sm:$0x1] %v433
      %v435 = vld [vmem:[%s392 + $0x30] sm:$0xf]
      %v436 = vsel %vm395, %v366, %v435
      %437 = vst [vmem:[%s392 + $0x30] sm:$0xf] %v436
      %v438 = vld [vmem:[%s392 + $0x34] sm:$0x1]
      %v439 = vsel %vm401, %v367, %v438
      %440 = vst [vmem:[%s392 + $0x34] sm:$0x1] %v439
      %v441 = vld [vmem:[%s392 + $0x38] sm:$0xf]
      %v442 = vsel %vm395, %v374, %v441
      %443 = vst [vmem:[%s392 + $0x38] sm:$0xf] %v442
      %v444 = vld [vmem:[%s392 + $0x3c] sm:$0x1]
      %v445 = vsel %vm401, %v375, %v444
      %446 = vst [vmem:[%s392 + $0x3c] sm:$0x1] %v445
      %v447 = vld [vmem:[%s2] sm:$0xf]
      %v448 = vld [vmem:[%s2 + $0x4] sm:$0xf]
      %v449 = vld [vmem:[%s2 + $0x8] sm:$0xf]
      %v450 = vld [vmem:[%s2 + $0xc] sm:$0xf]
      %v451 = vld [vmem:[%s2 + $0x10] sm:$0xf]
      %v452 = vld [vmem:[%s2 + $0x14] sm:$0xf]
      %v453 = vld [vmem:[%s2 + $0x18] sm:$0xf]
      %v454 = vld [vmem:[%s2 + $0x1c] sm:$0xf]
      %v455 = vld [vmem:[%s2 + $0x20] sm:$0xf]
      %v456 = vld [vmem:[%s2 + $0x24] sm:$0xf]
      %v457 = vld [vmem:[%s2 + $0x28] sm:$0xf]
      %v458 = vld [vmem:[%s2 + $0x2c] sm:$0xf]
      %v459 = vld [vmem:[%s2 + $0x30] sm:$0xf]
      %v460 = vld [vmem:[%s2 + $0x34] sm:$0xf]
      %v461 = vld [vmem:[%s2 + $0x38] sm:$0xf]
      %v462 = vld [vmem:[%s2 + $0x3c] sm:$0xf]
      %v463 = vld [vmem:[%s2 + $0x40] sm:$0xf]
      %v464 = vld [vmem:[%s2 + $0x44] sm:$0xf]
      %v465 = vld [vmem:[%s2 + $0x48] sm:$0xf]
      %v466 = vld [vmem:[%s2 + $0x4c] sm:$0xf]
      %v467 = vld [vmem:[%s2 + $0x50] sm:$0xf]
      %v468 = vld [vmem:[%s2 + $0x54] sm:$0xf]
      %v469 = vld [vmem:[%s2 + $0x58] sm:$0xf]
      %v470 = vld [vmem:[%s2 + $0x5c] sm:$0xf]
      %v471 = vld [vmem:[%s2 + $0x60] sm:$0xf]
      %v472 = vld [vmem:[%s2 + $0x64] sm:$0xf]
      %v473 = vld [vmem:[%s2 + $0x68] sm:$0xf]
      %v474 = vld [vmem:[%s2 + $0x6c] sm:$0xf]
      %v475 = vld [vmem:[%s2 + $0x70] sm:$0xf]
      %v476 = vld [vmem:[%s2 + $0x74] sm:$0xf]
      %v477 = vld [vmem:[%s2 + $0x78] sm:$0xf]
      %v478 = vld [vmem:[%s2 + $0x7c] sm:$0xf]
      %v479 = vld [vmem:[%s2 + $0x80] sm:$0xf]
      %v480 = vld [vmem:[%s2 + $0x84] sm:$0xf]
      %v481 = vld [vmem:[%s2 + $0x88] sm:$0xf]
      %v482 = vld [vmem:[%s2 + $0x8c] sm:$0xf]
      %v483 = vld [vmem:[%s2 + $0x90] sm:$0xf]
      %v484 = vld [vmem:[%s2 + $0x94] sm:$0xf]
      %v485 = vld [vmem:[%s2 + $0x98] sm:$0xf]
      %v486 = vld [vmem:[%s2 + $0x9c] sm:$0xf]
      %v487 = vld [vmem:[%s2 + $0xa0] sm:$0xf]
      %v488 = vld [vmem:[%s2 + $0xa4] sm:$0xf]
      %v489 = vld [vmem:[%s2 + $0xa8] sm:$0xf]
      %v490 = vld [vmem:[%s2 + $0xac] sm:$0xf]
      %v491 = vld [vmem:[%s2 + $0xb0] sm:$0xf]
      %v492 = vld [vmem:[%s2 + $0xb4] sm:$0xf]
      %v493 = vld [vmem:[%s2 + $0xb8] sm:$0xf]
      %v494 = vld [vmem:[%s2 + $0xbc] sm:$0xf]
      %v495 = vld [vmem:[%s2 + $0xc0] sm:$0xf]
      %v496 = vld [vmem:[%s2 + $0xc4] sm:$0xf]
      %v497 = vld [vmem:[%s2 + $0xc8] sm:$0xf]
      %v498 = vld [vmem:[%s2 + $0xcc] sm:$0xf]
      %v499 = vld [vmem:[%s2 + $0xd0] sm:$0xf]
      %v500 = vld [vmem:[%s2 + $0xd4] sm:$0xf]
      %v501 = vld [vmem:[%s2 + $0xd8] sm:$0xf]
      %v502 = vld [vmem:[%s2 + $0xdc] sm:$0xf]
      %v503 = vld [vmem:[%s2 + $0xe0] sm:$0xf]
      %v504 = vld [vmem:[%s2 + $0xe4] sm:$0xf]
      %v505 = vld [vmem:[%s2 + $0xe8] sm:$0xf]
      %v506 = vld [vmem:[%s2 + $0xec] sm:$0xf]
      %v507 = vld [vmem:[%s2 + $0xf0] sm:$0xf]
      %v508 = vld [vmem:[%s2 + $0xf4] sm:$0xf]
      %v509 = vld [vmem:[%s2 + $0xf8] sm:$0xf]
      %v510 = vld [vmem:[%s2 + $0xfc] sm:$0xf]
      %v511 = vld [vmem:[%s2 + $0x100] sm:$0xf]
      %v512 = vld [vmem:[%s2 + $0x104] sm:$0xf]
      %v513 = vld [vmem:[%s2 + $0x108] sm:$0xf]
      %v514 = vld [vmem:[%s2 + $0x10c] sm:$0xf]
      %v515 = vld [vmem:[%s2 + $0x110] sm:$0xf]
      %v516 = vld [vmem:[%s2 + $0x114] sm:$0xf]
      %v517 = vld [vmem:[%s2 + $0x118] sm:$0xf]
      %v518 = vld [vmem:[%s2 + $0x11c] sm:$0xf]
      %v519 = vld [vmem:[%s2 + $0x120] sm:$0xf]
      %v520 = vld [vmem:[%s2 + $0x124] sm:$0xf]
      %v521 = vld [vmem:[%s2 + $0x128] sm:$0xf]
      %v522 = vld [vmem:[%s2 + $0x12c] sm:$0xf]
      %v523 = vld [vmem:[%s2 + $0x130] sm:$0xf]
      %v524 = vld [vmem:[%s2 + $0x134] sm:$0xf]
      %v525 = vld [vmem:[%s2 + $0x138] sm:$0xf]
      %v526 = vld [vmem:[%s2 + $0x13c] sm:$0xf]
      %v527 = vld [vmem:[%s2 + $0x140] sm:$0xf]
      %v528 = vld [vmem:[%s2 + $0x144] sm:$0xf]
      %v529 = vld [vmem:[%s2 + $0x148] sm:$0xf]
      %v530 = vld [vmem:[%s2 + $0x14c] sm:$0xf]
      %v531 = vld [vmem:[%s2 + $0x150] sm:$0xf]
      %v532 = vld [vmem:[%s2 + $0x154] sm:$0xf]
      %v533 = vld [vmem:[%s2 + $0x158] sm:$0xf]
      %v534 = vld [vmem:[%s2 + $0x15c] sm:$0xf]
      %v535 = vld [vmem:[%s2 + $0x160] sm:$0xf]
      %v536 = vld [vmem:[%s2 + $0x164] sm:$0xf]
      %v537 = vld [vmem:[%s2 + $0x168] sm:$0xf]
      %v538 = vld [vmem:[%s2 + $0x16c] sm:$0xf]
      %v539 = vld [vmem:[%s2 + $0x170] sm:$0xf]
      %v540 = vld [vmem:[%s2 + $0x174] sm:$0xf]
      %v541 = vld [vmem:[%s2 + $0x178] sm:$0xf]
      %v542 = vld [vmem:[%s2 + $0x17c] sm:$0xf]
      %v543 = vld [vmem:[%s2 + $0x180] sm:$0xf]
      %v544 = vld [vmem:[%s2 + $0x184] sm:$0xf]
      %v545 = vld [vmem:[%s2 + $0x188] sm:$0xf]
      %v546 = vld [vmem:[%s2 + $0x18c] sm:$0xf]
      %v547 = vld [vmem:[%s2 + $0x190] sm:$0xf]
      %v548 = vld [vmem:[%s2 + $0x194] sm:$0xf]
      %v549 = vld [vmem:[%s2 + $0x198] sm:$0xf]
      %v550 = vld [vmem:[%s2 + $0x19c] sm:$0xf]
      %v551 = vld [vmem:[%s2 + $0x1a0] sm:$0xf]
      %v552 = vld [vmem:[%s2 + $0x1a4] sm:$0xf]
      %v553 = vld [vmem:[%s2 + $0x1a8] sm:$0xf]
      %v554 = vld [vmem:[%s2 + $0x1ac] sm:$0xf]
      %v555 = vld [vmem:[%s2 + $0x1b0] sm:$0xf]
      %v556 = vld [vmem:[%s2 + $0x1b4] sm:$0xf]
      %v557 = vld [vmem:[%s2 + $0x1b8] sm:$0xf]
      %v558 = vld [vmem:[%s2 + $0x1bc] sm:$0xf]
      %v559 = vld [vmem:[%s2 + $0x1c0] sm:$0xf]
      %v560 = vld [vmem:[%s2 + $0x1c4] sm:$0xf]
      %v561 = vld [vmem:[%s2 + $0x1c8] sm:$0xf]
      %v562 = vld [vmem:[%s2 + $0x1cc] sm:$0xf]
      %v563 = vld [vmem:[%s2 + $0x1d0] sm:$0xf]
      %v564 = vld [vmem:[%s2 + $0x1d4] sm:$0xf]
      %v565 = vld [vmem:[%s2 + $0x1d8] sm:$0xf]
      %v566 = vld [vmem:[%s2 + $0x1dc] sm:$0xf]
      %v567 = vld [vmem:[%s2 + $0x1e0] sm:$0xf]
      %v568 = vld [vmem:[%s2 + $0x1e4] sm:$0xf]
      %v569 = vld [vmem:[%s2 + $0x1e8] sm:$0xf]
      %v570 = vld [vmem:[%s2 + $0x1ec] sm:$0xf]
      %v571 = vld [vmem:[%s2 + $0x1f0] sm:$0xf]
      %v572 = vld [vmem:[%s2 + $0x1f4] sm:$0xf]
      %v573 = vld [vmem:[%s2 + $0x1f8] sm:$0xf]
      %v574 = vld [vmem:[%s2 + $0x1fc] sm:$0xf]
      %v575 = vld [vmem:[%s2 + $0x200] sm:$0xf]
      %v576 = vld [vmem:[%s2 + $0x204] sm:$0xf]
      %v577 = vld [vmem:[%s2 + $0x208] sm:$0xf]
      %v578 = vld [vmem:[%s2 + $0x20c] sm:$0xf]
      %v579 = vld [vmem:[%s2 + $0x210] sm:$0xf]
      %v580 = vld [vmem:[%s2 + $0x214] sm:$0xf]
      %v581 = vld [vmem:[%s2 + $0x218] sm:$0xf]
      %v582 = vld [vmem:[%s2 + $0x21c] sm:$0xf]
      %v583 = vld [vmem:[%s2 + $0x220] sm:$0xf]
      %v584 = vld [vmem:[%s2 + $0x224] sm:$0xf]
      %v585 = vld [vmem:[%s2 + $0x228] sm:$0xf]
      %v586 = vld [vmem:[%s2 + $0x22c] sm:$0xf]
      %v587 = vld [vmem:[%s2 + $0x230] sm:$0xf]
      %v588 = vld [vmem:[%s2 + $0x234] sm:$0xf]
      %v589 = vld [vmem:[%s2 + $0x238] sm:$0xf]
      %v590 = vld [vmem:[%s2 + $0x23c] sm:$0xf]
      %v591 = vld [vmem:[#allocation2] sm:$0xf]
      %v592 = vld [vmem:[#allocation2 + $0x8] sm:$0xf]
      %v593 = vld [vmem:[#allocation2 + $0x10] sm:$0xf]
      %v594 = vld [vmem:[#allocation2 + $0x18] sm:$0xf]
      %v595 = vld [vmem:[#allocation2 + $0x20] sm:$0xf]
      %v596 = vld [vmem:[#allocation2 + $0x28] sm:$0xf]
      %v597 = vld [vmem:[#allocation2 + $0x30] sm:$0xf]
      %v598 = vld [vmem:[#allocation2 + $0x38] sm:$0xf]
      %v599 = vld [vmem:[#allocation2 + $0x4] sm:$0x1]
      %v600 = vld [vmem:[#allocation2 + $0xc] sm:$0x1]
      %v601 = vld [vmem:[#allocation2 + $0x14] sm:$0x1]
      %v602 = vld [vmem:[#allocation2 + $0x1c] sm:$0x1]
      %v603 = vld [vmem:[#allocation2 + $0x24] sm:$0x1]
      %v604 = vld [vmem:[#allocation2 + $0x2c] sm:$0x1]
      %v605 = vld [vmem:[#allocation2 + $0x34] sm:$0x1]
      %v606 = vld [vmem:[#allocation2 + $0x3c] sm:$0x1]
      %v607 = vld [vmem:[#allocation2] sm:$0xe]
      %v608 = vld [vmem:[#allocation2 + $0x8] sm:$0xe]
      %v609 = vld [vmem:[#allocation2 + $0x10] sm:$0xe]
      %v610 = vld [vmem:[#allocation2 + $0x18] sm:$0xe]
      %v611 = vld [vmem:[#allocation2 + $0x20] sm:$0xe]
      %v612 = vld [vmem:[#allocation2 + $0x28] sm:$0xe]
      %v613 = vld [vmem:[#allocation2 + $0x30] sm:$0xe]
      %v614 = vld [vmem:[#allocation2 + $0x38] sm:$0xe]
      %v615 = vld [vmem:[%s392] sm:$0xf]
      %v616 = vld [vmem:[%s392 + $0x8] sm:$0xf]
      %v617 = vld [vmem:[%s392 + $0x10] sm:$0xf]
      %v618 = vld [vmem:[%s392 + $0x18] sm:$0xf]
      %v619 = vld [vmem:[%s392 + $0x20] sm:$0xf]
      %v620 = vld [vmem:[%s392 + $0x28] sm:$0xf]
      %v621 = vld [vmem:[%s392 + $0x30] sm:$0xf]
      %v622 = vld [vmem:[%s392 + $0x38] sm:$0xf]
      %v623 = vld [vmem:[%s392 + $0x4] sm:$0x1]
      %v624 = vld [vmem:[%s392 + $0xc] sm:$0x1]
      %v625 = vld [vmem:[%s392 + $0x14] sm:$0x1]
      %v626 = vld [vmem:[%s392 + $0x1c] sm:$0x1]
      %v627 = vld [vmem:[%s392 + $0x24] sm:$0x1]
      %v628 = vld [vmem:[%s392 + $0x2c] sm:$0x1]
      %v629 = vld [vmem:[%s392 + $0x34] sm:$0x1]
      %v630 = vld [vmem:[%s392 + $0x3c] sm:$0x1]
      %v631 = vld [vmem:[%s392] sm:$0xe]
      %v632 = vld [vmem:[%s392 + $0x8] sm:$0xe]
      %v633 = vld [vmem:[%s392 + $0x10] sm:$0xe]
      %v634 = vld [vmem:[%s392 + $0x18] sm:$0xe]
      %v635 = vld [vmem:[%s392 + $0x20] sm:$0xe]
      %v636 = vld [vmem:[%s392 + $0x28] sm:$0xe]
      %v637 = vld [vmem:[%s392 + $0x30] sm:$0xe]
      %v638 = vld [vmem:[%s392 + $0x38] sm:$0xe]
      %s639 = scalar_lea.vmem [#allocation2], 16
      %v640 = vld [vmem:[%s639] sm:$0xf]
      %v641 = vld [vmem:[%s639 + $0x8] sm:$0xf]
      %v642 = vld [vmem:[%s639 + $0x10] sm:$0xf]
      %v643 = vld [vmem:[%s639 + $0x18] sm:$0xf]
      %v644 = vld [vmem:[%s639 + $0x20] sm:$0xf]
      %v645 = vld [vmem:[%s639 + $0x28] sm:$0xf]
      %v646 = vld [vmem:[%s639 + $0x30] sm:$0xf]
      %v647 = vld [vmem:[%s639 + $0x38] sm:$0xf]
      %v648 = vld [vmem:[%s639 + $0x4] sm:$0x1]
      %v649 = vld [vmem:[%s639 + $0xc] sm:$0x1]
      %v650 = vld [vmem:[%s639 + $0x14] sm:$0x1]
      %v651 = vld [vmem:[%s639 + $0x1c] sm:$0x1]
      %v652 = vld [vmem:[%s639 + $0x24] sm:$0x1]
      %v653 = vld [vmem:[%s639 + $0x2c] sm:$0x1]
      %v654 = vld [vmem:[%s639 + $0x34] sm:$0x1]
      %v655 = vld [vmem:[%s639 + $0x3c] sm:$0x1]
      %v656 = vld [vmem:[%s639] sm:$0xe]
      %v657 = vld [vmem:[%s639 + $0x8] sm:$0xe]
      %v658 = vld [vmem:[%s639 + $0x10] sm:$0xe]
      %v659 = vld [vmem:[%s639 + $0x18] sm:$0xe]
      %v660 = vld [vmem:[%s639 + $0x20] sm:$0xe]
      %v661 = vld [vmem:[%s639 + $0x28] sm:$0xe]
      %v662 = vld [vmem:[%s639 + $0x30] sm:$0xe]
      %v663 = vld [vmem:[%s639 + $0x38] sm:$0xe]
      %v680 = vunpack.c.l.b16 %v591
      %v681 = vunpack.c.l.b16 %v599
      %v682 = vunpack.c.l.b16 %v592
      %v683 = vunpack.c.l.b16 %v600
      %v684 = vunpack.c.l.b16 %v593
      %v685 = vunpack.c.l.b16 %v601
      %v686 = vunpack.c.l.b16 %v594
      %v687 = vunpack.c.l.b16 %v602
      %v688 = vunpack.c.l.b16 %v595
      %v689 = vunpack.c.l.b16 %v603
      %v690 = vunpack.c.l.b16 %v596
      %v691 = vunpack.c.l.b16 %v604
      %v692 = vunpack.c.l.b16 %v597
      %v693 = vunpack.c.l.b16 %v605
      %v694 = vunpack.c.l.b16 %v598
      %v695 = vunpack.c.l.b16 %v606
      %v696 = vpack.c.b16 %v681, %v680
      %v697 = vpack.c.b16 %v683, %v682
      %v698 = vpack.c.b16 %v685, %v684
      %v699 = vpack.c.b16 %v687, %v686
      %v700 = vpack.c.b16 %v689, %v688
      %v701 = vpack.c.b16 %v691, %v690
      %v702 = vpack.c.b16 %v693, %v692
      %v703 = vpack.c.b16 %v695, %v694
      %v705 = vshrl.u32 %v696, 16
      %v707 = vshll.u32 %v696, 16
      %v709 = vrot.slane %v707, 1
      %v710 = vor.u32 %v705, %v709
      %v712 = vshrl.u32 %v697, 16
      %v714 = vshll.u32 %v697, 16
      %v716 = vrot.slane %v714, 1
      %v717 = vor.u32 %v712, %v716
      %v719 = vshrl.u32 %v698, 16
      %v721 = vshll.u32 %v698, 16
      %v723 = vrot.slane %v721, 1
      %v724 = vor.u32 %v719, %v723
      %v726 = vshrl.u32 %v699, 16
      %v728 = vshll.u32 %v699, 16
      %v730 = vrot.slane %v728, 1
      %v731 = vor.u32 %v726, %v730
      %v733 = vshrl.u32 %v700, 16
      %v735 = vshll.u32 %v700, 16
      %v737 = vrot.slane %v735, 1
      %v738 = vor.u32 %v733, %v737
      %v740 = vshrl.u32 %v701, 16
      %v742 = vshll.u32 %v701, 16
      %v744 = vrot.slane %v742, 1
      %v745 = vor.u32 %v740, %v744
      %v747 = vshrl.u32 %v702, 16
      %v749 = vshll.u32 %v702, 16
      %v751 = vrot.slane %v749, 1
      %v752 = vor.u32 %v747, %v751
      %v754 = vshrl.u32 %v703, 16
      %v756 = vshll.u32 %v703, 16
      %v758 = vrot.slane %v756, 1
      %v759 = vor.u32 %v754, %v758
      %v768 = vunpack.c.l.b16 %v607
      %v769 = vunpack.c.l.b16 %v608
      %v770 = vunpack.c.l.b16 %v609
      %v771 = vunpack.c.l.b16 %v610
      %v772 = vunpack.c.l.b16 %v611
      %v773 = vunpack.c.l.b16 %v612
      %v774 = vunpack.c.l.b16 %v613
      %v775 = vunpack.c.l.b16 %v614
      %v776 = vpack.c.b16 %v681, %v768
      %v777 = vpack.c.b16 %v683, %v769
      %v778 = vpack.c.b16 %v685, %v770
      %v779 = vpack.c.b16 %v687, %v771
      %v780 = vpack.c.b16 %v689, %v772
      %v781 = vpack.c.b16 %v691, %v773
      %v782 = vpack.c.b16 %v693, %v774
      %v783 = vpack.c.b16 %v695, %v775
      %v784 = vrot.slane %v776, 1
      %v785 = vrot.slane %v777, 1
      %v786 = vrot.slane %v778, 1
      %v787 = vrot.slane %v779, 1
      %v788 = vrot.slane %v780, 1
      %v789 = vrot.slane %v781, 1
      %v790 = vrot.slane %v782, 1
      %v791 = vrot.slane %v783, 1
      %v808 = vunpack.c.l.b16 %v615
      %v809 = vunpack.c.l.b16 %v623
      %v810 = vunpack.c.l.b16 %v616
      %v811 = vunpack.c.l.b16 %v624
      %v812 = vunpack.c.l.b16 %v617
      %v813 = vunpack.c.l.b16 %v625
      %v814 = vunpack.c.l.b16 %v618
      %v815 = vunpack.c.l.b16 %v626
      %v816 = vunpack.c.l.b16 %v619
      %v817 = vunpack.c.l.b16 %v627
      %v818 = vunpack.c.l.b16 %v620
      %v819 = vunpack.c.l.b16 %v628
      %v820 = vunpack.c.l.b16 %v621
      %v821 = vunpack.c.l.b16 %v629
      %v822 = vunpack.c.l.b16 %v622
      %v823 = vunpack.c.l.b16 %v630
      %v824 = vpack.c.b16 %v809, %v808
      %v825 = vpack.c.b16 %v811, %v810
      %v826 = vpack.c.b16 %v813, %v812
      %v827 = vpack.c.b16 %v815, %v814
      %v828 = vpack.c.b16 %v817, %v816
      %v829 = vpack.c.b16 %v819, %v818
      %v830 = vpack.c.b16 %v821, %v820
      %v831 = vpack.c.b16 %v823, %v822
      %v833 = vshrl.u32 %v824, 16
      %v835 = vshll.u32 %v824, 16
      %v837 = vrot.slane %v835, 1
      %v838 = vor.u32 %v833, %v837
      %v840 = vshrl.u32 %v825, 16
      %v842 = vshll.u32 %v825, 16
      %v844 = vrot.slane %v842, 1
      %v845 = vor.u32 %v840, %v844
      %v847 = vshrl.u32 %v826, 16
      %v849 = vshll.u32 %v826, 16
      %v851 = vrot.slane %v849, 1
      %v852 = vor.u32 %v847, %v851
      %v854 = vshrl.u32 %v827, 16
      %v856 = vshll.u32 %v827, 16
      %v858 = vrot.slane %v856, 1
      %v859 = vor.u32 %v854, %v858
      %v861 = vshrl.u32 %v828, 16
      %v863 = vshll.u32 %v828, 16
      %v865 = vrot.slane %v863, 1
      %v866 = vor.u32 %v861, %v865
      %v868 = vshrl.u32 %v829, 16
      %v870 = vshll.u32 %v829, 16
      %v872 = vrot.slane %v870, 1
      %v873 = vor.u32 %v868, %v872
      %v875 = vshrl.u32 %v830, 16
      %v877 = vshll.u32 %v830, 16
      %v879 = vrot.slane %v877, 1
      %v880 = vor.u32 %v875, %v879
      %v882 = vshrl.u32 %v831, 16
      %v884 = vshll.u32 %v831, 16
      %v886 = vrot.slane %v884, 1
      %v887 = vor.u32 %v882, %v886
      %v896 = vunpack.c.l.b16 %v631
      %v897 = vunpack.c.l.b16 %v632
      %v898 = vunpack.c.l.b16 %v633
      %v899 = vunpack.c.l.b16 %v634
      %v900 = vunpack.c.l.b16 %v635
      %v901 = vunpack.c.l.b16 %v636
      %v902 = vunpack.c.l.b16 %v637
      %v903 = vunpack.c.l.b16 %v638
      %v904 = vpack.c.b16 %v809, %v896
      %v905 = vpack.c.b16 %v811, %v897
      %v906 = vpack.c.b16 %v813, %v898
      %v907 = vpack.c.b16 %v815, %v899
      %v908 = vpack.c.b16 %v817, %v900
      %v909 = vpack.c.b16 %v819, %v901
      %v910 = vpack.c.b16 %v821, %v902
      %v911 = vpack.c.b16 %v823, %v903
      %v912 = vrot.slane %v904, 1
      %v913 = vrot.slane %v905, 1
      %v914 = vrot.slane %v906, 1
      %v915 = vrot.slane %v907, 1
      %v916 = vrot.slane %v908, 1
      %v917 = vrot.slane %v909, 1
      %v918 = vrot.slane %v910, 1
      %v919 = vrot.slane %v911, 1
      %v936 = vunpack.c.l.b16 %v640
      %v937 = vunpack.c.l.b16 %v648
      %v938 = vunpack.c.l.b16 %v641
      %v939 = vunpack.c.l.b16 %v649
      %v940 = vunpack.c.l.b16 %v642
      %v941 = vunpack.c.l.b16 %v650
      %v942 = vunpack.c.l.b16 %v643
      %v943 = vunpack.c.l.b16 %v651
      %v944 = vunpack.c.l.b16 %v644
      %v945 = vunpack.c.l.b16 %v652
      %v946 = vunpack.c.l.b16 %v645
      %v947 = vunpack.c.l.b16 %v653
      %v948 = vunpack.c.l.b16 %v646
      %v949 = vunpack.c.l.b16 %v654
      %v950 = vunpack.c.l.b16 %v647
      %v951 = vunpack.c.l.b16 %v655
      %v952 = vpack.c.b16 %v937, %v936
      %v953 = vpack.c.b16 %v939, %v938
      %v954 = vpack.c.b16 %v941, %v940
      %v955 = vpack.c.b16 %v943, %v942
      %v956 = vpack.c.b16 %v945, %v944
      %v957 = vpack.c.b16 %v947, %v946
      %v958 = vpack.c.b16 %v949, %v948
      %v959 = vpack.c.b16 %v951, %v950
      %v961 = vshrl.u32 %v952, 16
      %v963 = vshll.u32 %v952, 16
      %v965 = vrot.slane %v963, 1
      %v966 = vor.u32 %v961, %v965
      %v968 = vshrl.u32 %v953, 16
      %v970 = vshll.u32 %v953, 16
      %v972 = vrot.slane %v970, 1
      %v973 = vor.u32 %v968, %v972
      %v975 = vshrl.u32 %v954, 16
      %v977 = vshll.u32 %v954, 16
      %v979 = vrot.slane %v977, 1
      %v980 = vor.u32 %v975, %v979
      %v982 = vshrl.u32 %v955, 16
      %v984 = vshll.u32 %v955, 16
      %v986 = vrot.slane %v984, 1
      %v987 = vor.u32 %v982, %v986
      %v989 = vshrl.u32 %v956, 16
      %v991 = vshll.u32 %v956, 16
      %v993 = vrot.slane %v991, 1
      %v994 = vor.u32 %v989, %v993
      %v996 = vshrl.u32 %v957, 16
      %v998 = vshll.u32 %v957, 16
      %v1000 = vrot.slane %v998, 1
      %v1001 = vor.u32 %v996, %v1000
      %v1003 = vshrl.u32 %v958, 16
      %v1005 = vshll.u32 %v958, 16
      %v1007 = vrot.slane %v1005, 1
      %v1008 = vor.u32 %v1003, %v1007
      %v1010 = vshrl.u32 %v959, 16
      %v1012 = vshll.u32 %v959, 16
      %v1014 = vrot.slane %v1012, 1
      %v1015 = vor.u32 %v1010, %v1014
      %v1024 = vunpack.c.l.b16 %v656
      %v1025 = vunpack.c.l.b16 %v657
      %v1026 = vunpack.c.l.b16 %v658
      %v1027 = vunpack.c.l.b16 %v659
      %v1028 = vunpack.c.l.b16 %v660
      %v1029 = vunpack.c.l.b16 %v661
      %v1030 = vunpack.c.l.b16 %v662
      %v1031 = vunpack.c.l.b16 %v663
      %v1032 = vpack.c.b16 %v937, %v1024
      %v1033 = vpack.c.b16 %v939, %v1025
      %v1034 = vpack.c.b16 %v941, %v1026
      %v1035 = vpack.c.b16 %v943, %v1027
      %v1036 = vpack.c.b16 %v945, %v1028
      %v1037 = vpack.c.b16 %v947, %v1029
      %v1038 = vpack.c.b16 %v949, %v1030
      %v1039 = vpack.c.b16 %v951, %v1031
      %v1040 = vrot.slane %v1032, 1
      %v1041 = vrot.slane %v1033, 1
      %v1042 = vrot.slane %v1034, 1
      %v1043 = vrot.slane %v1035, 1
      %v1044 = vrot.slane %v1036, 1
      %v1045 = vrot.slane %v1037, 1
      %v1046 = vrot.slane %v1038, 1
      %v1047 = vrot.slane %v1039, 1
      %v1048 = vunpack.c.l.b16 %v710
      %v1049 = vunpack.c.l.b16 %v784
      %v1050 = vunpack.c.l.b16 %v838
      %v1051 = vunpack.c.l.b16 %v912
      %v1052 = vunpack.c.l.b16 %v966
      %v1053 = vunpack.c.l.b16 %v1040
      %v1054 = vunpack.c.l.b16 %v717
      %v1055 = vunpack.c.l.b16 %v785
      %v1056 = vunpack.c.l.b16 %v845
      %v1057 = vunpack.c.l.b16 %v913
      %v1058 = vunpack.c.l.b16 %v973
      %v1059 = vunpack.c.l.b16 %v1041
      %v1060 = vunpack.c.l.b16 %v724
      %v1061 = vunpack.c.l.b16 %v786
      %v1062 = vunpack.c.l.b16 %v852
      %v1063 = vunpack.c.l.b16 %v914
      %v1064 = vunpack.c.l.b16 %v980
      %v1065 = vunpack.c.l.b16 %v1042
      %v1066 = vunpack.c.l.b16 %v731
      %v1067 = vunpack.c.l.b16 %v787
      %v1068 = vunpack.c.l.b16 %v859
      %v1069 = vunpack.c.l.b16 %v915
      %v1070 = vunpack.c.l.b16 %v987
      %v1071 = vunpack.c.l.b16 %v1043
      %v1072 = vunpack.c.l.b16 %v738
      %v1073 = vunpack.c.l.b16 %v788
      %v1074 = vunpack.c.l.b16 %v866
      %v1075 = vunpack.c.l.b16 %v916
      %v1076 = vunpack.c.l.b16 %v994
      %v1077 = vunpack.c.l.b16 %v1044
      %v1078 = vunpack.c.l.b16 %v745
      %v1079 = vunpack.c.l.b16 %v789
      %v1080 = vunpack.c.l.b16 %v873
      %v1081 = vunpack.c.l.b16 %v917
      %v1082 = vunpack.c.l.b16 %v1001
      %v1083 = vunpack.c.l.b16 %v1045
      %v1084 = vunpack.c.l.b16 %v752
      %v1085 = vunpack.c.l.b16 %v790
      %v1086 = vunpack.c.l.b16 %v880
      %v1087 = vunpack.c.l.b16 %v918
      %v1088 = vunpack.c.l.b16 %v1008
      %v1089 = vunpack.c.l.b16 %v1046
      %v1090 = vunpack.c.l.b16 %v759
      %v1091 = vunpack.c.l.b16 %v791
      %v1092 = vunpack.c.l.b16 %v887
      %v1093 = vunpack.c.l.b16 %v919
      %v1094 = vunpack.c.l.b16 %v1015
      %v1095 = vunpack.c.l.b16 %v1047
      %v1096 = vpack.c.b16 %v682, %v680
      %v1097 = vpack.c.b16 %v1054, %v1048
      %v1098 = vpack.c.b16 %v1055, %v1049
      %v1099 = vpack.c.b16 %v810, %v808
      %v1100 = vpack.c.b16 %v1056, %v1050
      %v1101 = vpack.c.b16 %v1057, %v1051
      %v1102 = vpack.c.b16 %v938, %v936
      %v1103 = vpack.c.b16 %v1058, %v1052
      %v1104 = vpack.c.b16 %v1059, %v1053
      %v1105 = vpack.c.b16 %v686, %v684
      %v1106 = vpack.c.b16 %v1066, %v1060
      %v1107 = vpack.c.b16 %v1067, %v1061
      %v1108 = vpack.c.b16 %v814, %v812
      %v1109 = vpack.c.b16 %v1068, %v1062
      %v1110 = vpack.c.b16 %v1069, %v1063
      %v1111 = vpack.c.b16 %v942, %v940
      %v1112 = vpack.c.b16 %v1070, %v1064
      %v1113 = vpack.c.b16 %v1071, %v1065
      %v1114 = vpack.c.b16 %v690, %v688
      %v1115 = vpack.c.b16 %v1078, %v1072
      %v1116 = vpack.c.b16 %v1079, %v1073
      %v1117 = vpack.c.b16 %v818, %v816
      %v1118 = vpack.c.b16 %v1080, %v1074
      %v1119 = vpack.c.b16 %v1081, %v1075
      %v1120 = vpack.c.b16 %v946, %v944
      %v1121 = vpack.c.b16 %v1082, %v1076
      %v1122 = vpack.c.b16 %v1083, %v1077
      %v1123 = vpack.c.b16 %v694, %v692
      %v1124 = vpack.c.b16 %v1090, %v1084
      %v1125 = vpack.c.b16 %v1091, %v1085
      %v1126 = vpack.c.b16 %v822, %v820
      %v1127 = vpack.c.b16 %v1092, %v1086
      %v1128 = vpack.c.b16 %v1093, %v1087
      %v1129 = vpack.c.b16 %v950, %v948
      %v1130 = vpack.c.b16 %v1094, %v1088
      %v1131 = vpack.c.b16 %v1095, %v1089
      %v1312 = vunpack.c.l.b16 %v447
      %v1313 = vunpack.c.l.b16 %v448
      %v1314 = vunpack.c.l.b16 %v449
      %v1315 = vunpack.c.l.b16 %v450
      %v1316 = vunpack.c.l.b16 %v451
      %v1317 = vunpack.c.l.b16 %v452
      %v1318 = vunpack.c.l.b16 %v453
      %v1319 = vunpack.c.l.b16 %v454
      %v1320 = vunpack.c.l.b16 %v455
      %v1321 = vunpack.c.l.b16 %v456
      %v1322 = vunpack.c.l.b16 %v457
      %v1323 = vunpack.c.l.b16 %v458
      %v1324 = vunpack.c.l.b16 %v459
      %v1325 = vunpack.c.l.b16 %v460
      %v1326 = vunpack.c.l.b16 %v461
      %v1327 = vunpack.c.l.b16 %v462
      %v1328 = vunpack.c.l.b16 %v463
      %v1329 = vunpack.c.l.b16 %v464
      %v1330 = vunpack.c.l.b16 %v465
      %v1331 = vunpack.c.l.b16 %v466
      %v1332 = vunpack.c.l.b16 %v467
      %v1333 = vunpack.c.l.b16 %v468
      %v1334 = vunpack.c.l.b16 %v469
      %v1335 = vunpack.c.l.b16 %v470
      %v1336 = vunpack.c.l.b16 %v471
      %v1337 = vunpack.c.l.b16 %v472
      %v1338 = vunpack.c.l.b16 %v473
      %v1339 = vunpack.c.l.b16 %v474
      %v1340 = vunpack.c.l.b16 %v475
      %v1341 = vunpack.c.l.b16 %v476
      %v1342 = vunpack.c.l.b16 %v477
      %v1343 = vunpack.c.l.b16 %v478
      %v1344 = vunpack.c.l.b16 %v479
      %v1345 = vunpack.c.l.b16 %v480
      %v1346 = vunpack.c.l.b16 %v481
      %v1347 = vunpack.c.l.b16 %v482
      %v1348 = vunpack.c.l.b16 %v483
      %v1349 = vunpack.c.l.b16 %v484
      %v1350 = vunpack.c.l.b16 %v485
      %v1351 = vunpack.c.l.b16 %v486
      %v1352 = vunpack.c.l.b16 %v487
      %v1353 = vunpack.c.l.b16 %v488
      %v1354 = vunpack.c.l.b16 %v489
      %v1355 = vunpack.c.l.b16 %v490
      %v1356 = vunpack.c.l.b16 %v491
      %v1357 = vunpack.c.l.b16 %v492
      %v1358 = vunpack.c.l.b16 %v493
      %v1359 = vunpack.c.l.b16 %v494
      %v1360 = vunpack.c.l.b16 %v495
      %v1361 = vunpack.c.l.b16 %v496
      %v1362 = vunpack.c.l.b16 %v497
      %v1363 = vunpack.c.l.b16 %v498
      %v1364 = vunpack.c.l.b16 %v499
      %v1365 = vunpack.c.l.b16 %v500
      %v1366 = vunpack.c.l.b16 %v501
      %v1367 = vunpack.c.l.b16 %v502
      %v1368 = vunpack.c.l.b16 %v503
      %v1369 = vunpack.c.l.b16 %v504
      %v1370 = vunpack.c.l.b16 %v505
      %v1371 = vunpack.c.l.b16 %v506
      %v1372 = vunpack.c.l.b16 %v507
      %v1373 = vunpack.c.l.b16 %v508
      %v1374 = vunpack.c.l.b16 %v509
      %v1375 = vunpack.c.l.b16 %v510
      %v1376 = vunpack.c.l.b16 %v511
      %v1377 = vunpack.c.l.b16 %v512
      %v1378 = vunpack.c.l.b16 %v513
      %v1379 = vunpack.c.l.b16 %v514
      %v1380 = vunpack.c.l.b16 %v515
      %v1381 = vunpack.c.l.b16 %v516
      %v1382 = vunpack.c.l.b16 %v517
      %v1383 = vunpack.c.l.b16 %v518
      %v1384 = vunpack.c.l.b16 %v519
      %v1385 = vunpack.c.l.b16 %v520
      %v1386 = vunpack.c.l.b16 %v521
      %v1387 = vunpack.c.l.b16 %v522
      %v1388 = vunpack.c.l.b16 %v523
      %v1389 = vunpack.c.l.b16 %v524
      %v1390 = vunpack.c.l.b16 %v525
      %v1391 = vunpack.c.l.b16 %v526
      %v1392 = vunpack.c.l.b16 %v527
      %v1393 = vunpack.c.l.b16 %v528
      %v1394 = vunpack.c.l.b16 %v529
      %v1395 = vunpack.c.l.b16 %v530
      %v1396 = vunpack.c.l.b16 %v531
      %v1397 = vunpack.c.l.b16 %v532
      %v1398 = vunpack.c.l.b16 %v533
      %v1399 = vunpack.c.l.b16 %v534
      %v1400 = vunpack.c.l.b16 %v535
      %v1401 = vunpack.c.l.b16 %v536
      %v1402 = vunpack.c.l.b16 %v537
      %v1403 = vunpack.c.l.b16 %v538
      %v1404 = vunpack.c.l.b16 %v539
      %v1405 = vunpack.c.l.b16 %v540
      %v1406 = vunpack.c.l.b16 %v541
      %v1407 = vunpack.c.l.b16 %v542
      %v1408 = vunpack.c.l.b16 %v543
      %v1409 = vunpack.c.l.b16 %v544
      %v1410 = vunpack.c.l.b16 %v545
      %v1411 = vunpack.c.l.b16 %v546
      %v1412 = vunpack.c.l.b16 %v547
      %v1413 = vunpack.c.l.b16 %v548
      %v1414 = vunpack.c.l.b16 %v549
      %v1415 = vunpack.c.l.b16 %v550
      %v1416 = vunpack.c.l.b16 %v551
      %v1417 = vunpack.c.l.b16 %v552
      %v1418 = vunpack.c.l.b16 %v553
      %v1419 = vunpack.c.l.b16 %v554
      %v1420 = vunpack.c.l.b16 %v555
      %v1421 = vunpack.c.l.b16 %v556
      %v1422 = vunpack.c.l.b16 %v557
      %v1423 = vunpack.c.l.b16 %v558
      %v1424 = vunpack.c.l.b16 %v559
      %v1425 = vunpack.c.l.b16 %v560
      %v1426 = vunpack.c.l.b16 %v561
      %v1427 = vunpack.c.l.b16 %v562
      %v1428 = vunpack.c.l.b16 %v563
      %v1429 = vunpack.c.l.b16 %v564
      %v1430 = vunpack.c.l.b16 %v565
      %v1431 = vunpack.c.l.b16 %v566
      %v1432 = vunpack.c.l.b16 %v567
      %v1433 = vunpack.c.l.b16 %v568
      %v1434 = vunpack.c.l.b16 %v569
      %v1435 = vunpack.c.l.b16 %v570
      %v1436 = vunpack.c.l.b16 %v571
      %v1437 = vunpack.c.l.b16 %v572
      %v1438 = vunpack.c.l.b16 %v573
      %v1439 = vunpack.c.l.b16 %v574
      %v1440 = vunpack.c.l.b16 %v575
      %v1441 = vunpack.c.l.b16 %v576
      %v1442 = vunpack.c.l.b16 %v577
      %v1443 = vunpack.c.l.b16 %v578
      %v1444 = vunpack.c.l.b16 %v579
      %v1445 = vunpack.c.l.b16 %v580
      %v1446 = vunpack.c.l.b16 %v581
      %v1447 = vunpack.c.l.b16 %v582
      %v1448 = vunpack.c.l.b16 %v583
      %v1449 = vunpack.c.l.b16 %v584
      %v1450 = vunpack.c.l.b16 %v585
      %v1451 = vunpack.c.l.b16 %v586
      %v1452 = vunpack.c.l.b16 %v587
      %v1453 = vunpack.c.l.b16 %v588
      %v1454 = vunpack.c.l.b16 %v589
      %v1455 = vunpack.c.l.b16 %v590
      %v1456 = vpack.c.b16 %v1313, %v1312
      %v1457 = vpack.c.b16 %v1315, %v1314
      %v1458 = vpack.c.b16 %v1317, %v1316
      %v1459 = vpack.c.b16 %v1319, %v1318
      %v1460 = vpack.c.b16 %v1321, %v1320
      %v1461 = vpack.c.b16 %v1323, %v1322
      %v1462 = vpack.c.b16 %v1325, %v1324
      %v1463 = vpack.c.b16 %v1327, %v1326
      %v1464 = vpack.c.b16 %v1329, %v1328
      %v1465 = vpack.c.b16 %v1331, %v1330
      %v1466 = vpack.c.b16 %v1333, %v1332
      %v1467 = vpack.c.b16 %v1335, %v1334
      %v1468 = vpack.c.b16 %v1337, %v1336
      %v1469 = vpack.c.b16 %v1339, %v1338
      %v1470 = vpack.c.b16 %v1341, %v1340
      %v1471 = vpack.c.b16 %v1343, %v1342
      %v1472 = vpack.c.b16 %v1345, %v1344
      %v1473 = vpack.c.b16 %v1347, %v1346
      %v1474 = vpack.c.b16 %v1349, %v1348
      %v1475 = vpack.c.b16 %v1351, %v1350
      %v1476 = vpack.c.b16 %v1353, %v1352
      %v1477 = vpack.c.b16 %v1355, %v1354
      %v1478 = vpack.c.b16 %v1357, %v1356
      %v1479 = vpack.c.b16 %v1359, %v1358
      %v1480 = vpack.c.b16 %v1361, %v1360
      %v1481 = vpack.c.b16 %v1363, %v1362
      %v1482 = vpack.c.b16 %v1365, %v1364
      %v1483 = vpack.c.b16 %v1367, %v1366
      %v1484 = vpack.c.b16 %v1369, %v1368
      %v1485 = vpack.c.b16 %v1371, %v1370
      %v1486 = vpack.c.b16 %v1373, %v1372
      %v1487 = vpack.c.b16 %v1375, %v1374
      %v1488 = vpack.c.b16 %v1377, %v1376
      %v1489 = vpack.c.b16 %v1379, %v1378
      %v1490 = vpack.c.b16 %v1381, %v1380
      %v1491 = vpack.c.b16 %v1383, %v1382
      %v1492 = vpack.c.b16 %v1385, %v1384
      %v1493 = vpack.c.b16 %v1387, %v1386
      %v1494 = vpack.c.b16 %v1389, %v1388
      %v1495 = vpack.c.b16 %v1391, %v1390
      %v1496 = vpack.c.b16 %v1393, %v1392
      %v1497 = vpack.c.b16 %v1395, %v1394
      %v1498 = vpack.c.b16 %v1397, %v1396
      %v1499 = vpack.c.b16 %v1399, %v1398
      %v1500 = vpack.c.b16 %v1401, %v1400
      %v1501 = vpack.c.b16 %v1403, %v1402
      %v1502 = vpack.c.b16 %v1405, %v1404
      %v1503 = vpack.c.b16 %v1407, %v1406
      %v1504 = vpack.c.b16 %v1409, %v1408
      %v1505 = vpack.c.b16 %v1411, %v1410
      %v1506 = vpack.c.b16 %v1413, %v1412
      %v1507 = vpack.c.b16 %v1415, %v1414
      %v1508 = vpack.c.b16 %v1417, %v1416
      %v1509 = vpack.c.b16 %v1419, %v1418
      %v1510 = vpack.c.b16 %v1421, %v1420
      %v1511 = vpack.c.b16 %v1423, %v1422
      %v1512 = vpack.c.b16 %v1425, %v1424
      %v1513 = vpack.c.b16 %v1427, %v1426
      %v1514 = vpack.c.b16 %v1429, %v1428
      %v1515 = vpack.c.b16 %v1431, %v1430
      %v1516 = vpack.c.b16 %v1433, %v1432
      %v1517 = vpack.c.b16 %v1435, %v1434
      %v1518 = vpack.c.b16 %v1437, %v1436
      %v1519 = vpack.c.b16 %v1439, %v1438
      %v1520 = vpack.c.b16 %v1441, %v1440
      %v1521 = vpack.c.b16 %v1443, %v1442
      %v1522 = vpack.c.b16 %v1445, %v1444
      %v1523 = vpack.c.b16 %v1447, %v1446
      %v1524 = vpack.c.b16 %v1449, %v1448
      %v1525 = vpack.c.b16 %v1451, %v1450
      %v1526 = vpack.c.b16 %v1453, %v1452
      %v1527 = vpack.c.b16 %v1455, %v1454
      %1600 = vmatprep.subr.bf16.mxu0 0
      %1601 = vmatpush1.bf16.msra.mxu0 %v1456
      %1602 = vmatprep.subr.bf16.mxu0 0
      %1603 = vmatpush1.bf16.msra.mxu0 %v1457
      %1604 = vmatprep.subr.bf16.mxu0 0
      %1605 = vmatpush1.bf16.msra.mxu0 %v1458
      %1606 = vmatprep.subr.bf16.mxu0 0
      %1607 = vmatpush1.bf16.msra.mxu0 %v1459
      %1608 = vmatprep.subr.bf16.mxu0 0
      %1609 = vmatpush1.bf16.msra.mxu0 %v1460
      %1610 = vmatprep.subr.bf16.mxu0 0
      %1611 = vmatpush1.bf16.msra.mxu0 %v1461
      %1612 = vmatprep.subr.bf16.mxu0 0
      %1613 = vmatpush1.bf16.msra.mxu0 %v1462
      %1614 = vmatprep.subr.bf16.mxu0 0
      %1615 = vmatpush1.bf16.msra.mxu0 %v1463
      %1616 = vmatprep.subr.bf16.mxu0 0
      %1617 = vmatpush1.bf16.msra.mxu0 %v1464
      %1618 = vmatprep.subr.bf16.mxu0 0
      %1619 = vmatpush1.bf16.msra.mxu0 %v1465
      %1620 = vmatprep.subr.bf16.mxu0 0
      %1621 = vmatpush1.bf16.msra.mxu0 %v1466
      %1622 = vmatprep.subr.bf16.mxu0 0
      %1623 = vmatpush1.bf16.msra.mxu0 %v1467
      %1624 = vmatprep.subr.bf16.mxu0 0
      %1625 = vmatpush1.bf16.msra.mxu0 %v1468
      %1626 = vmatprep.subr.bf16.mxu0 0
      %1627 = vmatpush1.bf16.msra.mxu0 %v1469
      %1628 = vmatprep.subr.bf16.mxu0 0
      %1629 = vmatpush1.bf16.msra.mxu0 %v1470
      %1630 = vmatprep.subr.bf16.mxu0 0
      %1631 = vmatpush1.bf16.msra.mxu0 %v1471
      %1632 = vmatprep.mubr.bf16.mxu0 %v1097
      %1633 = vmatmul.mubr.bf16.gmra.mrb[0].mxu0 %v1096
      %v1634 = vpop.f32.mrb[0].mxu0
      %v1635 = vadd.f32 0.0, %v1634
      %v1636 = vpop.f32.mrb[0].mxu0
      %v1637 = vpop.f32.mrb[0].mxu0
      %v1638 = vadd.f32 0.0, %v1637
      %v1639 = vpop.f32.mrb[0].mxu0
      %1640 = vmatprep.mubr.bf16.mxu0 %v1106
      %1641 = vmatmul.mubr.bf16.gmra.mrb[0].mxu0 %v1105
      %v1642 = vpop.f32.mrb[0].mxu0
      %v1643 = vadd.f32 0.0, %v1642
      %v1644 = vpop.f32.mrb[0].mxu0
      %v1645 = vpop.f32.mrb[0].mxu0
      %v1646 = vadd.f32 0.0, %v1645
      %v1647 = vpop.f32.mrb[0].mxu0
      %1648 = vmatprep.mubr.bf16.mxu0 %v1115
      %1649 = vmatmul.mubr.bf16.gmra.mrb[0].mxu0 %v1114
      %v1650 = vpop.f32.mrb[0].mxu0
      %v1651 = vadd.f32 0.0, %v1650
      %v1652 = vpop.f32.mrb[0].mxu0
      %v1653 = vpop.f32.mrb[0].mxu0
      %v1654 = vadd.f32 0.0, %v1653
      %v1655 = vpop.f32.mrb[0].mxu0
      %1656 = vmatprep.mubr.bf16.mxu0 %v1124
      %1657 = vmatmul.mubr.bf16.gmra.mrb[0].mxu0 %v1123
      %v1658 = vpop.f32.mrb[0].mxu0
      %v1659 = vadd.f32 0.0, %v1658
      %v1660 = vpop.f32.mrb[0].mxu0
      %v1661 = vpop.f32.mrb[0].mxu0
      %v1662 = vadd.f32 0.0, %v1661
      %v1663 = vpop.f32.mrb[0].mxu0
      %1664 = vdwg.mxu0
      %1665 = vmatprep.subr.bf16.mxu0 0
      %1666 = vmatpush1.bf16.msra.mxu0 %v1472
      %1667 = vmatprep.subr.bf16.mxu0 0
      %1668 = vmatpush1.bf16.msra.mxu0 %v1473
      %1669 = vmatprep.subr.bf16.mxu0 0
      %1670 = vmatpush1.bf16.msra.mxu0 %v1474
      %1671 = vmatprep.subr.bf16.mxu0 0
      %1672 = vmatpush1.bf16.msra.mxu0 %v1475
      %1673 = vmatprep.subr.bf16.mxu0 0
      %1674 = vmatpush1.bf16.msra.mxu0 %v1476
      %1675 = vmatprep.subr.bf16.mxu0 0
      %1676 = vmatpush1.bf16.msra.mxu0 %v1477
      %1677 = vmatprep.subr.bf16.mxu0 0
      %1678 = vmatpush1.bf16.msra.mxu0 %v1478
      %1679 = vmatprep.subr.bf16.mxu0 0
      %1680 = vmatpush1.bf16.msra.mxu0 %v1479
      %1681 = vmatprep.subr.bf16.mxu0 0
      %1682 = vmatpush1.bf16.msra.mxu0 %v1480
      %1683 = vmatprep.subr.bf16.mxu0 0
      %1684 = vmatpush1.bf16.msra.mxu0 %v1481
      %1685 = vmatprep.subr.bf16.mxu0 0
      %1686 = vmatpush1.bf16.msra.mxu0 %v1482
      %1687 = vmatprep.subr.bf16.mxu0 0
      %1688 = vmatpush1.bf16.msra.mxu0 %v1483
      %1689 = vmatprep.subr.bf16.mxu0 0
      %1690 = vmatpush1.bf16.msra.mxu0 %v1484
      %1691 = vmatprep.subr.bf16.mxu0 0
      %1692 = vmatpush1.bf16.msra.mxu0 %v1485
      %1693 = vmatprep.subr.bf16.mxu0 0
      %1694 = vmatpush1.bf16.msra.mxu0 %v1486
      %1695 = vmatprep.subr.bf16.mxu0 0
      %1696 = vmatpush1.bf16.msra.mxu0 %v1487
      %1697 = vmatprep.mubr.bf16.mxu0 %v1099
      %1698 = vmatmul.mubr.bf16.gmra.mrb[0].mxu0 %v1098
      %v1699 = vpop.f32.mrb[0].mxu0
      %v1700 = vadd.f32 %v1635, %v1699
      %v1701 = vpop.f32.mrb[0].mxu0
      %v1702 = vpop.f32.mrb[0].mxu0
      %v1703 = vadd.f32 %v1638, %v1702
      %v1704 = vpop.f32.mrb[0].mxu0
      %1705 = vmatprep.mubr.bf16.mxu0 %v1108
      %1706 = vmatmul.mubr.bf16.gmra.mrb[0].mxu0 %v1107
      %v1707 = vpop.f32.mrb[0].mxu0
      %v1708 = vadd.f32 %v1643, %v1707
      %v1709 = vpop.f32.mrb[0].mxu0
      %v1710 = vpop.f32.mrb[0].mxu0
      %v1711 = vadd.f32 %v1646, %v1710
      %v1712 = vpop.f32.mrb[0].mxu0
      %1713 = vmatprep.mubr.bf16.mxu0 %v1117
      %1714 = vmatmul.mubr.bf16.gmra.mrb[0].mxu0 %v1116
      %v1715 = vpop.f32.mrb[0].mxu0
      %v1716 = vadd.f32 %v1651, %v1715
      %v1717 = vpop.f32.mrb[0].mxu0
      %v1718 = vpop.f32.mrb[0].mxu0
      %v1719 = vadd.f32 %v1654, %v1718
      %v1720 = vpop.f32.mrb[0].mxu0
      %1721 = vmatprep.mubr.bf16.mxu0 %v1126
      %1722 = vmatmul.mubr.bf16.gmra.mrb[0].mxu0 %v1125
      %v1723 = vpop.f32.mrb[0].mxu0
      %v1724 = vadd.f32 %v1659, %v1723
      %v1725 = vpop.f32.mrb[0].mxu0
      %v1726 = vpop.f32.mrb[0].mxu0
      %v1727 = vadd.f32 %v1662, %v1726
      %v1728 = vpop.f32.mrb[0].mxu0
      %1729 = vdwg.mxu0
      %1730 = vmatprep.subr.bf16.mxu0 0
      %1731 = vmatpush1.bf16.msra.mxu0 %v1488
      %1732 = vmatprep.subr.bf16.mxu0 0
      %1733 = vmatpush1.bf16.msra.mxu0 %v1489
      %1734 = vmatprep.subr.bf16.mxu0 0
      %1735 = vmatpush1.bf16.msra.mxu0 %v1490
      %1736 = vmatprep.subr.bf16.mxu0 0
      %1737 = vmatpush1.bf16.msra.mxu0 %v1491
      %1738 = vmatprep.subr.bf16.mxu0 0
      %1739 = vmatpush1.bf16.msra.mxu0 %v1492
      %1740 = vmatprep.subr.bf16.mxu0 0
      %1741 = vmatpush1.bf16.msra.mxu0 %v1493
      %1742 = vmatprep.subr.bf16.mxu0 0
      %1743 = vmatpush1.bf16.msra.mxu0 %v1494
      %1744 = vmatprep.subr.bf16.mxu0 0
      %1745 = vmatpush1.bf16.msra.mxu0 %v1495
      %1746 = vmatprep.subr.bf16.mxu0 0
      %1747 = vmatpush1.bf16.msra.mxu0 %v1496
      %1748 = vmatprep.subr.bf16.mxu0 0
      %1749 = vmatpush1.bf16.msra.mxu0 %v1497
      %1750 = vmatprep.subr.bf16.mxu0 0
      %1751 = vmatpush1.bf16.msra.mxu0 %v1498
      %1752 = vmatprep.subr.bf16.mxu0 0
      %1753 = vmatpush1.bf16.msra.mxu0 %v1499
      %1754 = vmatprep.subr.bf16.mxu0 0
      %1755 = vmatpush1.bf16.msra.mxu0 %v1500
      %1756 = vmatprep.subr.bf16.mxu0 0
      %1757 = vmatpush1.bf16.msra.mxu0 %v1501
      %1758 = vmatprep.subr.bf16.mxu0 0
      %1759 = vmatpush1.bf16.msra.mxu0 %v1502
      %1760 = vmatprep.subr.bf16.mxu0 0
      %1761 = vmatpush1.bf16.msra.mxu0 %v1503
      %1762 = vmatprep.mubr.bf16.mxu0 %v1101
      %1763 = vmatmul.mubr.bf16.gmra.mrb[0].mxu0 %v1100
      %v1764 = vpop.f32.mrb[0].mxu0
      %v1765 = vadd.f32 %v1700, %v1764
      %v1766 = vpop.f32.mrb[0].mxu0
      %v1767 = vpop.f32.mrb[0].mxu0
      %v1768 = vadd.f32 %v1703, %v1767
      %v1769 = vpop.f32.mrb[0].mxu0
      %1770 = vmatprep.mubr.bf16.mxu0 %v1110
      %1771 = vmatmul.mubr.bf16.gmra.mrb[0].mxu0 %v1109
      %v1772 = vpop.f32.mrb[0].mxu0
      %v1773 = vadd.f32 %v1708, %v1772
      %v1774 = vpop.f32.mrb[0].mxu0
      %v1775 = vpop.f32.mrb[0].mxu0
      %v1776 = vadd.f32 %v1711, %v1775
      %v1777 = vpop.f32.mrb[0].mxu0
      %1778 = vmatprep.mubr.bf16.mxu0 %v1119
      %1779 = vmatmul.mubr.bf16.gmra.mrb[0].mxu0 %v1118
      %v1780 = vpop.f32.mrb[0].mxu0
      %v1781 = vadd.f32 %v1716, %v1780
      %v1782 = vpop.f32.mrb[0].mxu0
      %v1783 = vpop.f32.mrb[0].mxu0
      %v1784 = vadd.f32 %v1719, %v1783
      %v1785 = vpop.f32.mrb[0].mxu0
      %1786 = vmatprep.mubr.bf16.mxu0 %v1128
      %1787 = vmatmul.mubr.bf16.gmra.mrb[0].mxu0 %v1127
      %v1788 = vpop.f32.mrb[0].mxu0
      %v1789 = vadd.f32 %v1724, %v1788
      %v1790 = vpop.f32.mrb[0].mxu0
      %v1791 = vpop.f32.mrb[0].mxu0
      %v1792 = vadd.f32 %v1727, %v1791
      %v1793 = vpop.f32.mrb[0].mxu0
      %1794 = vdwg.mxu0
      %1795 = vmatprep.subr.bf16.mxu0 0
      %1796 = vmatpush1.bf16.msra.mxu0 %v1504
      %1797 = vmatprep.subr.bf16.mxu0 0
      %1798 = vmatpush1.bf16.msra.mxu0 %v1505
      %1799 = vmatprep.subr.bf16.mxu0 0
      %1800 = vmatpush1.bf16.msra.mxu0 %v1506
      %1801 = vmatprep.subr.bf16.mxu0 0
      %1802 = vmatpush1.bf16.msra.mxu0 %v1507
      %1803 = vmatprep.subr.bf16.mxu0 0
      %1804 = vmatpush1.bf16.msra.mxu0 %v1508
      %1805 = vmatprep.subr.bf16.mxu0 0
      %1806 = vmatpush1.bf16.msra.mxu0 %v1509
      %1807 = vmatprep.subr.bf16.mxu0 0
      %1808 = vmatpush1.bf16.msra.mxu0 %v1510
      %1809 = vmatprep.subr.bf16.mxu0 0
      %1810 = vmatpush1.bf16.msra.mxu0 %v1511
      %1811 = vmatprep.subr.bf16.mxu0 0
      %1812 = vmatpush1.bf16.msra.mxu0 %v1512
      %1813 = vmatprep.subr.bf16.mxu0 0
      %1814 = vmatpush1.bf16.msra.mxu0 %v1513
      %1815 = vmatprep.subr.bf16.mxu0 0
      %1816 = vmatpush1.bf16.msra.mxu0 %v1514
      %1817 = vmatprep.subr.bf16.mxu0 0
      %1818 = vmatpush1.bf16.msra.mxu0 %v1515
      %1819 = vmatprep.subr.bf16.mxu0 0
      %1820 = vmatpush1.bf16.msra.mxu0 %v1516
      %1821 = vmatprep.subr.bf16.mxu0 0
      %1822 = vmatpush1.bf16.msra.mxu0 %v1517
      %1823 = vmatprep.subr.bf16.mxu0 0
      %1824 = vmatpush1.bf16.msra.mxu0 %v1518
      %1825 = vmatprep.subr.bf16.mxu0 0
      %1826 = vmatpush1.bf16.msra.mxu0 %v1519
      %1827 = vmatprep.mubr.bf16.mxu0 %v1103
      %1828 = vmatmul.mubr.bf16.gmra.mrb[0].mxu0 %v1102
      %v1829 = vpop.f32.mrb[0].mxu0
      %v1830 = vadd.f32 %v1765, %v1829
      %v1831 = vpop.f32.mrb[0].mxu0
      %v1832 = vpop.f32.mrb[0].mxu0
      %v1833 = vadd.f32 %v1768, %v1832
      %v1834 = vpop.f32.mrb[0].mxu0
      %1835 = vmatprep.mubr.bf16.mxu0 %v1112
      %1836 = vmatmul.mubr.bf16.gmra.mrb[0].mxu0 %v1111
      %v1837 = vpop.f32.mrb[0].mxu0
      %v1838 = vadd.f32 %v1773, %v1837
      %v1839 = vpop.f32.mrb[0].mxu0
      %v1840 = vpop.f32.mrb[0].mxu0
      %v1841 = vadd.f32 %v1776, %v1840
      %v1842 = vpop.f32.mrb[0].mxu0
      %1843 = vmatprep.mubr.bf16.mxu0 %v1121
      %1844 = vmatmul.mubr.bf16.gmra.mrb[0].mxu0 %v1120
      %v1845 = vpop.f32.mrb[0].mxu0
      %v1846 = vadd.f32 %v1781, %v1845
      %v1847 = vpop.f32.mrb[0].mxu0
      %v1848 = vpop.f32.mrb[0].mxu0
      %v1849 = vadd.f32 %v1784, %v1848
      %v1850 = vpop.f32.mrb[0].mxu0
      %1851 = vmatprep.mubr.bf16.mxu0 %v1130
      %1852 = vmatmul.mubr.bf16.gmra.mrb[0].mxu0 %v1129
      %v1853 = vpop.f32.mrb[0].mxu0
      %v1854 = vadd.f32 %v1789, %v1853
      %v1855 = vpop.f32.mrb[0].mxu0
      %v1856 = vpop.f32.mrb[0].mxu0
      %v1857 = vadd.f32 %v1792, %v1856
      %v1858 = vpop.f32.mrb[0].mxu0
      %1859 = vdwg.mxu0
      %1860 = vmatprep.subr.bf16.mxu0 0
      %1861 = vmatpush1.bf16.msra.mxu0 %v1520
      %1862 = vmatprep.subr.bf16.mxu0 0
      %1863 = vmatpush1.bf16.msra.mxu0 %v1521
      %1864 = vmatprep.subr.bf16.mxu0 0
      %1865 = vmatpush1.bf16.msra.mxu0 %v1522
      %1866 = vmatprep.subr.bf16.mxu0 0
      %1867 = vmatpush1.bf16.msra.mxu0 %v1523
      %1868 = vmatprep.subr.bf16.mxu0 0
      %1869 = vmatpush1.bf16.msra.mxu0 %v1524
      %1870 = vmatprep.subr.bf16.mxu0 0
      %1871 = vmatpush1.bf16.msra.mxu0 %v1525
      %1872 = vmatprep.subr.bf16.mxu0 0
      %1873 = vmatpush1.bf16.msra.mxu0 %v1526
      %1874 = vmatprep.subr.bf16.mxu0 0
      %1875 = vmatpush1.bf16.msra.mxu0 %v1527
      %1876 = vmatprep.subr.bf16.mxu0 0
      %1877 = vmatpush1.bf16.msra.mxu0 0
      %1878 = vmatprep.subr.bf16.mxu0 0
      %1879 = vmatpush1.bf16.msra.mxu0 0
      %1880 = vmatprep.subr.bf16.mxu0 0
      %1881 = vmatpush1.bf16.msra.mxu0 0
      %1882 = vmatprep.subr.bf16.mxu0 0
      %1883 = vmatpush1.bf16.msra.mxu0 0
      %1884 = vmatprep.subr.bf16.mxu0 0
      %1885 = vmatpush1.bf16.msra.mxu0 0
      %1886 = vmatprep.subr.bf16.mxu0 0
      %1887 = vmatpush1.bf16.msra.mxu0 0
      %1888 = vmatprep.subr.bf16.mxu0 0
      %1889 = vmatpush1.bf16.msra.mxu0 0
      %1890 = vmatprep.subr.bf16.mxu0 0
      %1891 = vmatpush1.bf16.msra.mxu0 0
      %1892 = vmatprep.mubr.bf16.mxu0 0
      %1893 = vmatmul.mubr.bf16.gmra.mrb[0].mxu0 %v1104
      %v1894 = vpop.f32.mrb[0].mxu0
      %v1895 = vadd.f32 %v1830, %v1894
      %v1896 = vpop.f32.mrb[0].mxu0
      %v1897 = vpop.f32.mrb[0].mxu0
      %v1898 = vadd.f32 %v1833, %v1897
      %v1899 = vpop.f32.mrb[0].mxu0
      %1900 = vmatprep.mubr.bf16.mxu0 0
      %1901 = vmatmul.mubr.bf16.gmra.mrb[0].mxu0 %v1113
      %v1902 = vpop.f32.mrb[0].mxu0
      %v1903 = vadd.f32 %v1838, %v1902
      %v1904 = vpop.f32.mrb[0].mxu0
      %v1905 = vpop.f32.mrb[0].mxu0
      %v1906 = vadd.f32 %v1841, %v1905
      %v1907 = vpop.f32.mrb[0].mxu0
      %1908 = vmatprep.mubr.bf16.mxu0 0
      %1909 = vmatmul.mubr.bf16.gmra.mrb[0].mxu0 %v1122
      %v1910 = vpop.f32.mrb[0].mxu0
      %v1911 = vadd.f32 %v1846, %v1910
      %v1912 = vpop.f32.mrb[0].mxu0
      %v1913 = vpop.f32.mrb[0].mxu0
      %v1914 = vadd.f32 %v1849, %v1913
      %v1915 = vpop.f32.mrb[0].mxu0
      %1916 = vmatprep.mubr.bf16.mxu0 0
      %1917 = vmatmul.mubr.bf16.gmra.mrb[0].mxu0 %v1131
      %v1918 = vpop.f32.mrb[0].mxu0
      %v1919 = vadd.f32 %v1854, %v1918
      %v1920 = vpop.f32.mrb[0].mxu0
      %v1921 = vpop.f32.mrb[0].mxu0
      %v1922 = vadd.f32 %v1857, %v1921
      %v1923 = vpop.f32.mrb[0].mxu0
      %1924 = vdwg.mxu0
      %v1925 = vpack.c.bf16 %v1895, %v1895
      %v1926 = vpack.c.bf16 %v1898, %v1898
      %v1927 = vpack.c.bf16 %v1903, %v1903
      %v1928 = vpack.c.bf16 %v1906, %v1906
      %v1929 = vpack.c.bf16 %v1911, %v1911
      %v1930 = vpack.c.bf16 %v1914, %v1914
      %v1931 = vpack.c.bf16 %v1919, %v1919
      %v1932 = vpack.c.bf16 %v1922, %v1922
      %1933 = vst [vmem:[%s204] sm:$0xf] %v1925
      %1934 = vst [vmem:[%s204 + $0x4] sm:$0xf] %v1926
      %1935 = vst [vmem:[%s204 + $0x8] sm:$0xf] %v1927
      %1936 = vst [vmem:[%s204 + $0xc] sm:$0xf] %v1928
      %1937 = vst [vmem:[%s204 + $0x10] sm:$0xf] %v1929
      %1938 = vst [vmem:[%s204 + $0x14] sm:$0xf] %v1930
      %1939 = vst [vmem:[%s204 + $0x18] sm:$0xf] %v1931
      %1940 = vst [vmem:[%s204 + $0x1c] sm:$0xf] %v1932
      %v1941 = vadd.f32 %v1895, %v1898
      %v1942 = vadd.f32 %v1941, %v1903
      %v1943 = vadd.f32 %v1942, %v1906
      %v1944 = vadd.f32 %v1943, %v1911
      %v1945 = vadd.f32 %v1944, %v1914
      %v1946 = vadd.f32 %v1945, %v1919
      %v1947 = vadd.f32 %v1946, %v1922
      %v1948 = vrot.slane %v1947, 4
      %v1949 = vadd.f32 %v1947, %v1948
      %v1950 = vrot.slane %v1949, 2
      %v1951 = vadd.f32 %v1949, %v1950
      %v1952 = vrot.slane %v1951, 1
      %v1953 = vadd.f32 %v1951, %v1952
      %v1954 = vmul.f32 %v1895, %v1895
      %v1955 = vmul.f32 %v1898, %v1898
      %v1956 = vmul.f32 %v1903, %v1903
      %v1957 = vmul.f32 %v1906, %v1906
      %v1958 = vmul.f32 %v1911, %v1911
      %v1959 = vmul.f32 %v1914, %v1914
      %v1960 = vmul.f32 %v1919, %v1919
      %v1961 = vmul.f32 %v1922, %v1922
      %v1962 = vadd.f32 %v1954, %v1955
      %v1963 = vadd.f32 %v1962, %v1956
      %v1964 = vadd.f32 %v1963, %v1957
      %v1965 = vadd.f32 %v1964, %v1958
      %v1966 = vadd.f32 %v1965, %v1959
      %v1967 = vadd.f32 %v1966, %v1960
      %v1968 = vadd.f32 %v1967, %v1961
      %v1969 = vrot.slane %v1968, 4
      %v1970 = vadd.f32 %v1968, %v1969
      %v1971 = vrot.slane %v1970, 2
      %v1972 = vadd.f32 %v1970, %v1971
      %v1973 = vrot.slane %v1972, 1
      %v1974 = vadd.f32 %v1972, %v1973
      %vm1975 = vcmask 1040384
      %v1976 = vsel %vm1975, %v1953, %v1974
      %1977 = vst [vmem:[%s208] sm:$0x3] %v1976
      %p1978 = scmp.lt.s32.totalorder %s16, 1
      %s1979 = scalar_select %p1978, %s16, 1
      %s1980 = smul.addr %s1979, 8
      %s1981 = smul.addr %s1980, 4
      %s1982 = scalar_lea.vmem %s3, %s1981
      %p1983 = scmp.lt.s32.totalorder %s16, 1
      %s1984 = scalar_select %p1983, %s16, 1
      %s1985 = smul.addr %s1984, 2
      %s1986 = scalar_lea.vmem %s4, %s1985
      // Predicated region
      $region33: #{basic_block_forward.6} parent=31 // pred_check
        %p1987 = pneg %p102
      $region34: #{basic_block_forward.6} parent=31 // pred_check_branch
        %1989 = sbr.rel (%p1987) target = $region36
      $region35: #{basic_block_forward.6} parent=31 // pred_region
        _
      $region36: #{basic_block_forward.6} parent=31 // pred_fallthru
        _
      // Predicated region
      $region37: #{basic_block_forward.6} parent=31 // pred_check
        %p1990 = pneg %p128
      $region38: #{basic_block_forward.6} parent=31 // pred_check_branch
        %1992 = sbr.rel (%p1990) target = $region40
      $region39: #{basic_block_forward.6} parent=31 // pred_region
        _
      $region40: #{basic_block_forward.6} parent=31 // pred_fallthru
        _
    $region32: #{basic_block_forward.6} parent=5 // pred_fallthru
      _
    %p1993 = scmp.le.s32.totalorder 2, %s11
    // Predicated region
    $region41: #{basic_block_forward.6} parent=5 // pred_check
      %p1994 = pneg %p1993
    $region42: #{basic_block_forward.6} parent=5 // pred_check_branch
      %1996 = sbr.rel (%p1994) target = $region44
    $region43: #{basic_block_forward.6} parent=5 // pred_region
      %s1997 = ssub.s32 %s11, 2
      // Predicated region
      $region45: #{basic_block_forward.6} parent=43 // pred_check
        %p1998 = pneg %p108
      $region46: #{basic_block_forward.6} parent=43 // pred_check_branch
        %2000 = sbr.rel (%p1998) target = $region48
      $region47: #{basic_block_forward.6} parent=43 // pred_region
        %p2001 = scmp.lt.s32.totalorder %s17, 1
        %s2002 = scalar_select %p2001, %s17, 1
        %s2003 = smul.addr %s2002, 8
        %s2004 = smul.addr %s2003, 4
        %s2005 = scalar_lea.vmem %s3, %s2004
      $region48: #{basic_block_forward.6} parent=43 // pred_fallthru
        _
      // Predicated region
      $region49: #{basic_block_forward.6} parent=43 // pred_check
        %p2006 = pneg %p134
      $region50: #{basic_block_forward.6} parent=43 // pred_check_branch
        %2008 = sbr.rel (%p2006) target = $region52
      $region51: #{basic_block_forward.6} parent=43 // pred_region
        %p2009 = scmp.lt.s32.totalorder %s17, 1
        %s2010 = scalar_select %p2009, %s17, 1
        %s2011 = smul.addr %s2010, 2
        %s2012 = scalar_lea.vmem %s4, %s2011
      $region52: #{basic_block_forward.6} parent=43 // pred_fallthru
        _
    $region44: #{basic_block_forward.6} parent=5 // pred_fallthru
      _
  $region6: #{basic_block_forward.6} parent=0 // loop_footer
    %s15 = sadd.s32 1, %s11
  $region7: #{basic_block_forward.6} parent=0 // loop_footer_branch
    %10 = sbr.rel target = $region3
  $region8: #{basic_block_forward.6} parent=0 // loop_exit
    _

// kernel: basic_block_forward.4
$region0: #{basic_block_forward.4}
  #allocation0 [shape = 'u32[]', space=smem, size = 0x4, offset = 0x4, fixed_abs, tag = 'smem constant byte address 0x4 - core index']
  #allocation1 [shape = 'u32[144,128]{1,0:T(1,128)}', space=vmem, size = 0x12000, scoped, tag = 'internal scratch']
  %s0 = inlined_call_operand.vmem [shape: f32[36,128], index: 0, kind: input, shape index: {}]
  %s1 = inlined_call_operand.vmem [shape: f32[36,128], index: 1, kind: input, shape index: {}]
  %s2 = inlined_call_operand.vmem [shape: f32[36,128], index: 2, kind: input, shape index: {}]
  %s3 = inlined_call_operand.vmem [shape: f32[1152,128], index: 3, kind: input, shape index: {}]
  %s4 = inlined_call_operand.vmem [shape: f32[1152,128], index: 4, kind: input, shape index: {}]
  %s5 = inlined_call_operand.vmem [shape: f32[1152,128], index: 5, kind: input, shape index: {}]
  %s6 = inlined_call_operand.vmem [shape: bf16[36,128], index: 6, kind: output, shape index: {0}]
  %s7 = inlined_call_operand.vmem [shape: bf16[1152,128], index: 7, kind: output, shape index: {1}]
  %s8 = inlined_call_operand.vmem [shape: f32[1,128], index: 8, kind: output, shape index: {2}]
  %9 = xla_tuple %s6, %s7, %s8
  %s10 = sld [smem:[#allocation0]]
  $region50: #{basic_block_forward.4} parent=0
    _
  %s12 = ssub.s32 1, %s10
  %s13 = scalar_select 0, %s12, %s10
  // Predicated region
  $region2: #{basic_block_forward.4} parent=0 // pred_check
    _
  $region3: #{basic_block_forward.4} parent=0 // pred_check_branch
    %15 = sbr.rel (0) target = $region5
  $region4: #{basic_block_forward.4} parent=0 // pred_region
    _
  $region5: #{basic_block_forward.4} parent=0 // pred_fallthru
    _
  // Predicated region
  $region6: #{basic_block_forward.4} parent=0 // pred_check
    _
  $region7: #{basic_block_forward.4} parent=0 // pred_check_branch
    %17 = sbr.rel (0) target = $region9
  $region8: #{basic_block_forward.4} parent=0 // pred_region
    _
  $region9: #{basic_block_forward.4} parent=0 // pred_fallthru
    _
  // Predicated region
  $region10: #{basic_block_forward.4} parent=0 // pred_check
    _
  $region11: #{basic_block_forward.4} parent=0 // pred_check_branch
    %19 = sbr.rel (0) target = $region13
  $region12: #{basic_block_forward.4} parent=0 // pred_region
    _
  $region13: #{basic_block_forward.4} parent=0 // pred_fallthru
    _
  // Predicated region
  $region14: #{basic_block_forward.4} parent=0 // pred_check
    _
  $region15: #{basic_block_forward.4} parent=0 // pred_check_branch
    %21 = sbr.rel (0) target = $region17
  $region16: #{basic_block_forward.4} parent=0 // pred_region
    _
  $region17: #{basic_block_forward.4} parent=0 // pred_fallthru
    _
  // Predicated region
  $region18: #{basic_block_forward.4} parent=0 // pred_check
    _
  $region19: #{basic_block_forward.4} parent=0 // pred_check_branch
    %23 = sbr.rel (0) target = $region21
  $region20: #{basic_block_forward.4} parent=0 // pred_region
    _
  $region21: #{basic_block_forward.4} parent=0 // pred_fallthru
    _
  // Predicated region
  $region22: #{basic_block_forward.4} parent=0 // pred_check
    _
  $region23: #{basic_block_forward.4} parent=0 // pred_check_branch
    %25 = sbr.rel (0) target = $region25
  $region24: #{basic_block_forward.4} parent=0 // pred_region
    _
  $region25: #{basic_block_forward.4} parent=0 // pred_fallthru
    _
  %v26 = vld [vmem:[%s0] sm:$0xff]
  %v27 = vld [vmem:[%s0 + $0x8] sm:$0xff]
  %v28 = vld [vmem:[%s0 + $0x10] sm:$0xff]
  %v29 = vld [vmem:[%s0 + $0x18] sm:$0xff]
  %v30 = vld [vmem:[%s0 + $0x20] sm:$0xf]
  %v31 = vld [vmem:[%s1] sm:$0xff]
  %v32 = vld [vmem:[%s1 + $0x8] sm:$0xff]
  %v33 = vld [vmem:[%s1 + $0x10] sm:$0xff]
  %v34 = vld [vmem:[%s1 + $0x18] sm:$0xff]
  %v35 = vld [vmem:[%s1 + $0x20] sm:$0xf]
  %vm36 = vcmp.gt.f32.partialorder %v31, 20.0
  %vm37 = vcmp.gt.f32.partialorder %v32, 20.0
  %vm38 = vcmp.gt.f32.partialorder %v33, 20.0
  %vm39 = vcmp.gt.f32.partialorder %v34, 20.0
  %vm40 = vcmp.gt.f32.partialorder %v35, 20.0
  %v41 = vmin.f32 %v31, 20.0
  %v42 = vmin.f32 %v32, 20.0
  %v43 = vmin.f32 %v33, 20.0
  %v44 = vmin.f32 %v34, 20.0
  %v45 = vmin.f32 %v35, 20.0
  %v46 = vmul.f32 %v41, 1.442695
  %v47 = vpow.pop %v46
  %v48 = vmul.f32 %v42, 1.442695
  %v49 = vpow.pop %v48
  %v50 = vmul.f32 %v43, 1.442695
  %v51 = vpow.pop %v50
  %v52 = vmul.f32 %v44, 1.442695
  %v53 = vpow.pop %v52
  %v54 = vmul.f32 %v45, 1.442695
  %v55 = vpow.pop %v54
  %v56 = vadd.f32 %v47, 1.0
  %v57 = vlog2.pop %v56
  %v58 = vmul.f32 %v57, 0.6931472
  %v59 = vmul.f32 -0.5, %v47
  %v60 = vadd.f32 %v59, 1.0
  %v61 = vmul.f32 %v60, %v47
  %v62 = vand.u32 2147483647, %v47
  %vm63 = vcmp.lt.f32.partialorder %v62, 0.0004427343
  %v64 = vsel %vm63, %v61, %v58
  %v65 = vadd.f32 %v49, 1.0
  %v66 = vlog2.pop %v65
  %v67 = vmul.f32 %v66, 0.6931472
  %v68 = vmul.f32 -0.5, %v49
  %v69 = vadd.f32 %v68, 1.0
  %v70 = vmul.f32 %v69, %v49
  %v71 = vand.u32 2147483647, %v49
  %vm72 = vcmp.lt.f32.partialorder %v71, 0.0004427343
  %v73 = vsel %vm72, %v70, %v67
  %v74 = vadd.f32 %v51, 1.0
  %v75 = vlog2.pop %v74
  %v76 = vmul.f32 %v75, 0.6931472
  %v77 = vmul.f32 -0.5, %v51
  %v78 = vadd.f32 %v77, 1.0
  %v79 = vmul.f32 %v78, %v51
  %v80 = vand.u32 2147483647, %v51
  %vm81 = vcmp.lt.f32.partialorder %v80, 0.0004427343
  %v82 = vsel %vm81, %v79, %v76
  %v83 = vadd.f32 %v53, 1.0
  %v84 = vlog2.pop %v83
  %v85 = vmul.f32 %v84, 0.6931472
  %v86 = vmul.f32 -0.5, %v53
  %v87 = vadd.f32 %v86, 1.0
  %v88 = vmul.f32 %v87, %v53
  %v89 = vand.u32 2147483647, %v53
  %vm90 = vcmp.lt.f32.partialorder %v89, 0.0004427343
  %v91 = vsel %vm90, %v88, %v85
  %v92 = vadd.f32 %v55, 1.0
  %v93 = vlog2.pop %v92
  %v94 = vmul.f32 %v93, 0.6931472
  %v95 = vmul.f32 -0.5, %v55
  %v96 = vadd.f32 %v95, 1.0
  %v97 = vmul.f32 %v96, %v55
  %v98 = vand.u32 2147483647, %v55
  %vm99 = vcmp.lt.f32.partialorder %v98, 0.0004427343
  %v100 = vsel %vm99, %v97, %v94
  %v101 = vsel %vm36, %v31, %v64
  %v102 = vsel %vm37, %v32, %v73
  %v103 = vsel %vm38, %v33, %v82
  %v104 = vsel %vm39, %v34, %v91
  %v105 = vsel %vm40, %v35, %v100
  %v106 = vld [vmem:[%s2] sm:$0xff]
  %v107 = vld [vmem:[%s2 + $0x8] sm:$0xff]
  %v108 = vld [vmem:[%s2 + $0x10] sm:$0xff]
  %v109 = vld [vmem:[%s2 + $0x18] sm:$0xff]
  %v110 = vld [vmem:[%s2 + $0x20] sm:$0xf]
  %v111 = vmul.f32 %v101, %v106
  %v112 = vmul.f32 %v102, %v107
  %v113 = vmul.f32 %v103, %v108
  %v114 = vmul.f32 %v104, %v109
  %v115 = vmul.f32 %v105, %v110
  %v116 = vadd.f32 %v26, %v111
  %v117 = vadd.f32 %v27, %v112
  %v118 = vadd.f32 %v28, %v113
  %v119 = vadd.f32 %v29, %v114
  %v120 = vadd.f32 %v30, %v115
  %v121 = vpack.c.bf16 %v117, %v116
  %v122 = vpack.c.bf16 %v119, %v118
  %v123 = vpack.c.bf16 %v120, %v120
  %v127 = vunpack.c.l.b16 %v121
  %v128 = vunpack.c.h.b16 %v121
  %v129 = vunpack.c.l.b16 %v122
  %v130 = vunpack.c.h.b16 %v122
  %v131 = vunpack.c.l.b16 %v123
  %v132 = vpack.c.b16 %v127, %v127
  %v133 = vpack.c.b16 %v128, %v128
  %v134 = vpack.c.b16 %v129, %v129
  %v135 = vpack.c.b16 %v130, %v130
  %v136 = vpack.c.b16 %v131, %v131
  %142 = vst [vmem:[%s6] sm:$0xf] %v132
  %143 = vst [vmem:[%s6 + $0x4] sm:$0xf] %v133
  %144 = vst [vmem:[%s6 + $0x8] sm:$0xf] %v134
  %145 = vst [vmem:[%s6 + $0xc] sm:$0xf] %v135
  %146 = vst [vmem:[%s6 + $0x10] sm:$0x3] %v136
  %v147 = vlog2.pop %v101
  %v148 = vmul.f32 %v147, 0.6931472
  %v149 = vlog2.pop %v102
  %v150 = vmul.f32 %v149, 0.6931472
  %v151 = vlog2.pop %v103
  %v152 = vmul.f32 %v151, 0.6931472
  %v153 = vlog2.pop %v104
  %v154 = vmul.f32 %v153, 0.6931472
  %v155 = vlog2.pop %v105
  %v156 = vmul.f32 %v155, 0.6931472
  %v157 = vsub.f32 0.0, %v148
  %v158 = vsub.f32 0.0, %v150
  %v159 = vsub.f32 0.0, %v152
  %v160 = vsub.f32 0.0, %v154
  %v161 = vsub.f32 0.0, %v156
  %v162 = vmul.f32 %v101, %v101
  %v163 = vmul.f32 %v102, %v102
  %v164 = vmul.f32 %v103, %v103
  %v165 = vmul.f32 %v104, %v104
  %v166 = vmul.f32 %v105, %v105
  %v167 = vmul.f32 %v26, %v26
  %v168 = vmul.f32 %v27, %v27
  %v169 = vmul.f32 %v28, %v28
  %v170 = vmul.f32 %v29, %v29
  %v171 = vmul.f32 %v30, %v30
  %v172 = vadd.f32 %v162, %v167
  %v173 = vadd.f32 %v163, %v168
  %v174 = vadd.f32 %v164, %v169
  %v175 = vadd.f32 %v165, %v170
  %v176 = vadd.f32 %v166, %v171
  %v177 = vmul.f32 %v172, 0.5
  %v178 = vmul.f32 %v173, 0.5
  %v179 = vmul.f32 %v174, 0.5
  %v180 = vmul.f32 %v175, 0.5
  %v181 = vmul.f32 %v176, 0.5
  %v182 = vadd.f32 %v157, %v177
  %v183 = vadd.f32 %v158, %v178
  %v184 = vadd.f32 %v159, %v179
  %v185 = vadd.f32 %v160, %v180
  %v186 = vadd.f32 %v161, %v181
  %v187 = vsub.f32 %v182, 0.5
  %v188 = vsub.f32 %v183, 0.5
  %v189 = vsub.f32 %v184, 0.5
  %v190 = vsub.f32 %v185, 0.5
  %v191 = vsub.f32 %v186, 0.5
  %v192 = vadd.f32 %v187, %v188
  %v193 = vadd.f32 %v192, %v189
  %v194 = vadd.f32 %v193, %v190
  %vm195 = vcmask 1043456
  %v196 = vsel %vm195, %v191, 0.0
  %v197 = vadd.f32 %v194, %v196
  %v198 = vrot.slane %v197, 4
  %v199 = vadd.f32 %v197, %v198
  %v200 = vrot.slane %v199, 2
  %v201 = vadd.f32 %v199, %v200
  %v202 = vrot.slane %v201, 1
  %v203 = vadd.f32 %v201, %v202
  %v204 = vld [vmem:[%s3] sm:$0xff]
  %v205 = vld [vmem:[%s3 + $0x8] sm:$0xff]
  %v206 = vld [vmem:[%s3 + $0x10] sm:$0xff]
  %v207 = vld [vmem:[%s3 + $0x18] sm:$0xff]
  %v208 = vld [vmem:[%s3 + $0x20] sm:$0xff]
  %v209 = vld [vmem:[%s3 + $0x28] sm:$0xff]
  %v210 = vld [vmem:[%s3 + $0x30] sm:$0xff]
  %v211 = vld [vmem:[%s3 + $0x38] sm:$0xff]
  %v212 = vld [vmem:[%s3 + $0x40] sm:$0xff]
  %v213 = vld [vmem:[%s3 + $0x48] sm:$0xff]
  %v214 = vld [vmem:[%s3 + $0x50] sm:$0xff]
  %v215 = vld [vmem:[%s3 + $0x58] sm:$0xff]
  %v216 = vld [vmem:[%s3 + $0x60] sm:$0xff]
  %v217 = vld [vmem:[%s3 + $0x68] sm:$0xff]
  %v218 = vld [vmem:[%s3 + $0x70] sm:$0xff]
  %v219 = vld [vmem:[%s3 + $0x78] sm:$0xff]
  %v220 = vld [vmem:[%s3 + $0x80] sm:$0xff]
  %v221 = vld [vmem:[%s3 + $0x88] sm:$0xff]
  %v222 = vld [vmem:[%s3 + $0x90] sm:$0xff]
  %v223 = vld [vmem:[%s3 + $0x98] sm:$0xff]
  %v224 = vld [vmem:[%s3 + $0xa0] sm:$0xff]
  %v225 = vld [vmem:[%s3 + $0xa8] sm:$0xff]
  %v226 = vld [vmem:[%s3 + $0xb0] sm:$0xff]
  %v227 = vld [vmem:[%s3 + $0xb8] sm:$0xff]
  %v228 = vld [vmem:[%s3 + $0xc0] sm:$0xff]
  %v229 = vld [vmem:[%s3 + $0xc8] sm:$0xff]
  %v230 = vld [vmem:[%s3 + $0xd0] sm:$0xff]
  %v231 = vld [vmem:[%s3 + $0xd8] sm:$0xff]
  %v232 = vld [vmem:[%s3 + $0xe0] sm:$0xff]
  %v233 = vld [vmem:[%s3 + $0xe8] sm:$0xff]
  %v234 = vld [vmem:[%s3 + $0xf0] sm:$0xff]
  %v235 = vld [vmem:[%s3 + $0xf8] sm:$0xff]
  %v236 = vld [vmem:[%s3 + $0x100] sm:$0xff]
  %v237 = vld [vmem:[%s3 + $0x108] sm:$0xff]
  %v238 = vld [vmem:[%s3 + $0x110] sm:$0xff]
  %v239 = vld [vmem:[%s3 + $0x118] sm:$0xff]
  %v240 = vld [vmem:[%s3 + $0x120] sm:$0xff]
  %v241 = vld [vmem:[%s3 + $0x128] sm:$0xff]
  %v242 = vld [vmem:[%s3 + $0x130] sm:$0xff]
  %v243 = vld [vmem:[%s3 + $0x138] sm:$0xff]
  %v244 = vld [vmem:[%s3 + $0x140] sm:$0xff]
  %v245 = vld [vmem:[%s3 + $0x148] sm:$0xff]
  %v246 = vld [vmem:[%s3 + $0x150] sm:$0xff]
  %v247 = vld [vmem:[%s3 + $0x158] sm:$0xff]
  %v248 = vld [vmem:[%s3 + $0x160] sm:$0xff]
  %v249 = vld [vmem:[%s3 + $0x168] sm:$0xff]
  %v250 = vld [vmem:[%s3 + $0x170] sm:$0xff]
  %v251 = vld [vmem:[%s3 + $0x178] sm:$0xff]
  %v252 = vld [vmem:[%s3 + $0x180] sm:$0xff]
  %v253 = vld [vmem:[%s3 + $0x188] sm:$0xff]
  %v254 = vld [vmem:[%s3 + $0x190] sm:$0xff]
  %v255 = vld [vmem:[%s3 + $0x198] sm:$0xff]
  %v256 = vld [vmem:[%s3 + $0x1a0] sm:$0xff]
  %v257 = vld [vmem:[%s3 + $0x1a8] sm:$0xff]
  %v258 = vld [vmem:[%s3 + $0x1b0] sm:$0xff]
  %v259 = vld [vmem:[%s3 + $0x1b8] sm:$0xff]
  %v260 = vld [vmem:[%s3 + $0x1c0] sm:$0xff]
  %v261 = vld [vmem:[%s3 + $0x1c8] sm:$0xff]
  %v262 = vld [vmem:[%s3 + $0x1d0] sm:$0xff]
  %v263 = vld [vmem:[%s3 + $0x1d8] sm:$0xff]
  %v264 = vld [vmem:[%s3 + $0x1e0] sm:$0xff]
  %v265 = vld [vmem:[%s3 + $0x1e8] sm:$0xff]
  %v266 = vld [vmem:[%s3 + $0x1f0] sm:$0xff]
  %v267 = vld [vmem:[%s3 + $0x1f8] sm:$0xff]
  %v268 = vld [vmem:[%s3 + $0x200] sm:$0xff]
  %v269 = vld [vmem:[%s3 + $0x208] sm:$0xff]
  %v270 = vld [vmem:[%s3 + $0x210] sm:$0xff]
  %v271 = vld [vmem:[%s3 + $0x218] sm:$0xff]
  %v272 = vld [vmem:[%s3 + $0x220] sm:$0xff]
  %v273 = vld [vmem:[%s3 + $0x228] sm:$0xff]
  %v274 = vld [vmem:[%s3 + $0x230] sm:$0xff]
  %v275 = vld [vmem:[%s3 + $0x238] sm:$0xff]
  %v276 = vld [vmem:[%s3 + $0x240] sm:$0xff]
  %v277 = vld [vmem:[%s3 + $0x248] sm:$0xff]
  %v278 = vld [vmem:[%s3 + $0x250] sm:$0xff]
  %v279 = vld [vmem:[%s3 + $0x258] sm:$0xff]
  %v280 = vld [vmem:[%s3 + $0x260] sm:$0xff]
  %v281 = vld [vmem:[%s3 + $0x268] sm:$0xff]
  %v282 = vld [vmem:[%s3 + $0x270] sm:$0xff]
  %v283 = vld [vmem:[%s3 + $0x278] sm:$0xff]
  %v284 = vld [vmem:[%s3 + $0x280] sm:$0xff]
  %v285 = vld [vmem:[%s3 + $0x288] sm:$0xff]
  %v286 = vld [vmem:[%s3 + $0x290] sm:$0xff]
  %v287 = vld [vmem:[%s3 + $0x298] sm:$0xff]
  %v288 = vld [vmem:[%s3 + $0x2a0] sm:$0xff]
  %v289 = vld [vmem:[%s3 + $0x2a8] sm:$0xff]
  %v290 = vld [vmem:[%s3 + $0x2b0] sm:$0xff]
  %v291 = vld [vmem:[%s3 + $0x2b8] sm:$0xff]
  %v292 = vld [vmem:[%s3 + $0x2c0] sm:$0xff]
  %v293 = vld [vmem:[%s3 + $0x2c8] sm:$0xff]
  %v294 = vld [vmem:[%s3 + $0x2d0] sm:$0xff]
  %v295 = vld [vmem:[%s3 + $0x2d8] sm:$0xff]
  %v296 = vld [vmem:[%s3 + $0x2e0] sm:$0xff]
  %v297 = vld [vmem:[%s3 + $0x2e8] sm:$0xff]
  %v298 = vld [vmem:[%s3 + $0x2f0] sm:$0xff]
  %v299 = vld [vmem:[%s3 + $0x2f8] sm:$0xff]
  %v300 = vld [vmem:[%s3 + $0x300] sm:$0xff]
  %v301 = vld [vmem:[%s3 + $0x308] sm:$0xff]
  %v302 = vld [vmem:[%s3 + $0x310] sm:$0xff]
  %v303 = vld [vmem:[%s3 + $0x318] sm:$0xff]
  %v304 = vld [vmem:[%s3 + $0x320] sm:$0xff]
  %v305 = vld [vmem:[%s3 + $0x328] sm:$0xff]
  %v306 = vld [vmem:[%s3 + $0x330] sm:$0xff]
  %v307 = vld [vmem:[%s3 + $0x338] sm:$0xff]
  %v308 = vld [vmem:[%s3 + $0x340] sm:$0xff]
  %v309 = vld [vmem:[%s3 + $0x348] sm:$0xff]
  %v310 = vld [vmem:[%s3 + $0x350] sm:$0xff]
  %v311 = vld [vmem:[%s3 + $0x358] sm:$0xff]
  %v312 = vld [vmem:[%s3 + $0x360] sm:$0xff]
  %v313 = vld [vmem:[%s3 + $0x368] sm:$0xff]
  %v314 = vld [vmem:[%s3 + $0x370] sm:$0xff]
  %v315 = vld [vmem:[%s3 + $0x378] sm:$0xff]
  %v316 = vld [vmem:[%s3 + $0x380] sm:$0xff]
  %v317 = vld [vmem:[%s3 + $0x388] sm:$0xff]
  %v318 = vld [vmem:[%s3 + $0x390] sm:$0xff]
  %v319 = vld [vmem:[%s3 + $0x398] sm:$0xff]
  %v320 = vld [vmem:[%s3 + $0x3a0] sm:$0xff]
  %v321 = vld [vmem:[%s3 + $0x3a8] sm:$0xff]
  %v322 = vld [vmem:[%s3 + $0x3b0] sm:$0xff]
  %v323 = vld [vmem:[%s3 + $0x3b8] sm:$0xff]
  %v324 = vld [vmem:[%s3 + $0x3c0] sm:$0xff]
  %v325 = vld [vmem:[%s3 + $0x3c8] sm:$0xff]
  %v326 = vld [vmem:[%s3 + $0x3d0] sm:$0xff]
  %v327 = vld [vmem:[%s3 + $0x3d8] sm:$0xff]
  %v328 = vld [vmem:[%s3 + $0x3e0] sm:$0xff]
  %v329 = vld [vmem:[%s3 + $0x3e8] sm:$0xff]
  %v330 = vld [vmem:[%s3 + $0x3f0] sm:$0xff]
  %v331 = vld [vmem:[%s3 + $0x3f8] sm:$0xff]
  %v332 = vld [vmem:[%s3 + $0x400] sm:$0xff]
  %v333 = vld [vmem:[%s3 + $0x408] sm:$0xff]
  %v334 = vld [vmem:[%s3 + $0x410] sm:$0xff]
  %v335 = vld [vmem:[%s3 + $0x418] sm:$0xff]
  %v336 = vld [vmem:[%s3 + $0x420] sm:$0xff]
  %v337 = vld [vmem:[%s3 + $0x428] sm:$0xff]
  %v338 = vld [vmem:[%s3 + $0x430] sm:$0xff]
  %v339 = vld [vmem:[%s3 + $0x438] sm:$0xff]
  %v340 = vld [vmem:[%s3 + $0x440] sm:$0xff]
  %v341 = vld [vmem:[%s3 + $0x448] sm:$0xff]
  %v342 = vld [vmem:[%s3 + $0x450] sm:$0xff]
  %v343 = vld [vmem:[%s3 + $0x458] sm:$0xff]
  %v344 = vld [vmem:[%s3 + $0x460] sm:$0xff]
  %v345 = vld [vmem:[%s3 + $0x468] sm:$0xff]
  %v346 = vld [vmem:[%s3 + $0x470] sm:$0xff]
  %v347 = vld [vmem:[%s3 + $0x478] sm:$0xff]
  %v348 = vld [vmem:[%s4] sm:$0xff]
  %v349 = vld [vmem:[%s4 + $0x8] sm:$0xff]
  %v350 = vld [vmem:[%s4 + $0x10] sm:$0xff]
  %v351 = vld [vmem:[%s4 + $0x18] sm:$0xff]
  %v352 = vld [vmem:[%s4 + $0x20] sm:$0xff]
  %v353 = vld [vmem:[%s4 + $0x28] sm:$0xff]
  %v354 = vld [vmem:[%s4 + $0x30] sm:$0xff]
  %v355 = vld [vmem:[%s4 + $0x38] sm:$0xff]
  %v356 = vld [vmem:[%s4 + $0x40] sm:$0xff]
  %v357 = vld [vmem:[%s4 + $0x48] sm:$0xff]
  %v358 = vld [vmem:[%s4 + $0x50] sm:$0xff]
  %v359 = vld [vmem:[%s4 + $0x58] sm:$0xff]
  %v360 = vld [vmem:[%s4 + $0x60] sm:$0xff]
  %v361 = vld [vmem:[%s4 + $0x68] sm:$0xff]
  %v362 = vld [vmem:[%s4 + $0x70] sm:$0xff]
  %v363 = vld [vmem:[%s4 + $0x78] sm:$0xff]
  %v364 = vld [vmem:[%s4 + $0x80] sm:$0xff]
  %v365 = vld [vmem:[%s4 + $0x88] sm:$0xff]
  %v366 = vld [vmem:[%s4 + $0x90] sm:$0xff]
  %v367 = vld [vmem:[%s4 + $0x98] sm:$0xff]
  %v368 = vld [vmem:[%s4 + $0xa0] sm:$0xff]
  %v369 = vld [vmem:[%s4 + $0xa8] sm:$0xff]
  %v370 = vld [vmem:[%s4 + $0xb0] sm:$0xff]
  %v371 = vld [vmem:[%s4 + $0xb8] sm:$0xff]
  %v372 = vld [vmem:[%s4 + $0xc0] sm:$0xff]
  %v373 = vld [vmem:[%s4 + $0xc8] sm:$0xff]
  %v374 = vld [vmem:[%s4 + $0xd0] sm:$0xff]
  %v375 = vld [vmem:[%s4 + $0xd8] sm:$0xff]
  %v376 = vld [vmem:[%s4 + $0xe0] sm:$0xff]
  %v377 = vld [vmem:[%s4 + $0xe8] sm:$0xff]
  %v378 = vld [vmem:[%s4 + $0xf0] sm:$0xff]
  %v379 = vld [vmem:[%s4 + $0xf8] sm:$0xff]
  %v380 = vld [vmem:[%s4 + $0x100] sm:$0xff]
  %v381 = vld [vmem:[%s4 + $0x108] sm:$0xff]
  %v382 = vld [vmem:[%s4 + $0x110] sm:$0xff]
  %v383 = vld [vmem:[%s4 + $0x118] sm:$0xff]
  %v384 = vld [vmem:[%s4 + $0x120] sm:$0xff]
  %v385 = vld [vmem:[%s4 + $0x128] sm:$0xff]
  %v386 = vld [vmem:[%s4 + $0x130] sm:$0xff]
  %v387 = vld [vmem:[%s4 + $0x138] sm:$0xff]
  %v388 = vld [vmem:[%s4 + $0x140] sm:$0xff]
  %v389 = vld [vmem:[%s4 + $0x148] sm:$0xff]
  %v390 = vld [vmem:[%s4 + $0x150] sm:$0xff]
  %v391 = vld [vmem:[%s4 + $0x158] sm:$0xff]
  %v392 = vld [vmem:[%s4 + $0x160] sm:$0xff]
  %v393 = vld [vmem:[%s4 + $0x168] sm:$0xff]
  %v394 = vld [vmem:[%s4 + $0x170] sm:$0xff]
  %v395 = vld [vmem:[%s4 + $0x178] sm:$0xff]
  %v396 = vld [vmem:[%s4 + $0x180] sm:$0xff]
  %v397 = vld [vmem:[%s4 + $0x188] sm:$0xff]
  %v398 = vld [vmem:[%s4 + $0x190] sm:$0xff]
  %v399 = vld [vmem:[%s4 + $0x198] sm:$0xff]
  %v400 = vld [vmem:[%s4 + $0x1a0] sm:$0xff]
  %v401 = vld [vmem:[%s4 + $0x1a8] sm:$0xff]
  %v402 = vld [vmem:[%s4 + $0x1b0] sm:$0xff]
  %v403 = vld [vmem:[%s4 + $0x1b8] sm:$0xff]
  %v404 = vld [vmem:[%s4 + $0x1c0] sm:$0xff]
  %v405 = vld [vmem:[%s4 + $0x1c8] sm:$0xff]
  %v406 = vld [vmem:[%s4 + $0x1d0] sm:$0xff]
  %v407 = vld [vmem:[%s4 + $0x1d8] sm:$0xff]
  %v408 = vld [vmem:[%s4 + $0x1e0] sm:$0xff]
  %v409 = vld [vmem:[%s4 + $0x1e8] sm:$0xff]
  %v410 = vld [vmem:[%s4 + $0x1f0] sm:$0xff]
  %v411 = vld [vmem:[%s4 + $0x1f8] sm:$0xff]
  %v412 = vld [vmem:[%s4 + $0x200] sm:$0xff]
  %v413 = vld [vmem:[%s4 + $0x208] sm:$0xff]
  %v414 = vld [vmem:[%s4 + $0x210] sm:$0xff]
  %v415 = vld [vmem:[%s4 + $0x218] sm:$0xff]
  %v416 = vld [vmem:[%s4 + $0x220] sm:$0xff]
  %v417 = vld [vmem:[%s4 + $0x228] sm:$0xff]
  %v418 = vld [vmem:[%s4 + $0x230] sm:$0xff]
  %v419 = vld [vmem:[%s4 + $0x238] sm:$0xff]
  %v420 = vld [vmem:[%s4 + $0x240] sm:$0xff]
  %v421 = vld [vmem:[%s4 + $0x248] sm:$0xff]
  %v422 = vld [vmem:[%s4 + $0x250] sm:$0xff]
  %v423 = vld [vmem:[%s4 + $0x258] sm:$0xff]
  %v424 = vld [vmem:[%s4 + $0x260] sm:$0xff]
  %v425 = vld [vmem:[%s4 + $0x268] sm:$0xff]
  %v426 = vld [vmem:[%s4 + $0x270] sm:$0xff]
  %v427 = vld [vmem:[%s4 + $0x278] sm:$0xff]
  %v428 = vld [vmem:[%s4 + $0x280] sm:$0xff]
  %v429 = vld [vmem:[%s4 + $0x288] sm:$0xff]
  %v430 = vld [vmem:[%s4 + $0x290] sm:$0xff]
  %v431 = vld [vmem:[%s4 + $0x298] sm:$0xff]
  %v432 = vld [vmem:[%s4 + $0x2a0] sm:$0xff]
  %v433 = vld [vmem:[%s4 + $0x2a8] sm:$0xff]
  %v434 = vld [vmem:[%s4 + $0x2b0] sm:$0xff]
  %v435 = vld [vmem:[%s4 + $0x2b8] sm:$0xff]
  %v436 = vld [vmem:[%s4 + $0x2c0] sm:$0xff]
  %v437 = vld [vmem:[%s4 + $0x2c8] sm:$0xff]
  %v438 = vld [vmem:[%s4 + $0x2d0] sm:$0xff]
  %v439 = vld [vmem:[%s4 + $0x2d8] sm:$0xff]
  %v440 = vld [vmem:[%s4 + $0x2e0] sm:$0xff]
  %v441 = vld [vmem:[%s4 + $0x2e8] sm:$0xff]
  %v442 = vld [vmem:[%s4 + $0x2f0] sm:$0xff]
  %v443 = vld [vmem:[%s4 + $0x2f8] sm:$0xff]
  %v444 = vld [vmem:[%s4 + $0x300] sm:$0xff]
  %v445 = vld [vmem:[%s4 + $0x308] sm:$0xff]
  %v446 = vld [vmem:[%s4 + $0x310] sm:$0xff]
  %v447 = vld [vmem:[%s4 + $0x318] sm:$0xff]
  %v448 = vld [vmem:[%s4 + $0x320] sm:$0xff]
  %v449 = vld [vmem:[%s4 + $0x328] sm:$0xff]
  %v450 = vld [vmem:[%s4 + $0x330] sm:$0xff]
  %v451 = vld [vmem:[%s4 + $0x338] sm:$0xff]
  %v452 = vld [vmem:[%s4 + $0x340] sm:$0xff]
  %v453 = vld [vmem:[%s4 + $0x348] sm:$0xff]
  %v454 = vld [vmem:[%s4 + $0x350] sm:$0xff]
  %v455 = vld [vmem:[%s4 + $0x358] sm:$0xff]
  %v456 = vld [vmem:[%s4 + $0x360] sm:$0xff]
  %v457 = vld [vmem:[%s4 + $0x368] sm:$0xff]
  %v458 = vld [vmem:[%s4 + $0x370] sm:$0xff]
  %v459 = vld [vmem:[%s4 + $0x378] sm:$0xff]
  %v460 = vld [vmem:[%s4 + $0x380] sm:$0xff]
  %v461 = vld [vmem:[%s4 + $0x388] sm:$0xff]
  %v462 = vld [vmem:[%s4 + $0x390] sm:$0xff]
  %v463 = vld [vmem:[%s4 + $0x398] sm:$0xff]
  %v464 = vld [vmem:[%s4 + $0x3a0] sm:$0xff]
  %v465 = vld [vmem:[%s4 + $0x3a8] sm:$0xff]
  %v466 = vld [vmem:[%s4 + $0x3b0] sm:$0xff]
  %v467 = vld [vmem:[%s4 + $0x3b8] sm:$0xff]
  %v468 = vld [vmem:[%s4 + $0x3c0] sm:$0xff]
  %v469 = vld [vmem:[%s4 + $0x3c8] sm:$0xff]
  %v470 = vld [vmem:[%s4 + $0x3d0] sm:$0xff]
  %v471 = vld [vmem:[%s4 + $0x3d8] sm:$0xff]
  %v472 = vld [vmem:[%s4 + $0x3e0] sm:$0xff]
  %v473 = vld [vmem:[%s4 + $0x3e8] sm:$0xff]
  %v474 = vld [vmem:[%s4 + $0x3f0] sm:$0xff]
  %v475 = vld [vmem:[%s4 + $0x3f8] sm:$0xff]
  %v476 = vld [vmem:[%s4 + $0x400] sm:$0xff]
  %v477 = vld [vmem:[%s4 + $0x408] sm:$0xff]
  %v478 = vld [vmem:[%s4 + $0x410] sm:$0xff]
  %v479 = vld [vmem:[%s4 + $0x418] sm:$0xff]
  %v480 = vld [vmem:[%s4 + $0x420] sm:$0xff]
  %v481 = vld [vmem:[%s4 + $0x428] sm:$0xff]
  %v482 = vld [vmem:[%s4 + $0x430] sm:$0xff]
  %v483 = vld [vmem:[%s4 + $0x438] sm:$0xff]
  %v484 = vld [vmem:[%s4 + $0x440] sm:$0xff]
  %v485 = vld [vmem:[%s4 + $0x448] sm:$0xff]
  %v486 = vld [vmem:[%s4 + $0x450] sm:$0xff]
  %v487 = vld [vmem:[%s4 + $0x458] sm:$0xff]
  %v488 = vld [vmem:[%s4 + $0x460] sm:$0xff]
  %v489 = vld [vmem:[%s4 + $0x468] sm:$0xff]
  %v490 = vld [vmem:[%s4 + $0x470] sm:$0xff]
  %v491 = vld [vmem:[%s4 + $0x478] sm:$0xff]
  %vm492 = vcmp.gt.f32.partialorder %v348, 20.0
  %vm493 = vcmp.gt.f32.partialorder %v349, 20.0
  %vm494 = vcmp.gt.f32.partialorder %v350, 20.0
  %vm495 = vcmp.gt.f32.partialorder %v351, 20.0
  %vm496 = vcmp.gt.f32.partialorder %v352, 20.0
  %vm497 = vcmp.gt.f32.partialorder %v353, 20.0
  %vm498 = vcmp.gt.f32.partialorder %v354, 20.0
  %vm499 = vcmp.gt.f32.partialorder %v355, 20.0
  %vm500 = vcmp.gt.f32.partialorder %v356, 20.0
  %vm501 = vcmp.gt.f32.partialorder %v357, 20.0
  %vm502 = vcmp.gt.f32.partialorder %v358, 20.0
  %vm503 = vcmp.gt.f32.partialorder %v359, 20.0
  %vm504 = vcmp.gt.f32.partialorder %v360, 20.0
  %vm505 = vcmp.gt.f32.partialorder %v361, 20.0
  %vm506 = vcmp.gt.f32.partialorder %v362, 20.0
  %vm507 = vcmp.gt.f32.partialorder %v363, 20.0
  %vm508 = vcmp.gt.f32.partialorder %v364, 20.0
  %vm509 = vcmp.gt.f32.partialorder %v365, 20.0
  %vm510 = vcmp.gt.f32.partialorder %v366, 20.0
  %vm511 = vcmp.gt.f32.partialorder %v367, 20.0
  %vm512 = vcmp.gt.f32.partialorder %v368, 20.0
  %vm513 = vcmp.gt.f32.partialorder %v369, 20.0
  %vm514 = vcmp.gt.f32.partialorder %v370, 20.0
  %vm515 = vcmp.gt.f32.partialorder %v371, 20.0
  %vm516 = vcmp.gt.f32.partialorder %v372, 20.0
  %vm517 = vcmp.gt.f32.partialorder %v373, 20.0
  %vm518 = vcmp.gt.f32.partialorder %v374, 20.0
  %vm519 = vcmp.gt.f32.partialorder %v375, 20.0
  %vm520 = vcmp.gt.f32.partialorder %v376, 20.0
  %vm521 = vcmp.gt.f32.partialorder %v377, 20.0
  %vm522 = vcmp.gt.f32.partialorder %v378, 20.0
  %vm523 = vcmp.gt.f32.partialorder %v379, 20.0
  %vm524 = vcmp.gt.f32.partialorder %v380, 20.0
  %vm525 = vcmp.gt.f32.partialorder %v381, 20.0
  %vm526 = vcmp.gt.f32.partialorder %v382, 20.0
  %vm527 = vcmp.gt.f32.partialorder %v383, 20.0
  %vm528 = vcmp.gt.f32.partialorder %v384, 20.0
  %vm529 = vcmp.gt.f32.partialorder %v385, 20.0
  %vm530 = vcmp.gt.f32.partialorder %v386, 20.0
  %vm531 = vcmp.gt.f32.partialorder %v387, 20.0
  %vm532 = vcmp.gt.f32.partialorder %v388, 20.0
  %vm533 = vcmp.gt.f32.partialorder %v389, 20.0
  %vm534 = vcmp.gt.f32.partialorder %v390, 20.0
  %vm535 = vcmp.gt.f32.partialorder %v391, 20.0
  %vm536 = vcmp.gt.f32.partialorder %v392, 20.0
  %vm537 = vcmp.gt.f32.partialorder %v393, 20.0
  %vm538 = vcmp.gt.f32.partialorder %v394, 20.0
  %vm539 = vcmp.gt.f32.partialorder %v395, 20.0
  %vm540 = vcmp.gt.f32.partialorder %v396, 20.0
  %vm541 = vcmp.gt.f32.partialorder %v397, 20.0
  %vm542 = vcmp.gt.f32.partialorder %v398, 20.0
  %vm543 = vcmp.gt.f32.partialorder %v399, 20.0
  %vm544 = vcmp.gt.f32.partialorder %v400, 20.0
  %vm545 = vcmp.gt.f32.partialorder %v401, 20.0
  %vm546 = vcmp.gt.f32.partialorder %v402, 20.0
  %vm547 = vcmp.gt.f32.partialorder %v403, 20.0
  %vm548 = vcmp.gt.f32.partialorder %v404, 20.0
  %vm549 = vcmp.gt.f32.partialorder %v405, 20.0
  %vm550 = vcmp.gt.f32.partialorder %v406, 20.0
  %vm551 = vcmp.gt.f32.partialorder %v407, 20.0
  %vm552 = vcmp.gt.f32.partialorder %v408, 20.0
  %vm553 = vcmp.gt.f32.partialorder %v409, 20.0
  %vm554 = vcmp.gt.f32.partialorder %v410, 20.0
  %vm555 = vcmp.gt.f32.partialorder %v411, 20.0
  %vm556 = vcmp.gt.f32.partialorder %v412, 20.0
  %vm557 = vcmp.gt.f32.partialorder %v413, 20.0
  %vm558 = vcmp.gt.f32.partialorder %v414, 20.0
  %vm559 = vcmp.gt.f32.partialorder %v415, 20.0
  %vm560 = vcmp.gt.f32.partialorder %v416, 20.0
  %vm561 = vcmp.gt.f32.partialorder %v417, 20.0
  %vm562 = vcmp.gt.f32.partialorder %v418, 20.0
  %vm563 = vcmp.gt.f32.partialorder %v419, 20.0
  %vm564 = vcmp.gt.f32.partialorder %v420, 20.0
  %vm565 = vcmp.gt.f32.partialorder %v421, 20.0
  %vm566 = vcmp.gt.f32.partialorder %v422, 20.0
  %vm567 = vcmp.gt.f32.partialorder %v423, 20.0
  %vm568 = vcmp.gt.f32.partialorder %v424, 20.0
  %vm569 = vcmp.gt.f32.partialorder %v425, 20.0
  %vm570 = vcmp.gt.f32.partialorder %v426, 20.0
  %vm571 = vcmp.gt.f32.partialorder %v427, 20.0
  %vm572 = vcmp.gt.f32.partialorder %v428, 20.0
  %vm573 = vcmp.gt.f32.partialorder %v429, 20.0
  %vm574 = vcmp.gt.f32.partialorder %v430, 20.0
  %vm575 = vcmp.gt.f32.partialorder %v431, 20.0
  %vm576 = vcmp.gt.f32.partialorder %v432, 20.0
  %vm577 = vcmp.gt.f32.partialorder %v433, 20.0
  %vm578 = vcmp.gt.f32.partialorder %v434, 20.0
  %vm579 = vcmp.gt.f32.partialorder %v435, 20.0
  %vm580 = vcmp.gt.f32.partialorder %v436, 20.0
  %vm581 = vcmp.gt.f32.partialorder %v437, 20.0
  %vm582 = vcmp.gt.f32.partialorder %v438, 20.0
  %vm583 = vcmp.gt.f32.partialorder %v439, 20.0
  %vm584 = vcmp.gt.f32.partialorder %v440, 20.0
  %vm585 = vcmp.gt.f32.partialorder %v441, 20.0
  %vm586 = vcmp.gt.f32.partialorder %v442, 20.0
  %vm587 = vcmp.gt.f32.partialorder %v443, 20.0
  %vm588 = vcmp.gt.f32.partialorder %v444, 20.0
  %vm589 = vcmp.gt.f32.partialorder %v445, 20.0
  %vm590 = vcmp.gt.f32.partialorder %v446, 20.0
  %vm591 = vcmp.gt.f32.partialorder %v447, 20.0
  %vm592 = vcmp.gt.f32.partialorder %v448, 20.0
  %vm593 = vcmp.gt.f32.partialorder %v449, 20.0
  %vm594 = vcmp.gt.f32.partialorder %v450, 20.0
  %vm595 = vcmp.gt.f32.partialorder %v451, 20.0
  %vm596 = vcmp.gt.f32.partialorder %v452, 20.0
  %vm597 = vcmp.gt.f32.partialorder %v453, 20.0
  %vm598 = vcmp.gt.f32.partialorder %v454, 20.0
  %vm599 = vcmp.gt.f32.partialorder %v455, 20.0
  %vm600 = vcmp.gt.f32.partialorder %v456, 20.0
  %vm601 = vcmp.gt.f32.partialorder %v457, 20.0
  %vm602 = vcmp.gt.f32.partialorder %v458, 20.0
  %vm603 = vcmp.gt.f32.partialorder %v459, 20.0
  %vm604 = vcmp.gt.f32.partialorder %v460, 20.0
  %vm605 = vcmp.gt.f32.partialorder %v461, 20.0
  %vm606 = vcmp.gt.f32.partialorder %v462, 20.0
  %vm607 = vcmp.gt.f32.partialorder %v463, 20.0
  %vm608 = vcmp.gt.f32.partialorder %v464, 20.0
  %vm609 = vcmp.gt.f32.partialorder %v465, 20.0
  %vm610 = vcmp.gt.f32.partialorder %v466, 20.0
  %vm611 = vcmp.gt.f32.partialorder %v467, 20.0
  %vm612 = vcmp.gt.f32.partialorder %v468, 20.0
  %vm613 = vcmp.gt.f32.partialorder %v469, 20.0
  %vm614 = vcmp.gt.f32.partialorder %v470, 20.0
  %vm615 = vcmp.gt.f32.partialorder %v471, 20.0
  %vm616 = vcmp.gt.f32.partialorder %v472, 20.0
  %vm617 = vcmp.gt.f32.partialorder %v473, 20.0
  %vm618 = vcmp.gt.f32.partialorder %v474, 20.0
  %vm619 = vcmp.gt.f32.partialorder %v475, 20.0
  %vm620 = vcmp.gt.f32.partialorder %v476, 20.0
  %vm621 = vcmp.gt.f32.partialorder %v477, 20.0
  %vm622 = vcmp.gt.f32.partialorder %v478, 20.0
  %vm623 = vcmp.gt.f32.partialorder %v479, 20.0
  %vm624 = vcmp.gt.f32.partialorder %v480, 20.0
  %vm625 = vcmp.gt.f32.partialorder %v481, 20.0
  %vm626 = vcmp.gt.f32.partialorder %v482, 20.0
  %vm627 = vcmp.gt.f32.partialorder %v483, 20.0
  %vm628 = vcmp.gt.f32.partialorder %v484, 20.0
  %vm629 = vcmp.gt.f32.partialorder %v485, 20.0
  %vm630 = vcmp.gt.f32.partialorder %v486, 20.0
  %vm631 = vcmp.gt.f32.partialorder %v487, 20.0
  %vm632 = vcmp.gt.f32.partialorder %v488, 20.0
  %vm633 = vcmp.gt.f32.partialorder %v489, 20.0
  %vm634 = vcmp.gt.f32.partialorder %v490, 20.0
  %vm635 = vcmp.gt.f32.partialorder %v491, 20.0
  %v636 = vmin.f32 %v348, 20.0
  %v637 = vmin.f32 %v349, 20.0
  %v638 = vmin.f32 %v350, 20.0
  %v639 = vmin.f32 %v351, 20.0
  %v640 = vmin.f32 %v352, 20.0
  %v641 = vmin.f32 %v353, 20.0
  %v642 = vmin.f32 %v354, 20.0
  %v643 = vmin.f32 %v355, 20.0
  %v644 = vmin.f32 %v356, 20.0
  %v645 = vmin.f32 %v357, 20.0
  %v646 = vmin.f32 %v358, 20.0
  %v647 = vmin.f32 %v359, 20.0
  %v648 = vmin.f32 %v360, 20.0
  %v649 = vmin.f32 %v361, 20.0
  %v650 = vmin.f32 %v362, 20.0
  %v651 = vmin.f32 %v363, 20.0
  %v652 = vmin.f32 %v364, 20.0
  %v653 = vmin.f32 %v365, 20.0
  %v654 = vmin.f32 %v366, 20.0
  %v655 = vmin.f32 %v367, 20.0
  %v656 = vmin.f32 %v368, 20.0
  %v657 = vmin.f32 %v369, 20.0
  %v658 = vmin.f32 %v370, 20.0
  %v659 = vmin.f32 %v371, 20.0
  %v660 = vmin.f32 %v372, 20.0
  %v661 = vmin.f32 %v373, 20.0
  %v662 = vmin.f32 %v374, 20.0
  %v663 = vmin.f32 %v375, 20.0
  %v664 = vmin.f32 %v376, 20.0
  %v665 = vmin.f32 %v377, 20.0
  %v666 = vmin.f32 %v378, 20.0
  %v667 = vmin.f32 %v379, 20.0
  %v668 = vmin.f32 %v380, 20.0
  %v669 = vmin.f32 %v381, 20.0
  %v670 = vmin.f32 %v382, 20.0
  %v671 = vmin.f32 %v383, 20.0
  %v672 = vmin.f32 %v384, 20.0
  %v673 = vmin.f32 %v385, 20.0
  %v674 = vmin.f32 %v386, 20.0
  %v675 = vmin.f32 %v387, 20.0
  %v676 = vmin.f32 %v388, 20.0
  %v677 = vmin.f32 %v389, 20.0
  %v678 = vmin.f32 %v390, 20.0
  %v679 = vmin.f32 %v391, 20.0
  %v680 = vmin.f32 %v392, 20.0
  %v681 = vmin.f32 %v393, 20.0
  %v682 = vmin.f32 %v394, 20.0
  %v683 = vmin.f32 %v395, 20.0
  %v684 = vmin.f32 %v396, 20.0
  %v685 = vmin.f32 %v397, 20.0
  %v686 = vmin.f32 %v398, 20.0
  %v687 = vmin.f32 %v399, 20.0
  %v688 = vmin.f32 %v400, 20.0
  %v689 = vmin.f32 %v401, 20.0
  %v690 = vmin.f32 %v402, 20.0
  %v691 = vmin.f32 %v403, 20.0
  %v692 = vmin.f32 %v404, 20.0
  %v693 = vmin.f32 %v405, 20.0
  %v694 = vmin.f32 %v406, 20.0
  %v695 = vmin.f32 %v407, 20.0
  %v696 = vmin.f32 %v408, 20.0
  %v697 = vmin.f32 %v409, 20.0
  %v698 = vmin.f32 %v410, 20.0
  %v699 = vmin.f32 %v411, 20.0
  %v700 = vmin.f32 %v412, 20.0
  %v701 = vmin.f32 %v413, 20.0
  %v702 = vmin.f32 %v414, 20.0
  %v703 = vmin.f32 %v415, 20.0
  %v704 = vmin.f32 %v416, 20.0
  %v705 = vmin.f32 %v417, 20.0
  %v706 = vmin.f32 %v418, 20.0
  %v707 = vmin.f32 %v419, 20.0
  %v708 = vmin.f32 %v420, 20.0
  %v709 = vmin.f32 %v421, 20.0
  %v710 = vmin.f32 %v422, 20.0
  %v711 = vmin.f32 %v423, 20.0
  %v712 = vmin.f32 %v424, 20.0
  %v713 = vmin.f32 %v425, 20.0
  %v714 = vmin.f32 %v426, 20.0
  %v715 = vmin.f32 %v427, 20.0
  %v716 = vmin.f32 %v428, 20.0
  %v717 = vmin.f32 %v429, 20.0
  %v718 = vmin.f32 %v430, 20.0
  %v719 = vmin.f32 %v431, 20.0
  %v720 = vmin.f32 %v432, 20.0
  %v721 = vmin.f32 %v433, 20.0
  %v722 = vmin.f32 %v434, 20.0
  %v723 = vmin.f32 %v435, 20.0
  %v724 = vmin.f32 %v436, 20.0
  %v725 = vmin.f32 %v437, 20.0
  %v726 = vmin.f32 %v438, 20.0
  %v727 = vmin.f32 %v439, 20.0
  %v728 = vmin.f32 %v440, 20.0
  %v729 = vmin.f32 %v441, 20.0
  %v730 = vmin.f32 %v442, 20.0
  %v731 = vmin.f32 %v443, 20.0
  %v732 = vmin.f32 %v444, 20.0
  %v733 = vmin.f32 %v445, 20.0
  %v734 = vmin.f32 %v446, 20.0
  %v735 = vmin.f32 %v447, 20.0
  %v736 = vmin.f32 %v448, 20.0
  %v737 = vmin.f32 %v449, 20.0
  %v738 = vmin.f32 %v450, 20.0
  %v739 = vmin.f32 %v451, 20.0
  %v740 = vmin.f32 %v452, 20.0
  %v741 = vmin.f32 %v453, 20.0
  %v742 = vmin.f32 %v454, 20.0
  %v743 = vmin.f32 %v455, 20.0
  %v744 = vmin.f32 %v456, 20.0
  %v745 = vmin.f32 %v457, 20.0
  %v746 = vmin.f32 %v458, 20.0
  %v747 = vmin.f32 %v459, 20.0
  %v748 = vmin.f32 %v460, 20.0
  %v749 = vmin.f32 %v461, 20.0
  %v750 = vmin.f32 %v462, 20.0
  %v751 = vmin.f32 %v463, 20.0
  %v752 = vmin.f32 %v464, 20.0
  %v753 = vmin.f32 %v465, 20.0
  %v754 = vmin.f32 %v466, 20.0
  %v755 = vmin.f32 %v467, 20.0
  %v756 = vmin.f32 %v468, 20.0
  %v757 = vmin.f32 %v469, 20.0
  %v758 = vmin.f32 %v470, 20.0
  %v759 = vmin.f32 %v471, 20.0
  %v760 = vmin.f32 %v472, 20.0
  %v761 = vmin.f32 %v473, 20.0
  %v762 = vmin.f32 %v474, 20.0
  %v763 = vmin.f32 %v475, 20.0
  %v764 = vmin.f32 %v476, 20.0
  %v765 = vmin.f32 %v477, 20.0
  %v766 = vmin.f32 %v478, 20.0
  %v767 = vmin.f32 %v479, 20.0
  %v768 = vmin.f32 %v480, 20.0
  %v769 = vmin.f32 %v481, 20.0
  %v770 = vmin.f32 %v482, 20.0
  %v771 = vmin.f32 %v483, 20.0
  %v772 = vmin.f32 %v484, 20.0
  %v773 = vmin.f32 %v485, 20.0
  %v774 = vmin.f32 %v486, 20.0
  %v775 = vmin.f32 %v487, 20.0
  %v776 = vmin.f32 %v488, 20.0
  %v777 = vmin.f32 %v489, 20.0
  %v778 = vmin.f32 %v490, 20.0
  %v779 = vmin.f32 %v491, 20.0
  %v780 = vmul.f32 %v636, 1.442695
  %v781 = vpow.pop %v780
  %v782 = vmul.f32 %v637, 1.442695
  %v783 = vpow.pop %v782
  %v784 = vmul.f32 %v638, 1.442695
  %v785 = vpow.pop %v784
  %v786 = vmul.f32 %v639, 1.442695
  %v787 = vpow.pop %v786
  %v788 = vmul.f32 %v640, 1.442695
  %v789 = vpow.pop %v788
  %v790 = vmul.f32 %v641, 1.442695
  %v791 = vpow.pop %v790
  %v792 = vmul.f32 %v642, 1.442695
  %v793 = vpow.pop %v792
  %v794 = vmul.f32 %v643, 1.442695
  %v795 = vpow.pop %v794
  %v796 = vmul.f32 %v644, 1.442695
  %v797 = vpow.pop %v796
  %v798 = vmul.f32 %v645, 1.442695
  %v799 = vpow.pop %v798
  %v800 = vmul.f32 %v646, 1.442695
  %v801 = vpow.pop %v800
  %v802 = vmul.f32 %v647, 1.442695
  %v803 = vpow.pop %v802
  %v804 = vmul.f32 %v648, 1.442695
  %v805 = vpow.pop %v804
  %v806 = vmul.f32 %v649, 1.442695
  %v807 = vpow.pop %v806
  %v808 = vmul.f32 %v650, 1.442695
  %v809 = vpow.pop %v808
  %v810 = vmul.f32 %v651, 1.442695
  %v811 = vpow.pop %v810
  %v812 = vmul.f32 %v652, 1.442695
  %v813 = vpow.pop %v812
  %v814 = vmul.f32 %v653, 1.442695
  %v815 = vpow.pop %v814
  %v816 = vmul.f32 %v654, 1.442695
  %v817 = vpow.pop %v816
  %v818 = vmul.f32 %v655, 1.442695
  %v819 = vpow.pop %v818
  %v820 = vmul.f32 %v656, 1.442695
  %v821 = vpow.pop %v820
  %v822 = vmul.f32 %v657, 1.442695
  %v823 = vpow.pop %v822
  %v824 = vmul.f32 %v658, 1.442695
  %v825 = vpow.pop %v824
  %v826 = vmul.f32 %v659, 1.442695
  %v827 = vpow.pop %v826
  %v828 = vmul.f32 %v660, 1.442695
  %v829 = vpow.pop %v828
  %v830 = vmul.f32 %v661, 1.442695
  %v831 = vpow.pop %v830
  %v832 = vmul.f32 %v662, 1.442695
  %v833 = vpow.pop %v832
  %v834 = vmul.f32 %v663, 1.442695
  %v835 = vpow.pop %v834
  %v836 = vmul.f32 %v664, 1.442695
  %v837 = vpow.pop %v836
  %v838 = vmul.f32 %v665, 1.442695
  %v839 = vpow.pop %v838
  %v840 = vmul.f32 %v666, 1.442695
  %v841 = vpow.pop %v840
  %v842 = vmul.f32 %v667, 1.442695
  %v843 = vpow.pop %v842
  %v844 = vmul.f32 %v668, 1.442695
  %v845 = vpow.pop %v844
  %v846 = vmul.f32 %v669, 1.442695
  %v847 = vpow.pop %v846
  %v848 = vmul.f32 %v670, 1.442695
  %v849 = vpow.pop %v848
  %v850 = vmul.f32 %v671, 1.442695
  %v851 = vpow.pop %v850
  %v852 = vmul.f32 %v672, 1.442695
  %v853 = vpow.pop %v852
  %v854 = vmul.f32 %v673, 1.442695
  %v855 = vpow.pop %v854
  %v856 = vmul.f32 %v674, 1.442695
  %v857 = vpow.pop %v856
  %v858 = vmul.f32 %v675, 1.442695
  %v859 = vpow.pop %v858
  %v860 = vmul.f32 %v676, 1.442695
  %v861 = vpow.pop %v860
  %v862 = vmul.f32 %v677, 1.442695
  %v863 = vpow.pop %v862
  %v864 = vmul.f32 %v678, 1.442695
  %v865 = vpow.pop %v864
  %v866 = vmul.f32 %v679, 1.442695
  %v867 = vpow.pop %v866
  %v868 = vmul.f32 %v680, 1.442695
  %v869 = vpow.pop %v868
  %v870 = vmul.f32 %v681, 1.442695
  %v871 = vpow.pop %v870
  %v872 = vmul.f32 %v682, 1.442695
  %v873 = vpow.pop %v872
  %v874 = vmul.f32 %v683, 1.442695
  %v875 = vpow.pop %v874
  %v876 = vmul.f32 %v684, 1.442695
  %v877 = vpow.pop %v876
  %v878 = vmul.f32 %v685, 1.442695
  %v879 = vpow.pop %v878
  %v880 = vmul.f32 %v686, 1.442695
  %v881 = vpow.pop %v880
  %v882 = vmul.f32 %v687, 1.442695
  %v883 = vpow.pop %v882
  %v884 = vmul.f32 %v688, 1.442695
  %v885 = vpow.pop %v884
  %v886 = vmul.f32 %v689, 1.442695
  %v887 = vpow.pop %v886
  %v888 = vmul.f32 %v690, 1.442695
  %v889 = vpow.pop %v888
  %v890 = vmul.f32 %v691, 1.442695
  %v891 = vpow.pop %v890
  %v892 = vmul.f32 %v692, 1.442695
  %v893 = vpow.pop %v892
  %v894 = vmul.f32 %v693, 1.442695
  %v895 = vpow.pop %v894
  %v896 = vmul.f32 %v694, 1.442695
  %v897 = vpow.pop %v896
  %v898 = vmul.f32 %v695, 1.442695
  %v899 = vpow.pop %v898
  %v900 = vmul.f32 %v696, 1.442695
  %v901 = vpow.pop %v900
  %v902 = vmul.f32 %v697, 1.442695
  %v903 = vpow.pop %v902
  %v904 = vmul.f32 %v698, 1.442695
  %v905 = vpow.pop %v904
  %v906 = vmul.f32 %v699, 1.442695
  %v907 = vpow.pop %v906
  %v908 = vmul.f32 %v700, 1.442695
  %v909 = vpow.pop %v908
  %v910 = vmul.f32 %v701, 1.442695
  %v911 = vpow.pop %v910
  %v912 = vmul.f32 %v702, 1.442695
  %v913 = vpow.pop %v912
  %v914 = vmul.f32 %v703, 1.442695
  %v915 = vpow.pop %v914
  %v916 = vmul.f32 %v704, 1.442695
  %v917 = vpow.pop %v916
  %v918 = vmul.f32 %v705, 1.442695
  %v919 = vpow.pop %v918
  %v920 = vmul.f32 %v706, 1.442695
  %v921 = vpow.pop %v920
  %v922 = vmul.f32 %v707, 1.442695
  %v923 = vpow.pop %v922
  %v924 = vmul.f32 %v708, 1.442695
  %v925 = vpow.pop %v924
  %v926 = vmul.f32 %v709, 1.442695
  %v927 = vpow.pop %v926
  %v928 = vmul.f32 %v710, 1.442695
  %v929 = vpow.pop %v928
  %v930 = vmul.f32 %v711, 1.442695
  %v931 = vpow.pop %v930
  %v932 = vmul.f32 %v712, 1.442695
  %v933 = vpow.pop %v932
  %v934 = vmul.f32 %v713, 1.442695
  %v935 = vpow.pop %v934
  %v936 = vmul.f32 %v714, 1.442695
  %v937 = vpow.pop %v936
  %v938 = vmul.f32 %v715, 1.442695
  %v939 = vpow.pop %v938
  %v940 = vmul.f32 %v716, 1.442695
  %v941 = vpow.pop %v940
  %v942 = vmul.f32 %v717, 1.442695
  %v943 = vpow.pop %v942
  %v944 = vmul.f32 %v718, 1.442695
  %v945 = vpow.pop %v944
  %v946 = vmul.f32 %v719, 1.442695
  %v947 = vpow.pop %v946
  %v948 = vmul.f32 %v720, 1.442695
  %v949 = vpow.pop %v948
  %v950 = vmul.f32 %v721, 1.442695
  %v951 = vpow.pop %v950
  %v952 = vmul.f32 %v722, 1.442695
  %v953 = vpow.pop %v952
  %v954 = vmul.f32 %v723, 1.442695
  %v955 = vpow.pop %v954
  %v956 = vmul.f32 %v724, 1.442695
  %v957 = vpow.pop %v956
  %v958 = vmul.f32 %v725, 1.442695
  %v959 = vpow.pop %v958
  %v960 = vmul.f32 %v726, 1.442695
  %v961 = vpow.pop %v960
  %v962 = vmul.f32 %v727, 1.442695
  %v963 = vpow.pop %v962
  %v964 = vmul.f32 %v728, 1.442695
  %v965 = vpow.pop %v964
  %v966 = vmul.f32 %v729, 1.442695
  %v967 = vpow.pop %v966
  %v968 = vmul.f32 %v730, 1.442695
  %v969 = vpow.pop %v968
  %v970 = vmul.f32 %v731, 1.442695
  %v971 = vpow.pop %v970
  %v972 = vmul.f32 %v732, 1.442695
  %v973 = vpow.pop %v972
  %v974 = vmul.f32 %v733, 1.442695
  %v975 = vpow.pop %v974
  %v976 = vmul.f32 %v734, 1.442695
  %v977 = vpow.pop %v976
  %v978 = vmul.f32 %v735, 1.442695
  %v979 = vpow.pop %v978
  %v980 = vmul.f32 %v736, 1.442695
  %v981 = vpow.pop %v980
  %v982 = vmul.f32 %v737, 1.442695
  %v983 = vpow.pop %v982
  %v984 = vmul.f32 %v738, 1.442695
  %v985 = vpow.pop %v984
  %v986 = vmul.f32 %v739, 1.442695
  %v987 = vpow.pop %v986
  %v988 = vmul.f32 %v740, 1.442695
  %v989 = vpow.pop %v988
  %v990 = vmul.f32 %v741, 1.442695
  %v991 = vpow.pop %v990
  %v992 = vmul.f32 %v742, 1.442695
  %v993 = vpow.pop %v992
  %v994 = vmul.f32 %v743, 1.442695
  %v995 = vpow.pop %v994
  %v996 = vmul.f32 %v744, 1.442695
  %v997 = vpow.pop %v996
  %v998 = vmul.f32 %v745, 1.442695
  %v999 = vpow.pop %v998
  %v1000 = vmul.f32 %v746, 1.442695
  %v1001 = vpow.pop %v1000
  %v1002 = vmul.f32 %v747, 1.442695
  %v1003 = vpow.pop %v1002
  %v1004 = vmul.f32 %v748, 1.442695
  %v1005 = vpow.pop %v1004
  %v1006 = vmul.f32 %v749, 1.442695
  %v1007 = vpow.pop %v1006
  %v1008 = vmul.f32 %v750, 1.442695
  %v1009 = vpow.pop %v1008
  %v1010 = vmul.f32 %v751, 1.442695
  %v1011 = vpow.pop %v1010
  %v1012 = vmul.f32 %v752, 1.442695
  %v1013 = vpow.pop %v1012
  %v1014 = vmul.f32 %v753, 1.442695
  %v1015 = vpow.pop %v1014
  %v1016 = vmul.f32 %v754, 1.442695
  %v1017 = vpow.pop %v1016
  %v1018 = vmul.f32 %v755, 1.442695
  %v1019 = vpow.pop %v1018
  %v1020 = vmul.f32 %v756, 1.442695
  %v1021 = vpow.pop %v1020
  %v1022 = vmul.f32 %v757, 1.442695
  %v1023 = vpow.pop %v1022
  %v1024 = vmul.f32 %v758, 1.442695
  %v1025 = vpow.pop %v1024
  %v1026 = vmul.f32 %v759, 1.442695
  %v1027 = vpow.pop %v1026
  %v1028 = vmul.f32 %v760, 1.442695
  %v1029 = vpow.pop %v1028
  %v1030 = vmul.f32 %v761, 1.442695
  %v1031 = vpow.pop %v1030
  %v1032 = vmul.f32 %v762, 1.442695
  %v1033 = vpow.pop %v1032
  %v1034 = vmul.f32 %v763, 1.442695
  %v1035 = vpow.pop %v1034
  %v1036 = vmul.f32 %v764, 1.442695
  %v1037 = vpow.pop %v1036
  %v1038 = vmul.f32 %v765, 1.442695
  %v1039 = vpow.pop %v1038
  %v1040 = vmul.f32 %v766, 1.442695
  %v1041 = vpow.pop %v1040
  %v1042 = vmul.f32 %v767, 1.442695
  %v1043 = vpow.pop %v1042
  %v1044 = vmul.f32 %v768, 1.442695
  %v1045 = vpow.pop %v1044
  %v1046 = vmul.f32 %v769, 1.442695
  %v1047 = vpow.pop %v1046
  %v1048 = vmul.f32 %v770, 1.442695
  %v1049 = vpow.pop %v1048
  %v1050 = vmul.f32 %v771, 1.442695
  %v1051 = vpow.pop %v1050
  %v1052 = vmul.f32 %v772, 1.442695
  %v1053 = vpow.pop %v1052
  %v1054 = vmul.f32 %v773, 1.442695
  %v1055 = vpow.pop %v1054
  %v1056 = vmul.f32 %v774, 1.442695
  %v1057 = vpow.pop %v1056
  %v1058 = vmul.f32 %v775, 1.442695
  %v1059 = vpow.pop %v1058
  %v1060 = vmul.f32 %v776, 1.442695
  %v1061 = vpow.pop %v1060
  %v1062 = vmul.f32 %v777, 1.442695
  %v1063 = vpow.pop %v1062
  %v1064 = vmul.f32 %v778, 1.442695
  %v1065 = vpow.pop %v1064
  %v1066 = vmul.f32 %v779, 1.442695
  %v1067 = vpow.pop %v1066
  %v1068 = vadd.f32 %v781, 1.0
  %v1069 = vlog2.pop %v1068
  %v1070 = vmul.f32 %v1069, 0.6931472
  %v1071 = vmul.f32 -0.5, %v781
  %v1072 = vadd.f32 %v1071, 1.0
  %v1073 = vmul.f32 %v1072, %v781
  %v1074 = vand.u32 2147483647, %v781
  %vm1075 = vcmp.lt.f32.partialorder %v1074, 0.0004427343
  %v1076 = vsel %vm1075, %v1073, %v1070
  %v1077 = vadd.f32 %v783, 1.0
  %v1078 = vlog2.pop %v1077
  %v1079 = vmul.f32 %v1078, 0.6931472
  %v1080 = vmul.f32 -0.5, %v783
  %v1081 = vadd.f32 %v1080, 1.0
  %v1082 = vmul.f32 %v1081, %v783
  %v1083 = vand.u32 2147483647, %v783
  %vm1084 = vcmp.lt.f32.partialorder %v1083, 0.0004427343
  %v1085 = vsel %vm1084, %v1082, %v1079
  %v1086 = vadd.f32 %v785, 1.0
  %v1087 = vlog2.pop %v1086
  %v1088 = vmul.f32 %v1087, 0.6931472
  %v1089 = vmul.f32 -0.5, %v785
  %v1090 = vadd.f32 %v1089, 1.0
  %v1091 = vmul.f32 %v1090, %v785
  %v1092 = vand.u32 2147483647, %v785
  %vm1093 = vcmp.lt.f32.partialorder %v1092, 0.0004427343
  %v1094 = vsel %vm1093, %v1091, %v1088
  %v1095 = vadd.f32 %v787, 1.0
  %v1096 = vlog2.pop %v1095
  %v1097 = vmul.f32 %v1096, 0.6931472
  %v1098 = vmul.f32 -0.5, %v787
  %v1099 = vadd.f32 %v1098, 1.0
  %v1100 = vmul.f32 %v1099, %v787
  %v1101 = vand.u32 2147483647, %v787
  %vm1102 = vcmp.lt.f32.partialorder %v1101, 0.0004427343
  %v1103 = vsel %vm1102, %v1100, %v1097
  %v1104 = vadd.f32 %v789, 1.0
  %v1105 = vlog2.pop %v1104
  %v1106 = vmul.f32 %v1105, 0.6931472
  %v1107 = vmul.f32 -0.5, %v789
  %v1108 = vadd.f32 %v1107, 1.0
  %v1109 = vmul.f32 %v1108, %v789
  %v1110 = vand.u32 2147483647, %v789
  %vm1111 = vcmp.lt.f32.partialorder %v1110, 0.0004427343
  %v1112 = vsel %vm1111, %v1109, %v1106
  %v1113 = vadd.f32 %v791, 1.0
  %v1114 = vlog2.pop %v1113
  %v1115 = vmul.f32 %v1114, 0.6931472
  %v1116 = vmul.f32 -0.5, %v791
  %v1117 = vadd.f32 %v1116, 1.0
  %v1118 = vmul.f32 %v1117, %v791
  %v1119 = vand.u32 2147483647, %v791
  %vm1120 = vcmp.lt.f32.partialorder %v1119, 0.0004427343
  %v1121 = vsel %vm1120, %v1118, %v1115
  %v1122 = vadd.f32 %v793, 1.0
  %v1123 = vlog2.pop %v1122
  %v1124 = vmul.f32 %v1123, 0.6931472
  %v1125 = vmul.f32 -0.5, %v793
  %v1126 = vadd.f32 %v1125, 1.0
  %v1127 = vmul.f32 %v1126, %v793
  %v1128 = vand.u32 2147483647, %v793
  %vm1129 = vcmp.lt.f32.partialorder %v1128, 0.0004427343
  %v1130 = vsel %vm1129, %v1127, %v1124
  %v1131 = vadd.f32 %v795, 1.0
  %v1132 = vlog2.pop %v1131
  %v1133 = vmul.f32 %v1132, 0.6931472
  %v1134 = vmul.f32 -0.5, %v795
  %v1135 = vadd.f32 %v1134, 1.0
  %v1136 = vmul.f32 %v1135, %v795
  %v1137 = vand.u32 2147483647, %v795
  %vm1138 = vcmp.lt.f32.partialorder %v1137, 0.0004427343
  %v1139 = vsel %vm1138, %v1136, %v1133
  %v1140 = vadd.f32 %v797, 1.0
  %v1141 = vlog2.pop %v1140
  %v1142 = vmul.f32 %v1141, 0.6931472
  %v1143 = vmul.f32 -0.5, %v797
  %v1144 = vadd.f32 %v1143, 1.0
  %v1145 = vmul.f32 %v1144, %v797
  %v1146 = vand.u32 2147483647, %v797
  %vm1147 = vcmp.lt.f32.partialorder %v1146, 0.0004427343
  %v1148 = vsel %vm1147, %v1145, %v1142
  %v1149 = vadd.f32 %v799, 1.0
  %v1150 = vlog2.pop %v1149
  %v1151 = vmul.f32 %v1150, 0.6931472
  %v1152 = vmul.f32 -0.5, %v799
  %v1153 = vadd.f32 %v1152, 1.0
  %v1154 = vmul.f32 %v1153, %v799
  %v1155 = vand.u32 2147483647, %v799
  %vm1156 = vcmp.lt.f32.partialorder %v1155, 0.0004427343
  %v1157 = vsel %vm1156, %v1154, %v1151
  %v1158 = vadd.f32 %v801, 1.0
  %v1159 = vlog2.pop %v1158
  %v1160 = vmul.f32 %v1159, 0.6931472
  %v1161 = vmul.f32 -0.5, %v801
  %v1162 = vadd.f32 %v1161, 1.0
  %v1163 = vmul.f32 %v1162, %v801
  %v1164 = vand.u32 2147483647, %v801
  %vm1165 = vcmp.lt.f32.partialorder %v1164, 0.0004427343
  %v1166 = vsel %vm1165, %v1163, %v1160
  %v1167 = vadd.f32 %v803, 1.0
  %v1168 = vlog2.pop %v1167
  %v1169 = vmul.f32 %v1168, 0.6931472
  %v1170 = vmul.f32 -0.5, %v803
  %v1171 = vadd.f32 %v1170, 1.0
  %v1172 = vmul.f32 %v1171, %v803
  %v1173 = vand.u32 2147483647, %v803
  %vm1174 = vcmp.lt.f32.partialorder %v1173, 0.0004427343
  %v1175 = vsel %vm1174, %v1172, %v1169
  %v1176 = vadd.f32 %v805, 1.0
  %v1177 = vlog2.pop %v1176
  %v1178 = vmul.f32 %v1177, 0.6931472
  %v1179 = vmul.f32 -0.5, %v805
  %v1180 = vadd.f32 %v1179, 1.0
  %v1181 = vmul.f32 %v1180, %v805
  %v1182 = vand.u32 2147483647, %v805
  %vm1183 = vcmp.lt.f32.partialorder %v1182, 0.0004427343
  %v1184 = vsel %vm1183, %v1181, %v1178
  %v1185 = vadd.f32 %v807, 1.0
  %v1186 = vlog2.pop %v1185
  %v1187 = vmul.f32 %v1186, 0.6931472
  %v1188 = vmul.f32 -0.5, %v807
  %v1189 = vadd.f32 %v1188, 1.0
  %v1190 = vmul.f32 %v1189, %v807
  %v1191 = vand.u32 2147483647, %v807
  %vm1192 = vcmp.lt.f32.partialorder %v1191, 0.0004427343
  %v1193 = vsel %vm1192, %v1190, %v1187
  %v1194 = vadd.f32 %v809, 1.0
  %v1195 = vlog2.pop %v1194
  %v1196 = vmul.f32 %v1195, 0.6931472
  %v1197 = vmul.f32 -0.5, %v809
  %v1198 = vadd.f32 %v1197, 1.0
  %v1199 = vmul.f32 %v1198, %v809
  %v1200 = vand.u32 2147483647, %v809
  %vm1201 = vcmp.lt.f32.partialorder %v1200, 0.0004427343
  %v1202 = vsel %vm1201, %v1199, %v1196
  %v1203 = vadd.f32 %v811, 1.0
  %v1204 = vlog2.pop %v1203
  %v1205 = vmul.f32 %v1204, 0.6931472
  %v1206 = vmul.f32 -0.5, %v811
  %v1207 = vadd.f32 %v1206, 1.0
  %v1208 = vmul.f32 %v1207, %v811
  %v1209 = vand.u32 2147483647, %v811
  %vm1210 = vcmp.lt.f32.partialorder %v1209, 0.0004427343
  %v1211 = vsel %vm1210, %v1208, %v1205
  %v1212 = vadd.f32 %v813, 1.0
  %v1213 = vlog2.pop %v1212
  %v1214 = vmul.f32 %v1213, 0.6931472
  %v1215 = vmul.f32 -0.5, %v813
  %v1216 = vadd.f32 %v1215, 1.0
  %v1217 = vmul.f32 %v1216, %v813
  %v1218 = vand.u32 2147483647, %v813
  %vm1219 = vcmp.lt.f32.partialorder %v1218, 0.0004427343
  %v1220 = vsel %vm1219, %v1217, %v1214
  %v1221 = vadd.f32 %v815, 1.0
  %v1222 = vlog2.pop %v1221
  %v1223 = vmul.f32 %v1222, 0.6931472
  %v1224 = vmul.f32 -0.5, %v815
  %v1225 = vadd.f32 %v1224, 1.0
  %v1226 = vmul.f32 %v1225, %v815
  %v1227 = vand.u32 2147483647, %v815
  %vm1228 = vcmp.lt.f32.partialorder %v1227, 0.0004427343
  %v1229 = vsel %vm1228, %v1226, %v1223
  %v1230 = vadd.f32 %v817, 1.0
  %v1231 = vlog2.pop %v1230
  %v1232 = vmul.f32 %v1231, 0.6931472
  %v1233 = vmul.f32 -0.5, %v817
  %v1234 = vadd.f32 %v1233, 1.0
  %v1235 = vmul.f32 %v1234, %v817
  %v1236 = vand.u32 2147483647, %v817
  %vm1237 = vcmp.lt.f32.partialorder %v1236, 0.0004427343
  %v1238 = vsel %vm1237, %v1235, %v1232
  %v1239 = vadd.f32 %v819, 1.0
  %v1240 = vlog2.pop %v1239
  %v1241 = vmul.f32 %v1240, 0.6931472
  %v1242 = vmul.f32 -0.5, %v819
  %v1243 = vadd.f32 %v1242, 1.0
  %v1244 = vmul.f32 %v1243, %v819
  %v1245 = vand.u32 2147483647, %v819
  %vm1246 = vcmp.lt.f32.partialorder %v1245, 0.0004427343
  %v1247 = vsel %vm1246, %v1244, %v1241
  %v1248 = vadd.f32 %v821, 1.0
  %v1249 = vlog2.pop %v1248
  %v1250 = vmul.f32 %v1249, 0.6931472
  %v1251 = vmul.f32 -0.5, %v821
  %v1252 = vadd.f32 %v1251, 1.0
  %v1253 = vmul.f32 %v1252, %v821
  %v1254 = vand.u32 2147483647, %v821
  %vm1255 = vcmp.lt.f32.partialorder %v1254, 0.0004427343
  %v1256 = vsel %vm1255, %v1253, %v1250
  %v1257 = vadd.f32 %v823, 1.0
  %v1258 = vlog2.pop %v1257
  %v1259 = vmul.f32 %v1258, 0.6931472
  %v1260 = vmul.f32 -0.5, %v823
  %v1261 = vadd.f32 %v1260, 1.0
  %v1262 = vmul.f32 %v1261, %v823
  %v1263 = vand.u32 2147483647, %v823
  %vm1264 = vcmp.lt.f32.partialorder %v1263, 0.0004427343
  %v1265 = vsel %vm1264, %v1262, %v1259
  %v1266 = vadd.f32 %v825, 1.0
  %v1267 = vlog2.pop %v1266
  %v1268 = vmul.f32 %v1267, 0.6931472
  %v1269 = vmul.f32 -0.5, %v825
  %v1270 = vadd.f32 %v1269, 1.0
  %v1271 = vmul.f32 %v1270, %v825
  %v1272 = vand.u32 2147483647, %v825
  %vm1273 = vcmp.lt.f32.partialorder %v1272, 0.0004427343
  %v1274 = vsel %vm1273, %v1271, %v1268
  %v1275 = vadd.f32 %v827, 1.0
  %v1276 = vlog2.pop %v1275
  %v1277 = vmul.f32 %v1276, 0.6931472
  %v1278 = vmul.f32 -0.5, %v827
  %v1279 = vadd.f32 %v1278, 1.0
  %v1280 = vmul.f32 %v1279, %v827
  %v1281 = vand.u32 2147483647, %v827
  %vm1282 = vcmp.lt.f32.partialorder %v1281, 0.0004427343
  %v1283 = vsel %vm1282, %v1280, %v1277
  %v1284 = vadd.f32 %v829, 1.0
  %v1285 = vlog2.pop %v1284
  %v1286 = vmul.f32 %v1285, 0.6931472
  %v1287 = vmul.f32 -0.5, %v829
  %v1288 = vadd.f32 %v1287, 1.0
  %v1289 = vmul.f32 %v1288, %v829
  %v1290 = vand.u32 2147483647, %v829
  %vm1291 = vcmp.lt.f32.partialorder %v1290, 0.0004427343
  %v1292 = vsel %vm1291, %v1289, %v1286
  %v1293 = vadd.f32 %v831, 1.0
  %v1294 = vlog2.pop %v1293
  %v1295 = vmul.f32 %v1294, 0.6931472
  %v1296 = vmul.f32 -0.5, %v831
  %v1297 = vadd.f32 %v1296, 1.0
  %v1298 = vmul.f32 %v1297, %v831
  %v1299 = vand.u32 2147483647, %v831
  %vm1300 = vcmp.lt.f32.partialorder %v1299, 0.0004427343
  %v1301 = vsel %vm1300, %v1298, %v1295
  %v1302 = vadd.f32 %v833, 1.0
  %v1303 = vlog2.pop %v1302
  %v1304 = vmul.f32 %v1303, 0.6931472
  %v1305 = vmul.f32 -0.5, %v833
  %v1306 = vadd.f32 %v1305, 1.0
  %v1307 = vmul.f32 %v1306, %v833
  %v1308 = vand.u32 2147483647, %v833
  %vm1309 = vcmp.lt.f32.partialorder %v1308, 0.0004427343
  %v1310 = vsel %vm1309, %v1307, %v1304
  %v1311 = vadd.f32 %v835, 1.0
  %v1312 = vlog2.pop %v1311
  %v1313 = vmul.f32 %v1312, 0.6931472
  %v1314 = vmul.f32 -0.5, %v835
  %v1315 = vadd.f32 %v1314, 1.0
  %v1316 = vmul.f32 %v1315, %v835
  %v1317 = vand.u32 2147483647, %v835
  %vm1318 = vcmp.lt.f32.partialorder %v1317, 0.0004427343
  %v1319 = vsel %vm1318, %v1316, %v1313
  %v1320 = vadd.f32 %v837, 1.0
  %v1321 = vlog2.pop %v1320
  %v1322 = vmul.f32 %v1321, 0.6931472
  %v1323 = vmul.f32 -0.5, %v837
  %v1324 = vadd.f32 %v1323, 1.0
  %v1325 = vmul.f32 %v1324, %v837
  %v1326 = vand.u32 2147483647, %v837
  %vm1327 = vcmp.lt.f32.partialorder %v1326, 0.0004427343
  %v1328 = vsel %vm1327, %v1325, %v1322
  %v1329 = vadd.f32 %v839, 1.0
  %v1330 = vlog2.pop %v1329
  %v1331 = vmul.f32 %v1330, 0.6931472
  %v1332 = vmul.f32 -0.5, %v839
  %v1333 = vadd.f32 %v1332, 1.0
  %v1334 = vmul.f32 %v1333, %v839
  %v1335 = vand.u32 2147483647, %v839
  %vm1336 = vcmp.lt.f32.partialorder %v1335, 0.0004427343
  %v1337 = vsel %vm1336, %v1334, %v1331
  %v1338 = vadd.f32 %v841, 1.0
  %v1339 = vlog2.pop %v1338
  %v1340 = vmul.f32 %v1339, 0.6931472
  %v1341 = vmul.f32 -0.5, %v841
  %v1342 = vadd.f32 %v1341, 1.0
  %v1343 = vmul.f32 %v1342, %v841
  %v1344 = vand.u32 2147483647, %v841
  %vm1345 = vcmp.lt.f32.partialorder %v1344, 0.0004427343
  %v1346 = vsel %vm1345, %v1343, %v1340
  %v1347 = vadd.f32 %v843, 1.0
  %v1348 = vlog2.pop %v1347
  %v1349 = vmul.f32 %v1348, 0.6931472
  %v1350 = vmul.f32 -0.5, %v843
  %v1351 = vadd.f32 %v1350, 1.0
  %v1352 = vmul.f32 %v1351, %v843
  %v1353 = vand.u32 2147483647, %v843
  %vm1354 = vcmp.lt.f32.partialorder %v1353, 0.0004427343
  %v1355 = vsel %vm1354, %v1352, %v1349
  %v1356 = vadd.f32 %v845, 1.0
  %v1357 = vlog2.pop %v1356
  %v1358 = vmul.f32 %v1357, 0.6931472
  %v1359 = vmul.f32 -0.5, %v845
  %v1360 = vadd.f32 %v1359, 1.0
  %v1361 = vmul.f32 %v1360, %v845
  %v1362 = vand.u32 2147483647, %v845
  %vm1363 = vcmp.lt.f32.partialorder %v1362, 0.0004427343
  %v1364 = vsel %vm1363, %v1361, %v1358
  %v1365 = vadd.f32 %v847, 1.0
  %v1366 = vlog2.pop %v1365
  %v1367 = vmul.f32 %v1366, 0.6931472
  %v1368 = vmul.f32 -0.5, %v847
  %v1369 = vadd.f32 %v1368, 1.0
  %v1370 = vmul.f32 %v1369, %v847
  %v1371 = vand.u32 2147483647, %v847
  %vm1372 = vcmp.lt.f32.partialorder %v1371, 0.0004427343
  %v1373 = vsel %vm1372, %v1370, %v1367
  %v1374 = vadd.f32 %v849, 1.0
  %v1375 = vlog2.pop %v1374
  %v1376 = vmul.f32 %v1375, 0.6931472
  %v1377 = vmul.f32 -0.5, %v849
  %v1378 = vadd.f32 %v1377, 1.0
  %v1379 = vmul.f32 %v1378, %v849
  %v1380 = vand.u32 2147483647, %v849
  %vm1381 = vcmp.lt.f32.partialorder %v1380, 0.0004427343
  %v1382 = vsel %vm1381, %v1379, %v1376
  %v1383 = vadd.f32 %v851, 1.0
  %v1384 = vlog2.pop %v1383
  %v1385 = vmul.f32 %v1384, 0.6931472
  %v1386 = vmul.f32 -0.5, %v851
  %v1387 = vadd.f32 %v1386, 1.0
  %v1388 = vmul.f32 %v1387, %v851
  %v1389 = vand.u32 2147483647, %v851
  %vm1390 = vcmp.lt.f32.partialorder %v1389, 0.0004427343
  %v1391 = vsel %vm1390, %v1388, %v1385
  %v1392 = vadd.f32 %v853, 1.0
  %v1393 = vlog2.pop %v1392
  %v1394 = vmul.f32 %v1393, 0.6931472
  %v1395 = vmul.f32 -0.5, %v853
  %v1396 = vadd.f32 %v1395, 1.0
  %v1397 = vmul.f32 %v1396, %v853
  %v1398 = vand.u32 2147483647, %v853
  %vm1399 = vcmp.lt.f32.partialorder %v1398, 0.0004427343
  %v1400 = vsel %vm1399, %v1397, %v1394
  %v1401 = vadd.f32 %v855, 1.0
  %v1402 = vlog2.pop %v1401
  %v1403 = vmul.f32 %v1402, 0.6931472
  %v1404 = vmul.f32 -0.5, %v855
  %v1405 = vadd.f32 %v1404, 1.0
  %v1406 = vmul.f32 %v1405, %v855
  %v1407 = vand.u32 2147483647, %v855
  %vm1408 = vcmp.lt.f32.partialorder %v1407, 0.0004427343
  %v1409 = vsel %vm1408, %v1406, %v1403
  %v1410 = vadd.f32 %v857, 1.0
  %v1411 = vlog2.pop %v1410
  %v1412 = vmul.f32 %v1411, 0.6931472
  %v1413 = vmul.f32 -0.5, %v857
  %v1414 = vadd.f32 %v1413, 1.0
  %v1415 = vmul.f32 %v1414, %v857
  %v1416 = vand.u32 2147483647, %v857
  %vm1417 = vcmp.lt.f32.partialorder %v1416, 0.0004427343
  %v1418 = vsel %vm1417, %v1415, %v1412
  %v1419 = vadd.f32 %v859, 1.0
  %v1420 = vlog2.pop %v1419
  %v1421 = vmul.f32 %v1420, 0.6931472
  %v1422 = vmul.f32 -0.5, %v859
  %v1423 = vadd.f32 %v1422, 1.0
  %v1424 = vmul.f32 %v1423, %v859
  %v1425 = vand.u32 2147483647, %v859
  %vm1426 = vcmp.lt.f32.partialorder %v1425, 0.0004427343
  %v1427 = vsel %vm1426, %v1424, %v1421
  %v1428 = vadd.f32 %v861, 1.0
  %v1429 = vlog2.pop %v1428
  %v1430 = vmul.f32 %v1429, 0.6931472
  %v1431 = vmul.f32 -0.5, %v861
  %v1432 = vadd.f32 %v1431, 1.0
  %v1433 = vmul.f32 %v1432, %v861
  %v1434 = vand.u32 2147483647, %v861
  %vm1435 = vcmp.lt.f32.partialorder %v1434, 0.0004427343
  %v1436 = vsel %vm1435, %v1433, %v1430
  %v1437 = vadd.f32 %v863, 1.0
  %v1438 = vlog2.pop %v1437
  %v1439 = vmul.f32 %v1438, 0.6931472
  %v1440 = vmul.f32 -0.5, %v863
  %v1441 = vadd.f32 %v1440, 1.0
  %v1442 = vmul.f32 %v1441, %v863
  %v1443 = vand.u32 2147483647, %v863
  %vm1444 = vcmp.lt.f32.partialorder %v1443, 0.0004427343
  %v1445 = vsel %vm1444, %v1442, %v1439
  %v1446 = vadd.f32 %v865, 1.0
  %v1447 = vlog2.pop %v1446
  %v1448 = vmul.f32 %v1447, 0.6931472
  %v1449 = vmul.f32 -0.5, %v865
  %v1450 = vadd.f32 %v1449, 1.0
  %v1451 = vmul.f32 %v1450, %v865
  %v1452 = vand.u32 2147483647, %v865
  %vm1453 = vcmp.lt.f32.partialorder %v1452, 0.0004427343
  %v1454 = vsel %vm1453, %v1451, %v1448
  %v1455 = vadd.f32 %v867, 1.0
  %v1456 = vlog2.pop %v1455
  %v1457 = vmul.f32 %v1456, 0.6931472
  %v1458 = vmul.f32 -0.5, %v867
  %v1459 = vadd.f32 %v1458, 1.0
  %v1460 = vmul.f32 %v1459, %v867
  %v1461 = vand.u32 2147483647, %v867
  %vm1462 = vcmp.lt.f32.partialorder %v1461, 0.0004427343
  %v1463 = vsel %vm1462, %v1460, %v1457
  %v1464 = vadd.f32 %v869, 1.0
  %v1465 = vlog2.pop %v1464
  %v1466 = vmul.f32 %v1465, 0.6931472
  %v1467 = vmul.f32 -0.5, %v869
  %v1468 = vadd.f32 %v1467, 1.0
  %v1469 = vmul.f32 %v1468, %v869
  %v1470 = vand.u32 2147483647, %v869
  %vm1471 = vcmp.lt.f32.partialorder %v1470, 0.0004427343
  %v1472 = vsel %vm1471, %v1469, %v1466
  %v1473 = vadd.f32 %v871, 1.0
  %v1474 = vlog2.pop %v1473
  %v1475 = vmul.f32 %v1474, 0.6931472
  %v1476 = vmul.f32 -0.5, %v871
  %v1477 = vadd.f32 %v1476, 1.0
  %v1478 = vmul.f32 %v1477, %v871
  %v1479 = vand.u32 2147483647, %v871
  %vm1480 = vcmp.lt.f32.partialorder %v1479, 0.0004427343
  %v1481 = vsel %vm1480, %v1478, %v1475
  %v1482 = vadd.f32 %v873, 1.0
  %v1483 = vlog2.pop %v1482
  %v1484 = vmul.f32 %v1483, 0.6931472
  %v1485 = vmul.f32 -0.5, %v873
  %v1486 = vadd.f32 %v1485, 1.0
  %v1487 = vmul.f32 %v1486, %v873
  %v1488 = vand.u32 2147483647, %v873
  %vm1489 = vcmp.lt.f32.partialorder %v1488, 0.0004427343
  %v1490 = vsel %vm1489, %v1487, %v1484
  %v1491 = vadd.f32 %v875, 1.0
  %v1492 = vlog2.pop %v1491
  %v1493 = vmul.f32 %v1492, 0.6931472
  %v1494 = vmul.f32 -0.5, %v875
  %v1495 = vadd.f32 %v1494, 1.0
  %v1496 = vmul.f32 %v1495, %v875
  %v1497 = vand.u32 2147483647, %v875
  %vm1498 = vcmp.lt.f32.partialorder %v1497, 0.0004427343
  %v1499 = vsel %vm1498, %v1496, %v1493
  %v1500 = vadd.f32 %v877, 1.0
  %v1501 = vlog2.pop %v1500
  %v1502 = vmul.f32 %v1501, 0.6931472
  %v1503 = vmul.f32 -0.5, %v877
  %v1504 = vadd.f32 %v1503, 1.0
  %v1505 = vmul.f32 %v1504, %v877
  %v1506 = vand.u32 2147483647, %v877
  %vm1507 = vcmp.lt.f32.partialorder %v1506, 0.0004427343
  %v1508 = vsel %vm1507, %v1505, %v1502
  %v1509 = vadd.f32 %v879, 1.0
  %v1510 = vlog2.pop %v1509
  %v1511 = vmul.f32 %v1510, 0.6931472
  %v1512 = vmul.f32 -0.5, %v879
  %v1513 = vadd.f32 %v1512, 1.0
  %v1514 = vmul.f32 %v1513, %v879
  %v1515 = vand.u32 2147483647, %v879
  %vm1516 = vcmp.lt.f32.partialorder %v1515, 0.0004427343
  %v1517 = vsel %vm1516, %v1514, %v1511
  %v1518 = vadd.f32 %v881, 1.0
  %v1519 = vlog2.pop %v1518
  %v1520 = vmul.f32 %v1519, 0.6931472
  %v1521 = vmul.f32 -0.5, %v881
  %v1522 = vadd.f32 %v1521, 1.0
  %v1523 = vmul.f32 %v1522, %v881
  %v1524 = vand.u32 2147483647, %v881
  %vm1525 = vcmp.lt.f32.partialorder %v1524, 0.0004427343
  %v1526 = vsel %vm1525, %v1523, %v1520
  %v1527 = vadd.f32 %v883, 1.0
  %v1528 = vlog2.pop %v1527
  %v1529 = vmul.f32 %v1528, 0.6931472
  %v1530 = vmul.f32 -0.5, %v883
  %v1531 = vadd.f32 %v1530, 1.0
  %v1532 = vmul.f32 %v1531, %v883
  %v1533 = vand.u32 2147483647, %v883
  %vm1534 = vcmp.lt.f32.partialorder %v1533, 0.0004427343
  %v1535 = vsel %vm1534, %v1532, %v1529
  %v1536 = vadd.f32 %v885, 1.0
  %v1537 = vlog2.pop %v1536
  %v1538 = vmul.f32 %v1537, 0.6931472
  %v1539 = vmul.f32 -0.5, %v885
  %v1540 = vadd.f32 %v1539, 1.0
  %v1541 = vmul.f32 %v1540, %v885
  %v1542 = vand.u32 2147483647, %v885
  %vm1543 = vcmp.lt.f32.partialorder %v1542, 0.0004427343
  %v1544 = vsel %vm1543, %v1541, %v1538
  %v1545 = vadd.f32 %v887, 1.0
  %v1546 = vlog2.pop %v1545
  %v1547 = vmul.f32 %v1546, 0.6931472
  %v1548 = vmul.f32 -0.5, %v887
  %v1549 = vadd.f32 %v1548, 1.0
  %v1550 = vmul.f32 %v1549, %v887
  %v1551 = vand.u32 2147483647, %v887
  %vm1552 = vcmp.lt.f32.partialorder %v1551, 0.0004427343
  %v1553 = vsel %vm1552, %v1550, %v1547
  %v1554 = vadd.f32 %v889, 1.0
  %v1555 = vlog2.pop %v1554
  %v1556 = vmul.f32 %v1555, 0.6931472
  %v1557 = vmul.f32 -0.5, %v889
  %v1558 = vadd.f32 %v1557, 1.0
  %v1559 = vmul.f32 %v1558, %v889
  %v1560 = vand.u32 2147483647, %v889
  %vm1561 = vcmp.lt.f32.partialorder %v1560, 0.0004427343
  %v1562 = vsel %vm1561, %v1559, %v1556
  %v1563 = vadd.f32 %v891, 1.0
  %v1564 = vlog2.pop %v1563
  %v1565 = vmul.f32 %v1564, 0.6931472
  %v1566 = vmul.f32 -0.5, %v891
  %v1567 = vadd.f32 %v1566, 1.0
  %v1568 = vmul.f32 %v1567, %v891
  %v1569 = vand.u32 2147483647, %v891
  %vm1570 = vcmp.lt.f32.partialorder %v1569, 0.0004427343
  %v1571 = vsel %vm1570, %v1568, %v1565
  %v1572 = vadd.f32 %v893, 1.0
  %v1573 = vlog2.pop %v1572
  %v1574 = vmul.f32 %v1573, 0.6931472
  %v1575 = vmul.f32 -0.5, %v893
  %v1576 = vadd.f32 %v1575, 1.0
  %v1577 = vmul.f32 %v1576, %v893
  %v1578 = vand.u32 2147483647, %v893
  %vm1579 = vcmp.lt.f32.partialorder %v1578, 0.0004427343
  %v1580 = vsel %vm1579, %v1577, %v1574
  %v1581 = vadd.f32 %v895, 1.0
  %v1582 = vlog2.pop %v1581
  %v1583 = vmul.f32 %v1582, 0.6931472
  %v1584 = vmul.f32 -0.5, %v895
  %v1585 = vadd.f32 %v1584, 1.0
  %v1586 = vmul.f32 %v1585, %v895
  %v1587 = vand.u32 2147483647, %v895
  %vm1588 = vcmp.lt.f32.partialorder %v1587, 0.0004427343
  %v1589 = vsel %vm1588, %v1586, %v1583
  %v1590 = vadd.f32 %v897, 1.0
  %v1591 = vlog2.pop %v1590
  %v1592 = vmul.f32 %v1591, 0.6931472
  %v1593 = vmul.f32 -0.5, %v897
  %v1594 = vadd.f32 %v1593, 1.0
  %v1595 = vmul.f32 %v1594, %v897
  %v1596 = vand.u32 2147483647, %v897
  %vm1597 = vcmp.lt.f32.partialorder %v1596, 0.0004427343
  %v1598 = vsel %vm1597, %v1595, %v1592
  %v1599 = vadd.f32 %v899, 1.0
  %v1600 = vlog2.pop %v1599
  %v1601 = vmul.f32 %v1600, 0.6931472
  %v1602 = vmul.f32 -0.5, %v899
  %v1603 = vadd.f32 %v1602, 1.0
  %v1604 = vmul.f32 %v1603, %v899
  %v1605 = vand.u32 2147483647, %v899
  %vm1606 = vcmp.lt.f32.partialorder %v1605, 0.0004427343
  %v1607 = vsel %vm1606, %v1604, %v1601
  %v1608 = vadd.f32 %v901, 1.0
  %v1609 = vlog2.pop %v1608
  %v1610 = vmul.f32 %v1609, 0.6931472
  %v1611 = vmul.f32 -0.5, %v901
  %v1612 = vadd.f32 %v1611, 1.0
  %v1613 = vmul.f32 %v1612, %v901
  %v1614 = vand.u32 2147483647, %v901
  %vm1615 = vcmp.lt.f32.partialorder %v1614, 0.0004427343
  %v1616 = vsel %vm1615, %v1613, %v1610
  %v1617 = vadd.f32 %v903, 1.0
  %v1618 = vlog2.pop %v1617
  %v1619 = vmul.f32 %v1618, 0.6931472
  %v1620 = vmul.f32 -0.5, %v903
  %v1621 = vadd.f32 %v1620, 1.0
  %v1622 = vmul.f32 %v1621, %v903
  %v1623 = vand.u32 2147483647, %v903
  %vm1624 = vcmp.lt.f32.partialorder %v1623, 0.0004427343
  %v1625 = vsel %vm1624, %v1622, %v1619
  %v1626 = vadd.f32 %v905, 1.0
  %v1627 = vlog2.pop %v1626
  %v1628 = vmul.f32 %v1627, 0.6931472
  %v1629 = vmul.f32 -0.5, %v905
  %v1630 = vadd.f32 %v1629, 1.0
  %v1631 = vmul.f32 %v1630, %v905
  %v1632 = vand.u32 2147483647, %v905
  %vm1633 = vcmp.lt.f32.partialorder %v1632, 0.0004427343
  %v1634 = vsel %vm1633, %v1631, %v1628
  %v1635 = vadd.f32 %v907, 1.0
  %v1636 = vlog2.pop %v1635
  %v1637 = vmul.f32 %v1636, 0.6931472
  %v1638 = vmul.f32 -0.5, %v907
  %v1639 = vadd.f32 %v1638, 1.0
  %v1640 = vmul.f32 %v1639, %v907
  %v1641 = vand.u32 2147483647, %v907
  %vm1642 = vcmp.lt.f32.partialorder %v1641, 0.0004427343
  %v1643 = vsel %vm1642, %v1640, %v1637
  %v1644 = vadd.f32 %v909, 1.0
  %v1645 = vlog2.pop %v1644
  %v1646 = vmul.f32 %v1645, 0.6931472
  %v1647 = vmul.f32 -0.5, %v909
  %v1648 = vadd.f32 %v1647, 1.0
  %v1649 = vmul.f32 %v1648, %v909
  %v1650 = vand.u32 2147483647, %v909
  %vm1651 = vcmp.lt.f32.partialorder %v1650, 0.0004427343
  %v1652 = vsel %vm1651, %v1649, %v1646
  %v1653 = vadd.f32 %v911, 1.0
  %v1654 = vlog2.pop %v1653
  %v1655 = vmul.f32 %v1654, 0.6931472
  %v1656 = vmul.f32 -0.5, %v911
  %v1657 = vadd.f32 %v1656, 1.0
  %v1658 = vmul.f32 %v1657, %v911
  %v1659 = vand.u32 2147483647, %v911
  %vm1660 = vcmp.lt.f32.partialorder %v1659, 0.0004427343
  %v1661 = vsel %vm1660, %v1658, %v1655
  %v1662 = vadd.f32 %v913, 1.0
  %v1663 = vlog2.pop %v1662
  %v1664 = vmul.f32 %v1663, 0.6931472
  %v1665 = vmul.f32 -0.5, %v913
  %v1666 = vadd.f32 %v1665, 1.0
  %v1667 = vmul.f32 %v1666, %v913
  %v1668 = vand.u32 2147483647, %v913
  %vm1669 = vcmp.lt.f32.partialorder %v1668, 0.0004427343
  %v1670 = vsel %vm1669, %v1667, %v1664
  %v1671 = vadd.f32 %v915, 1.0
  %v1672 = vlog2.pop %v1671
  %v1673 = vmul.f32 %v1672, 0.6931472
  %v1674 = vmul.f32 -0.5, %v915
  %v1675 = vadd.f32 %v1674, 1.0
  %v1676 = vmul.f32 %v1675, %v915
  %v1677 = vand.u32 2147483647, %v915
  %vm1678 = vcmp.lt.f32.partialorder %v1677, 0.0004427343
  %v1679 = vsel %vm1678, %v1676, %v1673
  %v1680 = vadd.f32 %v917, 1.0
  %v1681 = vlog2.pop %v1680
  %v1682 = vmul.f32 %v1681, 0.6931472
  %v1683 = vmul.f32 -0.5, %v917
  %v1684 = vadd.f32 %v1683, 1.0
  %v1685 = vmul.f32 %v1684, %v917
  %v1686 = vand.u32 2147483647, %v917
  %vm1687 = vcmp.lt.f32.partialorder %v1686, 0.0004427343
  %v1688 = vsel %vm1687, %v1685, %v1682
  %v1689 = vadd.f32 %v919, 1.0
  %v1690 = vlog2.pop %v1689
  %v1691 = vmul.f32 %v1690, 0.6931472
  %v1692 = vmul.f32 -0.5, %v919
  %v1693 = vadd.f32 %v1692, 1.0
  %v1694 = vmul.f32 %v1693, %v919
  %v1695 = vand.u32 2147483647, %v919
  %vm1696 = vcmp.lt.f32.partialorder %v1695, 0.0004427343
  %v1697 = vsel %vm1696, %v1694, %v1691
  %v1698 = vadd.f32 %v921, 1.0
  %v1699 = vlog2.pop %v1698
  %v1700 = vmul.f32 %v1699, 0.6931472
  %v1701 = vmul.f32 -0.5, %v921
  %v1702 = vadd.f32 %v1701, 1.0
  %v1703 = vmul.f32 %v1702, %v921
  %v1704 = vand.u32 2147483647, %v921
  %vm1705 = vcmp.lt.f32.partialorder %v1704, 0.0004427343
  %v1706 = vsel %vm1705, %v1703, %v1700
  %v1707 = vadd.f32 %v923, 1.0
  %v1708 = vlog2.pop %v1707
  %v1709 = vmul.f32 %v1708, 0.6931472
  %v1710 = vmul.f32 -0.5, %v923
  %v1711 = vadd.f32 %v1710, 1.0
  %v1712 = vmul.f32 %v1711, %v923
  %v1713 = vand.u32 2147483647, %v923
  %vm1714 = vcmp.lt.f32.partialorder %v1713, 0.0004427343
  %v1715 = vsel %vm1714, %v1712, %v1709
  %v1716 = vadd.f32 %v925, 1.0
  %v1717 = vlog2.pop %v1716
  %v1718 = vmul.f32 %v1717, 0.6931472
  %v1719 = vmul.f32 -0.5, %v925
  %v1720 = vadd.f32 %v1719, 1.0
  %v1721 = vmul.f32 %v1720, %v925
  %v1722 = vand.u32 2147483647, %v925
  %vm1723 = vcmp.lt.f32.partialorder %v1722, 0.0004427343
  %v1724 = vsel %vm1723, %v1721, %v1718
  %v1725 = vadd.f32 %v927, 1.0
  %v1726 = vlog2.pop %v1725
  %v1727 = vmul.f32 %v1726, 0.6931472
  %v1728 = vmul.f32 -0.5, %v927
  %v1729 = vadd.f32 %v1728, 1.0
  %v1730 = vmul.f32 %v1729, %v927
  %v1731 = vand.u32 2147483647, %v927
  %vm1732 = vcmp.lt.f32.partialorder %v1731, 0.0004427343
  %v1733 = vsel %vm1732, %v1730, %v1727
  %v1734 = vadd.f32 %v929, 1.0
  %v1735 = vlog2.pop %v1734
  %v1736 = vmul.f32 %v1735, 0.6931472
  %v1737 = vmul.f32 -0.5, %v929
  %v1738 = vadd.f32 %v1737, 1.0
  %v1739 = vmul.f32 %v1738, %v929
  %v1740 = vand.u32 2147483647, %v929
  %vm1741 = vcmp.lt.f32.partialorder %v1740, 0.0004427343
  %v1742 = vsel %vm1741, %v1739, %v1736
  %v1743 = vadd.f32 %v931, 1.0
  %v1744 = vlog2.pop %v1743
  %v1745 = vmul.f32 %v1744, 0.6931472
  %v1746 = vmul.f32 -0.5, %v931
  %v1747 = vadd.f32 %v1746, 1.0
  %v1748 = vmul.f32 %v1747, %v931
  %v1749 = vand.u32 2147483647, %v931
  %vm1750 = vcmp.lt.f32.partialorder %v1749, 0.0004427343
  %v1751 = vsel %vm1750, %v1748, %v1745
  %v1752 = vadd.f32 %v933, 1.0
  %v1753 = vlog2.pop %v1752
  %v1754 = vmul.f32 %v1753, 0.6931472
  %v1755 = vmul.f32 -0.5, %v933
  %v1756 = vadd.f32 %v1755, 1.0
  %v1757 = vmul.f32 %v1756, %v933
  %v1758 = vand.u32 2147483647, %v933
  %vm1759 = vcmp.lt.f32.partialorder %v1758, 0.0004427343
  %v1760 = vsel %vm1759, %v1757, %v1754
  %v1761 = vadd.f32 %v935, 1.0
  %v1762 = vlog2.pop %v1761
  %v1763 = vmul.f32 %v1762, 0.6931472
  %v1764 = vmul.f32 -0.5, %v935
  %v1765 = vadd.f32 %v1764, 1.0
  %v1766 = vmul.f32 %v1765, %v935
  %v1767 = vand.u32 2147483647, %v935
  %vm1768 = vcmp.lt.f32.partialorder %v1767, 0.0004427343
  %v1769 = vsel %vm1768, %v1766, %v1763
  %v1770 = vadd.f32 %v937, 1.0
  %v1771 = vlog2.pop %v1770
  %v1772 = vmul.f32 %v1771, 0.6931472
  %v1773 = vmul.f32 -0.5, %v937
  %v1774 = vadd.f32 %v1773, 1.0
  %v1775 = vmul.f32 %v1774, %v937
  %v1776 = vand.u32 2147483647, %v937
  %vm1777 = vcmp.lt.f32.partialorder %v1776, 0.0004427343
  %v1778 = vsel %vm1777, %v1775, %v1772
  %v1779 = vadd.f32 %v939, 1.0
  %v1780 = vlog2.pop %v1779
  %v1781 = vmul.f32 %v1780, 0.6931472
  %v1782 = vmul.f32 -0.5, %v939
  %v1783 = vadd.f32 %v1782, 1.0
  %v1784 = vmul.f32 %v1783, %v939
  %v1785 = vand.u32 2147483647, %v939
  %vm1786 = vcmp.lt.f32.partialorder %v1785, 0.0004427343
  %v1787 = vsel %vm1786, %v1784, %v1781
  %v1788 = vadd.f32 %v941, 1.0
  %v1789 = vlog2.pop %v1788
  %v1790 = vmul.f32 %v1789, 0.6931472
  %v1791 = vmul.f32 -0.5, %v941
  %v1792 = vadd.f32 %v1791, 1.0
  %v1793 = vmul.f32 %v1792, %v941
  %v1794 = vand.u32 2147483647, %v941
  %vm1795 = vcmp.lt.f32.partialorder %v1794, 0.0004427343
  %v1796 = vsel %vm1795, %v1793, %v1790
  %v1797 = vadd.f32 %v943, 1.0
  %v1798 = vlog2.pop %v1797
  %v1799 = vmul.f32 %v1798, 0.6931472
  %v1800 = vmul.f32 -0.5, %v943
  %v1801 = vadd.f32 %v1800, 1.0
  %v1802 = vmul.f32 %v1801, %v943
  %v1803 = vand.u32 2147483647, %v943
  %vm1804 = vcmp.lt.f32.partialorder %v1803, 0.0004427343
  %v1805 = vsel %vm1804, %v1802, %v1799
  %v1806 = vadd.f32 %v945, 1.0
  %v1807 = vlog2.pop %v1806
  %v1808 = vmul.f32 %v1807, 0.6931472
  %v1809 = vmul.f32 -0.5, %v945
  %v1810 = vadd.f32 %v1809, 1.0
  %v1811 = vmul.f32 %v1810, %v945
  %v1812 = vand.u32 2147483647, %v945
  %vm1813 = vcmp.lt.f32.partialorder %v1812, 0.0004427343
  %v1814 = vsel %vm1813, %v1811, %v1808
  %v1815 = vadd.f32 %v947, 1.0
  %v1816 = vlog2.pop %v1815
  %v1817 = vmul.f32 %v1816, 0.6931472
  %v1818 = vmul.f32 -0.5, %v947
  %v1819 = vadd.f32 %v1818, 1.0
  %v1820 = vmul.f32 %v1819, %v947
  %v1821 = vand.u32 2147483647, %v947
  %vm1822 = vcmp.lt.f32.partialorder %v1821, 0.0004427343
  %v1823 = vsel %vm1822, %v1820, %v1817
  %v1824 = vadd.f32 %v949, 1.0
  %v1825 = vlog2.pop %v1824
  %v1826 = vmul.f32 %v1825, 0.6931472
  %v1827 = vmul.f32 -0.5, %v949
  %v1828 = vadd.f32 %v1827, 1.0
  %v1829 = vmul.f32 %v1828, %v949
  %v1830 = vand.u32 2147483647, %v949
  %vm1831 = vcmp.lt.f32.partialorder %v1830, 0.0004427343
  %v1832 = vsel %vm1831, %v1829, %v1826
  %v1833 = vadd.f32 %v951, 1.0
  %v1834 = vlog2.pop %v1833
  %v1835 = vmul.f32 %v1834, 0.6931472
  %v1836 = vmul.f32 -0.5, %v951
  %v1837 = vadd.f32 %v1836, 1.0
  %v1838 = vmul.f32 %v1837, %v951
  %v1839 = vand.u32 2147483647, %v951
  %vm1840 = vcmp.lt.f32.partialorder %v1839, 0.0004427343
  %v1841 = vsel %vm1840, %v1838, %v1835
  %v1842 = vadd.f32 %v953, 1.0
  %v1843 = vlog2.pop %v1842
  %v1844 = vmul.f32 %v1843, 0.6931472
  %v1845 = vmul.f32 -0.5, %v953
  %v1846 = vadd.f32 %v1845, 1.0
  %v1847 = vmul.f32 %v1846, %v953
  %v1848 = vand.u32 2147483647, %v953
  %vm1849 = vcmp.lt.f32.partialorder %v1848, 0.0004427343
  %v1850 = vsel %vm1849, %v1847, %v1844
  %v1851 = vadd.f32 %v955, 1.0
  %v1852 = vlog2.pop %v1851
  %v1853 = vmul.f32 %v1852, 0.6931472
  %v1854 = vmul.f32 -0.5, %v955
  %v1855 = vadd.f32 %v1854, 1.0
  %v1856 = vmul.f32 %v1855, %v955
  %v1857 = vand.u32 2147483647, %v955
  %vm1858 = vcmp.lt.f32.partialorder %v1857, 0.0004427343
  %v1859 = vsel %vm1858, %v1856, %v1853
  %v1860 = vadd.f32 %v957, 1.0
  %v1861 = vlog2.pop %v1860
  %v1862 = vmul.f32 %v1861, 0.6931472
  %v1863 = vmul.f32 -0.5, %v957
  %v1864 = vadd.f32 %v1863, 1.0
  %v1865 = vmul.f32 %v1864, %v957
  %v1866 = vand.u32 2147483647, %v957
  %vm1867 = vcmp.lt.f32.partialorder %v1866, 0.0004427343
  %v1868 = vsel %vm1867, %v1865, %v1862
  %v1869 = vadd.f32 %v959, 1.0
  %v1870 = vlog2.pop %v1869
  %v1871 = vmul.f32 %v1870, 0.6931472
  %v1872 = vmul.f32 -0.5, %v959
  %v1873 = vadd.f32 %v1872, 1.0
  %v1874 = vmul.f32 %v1873, %v959
  %v1875 = vand.u32 2147483647, %v959
  %vm1876 = vcmp.lt.f32.partialorder %v1875, 0.0004427343
  %v1877 = vsel %vm1876, %v1874, %v1871
  %v1878 = vadd.f32 %v961, 1.0
  %v1879 = vlog2.pop %v1878
  %v1880 = vmul.f32 %v1879, 0.6931472
  %v1881 = vmul.f32 -0.5, %v961
  %v1882 = vadd.f32 %v1881, 1.0
  %v1883 = vmul.f32 %v1882, %v961
  %v1884 = vand.u32 2147483647, %v961
  %vm1885 = vcmp.lt.f32.partialorder %v1884, 0.0004427343
  %v1886 = vsel %vm1885, %v1883, %v1880
  %v1887 = vadd.f32 %v963, 1.0
  %v1888 = vlog2.pop %v1887
  %v1889 = vmul.f32 %v1888, 0.6931472
  %v1890 = vmul.f32 -0.5, %v963
  %v1891 = vadd.f32 %v1890, 1.0
  %v1892 = vmul.f32 %v1891, %v963
  %v1893 = vand.u32 2147483647, %v963
  %vm1894 = vcmp.lt.f32.partialorder %v1893, 0.0004427343
  %v1895 = vsel %vm1894, %v1892, %v1889
  %v1896 = vadd.f32 %v965, 1.0
  %v1897 = vlog2.pop %v1896
  %v1898 = vmul.f32 %v1897, 0.6931472
  %v1899 = vmul.f32 -0.5, %v965
  %v1900 = vadd.f32 %v1899, 1.0
  %v1901 = vmul.f32 %v1900, %v965
  %v1902 = vand.u32 2147483647, %v965
  %vm1903 = vcmp.lt.f32.partialorder %v1902, 0.0004427343
  %v1904 = vsel %vm1903, %v1901, %v1898
  %v1905 = vadd.f32 %v967, 1.0
  %v1906 = vlog2.pop %v1905
  %v1907 = vmul.f32 %v1906, 0.6931472
  %v1908 = vmul.f32 -0.5, %v967
  %v1909 = vadd.f32 %v1908, 1.0
  %v1910 = vmul.f32 %v1909, %v967
  %v1911 = vand.u32 2147483647, %v967
  %vm1912 = vcmp.lt.f32.partialorder %v1911, 0.0004427343
  %v1913 = vsel %vm1912, %v1910, %v1907
  %v1914 = vadd.f32 %v969, 1.0
  %v1915 = vlog2.pop %v1914
  %v1916 = vmul.f32 %v1915, 0.6931472
  %v1917 = vmul.f32 -0.5, %v969
  %v1918 = vadd.f32 %v1917, 1.0
  %v1919 = vmul.f32 %v1918, %v969
  %v1920 = vand.u32 2147483647, %v969
  %vm1921 = vcmp.lt.f32.partialorder %v1920, 0.0004427343
  %v1922 = vsel %vm1921, %v1919, %v1916
  %v1923 = vadd.f32 %v971, 1.0
  %v1924 = vlog2.pop %v1923
  %v1925 = vmul.f32 %v1924, 0.6931472
  %v1926 = vmul.f32 -0.5, %v971
  %v1927 = vadd.f32 %v1926, 1.0
  %v1928 = vmul.f32 %v1927, %v971
  %v1929 = vand.u32 2147483647, %v971
  %vm1930 = vcmp.lt.f32.partialorder %v1929, 0.0004427343
  %v1931 = vsel %vm1930, %v1928, %v1925
  %v1932 = vadd.f32 %v973, 1.0
  %v1933 = vlog2.pop %v1932
  %v1934 = vmul.f32 %v1933, 0.6931472
  %v1935 = vmul.f32 -0.5, %v973
  %v1936 = vadd.f32 %v1935, 1.0
  %v1937 = vmul.f32 %v1936, %v973
  %v1938 = vand.u32 2147483647, %v973
  %vm1939 = vcmp.lt.f32.partialorder %v1938, 0.0004427343
  %v1940 = vsel %vm1939, %v1937, %v1934
  %v1941 = vadd.f32 %v975, 1.0
  %v1942 = vlog2.pop %v1941
  %v1943 = vmul.f32 %v1942, 0.6931472
  %v1944 = vmul.f32 -0.5, %v975
  %v1945 = vadd.f32 %v1944, 1.0
  %v1946 = vmul.f32 %v1945, %v975
  %v1947 = vand.u32 2147483647, %v975
  %vm1948 = vcmp.lt.f32.partialorder %v1947, 0.0004427343
  %v1949 = vsel %vm1948, %v1946, %v1943
  %v1950 = vadd.f32 %v977, 1.0
  %v1951 = vlog2.pop %v1950
  %v1952 = vmul.f32 %v1951, 0.6931472
  %v1953 = vmul.f32 -0.5, %v977
  %v1954 = vadd.f32 %v1953, 1.0
  %v1955 = vmul.f32 %v1954, %v977
  %v1956 = vand.u32 2147483647, %v977
  %vm1957 = vcmp.lt.f32.partialorder %v1956, 0.0004427343
  %v1958 = vsel %vm1957, %v1955, %v1952
  %v1959 = vadd.f32 %v979, 1.0
  %v1960 = vlog2.pop %v1959
  %v1961 = vmul.f32 %v1960, 0.6931472
  %v1962 = vmul.f32 -0.5, %v979
  %v1963 = vadd.f32 %v1962, 1.0
  %v1964 = vmul.f32 %v1963, %v979
  %v1965 = vand.u32 2147483647, %v979
  %vm1966 = vcmp.lt.f32.partialorder %v1965, 0.0004427343
  %v1967 = vsel %vm1966, %v1964, %v1961
  %v1968 = vadd.f32 %v981, 1.0
  %v1969 = vlog2.pop %v1968
  %v1970 = vmul.f32 %v1969, 0.6931472
  %v1971 = vmul.f32 -0.5, %v981
  %v1972 = vadd.f32 %v1971, 1.0
  %v1973 = vmul.f32 %v1972, %v981
  %v1974 = vand.u32 2147483647, %v981
  %vm1975 = vcmp.lt.f32.partialorder %v1974, 0.0004427343
  %v1976 = vsel %vm1975, %v1973, %v1970
  %v1977 = vadd.f32 %v983, 1.0
  %v1978 = vlog2.pop %v1977
  %v1979 = vmul.f32 %v1978, 0.6931472
  %v1980 = vmul.f32 -0.5, %v983
  %v1981 = vadd.f32 %v1980, 1.0
  %v1982 = vmul.f32 %v1981, %v983
  %v1983 = vand.u32 2147483647, %v983
  %vm1984 = vcmp.lt.f32.partialorder %v1983, 0.0004427343
  %v1985 = vsel %vm1984, %v1982, %v1979
  %v1986 = vadd.f32 %v985, 1.0
  %v1987 = vlog2.pop %v1986
  %v1988 = vmul.f32 %v1987, 0.6931472
  %v1989 = vmul.f32 -0.5, %v985
  %v1990 = vadd.f32 %v1989, 1.0
  %v1991 = vmul.f32 %v1990, %v985
  %v1992 = vand.u32 2147483647, %v985
  %vm1993 = vcmp.lt.f32.partialorder %v1992, 0.0004427343
  %v1994 = vsel %vm1993, %v1991, %v1988
  %v1995 = vadd.f32 %v987, 1.0
  %v1996 = vlog2.pop %v1995
  %v1997 = vmul.f32 %v1996, 0.6931472
  %v1998 = vmul.f32 -0.5, %v987
  %v1999 = vadd.f32 %v1998, 1.0
  %v2000 = vmul.f32 %v1999, %v987
  %v2001 = vand.u32 2147483647, %v987
  %vm2002 = vcmp.lt.f32.partialorder %v2001, 0.0004427343
  %v2003 = vsel %vm2002, %v2000, %v1997
  %v2004 = vadd.f32 %v989, 1.0
  %v2005 = vlog2.pop %v2004
  %v2006 = vmul.f32 %v2005, 0.6931472
  %v2007 = vmul.f32 -0.5, %v989
  %v2008 = vadd.f32 %v2007, 1.0
  %v2009 = vmul.f32 %v2008, %v989
  %v2010 = vand.u32 2147483647, %v989
  %vm2011 = vcmp.lt.f32.partialorder %v2010, 0.0004427343
  %v2012 = vsel %vm2011, %v2009, %v2006
  %v2013 = vadd.f32 %v991, 1.0
  %v2014 = vlog2.pop %v2013
  %v2015 = vmul.f32 %v2014, 0.6931472
  %v2016 = vmul.f32 -0.5, %v991
  %v2017 = vadd.f32 %v2016, 1.0
  %v2018 = vmul.f32 %v2017, %v991
  %v2019 = vand.u32 2147483647, %v991
  %vm2020 = vcmp.lt.f32.partialorder %v2019, 0.0004427343
  %v2021 = vsel %vm2020, %v2018, %v2015
  %v2022 = vadd.f32 %v993, 1.0
  %v2023 = vlog2.pop %v2022
  %v2024 = vmul.f32 %v2023, 0.6931472
  %v2025 = vmul.f32 -0.5, %v993
  %v2026 = vadd.f32 %v2025, 1.0
  %v2027 = vmul.f32 %v2026, %v993
  %v2028 = vand.u32 2147483647, %v993
  %vm2029 = vcmp.lt.f32.partialorder %v2028, 0.0004427343
  %v2030 = vsel %vm2029, %v2027, %v2024
  %v2031 = vadd.f32 %v995, 1.0
  %v2032 = vlog2.pop %v2031
  %v2033 = vmul.f32 %v2032, 0.6931472
  %v2034 = vmul.f32 -0.5, %v995
  %v2035 = vadd.f32 %v2034, 1.0
  %v2036 = vmul.f32 %v2035, %v995
  %v2037 = vand.u32 2147483647, %v995
  %vm2038 = vcmp.lt.f32.partialorder %v2037, 0.0004427343
  %v2039 = vsel %vm2038, %v2036, %v2033
  %v2040 = vadd.f32 %v997, 1.0
  %v2041 = vlog2.pop %v2040
  %v2042 = vmul.f32 %v2041, 0.6931472
  %v2043 = vmul.f32 -0.5, %v997
  %v2044 = vadd.f32 %v2043, 1.0
  %v2045 = vmul.f32 %v2044, %v997
  %v2046 = vand.u32 2147483647, %v997
  %vm2047 = vcmp.lt.f32.partialorder %v2046, 0.0004427343
  %v2048 = vsel %vm2047, %v2045, %v2042
  %v2049 = vadd.f32 %v999, 1.0
  %v2050 = vlog2.pop %v2049
  %v2051 = vmul.f32 %v2050, 0.6931472
  %v2052 = vmul.f32 -0.5, %v999
  %v2053 = vadd.f32 %v2052, 1.0
  %v2054 = vmul.f32 %v2053, %v999
  %v2055 = vand.u32 2147483647, %v999
  %vm2056 = vcmp.lt.f32.partialorder %v2055, 0.0004427343
  %v2057 = vsel %vm2056, %v2054, %v2051
  %v2058 = vadd.f32 %v1001, 1.0
  %v2059 = vlog2.pop %v2058
  %v2060 = vmul.f32 %v2059, 0.6931472
  %v2061 = vmul.f32 -0.5, %v1001
  %v2062 = vadd.f32 %v2061, 1.0
  %v2063 = vmul.f32 %v2062, %v1001
  %v2064 = vand.u32 2147483647, %v1001
  %vm2065 = vcmp.lt.f32.partialorder %v2064, 0.0004427343
  %v2066 = vsel %vm2065, %v2063, %v2060
  %v2067 = vadd.f32 %v1003, 1.0
  %v2068 = vlog2.pop %v2067
  %v2069 = vmul.f32 %v2068, 0.6931472
  %v2070 = vmul.f32 -0.5, %v1003
  %v2071 = vadd.f32 %v2070, 1.0
  %v2072 = vmul.f32 %v2071, %v1003
  %v2073 = vand.u32 2147483647, %v1003
  %vm2074 = vcmp.lt.f32.partialorder %v2073, 0.0004427343
  %v2075 = vsel %vm2074, %v2072, %v2069
  %v2076 = vadd.f32 %v1005, 1.0
  %v2077 = vlog2.pop %v2076
  %v2078 = vmul.f32 %v2077, 0.6931472
  %v2079 = vmul.f32 -0.5, %v1005
  %v2080 = vadd.f32 %v2079, 1.0
  %v2081 = vmul.f32 %v2080, %v1005
  %v2082 = vand.u32 2147483647, %v1005
  %vm2083 = vcmp.lt.f32.partialorder %v2082, 0.0004427343
  %v2084 = vsel %vm2083, %v2081, %v2078
  %v2085 = vadd.f32 %v1007, 1.0
  %v2086 = vlog2.pop %v2085
  %v2087 = vmul.f32 %v2086, 0.6931472
  %v2088 = vmul.f32 -0.5, %v1007
  %v2089 = vadd.f32 %v2088, 1.0
  %v2090 = vmul.f32 %v2089, %v1007
  %v2091 = vand.u32 2147483647, %v1007
  %vm2092 = vcmp.lt.f32.partialorder %v2091, 0.0004427343
  %v2093 = vsel %vm2092, %v2090, %v2087
  %v2094 = vadd.f32 %v1009, 1.0
  %v2095 = vlog2.pop %v2094
  %v2096 = vmul.f32 %v2095, 0.6931472
  %v2097 = vmul.f32 -0.5, %v1009
  %v2098 = vadd.f32 %v2097, 1.0
  %v2099 = vmul.f32 %v2098, %v1009
  %v2100 = vand.u32 2147483647, %v1009
  %vm2101 = vcmp.lt.f32.partialorder %v2100, 0.0004427343
  %v2102 = vsel %vm2101, %v2099, %v2096
  %v2103 = vadd.f32 %v1011, 1.0
  %v2104 = vlog2.pop %v2103
  %v2105 = vmul.f32 %v2104, 0.6931472
  %v2106 = vmul.f32 -0.5, %v1011
  %v2107 = vadd.f32 %v2106, 1.0
  %v2108 = vmul.f32 %v2107, %v1011
  %v2109 = vand.u32 2147483647, %v1011
  %vm2110 = vcmp.lt.f32.partialorder %v2109, 0.0004427343
  %v2111 = vsel %vm2110, %v2108, %v2105
  %v2112 = vadd.f32 %v1013, 1.0
  %v2113 = vlog2.pop %v2112
  %v2114 = vmul.f32 %v2113, 0.6931472
  %v2115 = vmul.f32 -0.5, %v1013
  %v2116 = vadd.f32 %v2115, 1.0
  %v2117 = vmul.f32 %v2116, %v1013
  %v2118 = vand.u32 2147483647, %v1013
  %vm2119 = vcmp.lt.f32.partialorder %v2118, 0.0004427343
  %v2120 = vsel %vm2119, %v2117, %v2114
  %v2121 = vadd.f32 %v1015, 1.0
  %v2122 = vlog2.pop %v2121
  %v2123 = vmul.f32 %v2122, 0.6931472
  %v2124 = vmul.f32 -0.5, %v1015
  %v2125 = vadd.f32 %v2124, 1.0
  %v2126 = vmul.f32 %v2125, %v1015
  %v2127 = vand.u32 2147483647, %v1015
  %vm2128 = vcmp.lt.f32.partialorder %v2127, 0.0004427343
  %v2129 = vsel %vm2128, %v2126, %v2123
  %v2130 = vadd.f32 %v1017, 1.0
  %v2131 = vlog2.pop %v2130
  %v2132 = vmul.f32 %v2131, 0.6931472
  %v2133 = vmul.f32 -0.5, %v1017
  %v2134 = vadd.f32 %v2133, 1.0
  %v2135 = vmul.f32 %v2134, %v1017
  %v2136 = vand.u32 2147483647, %v1017
  %vm2137 = vcmp.lt.f32.partialorder %v2136, 0.0004427343
  %v2138 = vsel %vm2137, %v2135, %v2132
  %v2139 = vadd.f32 %v1019, 1.0
  %v2140 = vlog2.pop %v2139
  %v2141 = vmul.f32 %v2140, 0.6931472
  %v2142 = vmul.f32 -0.5, %v1019
  %v2143 = vadd.f32 %v2142, 1.0
  %v2144 = vmul.f32 %v2143, %v1019
  %v2145 = vand.u32 2147483647, %v1019
  %vm2146 = vcmp.lt.f32.partialorder %v2145, 0.0004427343
  %v2147 = vsel %vm2146, %v2144, %v2141
  %v2148 = vadd.f32 %v1021, 1.0
  %v2149 = vlog2.pop %v2148
  %v2150 = vmul.f32 %v2149, 0.6931472
  %v2151 = vmul.f32 -0.5, %v1021
  %v2152 = vadd.f32 %v2151, 1.0
  %v2153 = vmul.f32 %v2152, %v1021
  %v2154 = vand.u32 2147483647, %v1021
  %vm2155 = vcmp.lt.f32.partialorder %v2154, 0.0004427343
  %v2156 = vsel %vm2155, %v2153, %v2150
  %v2157 = vadd.f32 %v1023, 1.0
  %v2158 = vlog2.pop %v2157
  %v2159 = vmul.f32 %v2158, 0.6931472
  %v2160 = vmul.f32 -0.5, %v1023
  %v2161 = vadd.f32 %v2160, 1.0
  %v2162 = vmul.f32 %v2161, %v1023
  %v2163 = vand.u32 2147483647, %v1023
  %vm2164 = vcmp.lt.f32.partialorder %v2163, 0.0004427343
  %v2165 = vsel %vm2164, %v2162, %v2159
  %v2166 = vadd.f32 %v1025, 1.0
  %v2167 = vlog2.pop %v2166
  %v2168 = vmul.f32 %v2167, 0.6931472
  %v2169 = vmul.f32 -0.5, %v1025
  %v2170 = vadd.f32 %v2169, 1.0
  %v2171 = vmul.f32 %v2170, %v1025
  %v2172 = vand.u32 2147483647, %v1025
  %vm2173 = vcmp.lt.f32.partialorder %v2172, 0.0004427343
  %v2174 = vsel %vm2173, %v2171, %v2168
  %v2175 = vadd.f32 %v1027, 1.0
  %v2176 = vlog2.pop %v2175
  %v2177 = vmul.f32 %v2176, 0.6931472
  %v2178 = vmul.f32 -0.5, %v1027
  %v2179 = vadd.f32 %v2178, 1.0
  %v2180 = vmul.f32 %v2179, %v1027
  %v2181 = vand.u32 2147483647, %v1027
  %vm2182 = vcmp.lt.f32.partialorder %v2181, 0.0004427343
  %v2183 = vsel %vm2182, %v2180, %v2177
  %v2184 = vadd.f32 %v1029, 1.0
  %v2185 = vlog2.pop %v2184
  %v2186 = vmul.f32 %v2185, 0.6931472
  %v2187 = vmul.f32 -0.5, %v1029
  %v2188 = vadd.f32 %v2187, 1.0
  %v2189 = vmul.f32 %v2188, %v1029
  %v2190 = vand.u32 2147483647, %v1029
  %vm2191 = vcmp.lt.f32.partialorder %v2190, 0.0004427343
  %v2192 = vsel %vm2191, %v2189, %v2186
  %v2193 = vadd.f32 %v1031, 1.0
  %v2194 = vlog2.pop %v2193
  %v2195 = vmul.f32 %v2194, 0.6931472
  %v2196 = vmul.f32 -0.5, %v1031
  %v2197 = vadd.f32 %v2196, 1.0
  %v2198 = vmul.f32 %v2197, %v1031
  %v2199 = vand.u32 2147483647, %v1031
  %vm2200 = vcmp.lt.f32.partialorder %v2199, 0.0004427343
  %v2201 = vsel %vm2200, %v2198, %v2195
  %v2202 = vadd.f32 %v1033, 1.0
  %v2203 = vlog2.pop %v2202
  %v2204 = vmul.f32 %v2203, 0.6931472
  %v2205 = vmul.f32 -0.5, %v1033
  %v2206 = vadd.f32 %v2205, 1.0
  %v2207 = vmul.f32 %v2206, %v1033
  %v2208 = vand.u32 2147483647, %v1033
  %vm2209 = vcmp.lt.f32.partialorder %v2208, 0.0004427343
  %v2210 = vsel %vm2209, %v2207, %v2204
  %v2211 = vadd.f32 %v1035, 1.0
  %v2212 = vlog2.pop %v2211
  %v2213 = vmul.f32 %v2212, 0.6931472
  %v2214 = vmul.f32 -0.5, %v1035
  %v2215 = vadd.f32 %v2214, 1.0
  %v2216 = vmul.f32 %v2215, %v1035
  %v2217 = vand.u32 2147483647, %v1035
  %vm2218 = vcmp.lt.f32.partialorder %v2217, 0.0004427343
  %v2219 = vsel %vm2218, %v2216, %v2213
  %v2220 = vadd.f32 %v1037, 1.0
  %v2221 = vlog2.pop %v2220
  %v2222 = vmul.f32 %v2221, 0.6931472
  %v2223 = vmul.f32 -0.5, %v1037
  %v2224 = vadd.f32 %v2223, 1.0
  %v2225 = vmul.f32 %v2224, %v1037
  %v2226 = vand.u32 2147483647, %v1037
  %vm2227 = vcmp.lt.f32.partialorder %v2226, 0.0004427343
  %v2228 = vsel %vm2227, %v2225, %v2222
  %v2229 = vadd.f32 %v1039, 1.0
  %v2230 = vlog2.pop %v2229
  %v2231 = vmul.f32 %v2230, 0.6931472
  %v2232 = vmul.f32 -0.5, %v1039
  %v2233 = vadd.f32 %v2232, 1.0
  %v2234 = vmul.f32 %v2233, %v1039
  %v2235 = vand.u32 2147483647, %v1039
  %vm2236 = vcmp.lt.f32.partialorder %v2235, 0.0004427343
  %v2237 = vsel %vm2236, %v2234, %v2231
  %v2238 = vadd.f32 %v1041, 1.0
  %v2239 = vlog2.pop %v2238
  %v2240 = vmul.f32 %v2239, 0.6931472
  %v2241 = vmul.f32 -0.5, %v1041
  %v2242 = vadd.f32 %v2241, 1.0
  %v2243 = vmul.f32 %v2242, %v1041
  %v2244 = vand.u32 2147483647, %v1041
  %vm2245 = vcmp.lt.f32.partialorder %v2244, 0.0004427343
  %v2246 = vsel %vm2245, %v2243, %v2240
  %v2247 = vadd.f32 %v1043, 1.0
  %v2248 = vlog2.pop %v2247
  %v2249 = vmul.f32 %v2248, 0.6931472
  %v2250 = vmul.f32 -0.5, %v1043
  %v2251 = vadd.f32 %v2250, 1.0
  %v2252 = vmul.f32 %v2251, %v1043
  %v2253 = vand.u32 2147483647, %v1043
  %vm2254 = vcmp.lt.f32.partialorder %v2253, 0.0004427343
  %v2255 = vsel %vm2254, %v2252, %v2249
  %v2256 = vadd.f32 %v1045, 1.0
  %v2257 = vlog2.pop %v2256
  %v2258 = vmul.f32 %v2257, 0.6931472
  %v2259 = vmul.f32 -0.5, %v1045
  %v2260 = vadd.f32 %v2259, 1.0
  %v2261 = vmul.f32 %v2260, %v1045
  %v2262 = vand.u32 2147483647, %v1045
  %vm2263 = vcmp.lt.f32.partialorder %v2262, 0.0004427343
  %v2264 = vsel %vm2263, %v2261, %v2258
  %v2265 = vadd.f32 %v1047, 1.0
  %v2266 = vlog2.pop %v2265
  %v2267 = vmul.f32 %v2266, 0.6931472
  %v2268 = vmul.f32 -0.5, %v1047
  %v2269 = vadd.f32 %v2268, 1.0
  %v2270 = vmul.f32 %v2269, %v1047
  %v2271 = vand.u32 2147483647, %v1047
  %vm2272 = vcmp.lt.f32.partialorder %v2271, 0.0004427343
  %v2273 = vsel %vm2272, %v2270, %v2267
  %v2274 = vadd.f32 %v1049, 1.0
  %v2275 = vlog2.pop %v2274
  %v2276 = vmul.f32 %v2275, 0.6931472
  %v2277 = vmul.f32 -0.5, %v1049
  %v2278 = vadd.f32 %v2277, 1.0
  %v2279 = vmul.f32 %v2278, %v1049
  %v2280 = vand.u32 2147483647, %v1049
  %vm2281 = vcmp.lt.f32.partialorder %v2280, 0.0004427343
  %v2282 = vsel %vm2281, %v2279, %v2276
  %v2283 = vadd.f32 %v1051, 1.0
  %v2284 = vlog2.pop %v2283
  %v2285 = vmul.f32 %v2284, 0.6931472
  %v2286 = vmul.f32 -0.5, %v1051
  %v2287 = vadd.f32 %v2286, 1.0
  %v2288 = vmul.f32 %v2287, %v1051
  %v2289 = vand.u32 2147483647, %v1051
  %vm2290 = vcmp.lt.f32.partialorder %v2289, 0.0004427343
  %v2291 = vsel %vm2290, %v2288, %v2285
  %v2292 = vadd.f32 %v1053, 1.0
  %v2293 = vlog2.pop %v2292
  %v2294 = vmul.f32 %v2293, 0.6931472
  %v2295 = vmul.f32 -0.5, %v1053
  %v2296 = vadd.f32 %v2295, 1.0
  %v2297 = vmul.f32 %v2296, %v1053
  %v2298 = vand.u32 2147483647, %v1053
  %vm2299 = vcmp.lt.f32.partialorder %v2298, 0.0004427343
  %v2300 = vsel %vm2299, %v2297, %v2294
  %v2301 = vadd.f32 %v1055, 1.0
  %v2302 = vlog2.pop %v2301
  %v2303 = vmul.f32 %v2302, 0.6931472
  %v2304 = vmul.f32 -0.5, %v1055
  %v2305 = vadd.f32 %v2304, 1.0
  %v2306 = vmul.f32 %v2305, %v1055
  %v2307 = vand.u32 2147483647, %v1055
  %vm2308 = vcmp.lt.f32.partialorder %v2307, 0.0004427343
  %v2309 = vsel %vm2308, %v2306, %v2303
  %v2310 = vadd.f32 %v1057, 1.0
  %v2311 = vlog2.pop %v2310
  %v2312 = vmul.f32 %v2311, 0.6931472
  %v2313 = vmul.f32 -0.5, %v1057
  %v2314 = vadd.f32 %v2313, 1.0
  %v2315 = vmul.f32 %v2314, %v1057
  %v2316 = vand.u32 2147483647, %v1057
  %vm2317 = vcmp.lt.f32.partialorder %v2316, 0.0004427343
  %v2318 = vsel %vm2317, %v2315, %v2312
  %v2319 = vadd.f32 %v1059, 1.0
  %v2320 = vlog2.pop %v2319
  %v2321 = vmul.f32 %v2320, 0.6931472
  %v2322 = vmul.f32 -0.5, %v1059
  %v2323 = vadd.f32 %v2322, 1.0
  %v2324 = vmul.f32 %v2323, %v1059
  %v2325 = vand.u32 2147483647, %v1059
  %vm2326 = vcmp.lt.f32.partialorder %v2325, 0.0004427343
  %v2327 = vsel %vm2326, %v2324, %v2321
  %v2328 = vadd.f32 %v1061, 1.0
  %v2329 = vlog2.pop %v2328
  %v2330 = vmul.f32 %v2329, 0.6931472
  %v2331 = vmul.f32 -0.5, %v1061
  %v2332 = vadd.f32 %v2331, 1.0
  %v2333 = vmul.f32 %v2332, %v1061
  %v2334 = vand.u32 2147483647, %v1061
  %vm2335 = vcmp.lt.f32.partialorder %v2334, 0.0004427343
  %v2336 = vsel %vm2335, %v2333, %v2330
  %v2337 = vadd.f32 %v1063, 1.0
  %v2338 = vlog2.pop %v2337
  %v2339 = vmul.f32 %v2338, 0.6931472
  %v2340 = vmul.f32 -0.5, %v1063
  %v2341 = vadd.f32 %v2340, 1.0
  %v2342 = vmul.f32 %v2341, %v1063
  %v2343 = vand.u32 2147483647, %v1063
  %vm2344 = vcmp.lt.f32.partialorder %v2343, 0.0004427343
  %v2345 = vsel %vm2344, %v2342, %v2339
  %v2346 = vadd.f32 %v1065, 1.0
  %v2347 = vlog2.pop %v2346
  %v2348 = vmul.f32 %v2347, 0.6931472
  %v2349 = vmul.f32 -0.5, %v1065
  %v2350 = vadd.f32 %v2349, 1.0
  %v2351 = vmul.f32 %v2350, %v1065
  %v2352 = vand.u32 2147483647, %v1065
  %vm2353 = vcmp.lt.f32.partialorder %v2352, 0.0004427343
  %v2354 = vsel %vm2353, %v2351, %v2348
  %v2355 = vadd.f32 %v1067, 1.0
  %v2356 = vlog2.pop %v2355
  %v2357 = vmul.f32 %v2356, 0.6931472
  %v2358 = vmul.f32 -0.5, %v1067
  %v2359 = vadd.f32 %v2358, 1.0
  %v2360 = vmul.f32 %v2359, %v1067
  %v2361 = vand.u32 2147483647, %v1067
  %vm2362 = vcmp.lt.f32.partialorder %v2361, 0.0004427343
  %v2363 = vsel %vm2362, %v2360, %v2357
  %v2364 = vsel %vm492, %v348, %v1076
  %v2365 = vsel %vm493, %v349, %v1085
  %v2366 = vsel %vm494, %v350, %v1094
  %v2367 = vsel %vm495, %v351, %v1103
  %v2368 = vsel %vm496, %v352, %v1112
  %v2369 = vsel %vm497, %v353, %v1121
  %v2370 = vsel %vm498, %v354, %v1130
  %v2371 = vsel %vm499, %v355, %v1139
  %v2372 = vsel %vm500, %v356, %v1148
  %v2373 = vsel %vm501, %v357, %v1157
  %v2374 = vsel %vm502, %v358, %v1166
  %v2375 = vsel %vm503, %v359, %v1175
  %v2376 = vsel %vm504, %v360, %v1184
  %v2377 = vsel %vm505, %v361, %v1193
  %v2378 = vsel %vm506, %v362, %v1202
  %v2379 = vsel %vm507, %v363, %v1211
  %v2380 = vsel %vm508, %v364, %v1220
  %v2381 = vsel %vm509, %v365, %v1229
  %v2382 = vsel %vm510, %v366, %v1238
  %v2383 = vsel %vm511, %v367, %v1247
  %v2384 = vsel %vm512, %v368, %v1256
  %v2385 = vsel %vm513, %v369, %v1265
  %v2386 = vsel %vm514, %v370, %v1274
  %v2387 = vsel %vm515, %v371, %v1283
  %v2388 = vsel %vm516, %v372, %v1292
  %v2389 = vsel %vm517, %v373, %v1301
  %v2390 = vsel %vm518, %v374, %v1310
  %v2391 = vsel %vm519, %v375, %v1319
  %v2392 = vsel %vm520, %v376, %v1328
  %v2393 = vsel %vm521, %v377, %v1337
  %v2394 = vsel %vm522, %v378, %v1346
  %v2395 = vsel %vm523, %v379, %v1355
  %v2396 = vsel %vm524, %v380, %v1364
  %v2397 = vsel %vm525, %v381, %v1373
  %v2398 = vsel %vm526, %v382, %v1382
  %v2399 = vsel %vm527, %v383, %v1391
  %v2400 = vsel %vm528, %v384, %v1400
  %v2401 = vsel %vm529, %v385, %v1409
  %v2402 = vsel %vm530, %v386, %v1418
  %v2403 = vsel %vm531, %v387, %v1427
  %v2404 = vsel %vm532, %v388, %v1436
  %v2405 = vsel %vm533, %v389, %v1445
  %v2406 = vsel %vm534, %v390, %v1454
  %v2407 = vsel %vm535, %v391, %v1463
  %v2408 = vsel %vm536, %v392, %v1472
  %v2409 = vsel %vm537, %v393, %v1481
  %v2410 = vsel %vm538, %v394, %v1490
  %v2411 = vsel %vm539, %v395, %v1499
  %v2412 = vsel %vm540, %v396, %v1508
  %v2413 = vsel %vm541, %v397, %v1517
  %v2414 = vsel %vm542, %v398, %v1526
  %v2415 = vsel %vm543, %v399, %v1535
  %v2416 = vsel %vm544, %v400, %v1544
  %v2417 = vsel %vm545, %v401, %v1553
  %v2418 = vsel %vm546, %v402, %v1562
  %v2419 = vsel %vm547, %v403, %v1571
  %v2420 = vsel %vm548, %v404, %v1580
  %v2421 = vsel %vm549, %v405, %v1589
  %v2422 = vsel %vm550, %v406, %v1598
  %v2423 = vsel %vm551, %v407, %v1607
  %v2424 = vsel %vm552, %v408, %v1616
  %v2425 = vsel %vm553, %v409, %v1625
  %v2426 = vsel %vm554, %v410, %v1634
  %v2427 = vsel %vm555, %v411, %v1643
  %v2428 = vsel %vm556, %v412, %v1652
  %v2429 = vsel %vm557, %v413, %v1661
  %v2430 = vsel %vm558, %v414, %v1670
  %v2431 = vsel %vm559, %v415, %v1679
  %v2432 = vsel %vm560, %v416, %v1688
  %v2433 = vsel %vm561, %v417, %v1697
  %v2434 = vsel %vm562, %v418, %v1706
  %v2435 = vsel %vm563, %v419, %v1715
  %v2436 = vsel %vm564, %v420, %v1724
  %v2437 = vsel %vm565, %v421, %v1733
  %v2438 = vsel %vm566, %v422, %v1742
  %v2439 = vsel %vm567, %v423, %v1751
  %v2440 = vsel %vm568, %v424, %v1760
  %v2441 = vsel %vm569, %v425, %v1769
  %v2442 = vsel %vm570, %v426, %v1778
  %v2443 = vsel %vm571, %v427, %v1787
  %v2444 = vsel %vm572, %v428, %v1796
  %v2445 = vsel %vm573, %v429, %v1805
  %v2446 = vsel %vm574, %v430, %v1814
  %v2447 = vsel %vm575, %v431, %v1823
  %v2448 = vsel %vm576, %v432, %v1832
  %v2449 = vsel %vm577, %v433, %v1841
  %v2450 = vsel %vm578, %v434, %v1850
  %v2451 = vsel %vm579, %v435, %v1859
  %v2452 = vsel %vm580, %v436, %v1868
  %v2453 = vsel %vm581, %v437, %v1877
  %v2454 = vsel %vm582, %v438, %v1886
  %v2455 = vsel %vm583, %v439, %v1895
  %v2456 = vsel %vm584, %v440, %v1904
  %v2457 = vsel %vm585, %v441, %v1913
  %v2458 = vsel %vm586, %v442, %v1922
  %v2459 = vsel %vm587, %v443, %v1931
  %v2460 = vsel %vm588, %v444, %v1940
  %v2461 = vsel %vm589, %v445, %v1949
  %v2462 = vsel %vm590, %v446, %v1958
  %v2463 = vsel %vm591, %v447, %v1967
  %v2464 = vsel %vm592, %v448, %v1976
  %v2465 = vsel %vm593, %v449, %v1985
  %v2466 = vsel %vm594, %v450, %v1994
  %v2467 = vsel %vm595, %v451, %v2003
  %v2468 = vsel %vm596, %v452, %v2012
  %v2469 = vsel %vm597, %v453, %v2021
  %v2470 = vsel %vm598, %v454, %v2030
  %v2471 = vsel %vm599, %v455, %v2039
  %v2472 = vsel %vm600, %v456, %v2048
  %v2473 = vsel %vm601, %v457, %v2057
  %v2474 = vsel %vm602, %v458, %v2066
  %v2475 = vsel %vm603, %v459, %v2075
  %v2476 = vsel %vm604, %v460, %v2084
  %v2477 = vsel %vm605, %v461, %v2093
  %v2478 = vsel %vm606, %v462, %v2102
  %v2479 = vsel %vm607, %v463, %v2111
  %v2480 = vsel %vm608, %v464, %v2120
  %v2481 = vsel %vm609, %v465, %v2129
  %v2482 = vsel %vm610, %v466, %v2138
  %v2483 = vsel %vm611, %v467, %v2147
  %v2484 = vsel %vm612, %v468, %v2156
  %v2485 = vsel %vm613, %v469, %v2165
  %v2486 = vsel %vm614, %v470, %v2174
  %v2487 = vsel %vm615, %v471, %v2183
  %v2488 = vsel %vm616, %v472, %v2192
  %v2489 = vsel %vm617, %v473, %v2201
  %v2490 = vsel %vm618, %v474, %v2210
  %v2491 = vsel %vm619, %v475, %v2219
  %v2492 = vsel %vm620, %v476, %v2228
  %v2493 = vsel %vm621, %v477, %v2237
  %v2494 = vsel %vm622, %v478, %v2246
  %v2495 = vsel %vm623, %v479, %v2255
  %v2496 = vsel %vm624, %v480, %v2264
  %v2497 = vsel %vm625, %v481, %v2273
  %v2498 = vsel %vm626, %v482, %v2282
  %v2499 = vsel %vm627, %v483, %v2291
  %v2500 = vsel %vm628, %v484, %v2300
  %v2501 = vsel %vm629, %v485, %v2309
  %v2502 = vsel %vm630, %v486, %v2318
  %v2503 = vsel %vm631, %v487, %v2327
  %v2504 = vsel %vm632, %v488, %v2336
  %v2505 = vsel %vm633, %v489, %v2345
  %v2506 = vsel %vm634, %v490, %v2354
  %v2507 = vsel %vm635, %v491, %v2363
  %v2508 = vld [vmem:[%s5] sm:$0xff]
  %v2509 = vld [vmem:[%s5 + $0x8] sm:$0xff]
  %v2510 = vld [vmem:[%s5 + $0x10] sm:$0xff]
  %v2511 = vld [vmem:[%s5 + $0x18] sm:$0xff]
  %v2512 = vld [vmem:[%s5 + $0x20] sm:$0xff]
  %v2513 = vld [vmem:[%s5 + $0x28] sm:$0xff]
  %v2514 = vld [vmem:[%s5 + $0x30] sm:$0xff]
  %v2515 = vld [vmem:[%s5 + $0x38] sm:$0xff]
  %v2516 = vld [vmem:[%s5 + $0x40] sm:$0xff]
  %v2517 = vld [vmem:[%s5 + $0x48] sm:$0xff]
  %v2518 = vld [vmem:[%s5 + $0x50] sm:$0xff]
  %v2519 = vld [vmem:[%s5 + $0x58] sm:$0xff]
  %v2520 = vld [vmem:[%s5 + $0x60] sm:$0xff]
  %v2521 = vld [vmem:[%s5 + $0x68] sm:$0xff]
  %v2522 = vld [vmem:[%s5 + $0x70] sm:$0xff]
  %v2523 = vld [vmem:[%s5 + $0x78] sm:$0xff]
  %v2524 = vld [vmem:[%s5 + $0x80] sm:$0xff]
  %v2525 = vld [vmem:[%s5 + $0x88] sm:$0xff]
  %v2526 = vld [vmem:[%s5 + $0x90] sm:$0xff]
  %v2527 = vld [vmem:[%s5 + $0x98] sm:$0xff]
  %v2528 = vld [vmem:[%s5 + $0xa0] sm:$0xff]
  %v2529 = vld [vmem:[%s5 + $0xa8] sm:$0xff]
  %v2530 = vld [vmem:[%s5 + $0xb0] sm:$0xff]
  %v2531 = vld [vmem:[%s5 + $0xb8] sm:$0xff]
  %v2532 = vld [vmem:[%s5 + $0xc0] sm:$0xff]
  %v2533 = vld [vmem:[%s5 + $0xc8] sm:$0xff]
  %v2534 = vld [vmem:[%s5 + $0xd0] sm:$0xff]
  %v2535 = vld [vmem:[%s5 + $0xd8] sm:$0xff]
  %v2536 = vld [vmem:[%s5 + $0xe0] sm:$0xff]
  %v2537 = vld [vmem:[%s5 + $0xe8] sm:$0xff]
  %v2538 = vld [vmem:[%s5 + $0xf0] sm:$0xff]
  %v2539 = vld [vmem:[%s5 + $0xf8] sm:$0xff]
  %v2540 = vld [vmem:[%s5 + $0x100] sm:$0xff]
  %v2541 = vld [vmem:[%s5 + $0x108] sm:$0xff]
  %v2542 = vld [vmem:[%s5 + $0x110] sm:$0xff]
  %v2543 = vld [vmem:[%s5 + $0x118] sm:$0xff]
  %v2544 = vld [vmem:[%s5 + $0x120] sm:$0xff]
  %v2545 = vld [vmem:[%s5 + $0x128] sm:$0xff]
  %v2546 = vld [vmem:[%s5 + $0x130] sm:$0xff]
  %v2547 = vld [vmem:[%s5 + $0x138] sm:$0xff]
  %v2548 = vld [vmem:[%s5 + $0x140] sm:$0xff]
  %v2549 = vld [vmem:[%s5 + $0x148] sm:$0xff]
  %v2550 = vld [vmem:[%s5 + $0x150] sm:$0xff]
  %v2551 = vld [vmem:[%s5 + $0x158] sm:$0xff]
  %v2552 = vld [vmem:[%s5 + $0x160] sm:$0xff]
  %v2553 = vld [vmem:[%s5 + $0x168] sm:$0xff]
  %v2554 = vld [vmem:[%s5 + $0x170] sm:$0xff]
  %v2555 = vld [vmem:[%s5 + $0x178] sm:$0xff]
  %v2556 = vld [vmem:[%s5 + $0x180] sm:$0xff]
  %v2557 = vld [vmem:[%s5 + $0x188] sm:$0xff]
  %v2558 = vld [vmem:[%s5 + $0x190] sm:$0xff]
  %v2559 = vld [vmem:[%s5 + $0x198] sm:$0xff]
  %v2560 = vld [vmem:[%s5 + $0x1a0] sm:$0xff]
  %v2561 = vld [vmem:[%s5 + $0x1a8] sm:$0xff]
  %v2562 = vld [vmem:[%s5 + $0x1b0] sm:$0xff]
  %v2563 = vld [vmem:[%s5 + $0x1b8] sm:$0xff]
  %v2564 = vld [vmem:[%s5 + $0x1c0] sm:$0xff]
  %v2565 = vld [vmem:[%s5 + $0x1c8] sm:$0xff]
  %v2566 = vld [vmem:[%s5 + $0x1d0] sm:$0xff]
  %v2567 = vld [vmem:[%s5 + $0x1d8] sm:$0xff]
  %v2568 = vld [vmem:[%s5 + $0x1e0] sm:$0xff]
  %v2569 = vld [vmem:[%s5 + $0x1e8] sm:$0xff]
  %v2570 = vld [vmem:[%s5 + $0x1f0] sm:$0xff]
  %v2571 = vld [vmem:[%s5 + $0x1f8] sm:$0xff]
  %v2572 = vld [vmem:[%s5 + $0x200] sm:$0xff]
  %v2573 = vld [vmem:[%s5 + $0x208] sm:$0xff]
  %v2574 = vld [vmem:[%s5 + $0x210] sm:$0xff]
  %v2575 = vld [vmem:[%s5 + $0x218] sm:$0xff]
  %v2576 = vld [vmem:[%s5 + $0x220] sm:$0xff]
  %v2577 = vld [vmem:[%s5 + $0x228] sm:$0xff]
  %v2578 = vld [vmem:[%s5 + $0x230] sm:$0xff]
  %v2579 = vld [vmem:[%s5 + $0x238] sm:$0xff]
  %v2580 = vld [vmem:[%s5 + $0x240] sm:$0xff]
  %v2581 = vld [vmem:[%s5 + $0x248] sm:$0xff]
  %v2582 = vld [vmem:[%s5 + $0x250] sm:$0xff]
  %v2583 = vld [vmem:[%s5 + $0x258] sm:$0xff]
  %v2584 = vld [vmem:[%s5 + $0x260] sm:$0xff]
  %v2585 = vld [vmem:[%s5 + $0x268] sm:$0xff]
  %v2586 = vld [vmem:[%s5 + $0x270] sm:$0xff]
  %v2587 = vld [vmem:[%s5 + $0x278] sm:$0xff]
  %v2588 = vld [vmem:[%s5 + $0x280] sm:$0xff]
  %v2589 = vld [vmem:[%s5 + $0x288] sm:$0xff]
  %v2590 = vld [vmem:[%s5 + $0x290] sm:$0xff]
  %v2591 = vld [vmem:[%s5 + $0x298] sm:$0xff]
  %v2592 = vld [vmem:[%s5 + $0x2a0] sm:$0xff]
  %v2593 = vld [vmem:[%s5 + $0x2a8] sm:$0xff]
  %v2594 = vld [vmem:[%s5 + $0x2b0] sm:$0xff]
  %v2595 = vld [vmem:[%s5 + $0x2b8] sm:$0xff]
  %v2596 = vld [vmem:[%s5 + $0x2c0] sm:$0xff]
  %v2597 = vld [vmem:[%s5 + $0x2c8] sm:$0xff]
  %v2598 = vld [vmem:[%s5 + $0x2d0] sm:$0xff]
  %v2599 = vld [vmem:[%s5 + $0x2d8] sm:$0xff]
  %v2600 = vld [vmem:[%s5 + $0x2e0] sm:$0xff]
  %v2601 = vld [vmem:[%s5 + $0x2e8] sm:$0xff]
  %v2602 = vld [vmem:[%s5 + $0x2f0] sm:$0xff]
  %v2603 = vld [vmem:[%s5 + $0x2f8] sm:$0xff]
  %v2604 = vld [vmem:[%s5 + $0x300] sm:$0xff]
  %v2605 = vld [vmem:[%s5 + $0x308] sm:$0xff]
  %v2606 = vld [vmem:[%s5 + $0x310] sm:$0xff]
  %v2607 = vld [vmem:[%s5 + $0x318] sm:$0xff]
  %v2608 = vld [vmem:[%s5 + $0x320] sm:$0xff]
  %v2609 = vld [vmem:[%s5 + $0x328] sm:$0xff]
  %v2610 = vld [vmem:[%s5 + $0x330] sm:$0xff]
  %v2611 = vld [vmem:[%s5 + $0x338] sm:$0xff]
  %v2612 = vld [vmem:[%s5 + $0x340] sm:$0xff]
  %v2613 = vld [vmem:[%s5 + $0x348] sm:$0xff]
  %v2614 = vld [vmem:[%s5 + $0x350] sm:$0xff]
  %v2615 = vld [vmem:[%s5 + $0x358] sm:$0xff]
  %v2616 = vld [vmem:[%s5 + $0x360] sm:$0xff]
  %v2617 = vld [vmem:[%s5 + $0x368] sm:$0xff]
  %v2618 = vld [vmem:[%s5 + $0x370] sm:$0xff]
  %v2619 = vld [vmem:[%s5 + $0x378] sm:$0xff]
  %v2620 = vld [vmem:[%s5 + $0x380] sm:$0xff]
  %v2621 = vld [vmem:[%s5 + $0x388] sm:$0xff]
  %v2622 = vld [vmem:[%s5 + $0x390] sm:$0xff]
  %v2623 = vld [vmem:[%s5 + $0x398] sm:$0xff]
  %v2624 = vld [vmem:[%s5 + $0x3a0] sm:$0xff]
  %v2625 = vld [vmem:[%s5 + $0x3a8] sm:$0xff]
  %v2626 = vld [vmem:[%s5 + $0x3b0] sm:$0xff]
  %v2627 = vld [vmem:[%s5 + $0x3b8] sm:$0xff]
  %v2628 = vld [vmem:[%s5 + $0x3c0] sm:$0xff]
  %v2629 = vld [vmem:[%s5 + $0x3c8] sm:$0xff]
  %v2630 = vld [vmem:[%s5 + $0x3d0] sm:$0xff]
  %v2631 = vld [vmem:[%s5 + $0x3d8] sm:$0xff]
  %v2632 = vld [vmem:[%s5 + $0x3e0] sm:$0xff]
  %v2633 = vld [vmem:[%s5 + $0x3e8] sm:$0xff]
  %v2634 = vld [vmem:[%s5 + $0x3f0] sm:$0xff]
  %v2635 = vld [vmem:[%s5 + $0x3f8] sm:$0xff]
  %v2636 = vld [vmem:[%s5 + $0x400] sm:$0xff]
  %v2637 = vld [vmem:[%s5 + $0x408] sm:$0xff]
  %v2638 = vld [vmem:[%s5 + $0x410] sm:$0xff]
  %v2639 = vld [vmem:[%s5 + $0x418] sm:$0xff]
  %v2640 = vld [vmem:[%s5 + $0x420] sm:$0xff]
  %v2641 = vld [vmem:[%s5 + $0x428] sm:$0xff]
  %v2642 = vld [vmem:[%s5 + $0x430] sm:$0xff]
  %v2643 = vld [vmem:[%s5 + $0x438] sm:$0xff]
  %v2644 = vld [vmem:[%s5 + $0x440] sm:$0xff]
  %v2645 = vld [vmem:[%s5 + $0x448] sm:$0xff]
  %v2646 = vld [vmem:[%s5 + $0x450] sm:$0xff]
  %v2647 = vld [vmem:[%s5 + $0x458] sm:$0xff]
  %v2648 = vld [vmem:[%s5 + $0x460] sm:$0xff]
  %v2649 = vld [vmem:[%s5 + $0x468] sm:$0xff]
  %v2650 = vld [vmem:[%s5 + $0x470] sm:$0xff]
  %v2651 = vld [vmem:[%s5 + $0x478] sm:$0xff]
  %v2652 = vmul.f32 %v2364, %v2508
  %v2653 = vmul.f32 %v2365, %v2509
  %v2654 = vmul.f32 %v2366, %v2510
  %v2655 = vmul.f32 %v2367, %v2511
  %v2656 = vmul.f32 %v2368, %v2512
  %v2657 = vmul.f32 %v2369, %v2513
  %v2658 = vmul.f32 %v2370, %v2514
  %v2659 = vmul.f32 %v2371, %v2515
  %v2660 = vmul.f32 %v2372, %v2516
  %v2661 = vmul.f32 %v2373, %v2517
  %v2662 = vmul.f32 %v2374, %v2518
  %v2663 = vmul.f32 %v2375, %v2519
  %v2664 = vmul.f32 %v2376, %v2520
  %v2665 = vmul.f32 %v2377, %v2521
  %v2666 = vmul.f32 %v2378, %v2522
  %v2667 = vmul.f32 %v2379, %v2523
  %v2668 = vmul.f32 %v2380, %v2524
  %v2669 = vmul.f32 %v2381, %v2525
  %v2670 = vmul.f32 %v2382, %v2526
  %v2671 = vmul.f32 %v2383, %v2527
  %v2672 = vmul.f32 %v2384, %v2528
  %v2673 = vmul.f32 %v2385, %v2529
  %v2674 = vmul.f32 %v2386, %v2530
  %v2675 = vmul.f32 %v2387, %v2531
  %v2676 = vmul.f32 %v2388, %v2532
  %v2677 = vmul.f32 %v2389, %v2533
  %v2678 = vmul.f32 %v2390, %v2534
  %v2679 = vmul.f32 %v2391, %v2535
  %v2680 = vmul.f32 %v2392, %v2536
  %v2681 = vmul.f32 %v2393, %v2537
  %v2682 = vmul.f32 %v2394, %v2538
  %v2683 = vmul.f32 %v2395, %v2539
  %v2684 = vmul.f32 %v2396, %v2540
  %v2685 = vmul.f32 %v2397, %v2541
  %v2686 = vmul.f32 %v2398, %v2542
  %v2687 = vmul.f32 %v2399, %v2543
  %v2688 = vmul.f32 %v2400, %v2544
  %v2689 = vmul.f32 %v2401, %v2545
  %v2690 = vmul.f32 %v2402, %v2546
  %v2691 = vmul.f32 %v2403, %v2547
  %v2692 = vmul.f32 %v2404, %v2548
  %v2693 = vmul.f32 %v2405, %v2549
  %v2694 = vmul.f32 %v2406, %v2550
  %v2695 = vmul.f32 %v2407, %v2551
  %v2696 = vmul.f32 %v2408, %v2552
  %v2697 = vmul.f32 %v2409, %v2553
  %v2698 = vmul.f32 %v2410, %v2554
  %v2699 = vmul.f32 %v2411, %v2555
  %v2700 = vmul.f32 %v2412, %v2556
  %v2701 = vmul.f32 %v2413, %v2557
  %v2702 = vmul.f32 %v2414, %v2558
  %v2703 = vmul.f32 %v2415, %v2559
  %v2704 = vmul.f32 %v2416, %v2560
  %v2705 = vmul.f32 %v2417, %v2561
  %v2706 = vmul.f32 %v2418, %v2562
  %v2707 = vmul.f32 %v2419, %v2563
  %v2708 = vmul.f32 %v2420, %v2564
  %v2709 = vmul.f32 %v2421, %v2565
  %v2710 = vmul.f32 %v2422, %v2566
  %v2711 = vmul.f32 %v2423, %v2567
  %v2712 = vmul.f32 %v2424, %v2568
  %v2713 = vmul.f32 %v2425, %v2569
  %v2714 = vmul.f32 %v2426, %v2570
  %v2715 = vmul.f32 %v2427, %v2571
  %v2716 = vmul.f32 %v2428, %v2572
  %v2717 = vmul.f32 %v2429, %v2573
  %v2718 = vmul.f32 %v2430, %v2574
  %v2719 = vmul.f32 %v2431, %v2575
  %v2720 = vmul.f32 %v2432, %v2576
  %v2721 = vmul.f32 %v2433, %v2577
  %v2722 = vmul.f32 %v2434, %v2578
  %v2723 = vmul.f32 %v2435, %v2579
  %v2724 = vmul.f32 %v2436, %v2580
  %v2725 = vmul.f32 %v2437, %v2581
  %v2726 = vmul.f32 %v2438, %v2582
  %v2727 = vmul.f32 %v2439, %v2583
  %v2728 = vmul.f32 %v2440, %v2584
  %v2729 = vmul.f32 %v2441, %v2585
  %v2730 = vmul.f32 %v2442, %v2586
  %v2731 = vmul.f32 %v2443, %v2587
  %v2732 = vmul.f32 %v2444, %v2588
  %v2733 = vmul.f32 %v2445, %v2589
  %v2734 = vmul.f32 %v2446, %v2590
  %v2735 = vmul.f32 %v2447, %v2591
  %v2736 = vmul.f32 %v2448, %v2592
  %v2737 = vmul.f32 %v2449, %v2593
  %v2738 = vmul.f32 %v2450, %v2594
  %v2739 = vmul.f32 %v2451, %v2595
  %v2740 = vmul.f32 %v2452, %v2596
  %v2741 = vmul.f32 %v2453, %v2597
  %v2742 = vmul.f32 %v2454, %v2598
  %v2743 = vmul.f32 %v2455, %v2599
  %v2744 = vmul.f32 %v2456, %v2600
  %v2745 = vmul.f32 %v2457, %v2601
  %v2746 = vmul.f32 %v2458, %v2602
  %v2747 = vmul.f32 %v2459, %v2603
  %v2748 = vmul.f32 %v2460, %v2604
  %v2749 = vmul.f32 %v2461, %v2605
  %v2750 = vmul.f32 %v2462, %v2606
  %v2751 = vmul.f32 %v2463, %v2607
  %v2752 = vmul.f32 %v2464, %v2608
  %v2753 = vmul.f32 %v2465, %v2609
  %v2754 = vmul.f32 %v2466, %v2610
  %v2755 = vmul.f32 %v2467, %v2611
  %v2756 = vmul.f32 %v2468, %v2612
  %v2757 = vmul.f32 %v2469, %v2613
  %v2758 = vmul.f32 %v2470, %v2614
  %v2759 = vmul.f32 %v2471, %v2615
  %v2760 = vmul.f32 %v2472, %v2616
  %v2761 = vmul.f32 %v2473, %v2617
  %v2762 = vmul.f32 %v2474, %v2618
  %v2763 = vmul.f32 %v2475, %v2619
  %v2764 = vmul.f32 %v2476, %v2620
  %v2765 = vmul.f32 %v2477, %v2621
  %v2766 = vmul.f32 %v2478, %v2622
  %v2767 = vmul.f32 %v2479, %v2623
  %v2768 = vmul.f32 %v2480, %v2624
  %v2769 = vmul.f32 %v2481, %v2625
  %v2770 = vmul.f32 %v2482, %v2626
  %v2771 = vmul.f32 %v2483, %v2627
  %v2772 = vmul.f32 %v2484, %v2628
  %v2773 = vmul.f32 %v2485, %v2629
  %v2774 = vmul.f32 %v2486, %v2630
  %v2775 = vmul.f32 %v2487, %v2631
  %v2776 = vmul.f32 %v2488, %v2632
  %v2777 = vmul.f32 %v2489, %v2633
  %v2778 = vmul.f32 %v2490, %v2634
  %v2779 = vmul.f32 %v2491, %v2635
  %v2780 = vmul.f32 %v2492, %v2636
  %v2781 = vmul.f32 %v2493, %v2637
  %v2782 = vmul.f32 %v2494, %v2638
  %v2783 = vmul.f32 %v2495, %v2639
  %v2784 = vmul.f32 %v2496, %v2640
  %v2785 = vmul.f32 %v2497, %v2641
  %v2786 = vmul.f32 %v2498, %v2642
  %v2787 = vmul.f32 %v2499, %v2643
  %v2788 = vmul.f32 %v2500, %v2644
  %v2789 = vmul.f32 %v2501, %v2645
  %v2790 = vmul.f32 %v2502, %v2646
  %v2791 = vmul.f32 %v2503, %v2647
  %v2792 = vmul.f32 %v2504, %v2648
  %v2793 = vmul.f32 %v2505, %v2649
  %v2794 = vmul.f32 %v2506, %v2650
  %v2795 = vmul.f32 %v2507, %v2651
  %v2796 = vadd.f32 %v204, %v2652
  %v2797 = vadd.f32 %v205, %v2653
  %v2798 = vadd.f32 %v206, %v2654
  %v2799 = vadd.f32 %v207, %v2655
  %v2800 = vadd.f32 %v208, %v2656
  %v2801 = vadd.f32 %v209, %v2657
  %v2802 = vadd.f32 %v210, %v2658
  %v2803 = vadd.f32 %v211, %v2659
  %v2804 = vadd.f32 %v212, %v2660
  %v2805 = vadd.f32 %v213, %v2661
  %v2806 = vadd.f32 %v214, %v2662
  %v2807 = vadd.f32 %v215, %v2663
  %v2808 = vadd.f32 %v216, %v2664
  %v2809 = vadd.f32 %v217, %v2665
  %v2810 = vadd.f32 %v218, %v2666
  %v2811 = vadd.f32 %v219, %v2667
  %v2812 = vadd.f32 %v220, %v2668
  %v2813 = vadd.f32 %v221, %v2669
  %v2814 = vadd.f32 %v222, %v2670
  %v2815 = vadd.f32 %v223, %v2671
  %v2816 = vadd.f32 %v224, %v2672
  %v2817 = vadd.f32 %v225, %v2673
  %v2818 = vadd.f32 %v226, %v2674
  %v2819 = vadd.f32 %v227, %v2675
  %v2820 = vadd.f32 %v228, %v2676
  %v2821 = vadd.f32 %v229, %v2677
  %v2822 = vadd.f32 %v230, %v2678
  %v2823 = vadd.f32 %v231, %v2679
  %v2824 = vadd.f32 %v232, %v2680
  %v2825 = vadd.f32 %v233, %v2681
  %v2826 = vadd.f32 %v234, %v2682
  %v2827 = vadd.f32 %v235, %v2683
  %v2828 = vadd.f32 %v236, %v2684
  %v2829 = vadd.f32 %v237, %v2685
  %v2830 = vadd.f32 %v238, %v2686
  %v2831 = vadd.f32 %v239, %v2687
  %v2832 = vadd.f32 %v240, %v2688
  %v2833 = vadd.f32 %v241, %v2689
  %v2834 = vadd.f32 %v242, %v2690
  %v2835 = vadd.f32 %v243, %v2691
  %v2836 = vadd.f32 %v244, %v2692
  %v2837 = vadd.f32 %v245, %v2693
  %v2838 = vadd.f32 %v246, %v2694
  %v2839 = vadd.f32 %v247, %v2695
  %v2840 = vadd.f32 %v248, %v2696
  %v2841 = vadd.f32 %v249, %v2697
  %v2842 = vadd.f32 %v250, %v2698
  %v2843 = vadd.f32 %v251, %v2699
  %v2844 = vadd.f32 %v252, %v2700
  %v2845 = vadd.f32 %v253, %v2701
  %v2846 = vadd.f32 %v254, %v2702
  %v2847 = vadd.f32 %v255, %v2703
  %v2848 = vadd.f32 %v256, %v2704
  %v2849 = vadd.f32 %v257, %v2705
  %v2850 = vadd.f32 %v258, %v2706
  %v2851 = vadd.f32 %v259, %v2707
  %v2852 = vadd.f32 %v260, %v2708
  %v2853 = vadd.f32 %v261, %v2709
  %v2854 = vadd.f32 %v262, %v2710
  %v2855 = vadd.f32 %v263, %v2711
  %v2856 = vadd.f32 %v264, %v2712
  %v2857 = vadd.f32 %v265, %v2713
  %v2858 = vadd.f32 %v266, %v2714
  %v2859 = vadd.f32 %v267, %v2715
  %v2860 = vadd.f32 %v268, %v2716
  %v2861 = vadd.f32 %v269, %v2717
  %v2862 = vadd.f32 %v270, %v2718
  %v2863 = vadd.f32 %v271, %v2719
  %v2864 = vadd.f32 %v272, %v2720
  %v2865 = vadd.f32 %v273, %v2721
  %v2866 = vadd.f32 %v274, %v2722
  %v2867 = vadd.f32 %v275, %v2723
  %v2868 = vadd.f32 %v276, %v2724
  %v2869 = vadd.f32 %v277, %v2725
  %v2870 = vadd.f32 %v278, %v2726
  %v2871 = vadd.f32 %v279, %v2727
  %v2872 = vadd.f32 %v280, %v2728
  %v2873 = vadd.f32 %v281, %v2729
  %v2874 = vadd.f32 %v282, %v2730
  %v2875 = vadd.f32 %v283, %v2731
  %v2876 = vadd.f32 %v284, %v2732
  %v2877 = vadd.f32 %v285, %v2733
  %v2878 = vadd.f32 %v286, %v2734
  %v2879 = vadd.f32 %v287, %v2735
  %v2880 = vadd.f32 %v288, %v2736
  %v2881 = vadd.f32 %v289, %v2737
  %v2882 = vadd.f32 %v290, %v2738
  %v2883 = vadd.f32 %v291, %v2739
  %v2884 = vadd.f32 %v292, %v2740
  %v2885 = vadd.f32 %v293, %v2741
  %v2886 = vadd.f32 %v294, %v2742
  %v2887 = vadd.f32 %v295, %v2743
  %v2888 = vadd.f32 %v296, %v2744
  %v2889 = vadd.f32 %v297, %v2745
  %v2890 = vadd.f32 %v298, %v2746
  %v2891 = vadd.f32 %v299, %v2747
  %v2892 = vadd.f32 %v300, %v2748
  %v2893 = vadd.f32 %v301, %v2749
  %v2894 = vadd.f32 %v302, %v2750
  %v2895 = vadd.f32 %v303, %v2751
  %v2896 = vadd.f32 %v304, %v2752
  %v2897 = vadd.f32 %v305, %v2753
  %v2898 = vadd.f32 %v306, %v2754
  %v2899 = vadd.f32 %v307, %v2755
  %v2900 = vadd.f32 %v308, %v2756
  %v2901 = vadd.f32 %v309, %v2757
  %v2902 = vadd.f32 %v310, %v2758
  %v2903 = vadd.f32 %v311, %v2759
  %v2904 = vadd.f32 %v312, %v2760
  %v2905 = vadd.f32 %v313, %v2761
  %v2906 = vadd.f32 %v314, %v2762
  %v2907 = vadd.f32 %v315, %v2763
  %v2908 = vadd.f32 %v316, %v2764
  %v2909 = vadd.f32 %v317, %v2765
  %v2910 = vadd.f32 %v318, %v2766
  %v2911 = vadd.f32 %v319, %v2767
  %v2912 = vadd.f32 %v320, %v2768
  %v2913 = vadd.f32 %v321, %v2769
  %v2914 = vadd.f32 %v322, %v2770
  %v2915 = vadd.f32 %v323, %v2771
  %v2916 = vadd.f32 %v324, %v2772
  %v2917 = vadd.f32 %v325, %v2773
  %v2918 = vadd.f32 %v326, %v2774
  %v2919 = vadd.f32 %v327, %v2775
  %v2920 = vadd.f32 %v328, %v2776
  %v2921 = vadd.f32 %v329, %v2777
  %v2922 = vadd.f32 %v330, %v2778
  %v2923 = vadd.f32 %v331, %v2779
  %v2924 = vadd.f32 %v332, %v2780
  %v2925 = vadd.f32 %v333, %v2781
  %v2926 = vadd.f32 %v334, %v2782
  %v2927 = vadd.f32 %v335, %v2783
  %v2928 = vadd.f32 %v336, %v2784
  %v2929 = vadd.f32 %v337, %v2785
  %v2930 = vadd.f32 %v338, %v2786
  %v2931 = vadd.f32 %v339, %v2787
  %v2932 = vadd.f32 %v340, %v2788
  %v2933 = vadd.f32 %v341, %v2789
  %v2934 = vadd.f32 %v342, %v2790
  %v2935 = vadd.f32 %v343, %v2791
  %v2936 = vadd.f32 %v344, %v2792
  %v2937 = vadd.f32 %v345, %v2793
  %v2938 = vadd.f32 %v346, %v2794
  %v2939 = vadd.f32 %v347, %v2795
  %v2940 = vpack.c.bf16 %v2797, %v2796
  %v2941 = vpack.c.bf16 %v2799, %v2798
  %v2942 = vpack.c.bf16 %v2801, %v2800
  %v2943 = vpack.c.bf16 %v2803, %v2802
  %v2944 = vpack.c.bf16 %v2805, %v2804
  %v2945 = vpack.c.bf16 %v2807, %v2806
  %v2946 = vpack.c.bf16 %v2809, %v2808
  %v2947 = vpack.c.bf16 %v2811, %v2810
  %v2948 = vpack.c.bf16 %v2813, %v2812
  %v2949 = vpack.c.bf16 %v2815, %v2814
  %v2950 = vpack.c.bf16 %v2817, %v2816
  %v2951 = vpack.c.bf16 %v2819, %v2818
  %v2952 = vpack.c.bf16 %v2821, %v2820
  %v2953 = vpack.c.bf16 %v2823, %v2822
  %v2954 = vpack.c.bf16 %v2825, %v2824
  %v2955 = vpack.c.bf16 %v2827, %v2826
  %v2956 = vpack.c.bf16 %v2829, %v2828
  %v2957 = vpack.c.bf16 %v2831, %v2830
  %v2958 = vpack.c.bf16 %v2833, %v2832
  %v2959 = vpack.c.bf16 %v2835, %v2834
  %v2960 = vpack.c.bf16 %v2837, %v2836
  %v2961 = vpack.c.bf16 %v2839, %v2838
  %v2962 = vpack.c.bf16 %v2841, %v2840
  %v2963 = vpack.c.bf16 %v2843, %v2842
  %v2964 = vpack.c.bf16 %v2845, %v2844
  %v2965 = vpack.c.bf16 %v2847, %v2846
  %v2966 = vpack.c.bf16 %v2849, %v2848
  %v2967 = vpack.c.bf16 %v2851, %v2850
  %v2968 = vpack.c.bf16 %v2853, %v2852
  %v2969 = vpack.c.bf16 %v2855, %v2854
  %v2970 = vpack.c.bf16 %v2857, %v2856
  %v2971 = vpack.c.bf16 %v2859, %v2858
  %v2972 = vpack.c.bf16 %v2861, %v2860
  %v2973 = vpack.c.bf16 %v2863, %v2862
  %v2974 = vpack.c.bf16 %v2865, %v2864
  %v2975 = vpack.c.bf16 %v2867, %v2866
  %v2976 = vpack.c.bf16 %v2869, %v2868
  %v2977 = vpack.c.bf16 %v2871, %v2870
  %v2978 = vpack.c.bf16 %v2873, %v2872
  %v2979 = vpack.c.bf16 %v2875, %v2874
  %v2980 = vpack.c.bf16 %v2877, %v2876
  %v2981 = vpack.c.bf16 %v2879, %v2878
  %v2982 = vpack.c.bf16 %v2881, %v2880
  %v2983 = vpack.c.bf16 %v2883, %v2882
  %v2984 = vpack.c.bf16 %v2885, %v2884
  %v2985 = vpack.c.bf16 %v2887, %v2886
  %v2986 = vpack.c.bf16 %v2889, %v2888
  %v2987 = vpack.c.bf16 %v2891, %v2890
  %v2988 = vpack.c.bf16 %v2893, %v2892
  %v2989 = vpack.c.bf16 %v2895, %v2894
  %v2990 = vpack.c.bf16 %v2897, %v2896
  %v2991 = vpack.c.bf16 %v2899, %v2898
  %v2992 = vpack.c.bf16 %v2901, %v2900
  %v2993 = vpack.c.bf16 %v2903, %v2902
  %v2994 = vpack.c.bf16 %v2905, %v2904
  %v2995 = vpack.c.bf16 %v2907, %v2906
  %v2996 = vpack.c.bf16 %v2909, %v2908
  %v2997 = vpack.c.bf16 %v2911, %v2910
  %v2998 = vpack.c.bf16 %v2913, %v2912
  %v2999 = vpack.c.bf16 %v2915, %v2914
  %v3000 = vpack.c.bf16 %v2917, %v2916
  %v3001 = vpack.c.bf16 %v2919, %v2918
  %v3002 = vpack.c.bf16 %v2921, %v2920
  %v3003 = vpack.c.bf16 %v2923, %v2922
  %v3004 = vpack.c.bf16 %v2925, %v2924
  %v3005 = vpack.c.bf16 %v2927, %v2926
  %v3006 = vpack.c.bf16 %v2929, %v2928
  %v3007 = vpack.c.bf16 %v2931, %v2930
  %v3008 = vpack.c.bf16 %v2933, %v2932
  %v3009 = vpack.c.bf16 %v2935, %v2934
  %v3010 = vpack.c.bf16 %v2937, %v2936
  %v3011 = vpack.c.bf16 %v2939, %v2938
  %v3084 = vunpack.c.l.b16 %v2940
  %v3085 = vunpack.c.h.b16 %v2940
  %v3086 = vunpack.c.l.b16 %v2941
  %v3087 = vunpack.c.h.b16 %v2941
  %v3088 = vunpack.c.l.b16 %v2942
  %v3089 = vunpack.c.h.b16 %v2942
  %v3090 = vunpack.c.l.b16 %v2943
  %v3091 = vunpack.c.h.b16 %v2943
  %v3092 = vunpack.c.l.b16 %v2944
  %v3093 = vunpack.c.h.b16 %v2944
  %v3094 = vunpack.c.l.b16 %v2945
  %v3095 = vunpack.c.h.b16 %v2945
  %v3096 = vunpack.c.l.b16 %v2946
  %v3097 = vunpack.c.h.b16 %v2946
  %v3098 = vunpack.c.l.b16 %v2947
  %v3099 = vunpack.c.h.b16 %v2947
  %v3100 = vunpack.c.l.b16 %v2948
  %v3101 = vunpack.c.h.b16 %v2948
  %v3102 = vunpack.c.l.b16 %v2949
  %v3103 = vunpack.c.h.b16 %v2949
  %v3104 = vunpack.c.l.b16 %v2950
  %v3105 = vunpack.c.h.b16 %v2950
  %v3106 = vunpack.c.l.b16 %v2951
  %v3107 = vunpack.c.h.b16 %v2951
  %v3108 = vunpack.c.l.b16 %v2952
  %v3109 = vunpack.c.h.b16 %v2952
  %v3110 = vunpack.c.l.b16 %v2953
  %v3111 = vunpack.c.h.b16 %v2953
  %v3112 = vunpack.c.l.b16 %v2954
  %v3113 = vunpack.c.h.b16 %v2954
  %v3114 = vunpack.c.l.b16 %v2955
  %v3115 = vunpack.c.h.b16 %v2955
  %v3116 = vunpack.c.l.b16 %v2956
  %v3117 = vunpack.c.h.b16 %v2956
  %v3118 = vunpack.c.l.b16 %v2957
  %v3119 = vunpack.c.h.b16 %v2957
  %v3120 = vunpack.c.l.b16 %v2958
  %v3121 = vunpack.c.h.b16 %v2958
  %v3122 = vunpack.c.l.b16 %v2959
  %v3123 = vunpack.c.h.b16 %v2959
  %v3124 = vunpack.c.l.b16 %v2960
  %v3125 = vunpack.c.h.b16 %v2960
  %v3126 = vunpack.c.l.b16 %v2961
  %v3127 = vunpack.c.h.b16 %v2961
  %v3128 = vunpack.c.l.b16 %v2962
  %v3129 = vunpack.c.h.b16 %v2962
  %v3130 = vunpack.c.l.b16 %v2963
  %v3131 = vunpack.c.h.b16 %v2963
  %v3132 = vunpack.c.l.b16 %v2964
  %v3133 = vunpack.c.h.b16 %v2964
  %v3134 = vunpack.c.l.b16 %v2965
  %v3135 = vunpack.c.h.b16 %v2965
  %v3136 = vunpack.c.l.b16 %v2966
  %v3137 = vunpack.c.h.b16 %v2966
  %v3138 = vunpack.c.l.b16 %v2967
  %v3139 = vunpack.c.h.b16 %v2967
  %v3140 = vunpack.c.l.b16 %v2968
  %v3141 = vunpack.c.h.b16 %v2968
  %v3142 = vunpack.c.l.b16 %v2969
  %v3143 = vunpack.c.h.b16 %v2969
  %v3144 = vunpack.c.l.b16 %v2970
  %v3145 = vunpack.c.h.b16 %v2970
  %v3146 = vunpack.c.l.b16 %v2971
  %v3147 = vunpack.c.h.b16 %v2971
  %v3148 = vunpack.c.l.b16 %v2972
  %v3149 = vunpack.c.h.b16 %v2972
  %v3150 = vunpack.c.l.b16 %v2973
  %v3151 = vunpack.c.h.b16 %v2973
  %v3152 = vunpack.c.l.b16 %v2974
  %v3153 = vunpack.c.h.b16 %v2974
  %v3154 = vunpack.c.l.b16 %v2975
  %v3155 = vunpack.c.h.b16 %v2975
  %v3156 = vunpack.c.l.b16 %v2976
  %v3157 = vunpack.c.h.b16 %v2976
  %v3158 = vunpack.c.l.b16 %v2977
  %v3159 = vunpack.c.h.b16 %v2977
  %v3160 = vunpack.c.l.b16 %v2978
  %v3161 = vunpack.c.h.b16 %v2978
  %v3162 = vunpack.c.l.b16 %v2979
  %v3163 = vunpack.c.h.b16 %v2979
  %v3164 = vunpack.c.l.b16 %v2980
  %v3165 = vunpack.c.h.b16 %v2980
  %v3166 = vunpack.c.l.b16 %v2981
  %v3167 = vunpack.c.h.b16 %v2981
  %v3168 = vunpack.c.l.b16 %v2982
  %v3169 = vunpack.c.h.b16 %v2982
  %v3170 = vunpack.c.l.b16 %v2983
  %v3171 = vunpack.c.h.b16 %v2983
  %v3172 = vunpack.c.l.b16 %v2984
  %v3173 = vunpack.c.h.b16 %v2984
  %v3174 = vunpack.c.l.b16 %v2985
  %v3175 = vunpack.c.h.b16 %v2985
  %v3176 = vunpack.c.l.b16 %v2986
  %v3177 = vunpack.c.h.b16 %v2986
  %v3178 = vunpack.c.l.b16 %v2987
  %v3179 = vunpack.c.h.b16 %v2987
  %v3180 = vunpack.c.l.b16 %v2988
  %v3181 = vunpack.c.h.b16 %v2988
  %v3182 = vunpack.c.l.b16 %v2989
  %v3183 = vunpack.c.h.b16 %v2989
  %v3184 = vunpack.c.l.b16 %v2990
  %v3185 = vunpack.c.h.b16 %v2990
  %v3186 = vunpack.c.l.b16 %v2991
  %v3187 = vunpack.c.h.b16 %v2991
  %v3188 = vunpack.c.l.b16 %v2992
  %v3189 = vunpack.c.h.b16 %v2992
  %v3190 = vunpack.c.l.b16 %v2993
  %v3191 = vunpack.c.h.b16 %v2993
  %v3192 = vunpack.c.l.b16 %v2994
  %v3193 = vunpack.c.h.b16 %v2994
  %v3194 = vunpack.c.l.b16 %v2995
  %v3195 = vunpack.c.h.b16 %v2995
  %v3196 = vunpack.c.l.b16 %v2996
  %v3197 = vunpack.c.h.b16 %v2996
  %v3198 = vunpack.c.l.b16 %v2997
  %v3199 = vunpack.c.h.b16 %v2997
  %v3200 = vunpack.c.l.b16 %v2998
  %v3201 = vunpack.c.h.b16 %v2998
  %v3202 = vunpack.c.l.b16 %v2999
  %v3203 = vunpack.c.h.b16 %v2999
  %v3204 = vunpack.c.l.b16 %v3000
  %v3205 = vunpack.c.h.b16 %v3000
  %v3206 = vunpack.c.l.b16 %v3001
  %v3207 = vunpack.c.h.b16 %v3001
  %v3208 = vunpack.c.l.b16 %v3002
  %v3209 = vunpack.c.h.b16 %v3002
  %v3210 = vunpack.c.l.b16 %v3003
  %v3211 = vunpack.c.h.b16 %v3003
  %v3212 = vunpack.c.l.b16 %v3004
  %v3213 = vunpack.c.h.b16 %v3004
  %v3214 = vunpack.c.l.b16 %v3005
  %v3215 = vunpack.c.h.b16 %v3005
  %v3216 = vunpack.c.l.b16 %v3006
  %v3217 = vunpack.c.h.b16 %v3006
  %v3218 = vunpack.c.l.b16 %v3007
  %v3219 = vunpack.c.h.b16 %v3007
  %v3220 = vunpack.c.l.b16 %v3008
  %v3221 = vunpack.c.h.b16 %v3008
  %v3222 = vunpack.c.l.b16 %v3009
  %v3223 = vunpack.c.h.b16 %v3009
  %v3224 = vunpack.c.l.b16 %v3010
  %v3225 = vunpack.c.h.b16 %v3010
  %v3226 = vunpack.c.l.b16 %v3011
  %v3227 = vunpack.c.h.b16 %v3011
  %v3228 = vpack.c.b16 %v3084, %v3084
  %v3229 = vpack.c.b16 %v3085, %v3085
  %v3230 = vpack.c.b16 %v3086, %v3086
  %v3231 = vpack.c.b16 %v3087, %v3087
  %v3232 = vpack.c.b16 %v3088, %v3088
  %v3233 = vpack.c.b16 %v3089, %v3089
  %v3234 = vpack.c.b16 %v3090, %v3090
  %v3235 = vpack.c.b16 %v3091, %v3091
  %v3236 = vpack.c.b16 %v3092, %v3092
  %v3237 = vpack.c.b16 %v3093, %v3093
  %v3238 = vpack.c.b16 %v3094, %v3094
  %v3239 = vpack.c.b16 %v3095, %v3095
  %v3240 = vpack.c.b16 %v3096, %v3096
  %v3241 = vpack.c.b16 %v3097, %v3097
  %v3242 = vpack.c.b16 %v3098, %v3098
  %v3243 = vpack.c.b16 %v3099, %v3099
  %v3244 = vpack.c.b16 %v3100, %v3100
  %v3245 = vpack.c.b16 %v3101, %v3101
  %v3246 = vpack.c.b16 %v3102, %v3102
  %v3247 = vpack.c.b16 %v3103, %v3103
  %v3248 = vpack.c.b16 %v3104, %v3104
  %v3249 = vpack.c.b16 %v3105, %v3105
  %v3250 = vpack.c.b16 %v3106, %v3106
  %v3251 = vpack.c.b16 %v3107, %v3107
  %v3252 = vpack.c.b16 %v3108, %v3108
  %v3253 = vpack.c.b16 %v3109, %v3109
  %v3254 = vpack.c.b16 %v3110, %v3110
  %v3255 = vpack.c.b16 %v3111, %v3111
  %v3256 = vpack.c.b16 %v3112, %v3112
  %v3257 = vpack.c.b16 %v3113, %v3113
  %v3258 = vpack.c.b16 %v3114, %v3114
  %v3259 = vpack.c.b16 %v3115, %v3115
  %v3260 = vpack.c.b16 %v3116, %v3116
  %v3261 = vpack.c.b16 %v3117, %v3117
  %v3262 = vpack.c.b16 %v3118, %v3118
  %v3263 = vpack.c.b16 %v3119, %v3119
  %v3264 = vpack.c.b16 %v3120, %v3120
  %v3265 = vpack.c.b16 %v3121, %v3121
  %v3266 = vpack.c.b16 %v3122, %v3122
  %v3267 = vpack.c.b16 %v3123, %v3123
  %v3268 = vpack.c.b16 %v3124, %v3124
  %v3269 = vpack.c.b16 %v3125, %v3125
  %v3270 = vpack.c.b16 %v3126, %v3126
  %v3271 = vpack.c.b16 %v3127, %v3127
  %v3272 = vpack.c.b16 %v3128, %v3128
  %v3273 = vpack.c.b16 %v3129, %v3129
  %v3274 = vpack.c.b16 %v3130, %v3130
  %v3275 = vpack.c.b16 %v3131, %v3131
  %v3276 = vpack.c.b16 %v3132, %v3132
  %v3277 = vpack.c.b16 %v3133, %v3133
  %v3278 = vpack.c.b16 %v3134, %v3134
  %v3279 = vpack.c.b16 %v3135, %v3135
  %v3280 = vpack.c.b16 %v3136, %v3136
  %v3281 = vpack.c.b16 %v3137, %v3137
  %v3282 = vpack.c.b16 %v3138, %v3138
  %v3283 = vpack.c.b16 %v3139, %v3139
  %v3284 = vpack.c.b16 %v3140, %v3140
  %v3285 = vpack.c.b16 %v3141, %v3141
  %v3286 = vpack.c.b16 %v3142, %v3142
  %v3287 = vpack.c.b16 %v3143, %v3143
  %v3288 = vpack.c.b16 %v3144, %v3144
  %v3289 = vpack.c.b16 %v3145, %v3145
  %v3290 = vpack.c.b16 %v3146, %v3146
  %v3291 = vpack.c.b16 %v3147, %v3147
  %v3292 = vpack.c.b16 %v3148, %v3148
  %v3293 = vpack.c.b16 %v3149, %v3149
  %v3294 = vpack.c.b16 %v3150, %v3150
  %v3295 = vpack.c.b16 %v3151, %v3151
  %v3296 = vpack.c.b16 %v3152, %v3152
  %v3297 = vpack.c.b16 %v3153, %v3153
  %v3298 = vpack.c.b16 %v3154, %v3154
  %v3299 = vpack.c.b16 %v3155, %v3155
  %v3300 = vpack.c.b16 %v3156, %v3156
  %v3301 = vpack.c.b16 %v3157, %v3157
  %v3302 = vpack.c.b16 %v3158, %v3158
  %v3303 = vpack.c.b16 %v3159, %v3159
  %v3304 = vpack.c.b16 %v3160, %v3160
  %v3305 = vpack.c.b16 %v3161, %v3161
  %v3306 = vpack.c.b16 %v3162, %v3162
  %v3307 = vpack.c.b16 %v3163, %v3163
  %v3308 = vpack.c.b16 %v3164, %v3164
  %v3309 = vpack.c.b16 %v3165, %v3165
  %v3310 = vpack.c.b16 %v3166, %v3166
  %v3311 = vpack.c.b16 %v3167, %v3167
  %v3312 = vpack.c.b16 %v3168, %v3168
  %v3313 = vpack.c.b16 %v3169, %v3169
  %v3314 = vpack.c.b16 %v3170, %v3170
  %v3315 = vpack.c.b16 %v3171, %v3171
  %v3316 = vpack.c.b16 %v3172, %v3172
  %v3317 = vpack.c.b16 %v3173, %v3173
  %v3318 = vpack.c.b16 %v3174, %v3174
  %v3319 = vpack.c.b16 %v3175, %v3175
  %v3320 = vpack.c.b16 %v3176, %v3176
  %v3321 = vpack.c.b16 %v3177, %v3177
  %v3322 = vpack.c.b16 %v3178, %v3178
  %v3323 = vpack.c.b16 %v3179, %v3179
  %v3324 = vpack.c.b16 %v3180, %v3180
  %v3325 = vpack.c.b16 %v3181, %v3181
  %v3326 = vpack.c.b16 %v3182, %v3182
  %v3327 = vpack.c.b16 %v3183, %v3183
  %v3328 = vpack.c.b16 %v3184, %v3184
  %v3329 = vpack.c.b16 %v3185, %v3185
  %v3330 = vpack.c.b16 %v3186, %v3186
  %v3331 = vpack.c.b16 %v3187, %v3187
  %v3332 = vpack.c.b16 %v3188, %v3188
  %v3333 = vpack.c.b16 %v3189, %v3189
  %v3334 = vpack.c.b16 %v3190, %v3190
  %v3335 = vpack.c.b16 %v3191, %v3191
  %v3336 = vpack.c.b16 %v3192, %v3192
  %v3337 = vpack.c.b16 %v3193, %v3193
  %v3338 = vpack.c.b16 %v3194, %v3194
  %v3339 = vpack.c.b16 %v3195, %v3195
  %v3340 = vpack.c.b16 %v3196, %v3196
  %v3341 = vpack.c.b16 %v3197, %v3197
  %v3342 = vpack.c.b16 %v3198, %v3198
  %v3343 = vpack.c.b16 %v3199, %v3199
  %v3344 = vpack.c.b16 %v3200, %v3200
  %v3345 = vpack.c.b16 %v3201, %v3201
  %v3346 = vpack.c.b16 %v3202, %v3202
  %v3347 = vpack.c.b16 %v3203, %v3203
  %v3348 = vpack.c.b16 %v3204, %v3204
  %v3349 = vpack.c.b16 %v3205, %v3205
  %v3350 = vpack.c.b16 %v3206, %v3206
  %v3351 = vpack.c.b16 %v3207, %v3207
  %v3352 = vpack.c.b16 %v3208, %v3208
  %v3353 = vpack.c.b16 %v3209, %v3209
  %v3354 = vpack.c.b16 %v3210, %v3210
  %v3355 = vpack.c.b16 %v3211, %v3211
  %v3356 = vpack.c.b16 %v3212, %v3212
  %v3357 = vpack.c.b16 %v3213, %v3213
  %v3358 = vpack.c.b16 %v3214, %v3214
  %v3359 = vpack.c.b16 %v3215, %v3215
  %v3360 = vpack.c.b16 %v3216, %v3216
  %v3361 = vpack.c.b16 %v3217, %v3217
  %v3362 = vpack.c.b16 %v3218, %v3218
  %v3363 = vpack.c.b16 %v3219, %v3219
  %v3364 = vpack.c.b16 %v3220, %v3220
  %v3365 = vpack.c.b16 %v3221, %v3221
  %v3366 = vpack.c.b16 %v3222, %v3222
  %v3367 = vpack.c.b16 %v3223, %v3223
  %v3368 = vpack.c.b16 %v3224, %v3224
  %v3369 = vpack.c.b16 %v3225, %v3225
  %v3370 = vpack.c.b16 %v3226, %v3226
  %v3371 = vpack.c.b16 %v3227, %v3227
  %3516 = vst [vmem:[%s7] sm:$0xf] %v3228
  %3517 = vst [vmem:[%s7 + $0x4] sm:$0xf] %v3229
  %3518 = vst [vmem:[%s7 + $0x8] sm:$0xf] %v3230
  %3519 = vst [vmem:[%s7 + $0xc] sm:$0xf] %v3231
  %3520 = vst [vmem:[%s7 + $0x10] sm:$0xf] %v3232
  %3521 = vst [vmem:[%s7 + $0x14] sm:$0xf] %v3233
  %3522 = vst [vmem:[%s7 + $0x18] sm:$0xf] %v3234
  %3523 = vst [vmem:[%s7 + $0x1c] sm:$0xf] %v3235
  %3524 = vst [vmem:[%s7 + $0x20] sm:$0xf] %v3236
  %3525 = vst [vmem:[%s7 + $0x24] sm:$0xf] %v3237
  %3526 = vst [vmem:[%s7 + $0x28] sm:$0xf] %v3238
  %3527 = vst [vmem:[%s7 + $0x2c] sm:$0xf] %v3239
  %3528 = vst [vmem:[%s7 + $0x30] sm:$0xf] %v3240
  %3529 = vst [vmem:[%s7 + $0x34] sm:$0xf] %v3241
  %3530 = vst [vmem:[%s7 + $0x38] sm:$0xf] %v3242
  %3531 = vst [vmem:[%s7 + $0x3c] sm:$0xf] %v3243
  %3532 = vst [vmem:[%s7 + $0x40] sm:$0xf] %v3244
  %3533 = vst [vmem:[%s7 + $0x44] sm:$0xf] %v3245
  %3534 = vst [vmem:[%s7 + $0x48] sm:$0xf] %v3246
  %3535 = vst [vmem:[%s7 + $0x4c] sm:$0xf] %v3247
  %3536 = vst [vmem:[%s7 + $0x50] sm:$0xf] %v3248
  %3537 = vst [vmem:[%s7 + $0x54] sm:$0xf] %v3249
  %3538 = vst [vmem:[%s7 + $0x58] sm:$0xf] %v3250
  %3539 = vst [vmem:[%s7 + $0x5c] sm:$0xf] %v3251
  %3540 = vst [vmem:[%s7 + $0x60] sm:$0xf] %v3252
  %3541 = vst [vmem:[%s7 + $0x64] sm:$0xf] %v3253
  %3542 = vst [vmem:[%s7 + $0x68] sm:$0xf] %v3254
  %3543 = vst [vmem:[%s7 + $0x6c] sm:$0xf] %v3255
  %3544 = vst [vmem:[%s7 + $0x70] sm:$0xf] %v3256
  %3545 = vst [vmem:[%s7 + $0x74] sm:$0xf] %v3257
  %3546 = vst [vmem:[%s7 + $0x78] sm:$0xf] %v3258
  %3547 = vst [vmem:[%s7 + $0x7c] sm:$0xf] %v3259
  %3548 = vst [vmem:[%s7 + $0x80] sm:$0xf] %v3260
  %3549 = vst [vmem:[%s7 + $0x84] sm:$0xf] %v3261
  %3550 = vst [vmem:[%s7 + $0x88] sm:$0xf] %v3262
  %3551 = vst [vmem:[%s7 + $0x8c] sm:$0xf] %v3263
  %3552 = vst [vmem:[%s7 + $0x90] sm:$0xf] %v3264
  %3553 = vst [vmem:[%s7 + $0x94] sm:$0xf] %v3265
  %3554 = vst [vmem:[%s7 + $0x98] sm:$0xf] %v3266
  %3555 = vst [vmem:[%s7 + $0x9c] sm:$0xf] %v3267
  %3556 = vst [vmem:[%s7 + $0xa0] sm:$0xf] %v3268
  %3557 = vst [vmem:[%s7 + $0xa4] sm:$0xf] %v3269
  %3558 = vst [vmem:[%s7 + $0xa8] sm:$0xf] %v3270
  %3559 = vst [vmem:[%s7 + $0xac] sm:$0xf] %v3271
  %3560 = vst [vmem:[%s7 + $0xb0] sm:$0xf] %v3272
  %3561 = vst [vmem:[%s7 + $0xb4] sm:$0xf] %v3273
  %3562 = vst [vmem:[%s7 + $0xb8] sm:$0xf] %v3274
  %3563 = vst [vmem:[%s7 + $0xbc] sm:$0xf] %v3275
  %3564 = vst [vmem:[%s7 + $0xc0] sm:$0xf] %v3276
  %3565 = vst [vmem:[%s7 + $0xc4] sm:$0xf] %v3277
  %3566 = vst [vmem:[%s7 + $0xc8] sm:$0xf] %v3278
  %3567 = vst [vmem:[%s7 + $0xcc] sm:$0xf] %v3279
  %3568 = vst [vmem:[%s7 + $0xd0] sm:$0xf] %v3280
  %3569 = vst [vmem:[%s7 + $0xd4] sm:$0xf] %v3281
  %3570 = vst [vmem:[%s7 + $0xd8] sm:$0xf] %v3282
  %3571 = vst [vmem:[%s7 + $0xdc] sm:$0xf] %v3283
  %3572 = vst [vmem:[%s7 + $0xe0] sm:$0xf] %v3284
  %3573 = vst [vmem:[%s7 + $0xe4] sm:$0xf] %v3285
  %3574 = vst [vmem:[%s7 + $0xe8] sm:$0xf] %v3286
  %3575 = vst [vmem:[%s7 + $0xec] sm:$0xf] %v3287
  %3576 = vst [vmem:[%s7 + $0xf0] sm:$0xf] %v3288
  %3577 = vst [vmem:[%s7 + $0xf4] sm:$0xf] %v3289
  %3578 = vst [vmem:[%s7 + $0xf8] sm:$0xf] %v3290
  %3579 = vst [vmem:[%s7 + $0xfc] sm:$0xf] %v3291
  %3580 = vst [vmem:[%s7 + $0x100] sm:$0xf] %v3292
  %3581 = vst [vmem:[%s7 + $0x104] sm:$0xf] %v3293
  %3582 = vst [vmem:[%s7 + $0x108] sm:$0xf] %v3294
  %3583 = vst [vmem:[%s7 + $0x10c] sm:$0xf] %v3295
  %3584 = vst [vmem:[%s7 + $0x110] sm:$0xf] %v3296
  %3585 = vst [vmem:[%s7 + $0x114] sm:$0xf] %v3297
  %3586 = vst [vmem:[%s7 + $0x118] sm:$0xf] %v3298
  %3587 = vst [vmem:[%s7 + $0x11c] sm:$0xf] %v3299
  %3588 = vst [vmem:[%s7 + $0x120] sm:$0xf] %v3300
  %3589 = vst [vmem:[%s7 + $0x124] sm:$0xf] %v3301
  %3590 = vst [vmem:[%s7 + $0x128] sm:$0xf] %v3302
  %3591 = vst [vmem:[%s7 + $0x12c] sm:$0xf] %v3303
  %3592 = vst [vmem:[%s7 + $0x130] sm:$0xf] %v3304
  %3593 = vst [vmem:[%s7 + $0x134] sm:$0xf] %v3305
  %3594 = vst [vmem:[%s7 + $0x138] sm:$0xf] %v3306
  %3595 = vst [vmem:[%s7 + $0x13c] sm:$0xf] %v3307
  %3596 = vst [vmem:[%s7 + $0x140] sm:$0xf] %v3308
  %3597 = vst [vmem:[%s7 + $0x144] sm:$0xf] %v3309
  %3598 = vst [vmem:[%s7 + $0x148] sm:$0xf] %v3310
  %3599 = vst [vmem:[%s7 + $0x14c] sm:$0xf] %v3311
  %3600 = vst [vmem:[%s7 + $0x150] sm:$0xf] %v3312
  %3601 = vst [vmem:[%s7 + $0x154] sm:$0xf] %v3313
  %3602 = vst [vmem:[%s7 + $0x158] sm:$0xf] %v3314
  %3603 = vst [vmem:[%s7 + $0x15c] sm:$0xf] %v3315
  %3604 = vst [vmem:[%s7 + $0x160] sm:$0xf] %v3316
  %3605 = vst [vmem:[%s7 + $0x164] sm:$0xf] %v3317
  %3606 = vst [vmem:[%s7 + $0x168] sm:$0xf] %v3318
  %3607 = vst [vmem:[%s7 + $0x16c] sm:$0xf] %v3319
  %3608 = vst [vmem:[%s7 + $0x170] sm:$0xf] %v3320
  %3609 = vst [vmem:[%s7 + $0x174] sm:$0xf] %v3321
  %3610 = vst [vmem:[%s7 + $0x178] sm:$0xf] %v3322
  %3611 = vst [vmem:[%s7 + $0x17c] sm:$0xf] %v3323
  %3612 = vst [vmem:[%s7 + $0x180] sm:$0xf] %v3324
  %3613 = vst [vmem:[%s7 + $0x184] sm:$0xf] %v3325
  %3614 = vst [vmem:[%s7 + $0x188] sm:$0xf] %v3326
  %3615 = vst [vmem:[%s7 + $0x18c] sm:$0xf] %v3327
  %3616 = vst [vmem:[%s7 + $0x190] sm:$0xf] %v3328
  %3617 = vst [vmem:[%s7 + $0x194] sm:$0xf] %v3329
  %3618 = vst [vmem:[%s7 + $0x198] sm:$0xf] %v3330
  %3619 = vst [vmem:[%s7 + $0x19c] sm:$0xf] %v3331
  %3620 = vst [vmem:[%s7 + $0x1a0] sm:$0xf] %v3332
  %3621 = vst [vmem:[%s7 + $0x1a4] sm:$0xf] %v3333
  %3622 = vst [vmem:[%s7 + $0x1a8] sm:$0xf] %v3334
  %3623 = vst [vmem:[%s7 + $0x1ac] sm:$0xf] %v3335
  %3624 = vst [vmem:[%s7 + $0x1b0] sm:$0xf] %v3336
  %3625 = vst [vmem:[%s7 + $0x1b4] sm:$0xf] %v3337
  %3626 = vst [vmem:[%s7 + $0x1b8] sm:$0xf] %v3338
  %3627 = vst [vmem:[%s7 + $0x1bc] sm:$0xf] %v3339
  %3628 = vst [vmem:[%s7 + $0x1c0] sm:$0xf] %v3340
  %3629 = vst [vmem:[%s7 + $0x1c4] sm:$0xf] %v3341
  %3630 = vst [vmem:[%s7 + $0x1c8] sm:$0xf] %v3342
  %3631 = vst [vmem:[%s7 + $0x1cc] sm:$0xf] %v3343
  %3632 = vst [vmem:[%s7 + $0x1d0] sm:$0xf] %v3344
  %3633 = vst [vmem:[%s7 + $0x1d4] sm:$0xf] %v3345
  %3634 = vst [vmem:[%s7 + $0x1d8] sm:$0xf] %v3346
  %3635 = vst [vmem:[%s7 + $0x1dc] sm:$0xf] %v3347
  %3636 = vst [vmem:[%s7 + $0x1e0] sm:$0xf] %v3348
  %3637 = vst [vmem:[%s7 + $0x1e4] sm:$0xf] %v3349
  %3638 = vst [vmem:[%s7 + $0x1e8] sm:$0xf] %v3350
  %3639 = vst [vmem:[%s7 + $0x1ec] sm:$0xf] %v3351
  %3640 = vst [vmem:[%s7 + $0x1f0] sm:$0xf] %v3352
  %3641 = vst [vmem:[%s7 + $0x1f4] sm:$0xf] %v3353
  %3642 = vst [vmem:[%s7 + $0x1f8] sm:$0xf] %v3354
  %3643 = vst [vmem:[%s7 + $0x1fc] sm:$0xf] %v3355
  %3644 = vst [vmem:[%s7 + $0x200] sm:$0xf] %v3356
  %3645 = vst [vmem:[%s7 + $0x204] sm:$0xf] %v3357
  %3646 = vst [vmem:[%s7 + $0x208] sm:$0xf] %v3358
  %3647 = vst [vmem:[%s7 + $0x20c] sm:$0xf] %v3359
  %3648 = vst [vmem:[%s7 + $0x210] sm:$0xf] %v3360
  %3649 = vst [vmem:[%s7 + $0x214] sm:$0xf] %v3361
  %3650 = vst [vmem:[%s7 + $0x218] sm:$0xf] %v3362
  %3651 = vst [vmem:[%s7 + $0x21c] sm:$0xf] %v3363
  %3652 = vst [vmem:[%s7 + $0x220] sm:$0xf] %v3364
  %3653 = vst [vmem:[%s7 + $0x224] sm:$0xf] %v3365
  %3654 = vst [vmem:[%s7 + $0x228] sm:$0xf] %v3366
  %3655 = vst [vmem:[%s7 + $0x22c] sm:$0xf] %v3367
  %3656 = vst [vmem:[%s7 + $0x230] sm:$0xf] %v3368
  %3657 = vst [vmem:[%s7 + $0x234] sm:$0xf] %v3369
  %3658 = vst [vmem:[%s7 + $0x238] sm:$0xf] %v3370
  %3659 = vst [vmem:[%s7 + $0x23c] sm:$0xf] %v3371
  %v3660 = vlog2.pop %v2364
  %v3661 = vmul.f32 %v3660, 0.6931472
  %v3662 = vlog2.pop %v2365
  %v3663 = vmul.f32 %v3662, 0.6931472
  %v3664 = vlog2.pop %v2366
  %v3665 = vmul.f32 %v3664, 0.6931472
  %v3666 = vlog2.pop %v2367
  %v3667 = vmul.f32 %v3666, 0.6931472
  %v3668 = vlog2.pop %v2368
  %v3669 = vmul.f32 %v3668, 0.6931472
  %v3670 = vlog2.pop %v2369
  %v3671 = vmul.f32 %v3670, 0.6931472
  %v3672 = vlog2.pop %v2370
  %v3673 = vmul.f32 %v3672, 0.6931472
  %v3674 = vlog2.pop %v2371
  %v3675 = vmul.f32 %v3674, 0.6931472
  %v3676 = vlog2.pop %v2372
  %v3677 = vmul.f32 %v3676, 0.6931472
  %v3678 = vlog2.pop %v2373
  %v3679 = vmul.f32 %v3678, 0.6931472
  %v3680 = vlog2.pop %v2374
  %v3681 = vmul.f32 %v3680, 0.6931472
  %v3682 = vlog2.pop %v2375
  %v3683 = vmul.f32 %v3682, 0.6931472
  %v3684 = vlog2.pop %v2376
  %v3685 = vmul.f32 %v3684, 0.6931472
  %v3686 = vlog2.pop %v2377
  %v3687 = vmul.f32 %v3686, 0.6931472
  %v3688 = vlog2.pop %v2378
  %v3689 = vmul.f32 %v3688, 0.6931472
  %v3690 = vlog2.pop %v2379
  %v3691 = vmul.f32 %v3690, 0.6931472
  %v3692 = vlog2.pop %v2380
  %v3693 = vmul.f32 %v3692, 0.6931472
  %v3694 = vlog2.pop %v2381
  %v3695 = vmul.f32 %v3694, 0.6931472
  %v3696 = vlog2.pop %v2382
  %v3697 = vmul.f32 %v3696, 0.6931472
  %v3698 = vlog2.pop %v2383
  %v3699 = vmul.f32 %v3698, 0.6931472
  %v3700 = vlog2.pop %v2384
  %v3701 = vmul.f32 %v3700, 0.6931472
  %v3702 = vlog2.pop %v2385
  %v3703 = vmul.f32 %v3702, 0.6931472
  %v3704 = vlog2.pop %v2386
  %v3705 = vmul.f32 %v3704, 0.6931472
  %v3706 = vlog2.pop %v2387
  %v3707 = vmul.f32 %v3706, 0.6931472
  %v3708 = vlog2.pop %v2388
  %v3709 = vmul.f32 %v3708, 0.6931472
  %v3710 = vlog2.pop %v2389
  %v3711 = vmul.f32 %v3710, 0.6931472
  %v3712 = vlog2.pop %v2390
  %v3713 = vmul.f32 %v3712, 0.6931472
  %v3714 = vlog2.pop %v2391
  %v3715 = vmul.f32 %v3714, 0.6931472
  %v3716 = vlog2.pop %v2392
  %v3717 = vmul.f32 %v3716, 0.6931472
  %v3718 = vlog2.pop %v2393
  %v3719 = vmul.f32 %v3718, 0.6931472
  %v3720 = vlog2.pop %v2394
  %v3721 = vmul.f32 %v3720, 0.6931472
  %v3722 = vlog2.pop %v2395
  %v3723 = vmul.f32 %v3722, 0.6931472
  %v3724 = vlog2.pop %v2396
  %v3725 = vmul.f32 %v3724, 0.6931472
  %v3726 = vlog2.pop %v2397
  %v3727 = vmul.f32 %v3726, 0.6931472
  %v3728 = vlog2.pop %v2398
  %v3729 = vmul.f32 %v3728, 0.6931472
  %v3730 = vlog2.pop %v2399
  %v3731 = vmul.f32 %v3730, 0.6931472
  %v3732 = vlog2.pop %v2400
  %v3733 = vmul.f32 %v3732, 0.6931472
  %v3734 = vlog2.pop %v2401
  %v3735 = vmul.f32 %v3734, 0.6931472
  %v3736 = vlog2.pop %v2402
  %v3737 = vmul.f32 %v3736, 0.6931472
  %v3738 = vlog2.pop %v2403
  %v3739 = vmul.f32 %v3738, 0.6931472
  %v3740 = vlog2.pop %v2404
  %v3741 = vmul.f32 %v3740, 0.6931472
  %v3742 = vlog2.pop %v2405
  %v3743 = vmul.f32 %v3742, 0.6931472
  %v3744 = vlog2.pop %v2406
  %v3745 = vmul.f32 %v3744, 0.6931472
  %v3746 = vlog2.pop %v2407
  %v3747 = vmul.f32 %v3746, 0.6931472
  %v3748 = vlog2.pop %v2408
  %v3749 = vmul.f32 %v3748, 0.6931472
  %v3750 = vlog2.pop %v2409
  %v3751 = vmul.f32 %v3750, 0.6931472
  %v3752 = vlog2.pop %v2410
  %v3753 = vmul.f32 %v3752, 0.6931472
  %v3754 = vlog2.pop %v2411
  %v3755 = vmul.f32 %v3754, 0.6931472
  %v3756 = vlog2.pop %v2412
  %v3757 = vmul.f32 %v3756, 0.6931472
  %v3758 = vlog2.pop %v2413
  %v3759 = vmul.f32 %v3758, 0.6931472
  %v3760 = vlog2.pop %v2414
  %v3761 = vmul.f32 %v3760, 0.6931472
  %v3762 = vlog2.pop %v2415
  %v3763 = vmul.f32 %v3762, 0.6931472
  %v3764 = vlog2.pop %v2416
  %v3765 = vmul.f32 %v3764, 0.6931472
  %v3766 = vlog2.pop %v2417
  %v3767 = vmul.f32 %v3766, 0.6931472
  %v3768 = vlog2.pop %v2418
  %v3769 = vmul.f32 %v3768, 0.6931472
  %v3770 = vlog2.pop %v2419
  %v3771 = vmul.f32 %v3770, 0.6931472
  %v3772 = vlog2.pop %v2420
  %v3773 = vmul.f32 %v3772, 0.6931472
  %v3774 = vlog2.pop %v2421
  %v3775 = vmul.f32 %v3774, 0.6931472
  %v3776 = vlog2.pop %v2422
  %v3777 = vmul.f32 %v3776, 0.6931472
  %v3778 = vlog2.pop %v2423
  %v3779 = vmul.f32 %v3778, 0.6931472
  %v3780 = vlog2.pop %v2424
  %v3781 = vmul.f32 %v3780, 0.6931472
  %v3782 = vlog2.pop %v2425
  %v3783 = vmul.f32 %v3782, 0.6931472
  %v3784 = vlog2.pop %v2426
  %v3785 = vmul.f32 %v3784, 0.6931472
  %v3786 = vlog2.pop %v2427
  %v3787 = vmul.f32 %v3786, 0.6931472
  %v3788 = vlog2.pop %v2428
  %v3789 = vmul.f32 %v3788, 0.6931472
  %v3790 = vlog2.pop %v2429
  %v3791 = vmul.f32 %v3790, 0.6931472
  %v3792 = vlog2.pop %v2430
  %v3793 = vmul.f32 %v3792, 0.6931472
  %v3794 = vlog2.pop %v2431
  %v3795 = vmul.f32 %v3794, 0.6931472
  %v3796 = vlog2.pop %v2432
  %v3797 = vmul.f32 %v3796, 0.6931472
  %v3798 = vlog2.pop %v2433
  %v3799 = vmul.f32 %v3798, 0.6931472
  %v3800 = vlog2.pop %v2434
  %v3801 = vmul.f32 %v3800, 0.6931472
  %v3802 = vlog2.pop %v2435
  %v3803 = vmul.f32 %v3802, 0.6931472
  %v3804 = vlog2.pop %v2436
  %v3805 = vmul.f32 %v3804, 0.6931472
  %v3806 = vlog2.pop %v2437
  %v3807 = vmul.f32 %v3806, 0.6931472
  %v3808 = vlog2.pop %v2438
  %v3809 = vmul.f32 %v3808, 0.6931472
  %v3810 = vlog2.pop %v2439
  %v3811 = vmul.f32 %v3810, 0.6931472
  %v3812 = vlog2.pop %v2440
  %v3813 = vmul.f32 %v3812, 0.6931472
  %v3814 = vlog2.pop %v2441
  %v3815 = vmul.f32 %v3814, 0.6931472
  %v3816 = vlog2.pop %v2442
  %v3817 = vmul.f32 %v3816, 0.6931472
  %v3818 = vlog2.pop %v2443
  %v3819 = vmul.f32 %v3818, 0.6931472
  %v3820 = vlog2.pop %v2444
  %v3821 = vmul.f32 %v3820, 0.6931472
  %v3822 = vlog2.pop %v2445
  %v3823 = vmul.f32 %v3822, 0.6931472
  %v3824 = vlog2.pop %v2446
  %v3825 = vmul.f32 %v3824, 0.6931472
  %v3826 = vlog2.pop %v2447
  %v3827 = vmul.f32 %v3826, 0.6931472
  %v3828 = vlog2.pop %v2448
  %v3829 = vmul.f32 %v3828, 0.6931472
  %v3830 = vlog2.pop %v2449
  %v3831 = vmul.f32 %v3830, 0.6931472
  %v3832 = vlog2.pop %v2450
  %v3833 = vmul.f32 %v3832, 0.6931472
  %v3834 = vlog2.pop %v2451
  %v3835 = vmul.f32 %v3834, 0.6931472
  %v3836 = vlog2.pop %v2452
  %v3837 = vmul.f32 %v3836, 0.6931472
  %v3838 = vlog2.pop %v2453
  %v3839 = vmul.f32 %v3838, 0.6931472
  %v3840 = vlog2.pop %v2454
  %v3841 = vmul.f32 %v3840, 0.6931472
  %v3842 = vlog2.pop %v2455
  %v3843 = vmul.f32 %v3842, 0.6931472
  %v3844 = vlog2.pop %v2456
  %v3845 = vmul.f32 %v3844, 0.6931472
  %v3846 = vlog2.pop %v2457
  %v3847 = vmul.f32 %v3846, 0.6931472
  %v3848 = vlog2.pop %v2458
  %v3849 = vmul.f32 %v3848, 0.6931472
  %v3850 = vlog2.pop %v2459
  %v3851 = vmul.f32 %v3850, 0.6931472
  %v3852 = vlog2.pop %v2460
  %v3853 = vmul.f32 %v3852, 0.6931472
  %v3854 = vlog2.pop %v2461
  %v3855 = vmul.f32 %v3854, 0.6931472
  %v3856 = vlog2.pop %v2462
  %v3857 = vmul.f32 %v3856, 0.6931472
  %v3858 = vlog2.pop %v2463
  %v3859 = vmul.f32 %v3858, 0.6931472
  %v3860 = vlog2.pop %v2464
  %v3861 = vmul.f32 %v3860, 0.6931472
  %v3862 = vlog2.pop %v2465
  %v3863 = vmul.f32 %v3862, 0.6931472
  %v3864 = vlog2.pop %v2466
  %v3865 = vmul.f32 %v3864, 0.6931472
  %v3866 = vlog2.pop %v2467
  %v3867 = vmul.f32 %v3866, 0.6931472
  %v3868 = vlog2.pop %v2468
  %v3869 = vmul.f32 %v3868, 0.6931472
  %v3870 = vlog2.pop %v2469
  %v3871 = vmul.f32 %v3870, 0.6931472
  %v3872 = vlog2.pop %v2470
  %v3873 = vmul.f32 %v3872, 0.6931472
  %v3874 = vlog2.pop %v2471
  %v3875 = vmul.f32 %v3874, 0.6931472
  %v3876 = vlog2.pop %v2472
  %v3877 = vmul.f32 %v3876, 0.6931472
  %v3878 = vlog2.pop %v2473
  %v3879 = vmul.f32 %v3878, 0.6931472
  %v3880 = vlog2.pop %v2474
  %v3881 = vmul.f32 %v3880, 0.6931472
  %v3882 = vlog2.pop %v2475
  %v3883 = vmul.f32 %v3882, 0.6931472
  %v3884 = vlog2.pop %v2476
  %v3885 = vmul.f32 %v3884, 0.6931472
  %v3886 = vlog2.pop %v2477
  %v3887 = vmul.f32 %v3886, 0.6931472
  %v3888 = vlog2.pop %v2478
  %v3889 = vmul.f32 %v3888, 0.6931472
  %v3890 = vlog2.pop %v2479
  %v3891 = vmul.f32 %v3890, 0.6931472
  %v3892 = vlog2.pop %v2480
  %v3893 = vmul.f32 %v3892, 0.6931472
  %v3894 = vlog2.pop %v2481
  %v3895 = vmul.f32 %v3894, 0.6931472
  %v3896 = vlog2.pop %v2482
  %v3897 = vmul.f32 %v3896, 0.6931472
  %v3898 = vlog2.pop %v2483
  %v3899 = vmul.f32 %v3898, 0.6931472
  %v3900 = vlog2.pop %v2484
  %v3901 = vmul.f32 %v3900, 0.6931472
  %v3902 = vlog2.pop %v2485
  %v3903 = vmul.f32 %v3902, 0.6931472
  %v3904 = vlog2.pop %v2486
  %v3905 = vmul.f32 %v3904, 0.6931472
  %v3906 = vlog2.pop %v2487
  %v3907 = vmul.f32 %v3906, 0.6931472
  %v3908 = vlog2.pop %v2488
  %v3909 = vmul.f32 %v3908, 0.6931472
  %v3910 = vlog2.pop %v2489
  %v3911 = vmul.f32 %v3910, 0.6931472
  %v3912 = vlog2.pop %v2490
  %v3913 = vmul.f32 %v3912, 0.6931472
  %v3914 = vlog2.pop %v2491
  %v3915 = vmul.f32 %v3914, 0.6931472
  %v3916 = vlog2.pop %v2492
  %v3917 = vmul.f32 %v3916, 0.6931472
  %v3918 = vlog2.pop %v2493
  %v3919 = vmul.f32 %v3918, 0.6931472
  %v3920 = vlog2.pop %v2494
  %v3921 = vmul.f32 %v3920, 0.6931472
  %v3922 = vlog2.pop %v2495
  %v3923 = vmul.f32 %v3922, 0.6931472
  %v3924 = vlog2.pop %v2496
  %v3925 = vmul.f32 %v3924, 0.6931472
  %v3926 = vlog2.pop %v2497
  %v3927 = vmul.f32 %v3926, 0.6931472
  %v3928 = vlog2.pop %v2498
  %v3929 = vmul.f32 %v3928, 0.6931472
  %v3930 = vlog2.pop %v2499
  %v3931 = vmul.f32 %v3930, 0.6931472
  %v3932 = vlog2.pop %v2500
  %v3933 = vmul.f32 %v3932, 0.6931472
  %v3934 = vlog2.pop %v2501
  %v3935 = vmul.f32 %v3934, 0.6931472
  %v3936 = vlog2.pop %v2502
  %v3937 = vmul.f32 %v3936, 0.6931472
  %v3938 = vlog2.pop %v2503
  %v3939 = vmul.f32 %v3938, 0.6931472
  %v3940 = vlog2.pop %v2504
  %v3941 = vmul.f32 %v3940, 0.6931472
  %v3942 = vlog2.pop %v2505
  %v3943 = vmul.f32 %v3942, 0.6931472
  %v3944 = vlog2.pop %v2506
  %v3945 = vmul.f32 %v3944, 0.6931472
  %v3946 = vlog2.pop %v2507
  %v3947 = vmul.f32 %v3946, 0.6931472
  %v3948 = vsub.f32 0.0, %v3661
  %v3949 = vsub.f32 0.0, %v3663
  %v3950 = vsub.f32 0.0, %v3665
  %v3951 = vsub.f32 0.0, %v3667
  %v3952 = vsub.f32 0.0, %v3669
  %v3953 = vsub.f32 0.0, %v3671
  %v3954 = vsub.f32 0.0, %v3673
  %v3955 = vsub.f32 0.0, %v3675
  %v3956 = vsub.f32 0.0, %v3677
  %v3957 = vsub.f32 0.0, %v3679
  %v3958 = vsub.f32 0.0, %v3681
  %v3959 = vsub.f32 0.0, %v3683
  %v3960 = vsub.f32 0.0, %v3685
  %v3961 = vsub.f32 0.0, %v3687
  %v3962 = vsub.f32 0.0, %v3689
  %v3963 = vsub.f32 0.0, %v3691
  %v3964 = vsub.f32 0.0, %v3693
  %v3965 = vsub.f32 0.0, %v3695
  %v3966 = vsub.f32 0.0, %v3697
  %v3967 = vsub.f32 0.0, %v3699
  %v3968 = vsub.f32 0.0, %v3701
  %v3969 = vsub.f32 0.0, %v3703
  %v3970 = vsub.f32 0.0, %v3705
  %v3971 = vsub.f32 0.0, %v3707
  %v3972 = vsub.f32 0.0, %v3709
  %v3973 = vsub.f32 0.0, %v3711
  %v3974 = vsub.f32 0.0, %v3713
  %v3975 = vsub.f32 0.0, %v3715
  %v3976 = vsub.f32 0.0, %v3717
  %v3977 = vsub.f32 0.0, %v3719
  %v3978 = vsub.f32 0.0, %v3721
  %v3979 = vsub.f32 0.0, %v3723
  %v3980 = vsub.f32 0.0, %v3725
  %v3981 = vsub.f32 0.0, %v3727
  %v3982 = vsub.f32 0.0, %v3729
  %v3983 = vsub.f32 0.0, %v3731
  %v3984 = vsub.f32 0.0, %v3733
  %v3985 = vsub.f32 0.0, %v3735
  %v3986 = vsub.f32 0.0, %v3737
  %v3987 = vsub.f32 0.0, %v3739
  %v3988 = vsub.f32 0.0, %v3741
  %v3989 = vsub.f32 0.0, %v3743
  %v3990 = vsub.f32 0.0, %v3745
  %v3991 = vsub.f32 0.0, %v3747
  %v3992 = vsub.f32 0.0, %v3749
  %v3993 = vsub.f32 0.0, %v3751
  %v3994 = vsub.f32 0.0, %v3753
  %v3995 = vsub.f32 0.0, %v3755
  %v3996 = vsub.f32 0.0, %v3757
  %v3997 = vsub.f32 0.0, %v3759
  %v3998 = vsub.f32 0.0, %v3761
  %v3999 = vsub.f32 0.0, %v3763
  %v4000 = vsub.f32 0.0, %v3765
  %v4001 = vsub.f32 0.0, %v3767
  %v4002 = vsub.f32 0.0, %v3769
  %v4003 = vsub.f32 0.0, %v3771
  %v4004 = vsub.f32 0.0, %v3773
  %v4005 = vsub.f32 0.0, %v3775
  %v4006 = vsub.f32 0.0, %v3777
  %v4007 = vsub.f32 0.0, %v3779
  %v4008 = vsub.f32 0.0, %v3781
  %v4009 = vsub.f32 0.0, %v3783
  %v4010 = vsub.f32 0.0, %v3785
  %v4011 = vsub.f32 0.0, %v3787
  %v4012 = vsub.f32 0.0, %v3789
  %v4013 = vsub.f32 0.0, %v3791
  %v4014 = vsub.f32 0.0, %v3793
  %v4015 = vsub.f32 0.0, %v3795
  %v4016 = vsub.f32 0.0, %v3797
  %v4017 = vsub.f32 0.0, %v3799
  %v4018 = vsub.f32 0.0, %v3801
  %v4019 = vsub.f32 0.0, %v3803
  %v4020 = vsub.f32 0.0, %v3805
  %v4021 = vsub.f32 0.0, %v3807
  %v4022 = vsub.f32 0.0, %v3809
  %v4023 = vsub.f32 0.0, %v3811
  %v4024 = vsub.f32 0.0, %v3813
  %v4025 = vsub.f32 0.0, %v3815
  %v4026 = vsub.f32 0.0, %v3817
  %v4027 = vsub.f32 0.0, %v3819
  %v4028 = vsub.f32 0.0, %v3821
  %v4029 = vsub.f32 0.0, %v3823
  %v4030 = vsub.f32 0.0, %v3825
  %v4031 = vsub.f32 0.0, %v3827
  %v4032 = vsub.f32 0.0, %v3829
  %v4033 = vsub.f32 0.0, %v3831
  %v4034 = vsub.f32 0.0, %v3833
  %v4035 = vsub.f32 0.0, %v3835
  %v4036 = vsub.f32 0.0, %v3837
  %v4037 = vsub.f32 0.0, %v3839
  %v4038 = vsub.f32 0.0, %v3841
  %v4039 = vsub.f32 0.0, %v3843
  %v4040 = vsub.f32 0.0, %v3845
  %v4041 = vsub.f32 0.0, %v3847
  %v4042 = vsub.f32 0.0, %v3849
  %v4043 = vsub.f32 0.0, %v3851
  %v4044 = vsub.f32 0.0, %v3853
  %v4045 = vsub.f32 0.0, %v3855
  %v4046 = vsub.f32 0.0, %v3857
  %v4047 = vsub.f32 0.0, %v3859
  %v4048 = vsub.f32 0.0, %v3861
  %v4049 = vsub.f32 0.0, %v3863
  %v4050 = vsub.f32 0.0, %v3865
  %v4051 = vsub.f32 0.0, %v3867
  %v4052 = vsub.f32 0.0, %v3869
  %v4053 = vsub.f32 0.0, %v3871
  %v4054 = vsub.f32 0.0, %v3873
  %v4055 = vsub.f32 0.0, %v3875
  %v4056 = vsub.f32 0.0, %v3877
  %v4057 = vsub.f32 0.0, %v3879
  %v4058 = vsub.f32 0.0, %v3881
  %v4059 = vsub.f32 0.0, %v3883
  %v4060 = vsub.f32 0.0, %v3885
  %v4061 = vsub.f32 0.0, %v3887
  %v4062 = vsub.f32 0.0, %v3889
  %v4063 = vsub.f32 0.0, %v3891
  %v4064 = vsub.f32 0.0, %v3893
  %v4065 = vsub.f32 0.0, %v3895
  %v4066 = vsub.f32 0.0, %v3897
  %v4067 = vsub.f32 0.0, %v3899
  %v4068 = vsub.f32 0.0, %v3901
  %v4069 = vsub.f32 0.0, %v3903
  %v4070 = vsub.f32 0.0, %v3905
  %v4071 = vsub.f32 0.0, %v3907
  %v4072 = vsub.f32 0.0, %v3909
  %v4073 = vsub.f32 0.0, %v3911
  %v4074 = vsub.f32 0.0, %v3913
  %v4075 = vsub.f32 0.0, %v3915
  %v4076 = vsub.f32 0.0, %v3917
  %v4077 = vsub.f32 0.0, %v3919
  %v4078 = vsub.f32 0.0, %v3921
  %v4079 = vsub.f32 0.0, %v3923
  %v4080 = vsub.f32 0.0, %v3925
  %v4081 = vsub.f32 0.0, %v3927
  %v4082 = vsub.f32 0.0, %v3929
  %v4083 = vsub.f32 0.0, %v3931
  %v4084 = vsub.f32 0.0, %v3933
  %v4085 = vsub.f32 0.0, %v3935
  %v4086 = vsub.f32 0.0, %v3937
  %v4087 = vsub.f32 0.0, %v3939
  %v4088 = vsub.f32 0.0, %v3941
  %v4089 = vsub.f32 0.0, %v3943
  %v4090 = vsub.f32 0.0, %v3945
  %v4091 = vsub.f32 0.0, %v3947
  %v4092 = vmul.f32 %v2364, %v2364
  %v4093 = vmul.f32 %v2365, %v2365
  %v4094 = vmul.f32 %v2366, %v2366
  %v4095 = vmul.f32 %v2367, %v2367
  %v4096 = vmul.f32 %v2368, %v2368
  %v4097 = vmul.f32 %v2369, %v2369
  %v4098 = vmul.f32 %v2370, %v2370
  %v4099 = vmul.f32 %v2371, %v2371
  %v4100 = vmul.f32 %v2372, %v2372
  %v4101 = vmul.f32 %v2373, %v2373
  %v4102 = vmul.f32 %v2374, %v2374
  %v4103 = vmul.f32 %v2375, %v2375
  %v4104 = vmul.f32 %v2376, %v2376
  %v4105 = vmul.f32 %v2377, %v2377
  %v4106 = vmul.f32 %v2378, %v2378
  %v4107 = vmul.f32 %v2379, %v2379
  %v4108 = vmul.f32 %v2380, %v2380
  %v4109 = vmul.f32 %v2381, %v2381
  %v4110 = vmul.f32 %v2382, %v2382
  %v4111 = vmul.f32 %v2383, %v2383
  %v4112 = vmul.f32 %v2384, %v2384
  %v4113 = vmul.f32 %v2385, %v2385
  %v4114 = vmul.f32 %v2386, %v2386
  %v4115 = vmul.f32 %v2387, %v2387
  %v4116 = vmul.f32 %v2388, %v2388
  %v4117 = vmul.f32 %v2389, %v2389
  %v4118 = vmul.f32 %v2390, %v2390
  %v4119 = vmul.f32 %v2391, %v2391
  %v4120 = vmul.f32 %v2392, %v2392
  %v4121 = vmul.f32 %v2393, %v2393
  %v4122 = vmul.f32 %v2394, %v2394
  %v4123 = vmul.f32 %v2395, %v2395
  %v4124 = vmul.f32 %v2396, %v2396
  %v4125 = vmul.f32 %v2397, %v2397
  %v4126 = vmul.f32 %v2398, %v2398
  %v4127 = vmul.f32 %v2399, %v2399
  %v4128 = vmul.f32 %v2400, %v2400
  %v4129 = vmul.f32 %v2401, %v2401
  %v4130 = vmul.f32 %v2402, %v2402
  %v4131 = vmul.f32 %v2403, %v2403
  %v4132 = vmul.f32 %v2404, %v2404
  %v4133 = vmul.f32 %v2405, %v2405
  %v4134 = vmul.f32 %v2406, %v2406
  %v4135 = vmul.f32 %v2407, %v2407
  %v4136 = vmul.f32 %v2408, %v2408
  %v4137 = vmul.f32 %v2409, %v2409
  %v4138 = vmul.f32 %v2410, %v2410
  %v4139 = vmul.f32 %v2411, %v2411
  %v4140 = vmul.f32 %v2412, %v2412
  %v4141 = vmul.f32 %v2413, %v2413
  %v4142 = vmul.f32 %v2414, %v2414
  %v4143 = vmul.f32 %v2415, %v2415
  %v4144 = vmul.f32 %v2416, %v2416
  %v4145 = vmul.f32 %v2417, %v2417
  %v4146 = vmul.f32 %v2418, %v2418
  %v4147 = vmul.f32 %v2419, %v2419
  %v4148 = vmul.f32 %v2420, %v2420
  %v4149 = vmul.f32 %v2421, %v2421
  %v4150 = vmul.f32 %v2422, %v2422
  %v4151 = vmul.f32 %v2423, %v2423
  %v4152 = vmul.f32 %v2424, %v2424
  %v4153 = vmul.f32 %v2425, %v2425
  %v4154 = vmul.f32 %v2426, %v2426
  %v4155 = vmul.f32 %v2427, %v2427
  %v4156 = vmul.f32 %v2428, %v2428
  %v4157 = vmul.f32 %v2429, %v2429
  %v4158 = vmul.f32 %v2430, %v2430
  %v4159 = vmul.f32 %v2431, %v2431
  %v4160 = vmul.f32 %v2432, %v2432
  %v4161 = vmul.f32 %v2433, %v2433
  %v4162 = vmul.f32 %v2434, %v2434
  %v4163 = vmul.f32 %v2435, %v2435
  %v4164 = vmul.f32 %v2436, %v2436
  %v4165 = vmul.f32 %v2437, %v2437
  %v4166 = vmul.f32 %v2438, %v2438
  %v4167 = vmul.f32 %v2439, %v2439
  %v4168 = vmul.f32 %v2440, %v2440
  %v4169 = vmul.f32 %v2441, %v2441
  %v4170 = vmul.f32 %v2442, %v2442
  %v4171 = vmul.f32 %v2443, %v2443
  %v4172 = vmul.f32 %v2444, %v2444
  %v4173 = vmul.f32 %v2445, %v2445
  %v4174 = vmul.f32 %v2446, %v2446
  %v4175 = vmul.f32 %v2447, %v2447
  %v4176 = vmul.f32 %v2448, %v2448
  %v4177 = vmul.f32 %v2449, %v2449
  %v4178 = vmul.f32 %v2450, %v2450
  %v4179 = vmul.f32 %v2451, %v2451
  %v4180 = vmul.f32 %v2452, %v2452
  %v4181 = vmul.f32 %v2453, %v2453
  %v4182 = vmul.f32 %v2454, %v2454
  %v4183 = vmul.f32 %v2455, %v2455
  %v4184 = vmul.f32 %v2456, %v2456
  %v4185 = vmul.f32 %v2457, %v2457
  %v4186 = vmul.f32 %v2458, %v2458
  %v4187 = vmul.f32 %v2459, %v2459
  %v4188 = vmul.f32 %v2460, %v2460
  %v4189 = vmul.f32 %v2461, %v2461
  %v4190 = vmul.f32 %v2462, %v2462
  %v4191 = vmul.f32 %v2463, %v2463
  %v4192 = vmul.f32 %v2464, %v2464
  %v4193 = vmul.f32 %v2465, %v2465
  %v4194 = vmul.f32 %v2466, %v2466
  %v4195 = vmul.f32 %v2467, %v2467
  %v4196 = vmul.f32 %v2468, %v2468
  %v4197 = vmul.f32 %v2469, %v2469
  %v4198 = vmul.f32 %v2470, %v2470
  %v4199 = vmul.f32 %v2471, %v2471
  %v4200 = vmul.f32 %v2472, %v2472
  %v4201 = vmul.f32 %v2473, %v2473
  %v4202 = vmul.f32 %v2474, %v2474
  %v4203 = vmul.f32 %v2475, %v2475
  %v4204 = vmul.f32 %v2476, %v2476
  %v4205 = vmul.f32 %v2477, %v2477
  %v4206 = vmul.f32 %v2478, %v2478
  %v4207 = vmul.f32 %v2479, %v2479
  %v4208 = vmul.f32 %v2480, %v2480
  %v4209 = vmul.f32 %v2481, %v2481
  %v4210 = vmul.f32 %v2482, %v2482
  %v4211 = vmul.f32 %v2483, %v2483
  %v4212 = vmul.f32 %v2484, %v2484
  %v4213 = vmul.f32 %v2485, %v2485
  %v4214 = vmul.f32 %v2486, %v2486
  %v4215 = vmul.f32 %v2487, %v2487
  %v4216 = vmul.f32 %v2488, %v2488
  %v4217 = vmul.f32 %v2489, %v2489
  %v4218 = vmul.f32 %v2490, %v2490
  %v4219 = vmul.f32 %v2491, %v2491
  %v4220 = vmul.f32 %v2492, %v2492
  %v4221 = vmul.f32 %v2493, %v2493
  %v4222 = vmul.f32 %v2494, %v2494
  %v4223 = vmul.f32 %v2495, %v2495
  %v4224 = vmul.f32 %v2496, %v2496
  %v4225 = vmul.f32 %v2497, %v2497
  %v4226 = vmul.f32 %v2498, %v2498
  %v4227 = vmul.f32 %v2499, %v2499
  %v4228 = vmul.f32 %v2500, %v2500
  %v4229 = vmul.f32 %v2501, %v2501
  %v4230 = vmul.f32 %v2502, %v2502
  %v4231 = vmul.f32 %v2503, %v2503
  %v4232 = vmul.f32 %v2504, %v2504
  %v4233 = vmul.f32 %v2505, %v2505
  %v4234 = vmul.f32 %v2506, %v2506
  %v4235 = vmul.f32 %v2507, %v2507
  %v4236 = vmul.f32 %v204, %v204
  %v4237 = vmul.f32 %v205, %v205
  %v4238 = vmul.f32 %v206, %v206
  %v4239 = vmul.f32 %v207, %v207
  %v4240 = vmul.f32 %v208, %v208
  %v4241 = vmul.f32 %v209, %v209
  %v4242 = vmul.f32 %v210, %v210
  %v4243 = vmul.f32 %v211, %v211
  %v4244 = vmul.f32 %v212, %v212
  %v4245 = vmul.f32 %v213, %v213
  %v4246 = vmul.f32 %v214, %v214
  %v4247 = vmul.f32 %v215, %v215
  %v4248 = vmul.f32 %v216, %v216
  %v4249 = vmul.f32 %v217, %v217
  %v4250 = vmul.f32 %v218, %v218
  %v4251 = vmul.f32 %v219, %v219
  %v4252 = vmul.f32 %v220, %v220
  %v4253 = vmul.f32 %v221, %v221
  %v4254 = vmul.f32 %v222, %v222
  %v4255 = vmul.f32 %v223, %v223
  %v4256 = vmul.f32 %v224, %v224
  %v4257 = vmul.f32 %v225, %v225
  %v4258 = vmul.f32 %v226, %v226
  %v4259 = vmul.f32 %v227, %v227
  %v4260 = vmul.f32 %v228, %v228
  %v4261 = vmul.f32 %v229, %v229
  %v4262 = vmul.f32 %v230, %v230
  %v4263 = vmul.f32 %v231, %v231
  %v4264 = vmul.f32 %v232, %v232
  %v4265 = vmul.f32 %v233, %v233
  %v4266 = vmul.f32 %v234, %v234
  %v4267 = vmul.f32 %v235, %v235
  %v4268 = vmul.f32 %v236, %v236
  %v4269 = vmul.f32 %v237, %v237
  %v4270 = vmul.f32 %v238, %v238
  %v4271 = vmul.f32 %v239, %v239
  %v4272 = vmul.f32 %v240, %v240
  %v4273 = vmul.f32 %v241, %v241
  %v4274 = vmul.f32 %v242, %v242
  %v4275 = vmul.f32 %v243, %v243
  %v4276 = vmul.f32 %v244, %v244
  %v4277 = vmul.f32 %v245, %v245
  %v4278 = vmul.f32 %v246, %v246
  %v4279 = vmul.f32 %v247, %v247
  %v4280 = vmul.f32 %v248, %v248
  %v4281 = vmul.f32 %v249, %v249
  %v4282 = vmul.f32 %v250, %v250
  %v4283 = vmul.f32 %v251, %v251
  %v4284 = vmul.f32 %v252, %v252
  %v4285 = vmul.f32 %v253, %v253
  %v4286 = vmul.f32 %v254, %v254
  %v4287 = vmul.f32 %v255, %v255
  %v4288 = vmul.f32 %v256, %v256
  %v4289 = vmul.f32 %v257, %v257
  %v4290 = vmul.f32 %v258, %v258
  %v4291 = vmul.f32 %v259, %v259
  %v4292 = vmul.f32 %v260, %v260
  %v4293 = vmul.f32 %v261, %v261
  %v4294 = vmul.f32 %v262, %v262
  %v4295 = vmul.f32 %v263, %v263
  %v4296 = vmul.f32 %v264, %v264
  %v4297 = vmul.f32 %v265, %v265
  %v4298 = vmul.f32 %v266, %v266
  %v4299 = vmul.f32 %v267, %v267
  %v4300 = vmul.f32 %v268, %v268
  %v4301 = vmul.f32 %v269, %v269
  %v4302 = vmul.f32 %v270, %v270
  %v4303 = vmul.f32 %v271, %v271
  %v4304 = vmul.f32 %v272, %v272
  %v4305 = vmul.f32 %v273, %v273
  %v4306 = vmul.f32 %v274, %v274
  %v4307 = vmul.f32 %v275, %v275
  %v4308 = vmul.f32 %v276, %v276
  %v4309 = vmul.f32 %v277, %v277
  %v4310 = vmul.f32 %v278, %v278
  %v4311 = vmul.f32 %v279, %v279
  %v4312 = vmul.f32 %v280, %v280
  %v4313 = vmul.f32 %v281, %v281
  %v4314 = vmul.f32 %v282, %v282
  %v4315 = vmul.f32 %v283, %v283
  %v4316 = vmul.f32 %v284, %v284
  %v4317 = vmul.f32 %v285, %v285
  %v4318 = vmul.f32 %v286, %v286
  %v4319 = vmul.f32 %v287, %v287
  %v4320 = vmul.f32 %v288, %v288
  %v4321 = vmul.f32 %v289, %v289
  %v4322 = vmul.f32 %v290, %v290
  %v4323 = vmul.f32 %v291, %v291
  %v4324 = vmul.f32 %v292, %v292
  %v4325 = vmul.f32 %v293, %v293
  %v4326 = vmul.f32 %v294, %v294
  %v4327 = vmul.f32 %v295, %v295
  %v4328 = vmul.f32 %v296, %v296
  %v4329 = vmul.f32 %v297, %v297
  %v4330 = vmul.f32 %v298, %v298
  %v4331 = vmul.f32 %v299, %v299
  %v4332 = vmul.f32 %v300, %v300
  %v4333 = vmul.f32 %v301, %v301
  %v4334 = vmul.f32 %v302, %v302
  %v4335 = vmul.f32 %v303, %v303
  %v4336 = vmul.f32 %v304, %v304
  %v4337 = vmul.f32 %v305, %v305
  %v4338 = vmul.f32 %v306, %v306
  %v4339 = vmul.f32 %v307, %v307
  %v4340 = vmul.f32 %v308, %v308
  %v4341 = vmul.f32 %v309, %v309
  %v4342 = vmul.f32 %v310, %v310
  %v4343 = vmul.f32 %v311, %v311
  %v4344 = vmul.f32 %v312, %v312
  %v4345 = vmul.f32 %v313, %v313
  %v4346 = vmul.f32 %v314, %v314
  %v4347 = vmul.f32 %v315, %v315
  %v4348 = vmul.f32 %v316, %v316
  %v4349 = vmul.f32 %v317, %v317
  %v4350 = vmul.f32 %v318, %v318
  %v4351 = vmul.f32 %v319, %v319
  %v4352 = vmul.f32 %v320, %v320
  %v4353 = vmul.f32 %v321, %v321
  %v4354 = vmul.f32 %v322, %v322
  %v4355 = vmul.f32 %v323, %v323
  %v4356 = vmul.f32 %v324, %v324
  %v4357 = vmul.f32 %v325, %v325
  %v4358 = vmul.f32 %v326, %v326
  %v4359 = vmul.f32 %v327, %v327
  %v4360 = vmul.f32 %v328, %v328
  %v4361 = vmul.f32 %v329, %v329
  %v4362 = vmul.f32 %v330, %v330
  %v4363 = vmul.f32 %v331, %v331
  %v4364 = vmul.f32 %v332, %v332
  %v4365 = vmul.f32 %v333, %v333
  %v4366 = vmul.f32 %v334, %v334
  %v4367 = vmul.f32 %v335, %v335
  %v4368 = vmul.f32 %v336, %v336
  %v4369 = vmul.f32 %v337, %v337
  %v4370 = vmul.f32 %v338, %v338
  %v4371 = vmul.f32 %v339, %v339
  %v4372 = vmul.f32 %v340, %v340
  %v4373 = vmul.f32 %v341, %v341
  %v4374 = vmul.f32 %v342, %v342
  %v4375 = vmul.f32 %v343, %v343
  %v4376 = vmul.f32 %v344, %v344
  %v4377 = vmul.f32 %v345, %v345
  %v4378 = vmul.f32 %v346, %v346
  %v4379 = vmul.f32 %v347, %v347
  %v4380 = vadd.f32 %v4092, %v4236
  %v4381 = vadd.f32 %v4093, %v4237
  %v4382 = vadd.f32 %v4094, %v4238
  %v4383 = vadd.f32 %v4095, %v4239
  %v4384 = vadd.f32 %v4096, %v4240
  %v4385 = vadd.f32 %v4097, %v4241
  %v4386 = vadd.f32 %v4098, %v4242
  %v4387 = vadd.f32 %v4099, %v4243
  %v4388 = vadd.f32 %v4100, %v4244
  %v4389 = vadd.f32 %v4101, %v4245
  %v4390 = vadd.f32 %v4102, %v4246
  %v4391 = vadd.f32 %v4103, %v4247
  %v4392 = vadd.f32 %v4104, %v4248
  %v4393 = vadd.f32 %v4105, %v4249
  %v4394 = vadd.f32 %v4106, %v4250
  %v4395 = vadd.f32 %v4107, %v4251
  %v4396 = vadd.f32 %v4108, %v4252
  %v4397 = vadd.f32 %v4109, %v4253
  %v4398 = vadd.f32 %v4110, %v4254
  %v4399 = vadd.f32 %v4111, %v4255
  %v4400 = vadd.f32 %v4112, %v4256
  %v4401 = vadd.f32 %v4113, %v4257
  %v4402 = vadd.f32 %v4114, %v4258
  %v4403 = vadd.f32 %v4115, %v4259
  %v4404 = vadd.f32 %v4116, %v4260
  %v4405 = vadd.f32 %v4117, %v4261
  %v4406 = vadd.f32 %v4118, %v4262
  %v4407 = vadd.f32 %v4119, %v4263
  %v4408 = vadd.f32 %v4120, %v4264
  %v4409 = vadd.f32 %v4121, %v4265
  %v4410 = vadd.f32 %v4122, %v4266
  %v4411 = vadd.f32 %v4123, %v4267
  %v4412 = vadd.f32 %v4124, %v4268
  %v4413 = vadd.f32 %v4125, %v4269
  %v4414 = vadd.f32 %v4126, %v4270
  %v4415 = vadd.f32 %v4127, %v4271
  %v4416 = vadd.f32 %v4128, %v4272
  %v4417 = vadd.f32 %v4129, %v4273
  %v4418 = vadd.f32 %v4130, %v4274
  %v4419 = vadd.f32 %v4131, %v4275
  %v4420 = vadd.f32 %v4132, %v4276
  %v4421 = vadd.f32 %v4133, %v4277
  %v4422 = vadd.f32 %v4134, %v4278
  %v4423 = vadd.f32 %v4135, %v4279
  %v4424 = vadd.f32 %v4136, %v4280
  %v4425 = vadd.f32 %v4137, %v4281
  %v4426 = vadd.f32 %v4138, %v4282
  %v4427 = vadd.f32 %v4139, %v4283
  %v4428 = vadd.f32 %v4140, %v4284
  %v4429 = vadd.f32 %v4141, %v4285
  %v4430 = vadd.f32 %v4142, %v4286
  %v4431 = vadd.f32 %v4143, %v4287
  %v4432 = vadd.f32 %v4144, %v4288
  %v4433 = vadd.f32 %v4145, %v4289
  %v4434 = vadd.f32 %v4146, %v4290
  %v4435 = vadd.f32 %v4147, %v4291
  %v4436 = vadd.f32 %v4148, %v4292
  %v4437 = vadd.f32 %v4149, %v4293
  %v4438 = vadd.f32 %v4150, %v4294
  %v4439 = vadd.f32 %v4151, %v4295
  %v4440 = vadd.f32 %v4152, %v4296
  %v4441 = vadd.f32 %v4153, %v4297
  %v4442 = vadd.f32 %v4154, %v4298
  %v4443 = vadd.f32 %v4155, %v4299
  %v4444 = vadd.f32 %v4156, %v4300
  %v4445 = vadd.f32 %v4157, %v4301
  %v4446 = vadd.f32 %v4158, %v4302
  %v4447 = vadd.f32 %v4159, %v4303
  %v4448 = vadd.f32 %v4160, %v4304
  %v4449 = vadd.f32 %v4161, %v4305
  %v4450 = vadd.f32 %v4162, %v4306
  %v4451 = vadd.f32 %v4163, %v4307
  %v4452 = vadd.f32 %v4164, %v4308
  %v4453 = vadd.f32 %v4165, %v4309
  %v4454 = vadd.f32 %v4166, %v4310
  %v4455 = vadd.f32 %v4167, %v4311
  %v4456 = vadd.f32 %v4168, %v4312
  %v4457 = vadd.f32 %v4169, %v4313
  %v4458 = vadd.f32 %v4170, %v4314
  %v4459 = vadd.f32 %v4171, %v4315
  %v4460 = vadd.f32 %v4172, %v4316
  %v4461 = vadd.f32 %v4173, %v4317
  %v4462 = vadd.f32 %v4174, %v4318
  %v4463 = vadd.f32 %v4175, %v4319
  %v4464 = vadd.f32 %v4176, %v4320
  %v4465 = vadd.f32 %v4177, %v4321
  %v4466 = vadd.f32 %v4178, %v4322
  %v4467 = vadd.f32 %v4179, %v4323
  %v4468 = vadd.f32 %v4180, %v4324
  %v4469 = vadd.f32 %v4181, %v4325
  %v4470 = vadd.f32 %v4182, %v4326
  %v4471 = vadd.f32 %v4183, %v4327
  %v4472 = vadd.f32 %v4184, %v4328
  %v4473 = vadd.f32 %v4185, %v4329
  %v4474 = vadd.f32 %v4186, %v4330
  %v4475 = vadd.f32 %v4187, %v4331
  %v4476 = vadd.f32 %v4188, %v4332
  %v4477 = vadd.f32 %v4189, %v4333
  %v4478 = vadd.f32 %v4190, %v4334
  %v4479 = vadd.f32 %v4191, %v4335
  %v4480 = vadd.f32 %v4192, %v4336
  %v4481 = vadd.f32 %v4193, %v4337
  %v4482 = vadd.f32 %v4194, %v4338
  %v4483 = vadd.f32 %v4195, %v4339
  %v4484 = vadd.f32 %v4196, %v4340
  %v4485 = vadd.f32 %v4197, %v4341
  %v4486 = vadd.f32 %v4198, %v4342
  %v4487 = vadd.f32 %v4199, %v4343
  %v4488 = vadd.f32 %v4200, %v4344
  %v4489 = vadd.f32 %v4201, %v4345
  %v4490 = vadd.f32 %v4202, %v4346
  %v4491 = vadd.f32 %v4203, %v4347
  %v4492 = vadd.f32 %v4204, %v4348
  %v4493 = vadd.f32 %v4205, %v4349
  %v4494 = vadd.f32 %v4206, %v4350
  %v4495 = vadd.f32 %v4207, %v4351
  %v4496 = vadd.f32 %v4208, %v4352
  %v4497 = vadd.f32 %v4209, %v4353
  %v4498 = vadd.f32 %v4210, %v4354
  %v4499 = vadd.f32 %v4211, %v4355
  %v4500 = vadd.f32 %v4212, %v4356
  %v4501 = vadd.f32 %v4213, %v4357
  %v4502 = vadd.f32 %v4214, %v4358
  %v4503 = vadd.f32 %v4215, %v4359
  %v4504 = vadd.f32 %v4216, %v4360
  %v4505 = vadd.f32 %v4217, %v4361
  %v4506 = vadd.f32 %v4218, %v4362
  %v4507 = vadd.f32 %v4219, %v4363
  %v4508 = vadd.f32 %v4220, %v4364
  %v4509 = vadd.f32 %v4221, %v4365
  %v4510 = vadd.f32 %v4222, %v4366
  %v4511 = vadd.f32 %v4223, %v4367
  %v4512 = vadd.f32 %v4224, %v4368
  %v4513 = vadd.f32 %v4225, %v4369
  %v4514 = vadd.f32 %v4226, %v4370
  %v4515 = vadd.f32 %v4227, %v4371
  %v4516 = vadd.f32 %v4228, %v4372
  %v4517 = vadd.f32 %v4229, %v4373
  %v4518 = vadd.f32 %v4230, %v4374
  %v4519 = vadd.f32 %v4231, %v4375
  %v4520 = vadd.f32 %v4232, %v4376
  %v4521 = vadd.f32 %v4233, %v4377
  %v4522 = vadd.f32 %v4234, %v4378
  %v4523 = vadd.f32 %v4235, %v4379
  %v4524 = vmul.f32 %v4380, 0.5
  %v4525 = vmul.f32 %v4381, 0.5
  %v4526 = vmul.f32 %v4382, 0.5
  %v4527 = vmul.f32 %v4383, 0.5
  %v4528 = vmul.f32 %v4384, 0.5
  %v4529 = vmul.f32 %v4385, 0.5
  %v4530 = vmul.f32 %v4386, 0.5
  %v4531 = vmul.f32 %v4387, 0.5
  %v4532 = vmul.f32 %v4388, 0.5
  %v4533 = vmul.f32 %v4389, 0.5
  %v4534 = vmul.f32 %v4390, 0.5
  %v4535 = vmul.f32 %v4391, 0.5
  %v4536 = vmul.f32 %v4392, 0.5
  %v4537 = vmul.f32 %v4393, 0.5
  %v4538 = vmul.f32 %v4394, 0.5
  %v4539 = vmul.f32 %v4395, 0.5
  %v4540 = vmul.f32 %v4396, 0.5
  %v4541 = vmul.f32 %v4397, 0.5
  %v4542 = vmul.f32 %v4398, 0.5
  %v4543 = vmul.f32 %v4399, 0.5
  %v4544 = vmul.f32 %v4400, 0.5
  %v4545 = vmul.f32 %v4401, 0.5
  %v4546 = vmul.f32 %v4402, 0.5
  %v4547 = vmul.f32 %v4403, 0.5
  %v4548 = vmul.f32 %v4404, 0.5
  %v4549 = vmul.f32 %v4405, 0.5
  %v4550 = vmul.f32 %v4406, 0.5
  %v4551 = vmul.f32 %v4407, 0.5
  %v4552 = vmul.f32 %v4408, 0.5
  %v4553 = vmul.f32 %v4409, 0.5
  %v4554 = vmul.f32 %v4410, 0.5
  %v4555 = vmul.f32 %v4411, 0.5
  %v4556 = vmul.f32 %v4412, 0.5
  %v4557 = vmul.f32 %v4413, 0.5
  %v4558 = vmul.f32 %v4414, 0.5
  %v4559 = vmul.f32 %v4415, 0.5
  %v4560 = vmul.f32 %v4416, 0.5
  %v4561 = vmul.f32 %v4417, 0.5
  %v4562 = vmul.f32 %v4418, 0.5
  %v4563 = vmul.f32 %v4419, 0.5
  %v4564 = vmul.f32 %v4420, 0.5
  %v4565 = vmul.f32 %v4421, 0.5
  %v4566 = vmul.f32 %v4422, 0.5
  %v4567 = vmul.f32 %v4423, 0.5
  %v4568 = vmul.f32 %v4424, 0.5
  %v4569 = vmul.f32 %v4425, 0.5
  %v4570 = vmul.f32 %v4426, 0.5
  %v4571 = vmul.f32 %v4427, 0.5
  %v4572 = vmul.f32 %v4428, 0.5
  %v4573 = vmul.f32 %v4429, 0.5
  %v4574 = vmul.f32 %v4430, 0.5
  %v4575 = vmul.f32 %v4431, 0.5
  %v4576 = vmul.f32 %v4432, 0.5
  %v4577 = vmul.f32 %v4433, 0.5
  %v4578 = vmul.f32 %v4434, 0.5
  %v4579 = vmul.f32 %v4435, 0.5
  %v4580 = vmul.f32 %v4436, 0.5
  %v4581 = vmul.f32 %v4437, 0.5
  %v4582 = vmul.f32 %v4438, 0.5
  %v4583 = vmul.f32 %v4439, 0.5
  %v4584 = vmul.f32 %v4440, 0.5
  %v4585 = vmul.f32 %v4441, 0.5
  %v4586 = vmul.f32 %v4442, 0.5
  %v4587 = vmul.f32 %v4443, 0.5
  %v4588 = vmul.f32 %v4444, 0.5
  %v4589 = vmul.f32 %v4445, 0.5
  %v4590 = vmul.f32 %v4446, 0.5
  %v4591 = vmul.f32 %v4447, 0.5
  %v4592 = vmul.f32 %v4448, 0.5
  %v4593 = vmul.f32 %v4449, 0.5
  %v4594 = vmul.f32 %v4450, 0.5
  %v4595 = vmul.f32 %v4451, 0.5
  %v4596 = vmul.f32 %v4452, 0.5
  %v4597 = vmul.f32 %v4453, 0.5
  %v4598 = vmul.f32 %v4454, 0.5
  %v4599 = vmul.f32 %v4455, 0.5
  %v4600 = vmul.f32 %v4456, 0.5
  %v4601 = vmul.f32 %v4457, 0.5
  %v4602 = vmul.f32 %v4458, 0.5
  %v4603 = vmul.f32 %v4459, 0.5
  %v4604 = vmul.f32 %v4460, 0.5
  %v4605 = vmul.f32 %v4461, 0.5
  %v4606 = vmul.f32 %v4462, 0.5
  %v4607 = vmul.f32 %v4463, 0.5
  %v4608 = vmul.f32 %v4464, 0.5
  %v4609 = vmul.f32 %v4465, 0.5
  %v4610 = vmul.f32 %v4466, 0.5
  %v4611 = vmul.f32 %v4467, 0.5
  %v4612 = vmul.f32 %v4468, 0.5
  %v4613 = vmul.f32 %v4469, 0.5
  %v4614 = vmul.f32 %v4470, 0.5
  %v4615 = vmul.f32 %v4471, 0.5
  %v4616 = vmul.f32 %v4472, 0.5
  %v4617 = vmul.f32 %v4473, 0.5
  %v4618 = vmul.f32 %v4474, 0.5
  %v4619 = vmul.f32 %v4475, 0.5
  %v4620 = vmul.f32 %v4476, 0.5
  %v4621 = vmul.f32 %v4477, 0.5
  %v4622 = vmul.f32 %v4478, 0.5
  %v4623 = vmul.f32 %v4479, 0.5
  %v4624 = vmul.f32 %v4480, 0.5
  %v4625 = vmul.f32 %v4481, 0.5
  %v4626 = vmul.f32 %v4482, 0.5
  %v4627 = vmul.f32 %v4483, 0.5
  %v4628 = vmul.f32 %v4484, 0.5
  %v4629 = vmul.f32 %v4485, 0.5
  %v4630 = vmul.f32 %v4486, 0.5
  %v4631 = vmul.f32 %v4487, 0.5
  %v4632 = vmul.f32 %v4488, 0.5
  %v4633 = vmul.f32 %v4489, 0.5
  %v4634 = vmul.f32 %v4490, 0.5
  %v4635 = vmul.f32 %v4491, 0.5
  %v4636 = vmul.f32 %v4492, 0.5
  %v4637 = vmul.f32 %v4493, 0.5
  %v4638 = vmul.f32 %v4494, 0.5
  %v4639 = vmul.f32 %v4495, 0.5
  %v4640 = vmul.f32 %v4496, 0.5
  %v4641 = vmul.f32 %v4497, 0.5
  %v4642 = vmul.f32 %v4498, 0.5
  %v4643 = vmul.f32 %v4499, 0.5
  %v4644 = vmul.f32 %v4500, 0.5
  %v4645 = vmul.f32 %v4501, 0.5
  %v4646 = vmul.f32 %v4502, 0.5
  %v4647 = vmul.f32 %v4503, 0.5
  %v4648 = vmul.f32 %v4504, 0.5
  %v4649 = vmul.f32 %v4505, 0.5
  %v4650 = vmul.f32 %v4506, 0.5
  %v4651 = vmul.f32 %v4507, 0.5
  %v4652 = vmul.f32 %v4508, 0.5
  %v4653 = vmul.f32 %v4509, 0.5
  %v4654 = vmul.f32 %v4510, 0.5
  %v4655 = vmul.f32 %v4511, 0.5
  %v4656 = vmul.f32 %v4512, 0.5
  %v4657 = vmul.f32 %v4513, 0.5
  %v4658 = vmul.f32 %v4514, 0.5
  %v4659 = vmul.f32 %v4515, 0.5
  %v4660 = vmul.f32 %v4516, 0.5
  %v4661 = vmul.f32 %v4517, 0.5
  %v4662 = vmul.f32 %v4518, 0.5
  %v4663 = vmul.f32 %v4519, 0.5
  %v4664 = vmul.f32 %v4520, 0.5
  %v4665 = vmul.f32 %v4521, 0.5
  %v4666 = vmul.f32 %v4522, 0.5
  %v4667 = vmul.f32 %v4523, 0.5
  %v4668 = vadd.f32 %v3948, %v4524
  %v4669 = vadd.f32 %v3949, %v4525
  %v4670 = vadd.f32 %v3950, %v4526
  %v4671 = vadd.f32 %v3951, %v4527
  %v4672 = vadd.f32 %v3952, %v4528
  %v4673 = vadd.f32 %v3953, %v4529
  %v4674 = vadd.f32 %v3954, %v4530
  %v4675 = vadd.f32 %v3955, %v4531
  %v4676 = vadd.f32 %v3956, %v4532
  %v4677 = vadd.f32 %v3957, %v4533
  %v4678 = vadd.f32 %v3958, %v4534
  %v4679 = vadd.f32 %v3959, %v4535
  %v4680 = vadd.f32 %v3960, %v4536
  %v4681 = vadd.f32 %v3961, %v4537
  %v4682 = vadd.f32 %v3962, %v4538
  %v4683 = vadd.f32 %v3963, %v4539
  %v4684 = vadd.f32 %v3964, %v4540
  %v4685 = vadd.f32 %v3965, %v4541
  %v4686 = vadd.f32 %v3966, %v4542
  %v4687 = vadd.f32 %v3967, %v4543
  %v4688 = vadd.f32 %v3968, %v4544
  %v4689 = vadd.f32 %v3969, %v4545
  %v4690 = vadd.f32 %v3970, %v4546
  %v4691 = vadd.f32 %v3971, %v4547
  %v4692 = vadd.f32 %v3972, %v4548
  %v4693 = vadd.f32 %v3973, %v4549
  %v4694 = vadd.f32 %v3974, %v4550
  %v4695 = vadd.f32 %v3975, %v4551
  %v4696 = vadd.f32 %v3976, %v4552
  %v4697 = vadd.f32 %v3977, %v4553
  %v4698 = vadd.f32 %v3978, %v4554
  %v4699 = vadd.f32 %v3979, %v4555
  %v4700 = vadd.f32 %v3980, %v4556
  %v4701 = vadd.f32 %v3981, %v4557
  %v4702 = vadd.f32 %v3982, %v4558
  %v4703 = vadd.f32 %v3983, %v4559
  %v4704 = vadd.f32 %v3984, %v4560
  %v4705 = vadd.f32 %v3985, %v4561
  %v4706 = vadd.f32 %v3986, %v4562
  %v4707 = vadd.f32 %v3987, %v4563
  %v4708 = vadd.f32 %v3988, %v4564
  %v4709 = vadd.f32 %v3989, %v4565
  %v4710 = vadd.f32 %v3990, %v4566
  %v4711 = vadd.f32 %v3991, %v4567
  %v4712 = vadd.f32 %v3992, %v4568
  %v4713 = vadd.f32 %v3993, %v4569
  %v4714 = vadd.f32 %v3994, %v4570
  %v4715 = vadd.f32 %v3995, %v4571
  %v4716 = vadd.f32 %v3996, %v4572
  %v4717 = vadd.f32 %v3997, %v4573
  %v4718 = vadd.f32 %v3998, %v4574
  %v4719 = vadd.f32 %v3999, %v4575
  %v4720 = vadd.f32 %v4000, %v4576
  %v4721 = vadd.f32 %v4001, %v4577
  %v4722 = vadd.f32 %v4002, %v4578
  %v4723 = vadd.f32 %v4003, %v4579
  %v4724 = vadd.f32 %v4004, %v4580
  %v4725 = vadd.f32 %v4005, %v4581
  %v4726 = vadd.f32 %v4006, %v4582
  %v4727 = vadd.f32 %v4007, %v4583
  %v4728 = vadd.f32 %v4008, %v4584
  %v4729 = vadd.f32 %v4009, %v4585
  %v4730 = vadd.f32 %v4010, %v4586
  %v4731 = vadd.f32 %v4011, %v4587
  %v4732 = vadd.f32 %v4012, %v4588
  %v4733 = vadd.f32 %v4013, %v4589
  %v4734 = vadd.f32 %v4014, %v4590
  %v4735 = vadd.f32 %v4015, %v4591
  %v4736 = vadd.f32 %v4016, %v4592
  %v4737 = vadd.f32 %v4017, %v4593
  %v4738 = vadd.f32 %v4018, %v4594
  %v4739 = vadd.f32 %v4019, %v4595
  %v4740 = vadd.f32 %v4020, %v4596
  %v4741 = vadd.f32 %v4021, %v4597
  %v4742 = vadd.f32 %v4022, %v4598
  %v4743 = vadd.f32 %v4023, %v4599
  %v4744 = vadd.f32 %v4024, %v4600
  %v4745 = vadd.f32 %v4025, %v4601
  %v4746 = vadd.f32 %v4026, %v4602
  %v4747 = vadd.f32 %v4027, %v4603
  %v4748 = vadd.f32 %v4028, %v4604
  %v4749 = vadd.f32 %v4029, %v4605
  %v4750 = vadd.f32 %v4030, %v4606
  %v4751 = vadd.f32 %v4031, %v4607
  %v4752 = vadd.f32 %v4032, %v4608
  %v4753 = vadd.f32 %v4033, %v4609
  %v4754 = vadd.f32 %v4034, %v4610
  %v4755 = vadd.f32 %v4035, %v4611
  %v4756 = vadd.f32 %v4036, %v4612
  %v4757 = vadd.f32 %v4037, %v4613
  %v4758 = vadd.f32 %v4038, %v4614
  %v4759 = vadd.f32 %v4039, %v4615
  %v4760 = vadd.f32 %v4040, %v4616
  %v4761 = vadd.f32 %v4041, %v4617
  %v4762 = vadd.f32 %v4042, %v4618
  %v4763 = vadd.f32 %v4043, %v4619
  %v4764 = vadd.f32 %v4044, %v4620
  %v4765 = vadd.f32 %v4045, %v4621
  %v4766 = vadd.f32 %v4046, %v4622
  %v4767 = vadd.f32 %v4047, %v4623
  %v4768 = vadd.f32 %v4048, %v4624
  %v4769 = vadd.f32 %v4049, %v4625
  %v4770 = vadd.f32 %v4050, %v4626
  %v4771 = vadd.f32 %v4051, %v4627
  %v4772 = vadd.f32 %v4052, %v4628
  %v4773 = vadd.f32 %v4053, %v4629
  %v4774 = vadd.f32 %v4054, %v4630
  %v4775 = vadd.f32 %v4055, %v4631
  %v4776 = vadd.f32 %v4056, %v4632
  %v4777 = vadd.f32 %v4057, %v4633
  %v4778 = vadd.f32 %v4058, %v4634
  %v4779 = vadd.f32 %v4059, %v4635
  %v4780 = vadd.f32 %v4060, %v4636
  %v4781 = vadd.f32 %v4061, %v4637
  %v4782 = vadd.f32 %v4062, %v4638
  %v4783 = vadd.f32 %v4063, %v4639
  %v4784 = vadd.f32 %v4064, %v4640
  %v4785 = vadd.f32 %v4065, %v4641
  %v4786 = vadd.f32 %v4066, %v4642
  %v4787 = vadd.f32 %v4067, %v4643
  %v4788 = vadd.f32 %v4068, %v4644
  %v4789 = vadd.f32 %v4069, %v4645
  %v4790 = vadd.f32 %v4070, %v4646
  %v4791 = vadd.f32 %v4071, %v4647
  %v4792 = vadd.f32 %v4072, %v4648
  %v4793 = vadd.f32 %v4073, %v4649
  %v4794 = vadd.f32 %v4074, %v4650
  %v4795 = vadd.f32 %v4075, %v4651
  %v4796 = vadd.f32 %v4076, %v4652
  %v4797 = vadd.f32 %v4077, %v4653
  %v4798 = vadd.f32 %v4078, %v4654
  %v4799 = vadd.f32 %v4079, %v4655
  %v4800 = vadd.f32 %v4080, %v4656
  %v4801 = vadd.f32 %v4081, %v4657
  %v4802 = vadd.f32 %v4082, %v4658
  %v4803 = vadd.f32 %v4083, %v4659
  %v4804 = vadd.f32 %v4084, %v4660
  %v4805 = vadd.f32 %v4085, %v4661
  %v4806 = vadd.f32 %v4086, %v4662
  %v4807 = vadd.f32 %v4087, %v4663
  %v4808 = vadd.f32 %v4088, %v4664
  %v4809 = vadd.f32 %v4089, %v4665
  %v4810 = vadd.f32 %v4090, %v4666
  %v4811 = vadd.f32 %v4091, %v4667
  %v4812 = vsub.f32 %v4668, 0.5
  %v4813 = vsub.f32 %v4669, 0.5
  %v4814 = vsub.f32 %v4670, 0.5
  %v4815 = vsub.f32 %v4671, 0.5
  %v4816 = vsub.f32 %v4672, 0.5
  %v4817 = vsub.f32 %v4673, 0.5
  %v4818 = vsub.f32 %v4674, 0.5
  %v4819 = vsub.f32 %v4675, 0.5
  %v4820 = vsub.f32 %v4676, 0.5
  %v4821 = vsub.f32 %v4677, 0.5
  %v4822 = vsub.f32 %v4678, 0.5
  %v4823 = vsub.f32 %v4679, 0.5
  %v4824 = vsub.f32 %v4680, 0.5
  %v4825 = vsub.f32 %v4681, 0.5
  %v4826 = vsub.f32 %v4682, 0.5
  %v4827 = vsub.f32 %v4683, 0.5
  %v4828 = vsub.f32 %v4684, 0.5
  %v4829 = vsub.f32 %v4685, 0.5
  %v4830 = vsub.f32 %v4686, 0.5
  %v4831 = vsub.f32 %v4687, 0.5
  %v4832 = vsub.f32 %v4688, 0.5
  %v4833 = vsub.f32 %v4689, 0.5
  %v4834 = vsub.f32 %v4690, 0.5
  %v4835 = vsub.f32 %v4691, 0.5
  %v4836 = vsub.f32 %v4692, 0.5
  %v4837 = vsub.f32 %v4693, 0.5
  %v4838 = vsub.f32 %v4694, 0.5
  %v4839 = vsub.f32 %v4695, 0.5
  %v4840 = vsub.f32 %v4696, 0.5
  %v4841 = vsub.f32 %v4697, 0.5
  %v4842 = vsub.f32 %v4698, 0.5
  %v4843 = vsub.f32 %v4699, 0.5
  %v4844 = vsub.f32 %v4700, 0.5
  %v4845 = vsub.f32 %v4701, 0.5
  %v4846 = vsub.f32 %v4702, 0.5
  %v4847 = vsub.f32 %v4703, 0.5
  %v4848 = vsub.f32 %v4704, 0.5
  %v4849 = vsub.f32 %v4705, 0.5
  %v4850 = vsub.f32 %v4706, 0.5
  %v4851 = vsub.f32 %v4707, 0.5
  %v4852 = vsub.f32 %v4708, 0.5
  %v4853 = vsub.f32 %v4709, 0.5
  %v4854 = vsub.f32 %v4710, 0.5
  %v4855 = vsub.f32 %v4711, 0.5
  %v4856 = vsub.f32 %v4712, 0.5
  %v4857 = vsub.f32 %v4713, 0.5
  %v4858 = vsub.f32 %v4714, 0.5
  %v4859 = vsub.f32 %v4715, 0.5
  %v4860 = vsub.f32 %v4716, 0.5
  %v4861 = vsub.f32 %v4717, 0.5
  %v4862 = vsub.f32 %v4718, 0.5
  %v4863 = vsub.f32 %v4719, 0.5
  %v4864 = vsub.f32 %v4720, 0.5
  %v4865 = vsub.f32 %v4721, 0.5
  %v4866 = vsub.f32 %v4722, 0.5
  %v4867 = vsub.f32 %v4723, 0.5
  %v4868 = vsub.f32 %v4724, 0.5
  %v4869 = vsub.f32 %v4725, 0.5
  %v4870 = vsub.f32 %v4726, 0.5
  %v4871 = vsub.f32 %v4727, 0.5
  %v4872 = vsub.f32 %v4728, 0.5
  %v4873 = vsub.f32 %v4729, 0.5
  %v4874 = vsub.f32 %v4730, 0.5
  %v4875 = vsub.f32 %v4731, 0.5
  %v4876 = vsub.f32 %v4732, 0.5
  %v4877 = vsub.f32 %v4733, 0.5
  %v4878 = vsub.f32 %v4734, 0.5
  %v4879 = vsub.f32 %v4735, 0.5
  %v4880 = vsub.f32 %v4736, 0.5
  %v4881 = vsub.f32 %v4737, 0.5
  %v4882 = vsub.f32 %v4738, 0.5
  %v4883 = vsub.f32 %v4739, 0.5
  %v4884 = vsub.f32 %v4740, 0.5
  %v4885 = vsub.f32 %v4741, 0.5
  %v4886 = vsub.f32 %v4742, 0.5
  %v4887 = vsub.f32 %v4743, 0.5
  %v4888 = vsub.f32 %v4744, 0.5
  %v4889 = vsub.f32 %v4745, 0.5
  %v4890 = vsub.f32 %v4746, 0.5
  %v4891 = vsub.f32 %v4747, 0.5
  %v4892 = vsub.f32 %v4748, 0.5
  %v4893 = vsub.f32 %v4749, 0.5
  %v4894 = vsub.f32 %v4750, 0.5
  %v4895 = vsub.f32 %v4751, 0.5
  %v4896 = vsub.f32 %v4752, 0.5
  %v4897 = vsub.f32 %v4753, 0.5
  %v4898 = vsub.f32 %v4754, 0.5
  %v4899 = vsub.f32 %v4755, 0.5
  %v4900 = vsub.f32 %v4756, 0.5
  %v4901 = vsub.f32 %v4757, 0.5
  %v4902 = vsub.f32 %v4758, 0.5
  %v4903 = vsub.f32 %v4759, 0.5
  %v4904 = vsub.f32 %v4760, 0.5
  %v4905 = vsub.f32 %v4761, 0.5
  %v4906 = vsub.f32 %v4762, 0.5
  %v4907 = vsub.f32 %v4763, 0.5
  %v4908 = vsub.f32 %v4764, 0.5
  %v4909 = vsub.f32 %v4765, 0.5
  %v4910 = vsub.f32 %v4766, 0.5
  %v4911 = vsub.f32 %v4767, 0.5
  %v4912 = vsub.f32 %v4768, 0.5
  %v4913 = vsub.f32 %v4769, 0.5
  %v4914 = vsub.f32 %v4770, 0.5
  %v4915 = vsub.f32 %v4771, 0.5
  %v4916 = vsub.f32 %v4772, 0.5
  %v4917 = vsub.f32 %v4773, 0.5
  %v4918 = vsub.f32 %v4774, 0.5
  %v4919 = vsub.f32 %v4775, 0.5
  %v4920 = vsub.f32 %v4776, 0.5
  %v4921 = vsub.f32 %v4777, 0.5
  %v4922 = vsub.f32 %v4778, 0.5
  %v4923 = vsub.f32 %v4779, 0.5
  %v4924 = vsub.f32 %v4780, 0.5
  %v4925 = vsub.f32 %v4781, 0.5
  %v4926 = vsub.f32 %v4782, 0.5
  %v4927 = vsub.f32 %v4783, 0.5
  %v4928 = vsub.f32 %v4784, 0.5
  %v4929 = vsub.f32 %v4785, 0.5
  %v4930 = vsub.f32 %v4786, 0.5
  %v4931 = vsub.f32 %v4787, 0.5
  %v4932 = vsub.f32 %v4788, 0.5
  %v4933 = vsub.f32 %v4789, 0.5
  %v4934 = vsub.f32 %v4790, 0.5
  %v4935 = vsub.f32 %v4791, 0.5
  %v4936 = vsub.f32 %v4792, 0.5
  %v4937 = vsub.f32 %v4793, 0.5
  %v4938 = vsub.f32 %v4794, 0.5
  %v4939 = vsub.f32 %v4795, 0.5
  %v4940 = vsub.f32 %v4796, 0.5
  %v4941 = vsub.f32 %v4797, 0.5
  %v4942 = vsub.f32 %v4798, 0.5
  %v4943 = vsub.f32 %v4799, 0.5
  %v4944 = vsub.f32 %v4800, 0.5
  %v4945 = vsub.f32 %v4801, 0.5
  %v4946 = vsub.f32 %v4802, 0.5
  %v4947 = vsub.f32 %v4803, 0.5
  %v4948 = vsub.f32 %v4804, 0.5
  %v4949 = vsub.f32 %v4805, 0.5
  %v4950 = vsub.f32 %v4806, 0.5
  %v4951 = vsub.f32 %v4807, 0.5
  %v4952 = vsub.f32 %v4808, 0.5
  %v4953 = vsub.f32 %v4809, 0.5
  %v4954 = vsub.f32 %v4810, 0.5
  %v4955 = vsub.f32 %v4811, 0.5
  %v4956 = vadd.f32 %v4812, %v4813
  %v4957 = vadd.f32 %v4956, %v4814
  %v4958 = vadd.f32 %v4957, %v4815
  %v4959 = vadd.f32 %v4958, %v4816
  %v4960 = vadd.f32 %v4959, %v4817
  %v4961 = vadd.f32 %v4960, %v4818
  %v4962 = vadd.f32 %v4961, %v4819
  %v4963 = vadd.f32 %v4962, %v4820
  %v4964 = vadd.f32 %v4963, %v4821
  %v4965 = vadd.f32 %v4964, %v4822
  %v4966 = vadd.f32 %v4965, %v4823
  %v4967 = vadd.f32 %v4966, %v4824
  %v4968 = vadd.f32 %v4967, %v4825
  %v4969 = vadd.f32 %v4968, %v4826
  %v4970 = vadd.f32 %v4969, %v4827
  %v4971 = vadd.f32 %v4970, %v4828
  %v4972 = vadd.f32 %v4971, %v4829
  %v4973 = vadd.f32 %v4972, %v4830
  %v4974 = vadd.f32 %v4973, %v4831
  %v4975 = vadd.f32 %v4974, %v4832
  %v4976 = vadd.f32 %v4975, %v4833
  %v4977 = vadd.f32 %v4976, %v4834
  %v4978 = vadd.f32 %v4977, %v4835
  %v4979 = vadd.f32 %v4978, %v4836
  %v4980 = vadd.f32 %v4979, %v4837
  %v4981 = vadd.f32 %v4980, %v4838
  %v4982 = vadd.f32 %v4981, %v4839
  %v4983 = vadd.f32 %v4982, %v4840
  %v4984 = vadd.f32 %v4983, %v4841
  %v4985 = vadd.f32 %v4984, %v4842
  %v4986 = vadd.f32 %v4985, %v4843
  %v4987 = vadd.f32 %v4986, %v4844
  %v4988 = vadd.f32 %v4987, %v4845
  %v4989 = vadd.f32 %v4988, %v4846
  %v4990 = vadd.f32 %v4989, %v4847
  %v4991 = vadd.f32 %v4990, %v4848
  %v4992 = vadd.f32 %v4991, %v4849
  %v4993 = vadd.f32 %v4992, %v4850
  %v4994 = vadd.f32 %v4993, %v4851
  %v4995 = vadd.f32 %v4994, %v4852
  %v4996 = vadd.f32 %v4995, %v4853
  %v4997 = vadd.f32 %v4996, %v4854
  %v4998 = vadd.f32 %v4997, %v4855
  %v4999 = vadd.f32 %v4998, %v4856
  %v5000 = vadd.f32 %v4999, %v4857
  %v5001 = vadd.f32 %v5000, %v4858
  %v5002 = vadd.f32 %v5001, %v4859
  %v5003 = vadd.f32 %v5002, %v4860
  %v5004 = vadd.f32 %v5003, %v4861
  %v5005 = vadd.f32 %v5004, %v4862
  %v5006 = vadd.f32 %v5005, %v4863
  %v5007 = vadd.f32 %v5006, %v4864
  %v5008 = vadd.f32 %v5007, %v4865
  %v5009 = vadd.f32 %v5008, %v4866
  %v5010 = vadd.f32 %v5009, %v4867
  %v5011 = vadd.f32 %v5010, %v4868
  %v5012 = vadd.f32 %v5011, %v4869
  %v5013 = vadd.f32 %v5012, %v4870
  %v5014 = vadd.f32 %v5013, %v4871
  %v5015 = vadd.f32 %v5014, %v4872
  %v5016 = vadd.f32 %v5015, %v4873
  %v5017 = vadd.f32 %v5016, %v4874
  %v5018 = vadd.f32 %v5017, %v4875
  %v5019 = vadd.f32 %v5018, %v4876
  %v5020 = vadd.f32 %v5019, %v4877
  %v5021 = vadd.f32 %v5020, %v4878
  %v5022 = vadd.f32 %v5021, %v4879
  %v5023 = vadd.f32 %v5022, %v4880
  %v5024 = vadd.f32 %v5023, %v4881
  %v5025 = vadd.f32 %v5024, %v4882
  %v5026 = vadd.f32 %v5025, %v4883
  %v5027 = vadd.f32 %v5026, %v4884
  %v5028 = vadd.f32 %v5027, %v4885
  %v5029 = vadd.f32 %v5028, %v4886
  %v5030 = vadd.f32 %v5029, %v4887
  %v5031 = vadd.f32 %v5030, %v4888
  %v5032 = vadd.f32 %v5031, %v4889
  %v5033 = vadd.f32 %v5032, %v4890
  %v5034 = vadd.f32 %v5033, %v4891
  %v5035 = vadd.f32 %v5034, %v4892
  %v5036 = vadd.f32 %v5035, %v4893
  %v5037 = vadd.f32 %v5036, %v4894
  %v5038 = vadd.f32 %v5037, %v4895
  %v5039 = vadd.f32 %v5038, %v4896
  %v5040 = vadd.f32 %v5039, %v4897
  %v5041 = vadd.f32 %v5040, %v4898
  %v5042 = vadd.f32 %v5041, %v4899
  %v5043 = vadd.f32 %v5042, %v4900
  %v5044 = vadd.f32 %v5043, %v4901
  %v5045 = vadd.f32 %v5044, %v4902
  %v5046 = vadd.f32 %v5045, %v4903
  %v5047 = vadd.f32 %v5046, %v4904
  %v5048 = vadd.f32 %v5047, %v4905
  %v5049 = vadd.f32 %v5048, %v4906
  %v5050 = vadd.f32 %v5049, %v4907
  %v5051 = vadd.f32 %v5050, %v4908
  %v5052 = vadd.f32 %v5051, %v4909
  %v5053 = vadd.f32 %v5052, %v4910
  %v5054 = vadd.f32 %v5053, %v4911
  %v5055 = vadd.f32 %v5054, %v4912
  %v5056 = vadd.f32 %v5055, %v4913
  %v5057 = vadd.f32 %v5056, %v4914
  %v5058 = vadd.f32 %v5057, %v4915
  %v5059 = vadd.f32 %v5058, %v4916
  %v5060 = vadd.f32 %v5059, %v4917
  %v5061 = vadd.f32 %v5060, %v4918
  %v5062 = vadd.f32 %v5061, %v4919
  %v5063 = vadd.f32 %v5062, %v4920
  %v5064 = vadd.f32 %v5063, %v4921
  %v5065 = vadd.f32 %v5064, %v4922
  %v5066 = vadd.f32 %v5065, %v4923
  %v5067 = vadd.f32 %v5066, %v4924
  %v5068 = vadd.f32 %v5067, %v4925
  %v5069 = vadd.f32 %v5068, %v4926
  %v5070 = vadd.f32 %v5069, %v4927
  %v5071 = vadd.f32 %v5070, %v4928
  %v5072 = vadd.f32 %v5071, %v4929
  %v5073 = vadd.f32 %v5072, %v4930
  %v5074 = vadd.f32 %v5073, %v4931
  %v5075 = vadd.f32 %v5074, %v4932
  %v5076 = vadd.f32 %v5075, %v4933
  %v5077 = vadd.f32 %v5076, %v4934
  %v5078 = vadd.f32 %v5077, %v4935
  %v5079 = vadd.f32 %v5078, %v4936
  %v5080 = vadd.f32 %v5079, %v4937
  %v5081 = vadd.f32 %v5080, %v4938
  %v5082 = vadd.f32 %v5081, %v4939
  %v5083 = vadd.f32 %v5082, %v4940
  %v5084 = vadd.f32 %v5083, %v4941
  %v5085 = vadd.f32 %v5084, %v4942
  %v5086 = vadd.f32 %v5085, %v4943
  %v5087 = vadd.f32 %v5086, %v4944
  %v5088 = vadd.f32 %v5087, %v4945
  %v5089 = vadd.f32 %v5088, %v4946
  %v5090 = vadd.f32 %v5089, %v4947
  %v5091 = vadd.f32 %v5090, %v4948
  %v5092 = vadd.f32 %v5091, %v4949
  %v5093 = vadd.f32 %v5092, %v4950
  %v5094 = vadd.f32 %v5093, %v4951
  %v5095 = vadd.f32 %v5094, %v4952
  %v5096 = vadd.f32 %v5095, %v4953
  %v5097 = vadd.f32 %v5096, %v4954
  %v5098 = vadd.f32 %v5097, %v4955
  %v5099 = vrot.slane %v5098, 4
  %v5100 = vadd.f32 %v5098, %v5099
  %v5101 = vrot.slane %v5100, 2
  %v5102 = vadd.f32 %v5100, %v5101
  %v5103 = vrot.slane %v5102, 1
  %v5104 = vadd.f32 %v5102, %v5103
  %v5105 = vadd.f32 %v203, %v5104
  %5106 = vst [vmem:[%s8] sm:$0x1] %v5105
  // Predicated region
  $region26: #{basic_block_forward.4} parent=0 // pred_check
    _
  $region27: #{basic_block_forward.4} parent=0 // pred_check_branch
    %5108 = sbr.rel (0) target = $region29
  $region28: #{basic_block_forward.4} parent=0 // pred_region
    _
  $region29: #{basic_block_forward.4} parent=0 // pred_fallthru
    _
  // Predicated region
  $region30: #{basic_block_forward.4} parent=0 // pred_check
    _
  $region31: #{basic_block_forward.4} parent=0 // pred_check_branch
    %5110 = sbr.rel (0) target = $region33
  $region32: #{basic_block_forward.4} parent=0 // pred_region
    _
  $region33: #{basic_block_forward.4} parent=0 // pred_fallthru
    _
  // Predicated region
  $region34: #{basic_block_forward.4} parent=0 // pred_check
    _
  $region35: #{basic_block_forward.4} parent=0 // pred_check_branch
    %5112 = sbr.rel (0) target = $region37
  $region36: #{basic_block_forward.4} parent=0 // pred_region
    _
  $region37: #{basic_block_forward.4} parent=0 // pred_fallthru
    _
  // Predicated region
  $region38: #{basic_block_forward.4} parent=0 // pred_check
    _
  $region39: #{basic_block_forward.4} parent=0 // pred_check_branch
    %5114 = sbr.rel (0) target = $region41
  $region40: #{basic_block_forward.4} parent=0 // pred_region
    _
  $region41: #{basic_block_forward.4} parent=0 // pred_fallthru
    _
  // Predicated region
  $region42: #{basic_block_forward.4} parent=0 // pred_check
    _
  $region43: #{basic_block_forward.4} parent=0 // pred_check_branch
    %5116 = sbr.rel (0) target = $region45
  $region44: #{basic_block_forward.4} parent=0 // pred_region
    _
  $region45: #{basic_block_forward.4} parent=0 // pred_fallthru
    _
  // Predicated region
  $region46: #{basic_block_forward.4} parent=0 // pred_check
    _
  $region47: #{basic_block_forward.4} parent=0 // pred_check_branch
    %5118 = sbr.rel (0) target = $region49
  $region48: #{basic_block_forward.4} parent=0 // pred_region
    _
  $region49: #{basic_block_forward.4} parent=0 // pred_fallthru
    _

</llo_original>
